<compile_context>
chip_gen: v7x
topology: tpu7x:2x2x1
jax: 0.10.0
libtpu: 0.0.40
codegen_flags: <defaults>
</compile_context>

<pallas_src>
import functools
import math

import jax
import jax.numpy as jnp
from jax.experimental import pallas as pl
from jax.experimental.pallas import tpu as pltpu

# ---- model hyper-parameters (match the PyTorch module defaults) --------------
SEQ = 8           # input_size[0]
FEAT = 16         # input_size[1]
D_MODEL = 32
NHEAD = 4
HEAD_DIM = D_MODEL // NHEAD
NUM_LAYERS = 2
LATENT = 16
DIM_FF = 2048     # nn.TransformerEncoderLayer default dim_feedforward
FF_CHUNK = 512    # DIM_FF chunking (4 chunks)
EPS = 1e-5        # nn.LayerNorm default eps

# ---- packed bias/affine row layout (one lane-0-aligned row per vector) --------
R_BPOS, R_BLAT, R_BREC = 0, 1, 2
(O_BQ, O_BK, O_BV, O_BO, O_G1, O_BE1, O_B1, O_B2, O_G2, O_BE2) = range(10)
ROWS_PER_LAYER = 10
R_LAYER0 = 3
N_ROWS = R_LAYER0 + NUM_LAYERS * ROWS_PER_LAYER


def _layer_norm(x, gamma, beta):
    mu = jnp.mean(x, axis=-1, keepdims=True)
    var = jnp.mean((x - mu) ** 2, axis=-1, keepdims=True)
    return (x - mu) * jax.lax.rsqrt(var + EPS) * gamma + beta


# ---- fused forward kernel -----------------------------------------------------
def _fused_kernel(x_ref, wpos_ref, wqkv_ref, wo_ref, w1_ref, w2_ref,
                  wlat_ref, wrec_ref, vpk_ref, lat_ref, rec_ref, *, batch):
    BS = x_ref.shape[0]                 # B * S rows, kept flattened throughout
    S = BS // batch
    D = wpos_ref.shape[1]

    def vrow(r, width):
        # (1, width) bias/affine row; every slice starts at lane 0.
        return vpk_ref[r:r + 1, :width]

    # ---- pos_encoder: Linear + Tanh over all B*S rows at once ---------------
    h = jnp.tanh(
        jnp.dot(x_ref[...], wpos_ref[...], preferred_element_type=jnp.float32)
        + vrow(R_BPOS, D))                                          # (B*S, D)

    # ---- transformer encoder layers (post-norm, dropout == identity) --------
    for l in range(NUM_LAYERS):
        base = R_LAYER0 + l * ROWS_PER_LAYER

        # exact-width Q/K/V projections (1/sqrt(hd) pre-folded into wq/bq)
        q = jnp.dot(h, wqkv_ref[l, 0], preferred_element_type=jnp.float32) + vrow(base + O_BQ, D)
        k = jnp.dot(h, wqkv_ref[l, 1], preferred_element_type=jnp.float32) + vrow(base + O_BK, D)
        v = jnp.dot(h, wqkv_ref[l, 2], preferred_element_type=jnp.float32) + vrow(base + O_BV, D)
        q3 = q.reshape(batch, S, D)
        k3 = k.reshape(batch, S, D)
        v3 = v.reshape(batch, S, D)

        wo_l = wo_ref[l]
        attn = jnp.zeros((BS, D), jnp.float32)
        for hh in range(NHEAD):
            sl = slice(hh * HEAD_DIM, (hh + 1) * HEAD_DIM)
            sc = jnp.einsum('bqd,bkd->bqk', q3[:, :, sl], k3[:, :, sl],
                            preferred_element_type=jnp.float32)     # (B, S, S)
            sc = sc - jnp.max(sc, axis=-1, keepdims=True)
            p = jnp.exp(sc)
            p = p * pl.reciprocal(jnp.sum(p, axis=-1, keepdims=True), approx=True)
            o_h = jnp.einsum('bqk,bkd->bqd', p, v3[:, :, sl],
                             preferred_element_type=jnp.float32)    # (B, S, hd)
            # fold each head's output straight through its slice of W_o
            attn = attn + jnp.dot(o_h.reshape(BS, HEAD_DIM), wo_l[sl, :],
                                  preferred_element_type=jnp.float32)
        attn = attn + vrow(base + O_BO, D)

        # residual + LayerNorm 1
        h1 = _layer_norm(h + attn, vrow(base + O_G1, D), vrow(base + O_BE1, D))

        # feed-forward, chunked along DIM_FF (bf16 weights, f32 accumulation)
        h1_bf = h1.astype(jnp.bfloat16)
        ff = jnp.zeros((BS, D), jnp.float32)
        for c in range(0, DIM_FF, FF_CHUNK):
            z = jnp.dot(h1_bf, w1_ref[l, :, c:c + FF_CHUNK],
                        preferred_element_type=jnp.float32)
            z = jnp.maximum(
                z + vpk_ref[base + O_B1:base + O_B1 + 1, c:c + FF_CHUNK], 0.0)
            ff = ff + jnp.dot(z.astype(jnp.bfloat16), w2_ref[l, c:c + FF_CHUNK, :],
                              preferred_element_type=jnp.float32)
        ff = ff + vrow(base + O_B2, D)

        # residual + LayerNorm 2
        h = _layer_norm(h1 + ff, vrow(base + O_G2, D), vrow(base + O_BE2, D))

    # ---- heads ---------------------------------------------------------------
    # latent = flatten(x_out, 1) @ W_lat + b  ==  sum_s h3[:, s, :] @ wlat3[s] + b
    h3 = h.reshape(batch, S, D)
    lat = jnp.zeros((batch, LATENT), jnp.float32)
    for s in range(S):
        lat = lat + jnp.dot(h3[:, s, :], wlat_ref[s],
                            preferred_element_type=jnp.float32)
    lat = lat + vrow(R_BLAT, LATENT)
    lat_ref[...] = lat
    rec_ref[...] = (jnp.dot(lat, wrec_ref[...], preferred_element_type=jnp.float32)
                    + vrow(R_BREC, SEQ * FEAT))                     # (B, 128) lane-dense


# ---- pallas_call wrapper --------------------------------------------------------
_VMEM = pl.BlockSpec(memory_space=pltpu.MemorySpace.VMEM)


def transformer_reduction_forward(x, packed):
    B = x.shape[0]
    x2d = x.reshape(B * SEQ, FEAT)

    kernel = functools.partial(_fused_kernel, batch=B)
    latent, recon = pl.pallas_call(
        kernel,
        out_shape=(jax.ShapeDtypeStruct((B, LATENT), jnp.float32),
                   jax.ShapeDtypeStruct((B, SEQ * FEAT), jnp.float32)),
        in_specs=[_VMEM] * 9,
        out_specs=(_VMEM, _VMEM),
    )(x2d, packed["w_pos"], packed["wqkv"], packed["wo"],
      packed["w1"], packed["w2"], packed["wlat"], packed["wrec"], packed["vpk"])

    x_out = recon.reshape(B, SEQ, FEAT)   # free wrapper-side view of the (B, 128) output
    return x_out, latent


# ---- parameter init (deterministic, synthetic; weights pre-transposed to (in, out)) ----
def init_params(key):
    def nrm(k, shape, scale=0.05):
        return scale * jax.random.normal(k, shape, jnp.float32)

    keys = iter(jax.random.split(key, 6 + NUM_LAYERS * 8))
    p = {
        "w_pos": nrm(next(keys), (FEAT, D_MODEL)),
        "b_pos": nrm(next(keys), (D_MODEL,)),
        "w_lat": nrm(next(keys), (SEQ * D_MODEL, LATENT)),
        "b_lat": nrm(next(keys), (LATENT,)),
        "w_rec": nrm(next(keys), (LATENT, SEQ * FEAT)),
        "b_rec": nrm(next(keys), (SEQ * FEAT,)),
        "layers": [],
    }
    for _ in range(NUM_LAYERS):
        p["layers"].append({
            "wqkv": nrm(next(keys), (D_MODEL, 3 * D_MODEL)),
            "bqkv": nrm(next(keys), (3 * D_MODEL,)),
            "wo": nrm(next(keys), (D_MODEL, D_MODEL)),
            "bo": nrm(next(keys), (D_MODEL,)),
            "w1": nrm(next(keys), (D_MODEL, DIM_FF)),
            "b1": nrm(next(keys), (DIM_FF,)),
            "w2": nrm(next(keys), (DIM_FF, D_MODEL)),
            "b2": nrm(next(keys), (D_MODEL,)),
            "g1": jnp.ones((D_MODEL,), jnp.float32),
            "be1": jnp.zeros((D_MODEL,), jnp.float32),
            "g2": jnp.ones((D_MODEL,), jnp.float32),
            "be2": jnp.zeros((D_MODEL,), jnp.float32),
        })
    return p


def pack_params(p):
    """One-time host-side transform to kernel-ready layouts: folds 1/sqrt(hd)
    into Wq/bq, splits QKV into exact-width (3, D, D) weights, casts FFN
    weights to bf16, reshapes W_lat to (SEQ, D, LATENT), and packs every small
    bias/affine vector into one lane-0-aligned (N_ROWS, DIM_FF) f32 array."""
    scale = 1.0 / math.sqrt(HEAD_DIM)

    def row(vec):
        v = jnp.asarray(vec, jnp.float32).reshape(-1)
        return jnp.pad(v, (0, DIM_FF - v.shape[0]))

    rows = [row(p["b_pos"]), row(p["b_lat"]), row(p["b_rec"])]
    wqkv, wo, w1, w2 = [], [], [], []
    for lp in p["layers"]:
        wq = lp["wqkv"][:, :D_MODEL] * scale
        wk = lp["wqkv"][:, D_MODEL:2 * D_MODEL]
        wv = lp["wqkv"][:, 2 * D_MODEL:]
        wqkv.append(jnp.stack([wq, wk, wv]))           # (3, D, D)
        wo.append(lp["wo"])
        w1.append(lp["w1"].astype(jnp.bfloat16))
        w2.append(lp["w2"].astype(jnp.bfloat16))
        rows += [row(lp["bqkv"][:D_MODEL] * scale),     # O_BQ (scale folded)
                 row(lp["bqkv"][D_MODEL:2 * D_MODEL]),  # O_BK
                 row(lp["bqkv"][2 * D_MODEL:]),         # O_BV
                 row(lp["bo"]),                         # O_BO
                 row(lp["g1"]), row(lp["be1"]),         # O_G1, O_BE1
                 row(lp["b1"]),                         # O_B1 (full 2048 lanes)
                 row(lp["b2"]),                         # O_B2
                 row(lp["g2"]), row(lp["be2"])]         # O_G2, O_BE2
    assert len(rows) == N_ROWS
    return {
        "w_pos": p["w_pos"],                            # (FEAT, D)
        "wqkv": jnp.stack(wqkv),                        # (L, 3, D, D) f32
        "wo": jnp.stack(wo),                            # (L, D, D) f32
        "w1": jnp.stack(w1),                            # (L, D, DIM_FF) bf16
        "w2": jnp.stack(w2),                            # (L, DIM_FF, D) bf16
        "wlat": p["w_lat"].reshape(SEQ, D_MODEL, LATENT),
        "wrec": p["w_rec"],                             # (LATENT, SEQ*FEAT)
        "vpk": jnp.stack(rows),                         # (N_ROWS, DIM_FF) f32
    }


if __name__ == "__main__":
    key = jax.random.PRNGKey(0)
    k_x, k_p = jax.random.split(key)
    x = jax.random.normal(k_x, (2, SEQ, FEAT), jnp.float32)
    packed = pack_params(init_params(k_p))

    fwd = jax.jit(transformer_reduction_forward)
    x_out, latent = fwd(x, packed)
    jax.block_until_ready((x_out, latent))

    assert x_out.shape == (2, SEQ, FEAT), x_out.shape
    assert latent.shape == (2, LATENT), latent.shape
    assert bool(jnp.all(jnp.isfinite(x_out))) and bool(jnp.all(jnp.isfinite(latent)))
    print("KERNEL_OK")
</pallas_src>

<mosaic_0001>
module attributes {stable_mosaic.version = 11 : i64} {
  func.func @_fused_kernel(%arg0: memref<16x16xf32, #tpu.memory_space<vmem>>, %arg1: memref<16x32xf32, #tpu.memory_space<vmem>>, %arg2: memref<2x3x32x32xf32, #tpu.memory_space<vmem>>, %arg3: memref<2x32x32xf32, #tpu.memory_space<vmem>>, %arg4: memref<2x32x2048xbf16, #tpu.memory_space<vmem>>, %arg5: memref<2x2048x32xbf16, #tpu.memory_space<vmem>>, %arg6: memref<8x32x16xf32, #tpu.memory_space<vmem>>, %arg7: memref<16x128xf32, #tpu.memory_space<vmem>>, %arg8: memref<23x2048xf32, #tpu.memory_space<vmem>>, %arg9: memref<2x16xf32, #tpu.memory_space<vmem>>, %arg10: memref<2x128xf32, #tpu.memory_space<vmem>>) attributes {dimension_semantics = [], scalar_prefetch = 0 : i64, scratch_operands = 0 : i64, tpu.core_type = #tpu.core_type<tc>} {
    %c0 = arith.constant 0 : index
    %c0_0 = arith.constant 0 : index
    %0 = vector.load %arg0[%c0, %c0_0] : memref<16x16xf32, #tpu.memory_space<vmem>>, vector<16x16xf32>
    %c0_1 = arith.constant 0 : index
    %c0_2 = arith.constant 0 : index
    %1 = vector.load %arg1[%c0_1, %c0_2] : memref<16x32xf32, #tpu.memory_space<vmem>>, vector<16x32xf32>
    %cst = arith.constant dense<0.000000e+00> : vector<16x32xf32>
    %2 = tpu.matmul %0, %1, %cst {dimension_numbers = #tpu.dot_dimension_numbers<[1], [0], [0], [1], [0, 0, 1, 1], [], []>} : vector<16x16xf32>, vector<16x32xf32>, vector<16x32xf32> -> vector<16x32xf32>
    %c0_3 = arith.constant 0 : index
    %c0_4 = arith.constant 0 : index
    %3 = vector.load %arg8[%c0_3, %c0_4] : memref<23x2048xf32, #tpu.memory_space<vmem>>, vector<1x32xf32>
    %4 = vector.broadcast %3 : vector<1x32xf32> to vector<16x32xf32>
    %5 = arith.addf %2, %4 : vector<16x32xf32>
    %6 = math.tanh %5 : vector<16x32xf32>
    %c0_5 = arith.constant 0 : index
    %c0_6 = arith.constant 0 : index
    %c0_7 = arith.constant 0 : index
    %c0_8 = arith.constant 0 : index
    %7 = vector.load %arg2[%c0_5, %c0_6, %c0_7, %c0_8] : memref<2x3x32x32xf32, #tpu.memory_space<vmem>>, vector<1x1x32x32xf32>
    %8 = vector.shape_cast %7 : vector<1x1x32x32xf32> to vector<32x32xf32>
    %cst_9 = arith.constant dense<0.000000e+00> : vector<16x32xf32>
    %9 = tpu.matmul %6, %8, %cst_9 {dimension_numbers = #tpu.dot_dimension_numbers<[1], [0], [0], [1], [0, 0, 1, 1], [], []>} : vector<16x32xf32>, vector<32x32xf32>, vector<16x32xf32> -> vector<16x32xf32>
    %c3 = arith.constant 3 : index
    %c0_10 = arith.constant 0 : index
    %10 = vector.load %arg8[%c3, %c0_10] : memref<23x2048xf32, #tpu.memory_space<vmem>>, vector<1x32xf32>
    %11 = vector.broadcast %10 : vector<1x32xf32> to vector<16x32xf32>
    %12 = arith.addf %9, %11 : vector<16x32xf32>
    %c0_11 = arith.constant 0 : index
    %c1 = arith.constant 1 : index
    %c0_12 = arith.constant 0 : index
    %c0_13 = arith.constant 0 : index
    %13 = vector.load %arg2[%c0_11, %c1, %c0_12, %c0_13] : memref<2x3x32x32xf32, #tpu.memory_space<vmem>>, vector<1x1x32x32xf32>
    %14 = vector.shape_cast %13 : vector<1x1x32x32xf32> to vector<32x32xf32>
    %cst_14 = arith.constant dense<0.000000e+00> : vector<16x32xf32>
    %15 = tpu.matmul %6, %14, %cst_14 {dimension_numbers = #tpu.dot_dimension_numbers<[1], [0], [0], [1], [0, 0, 1, 1], [], []>} : vector<16x32xf32>, vector<32x32xf32>, vector<16x32xf32> -> vector<16x32xf32>
    %c4 = arith.constant 4 : index
    %c0_15 = arith.constant 0 : index
    %16 = vector.load %arg8[%c4, %c0_15] : memref<23x2048xf32, #tpu.memory_space<vmem>>, vector<1x32xf32>
    %17 = vector.broadcast %16 : vector<1x32xf32> to vector<16x32xf32>
    %18 = arith.addf %15, %17 : vector<16x32xf32>
    %c0_16 = arith.constant 0 : index
    %c2 = arith.constant 2 : index
    %c0_17 = arith.constant 0 : index
    %c0_18 = arith.constant 0 : index
    %19 = vector.load %arg2[%c0_16, %c2, %c0_17, %c0_18] : memref<2x3x32x32xf32, #tpu.memory_space<vmem>>, vector<1x1x32x32xf32>
    %20 = vector.shape_cast %19 : vector<1x1x32x32xf32> to vector<32x32xf32>
    %cst_19 = arith.constant dense<0.000000e+00> : vector<16x32xf32>
    %21 = tpu.matmul %6, %20, %cst_19 {dimension_numbers = #tpu.dot_dimension_numbers<[1], [0], [0], [1], [0, 0, 1, 1], [], []>} : vector<16x32xf32>, vector<32x32xf32>, vector<16x32xf32> -> vector<16x32xf32>
    %c5 = arith.constant 5 : index
    %c0_20 = arith.constant 0 : index
    %22 = vector.load %arg8[%c5, %c0_20] : memref<23x2048xf32, #tpu.memory_space<vmem>>, vector<1x32xf32>
    %23 = vector.broadcast %22 : vector<1x32xf32> to vector<16x32xf32>
    %24 = arith.addf %21, %23 : vector<16x32xf32>
    %25 = vector.shape_cast %12 : vector<16x32xf32> to vector<2x8x32xf32>
    %26 = vector.shape_cast %18 : vector<16x32xf32> to vector<2x8x32xf32>
    %27 = vector.shape_cast %24 : vector<16x32xf32> to vector<2x8x32xf32>
    %c0_21 = arith.constant 0 : index
    %c0_22 = arith.constant 0 : index
    %c0_23 = arith.constant 0 : index
    %28 = vector.load %arg3[%c0_21, %c0_22, %c0_23] : memref<2x32x32xf32, #tpu.memory_space<vmem>>, vector<1x32x32xf32>
    %29 = vector.shape_cast %28 : vector<1x32x32xf32> to vector<32x32xf32>
    %cst_24 = arith.constant 0.000000e+00 : f32
    %30 = vector.broadcast %cst_24 : f32 to vector<16x32xf32>
    %31 = vector.extract_strided_slice %25 {offsets = [0, 0, 0], sizes = [2, 8, 8], strides = [1, 1, 1]} : vector<2x8x32xf32> to vector<2x8x8xf32>
    %32 = vector.extract_strided_slice %26 {offsets = [0, 0, 0], sizes = [2, 8, 8], strides = [1, 1, 1]} : vector<2x8x32xf32> to vector<2x8x8xf32>
    "tpu.trace_start"() <{level = 10 : i32, message = "bqd,bkd->bqk"}> : () -> ()
    %cst_25 = arith.constant dense<0.000000e+00> : vector<2x8x8xf32>
    %33 = tpu.matmul %31, %32, %cst_25 {dimension_numbers = #tpu.dot_dimension_numbers<[2], [2], [1], [1], [0, 0, 0, 1, 1, 1], [0], [0]>} : vector<2x8x8xf32>, vector<2x8x8xf32>, vector<2x8x8xf32> -> vector<2x8x8xf32>
    "tpu.trace_stop"() : () -> ()
    %cst_26 = arith.constant dense<0xFF800000> : vector<2x8xf32>
    %34 = vector.multi_reduction <maximumf>, %33, %cst_26 [2] : vector<2x8x8xf32> to vector<2x8xf32>
    %35 = vector.shape_cast %34 : vector<2x8xf32> to vector<2x8x1xf32>
    %36 = vector.broadcast %35 : vector<2x8x1xf32> to vector<2x8x8xf32>
    %37 = arith.subf %33, %36 : vector<2x8x8xf32>
    %38 = math.exp %37 : vector<2x8x8xf32>
    %cst_27 = arith.constant dense<0.000000e+00> : vector<2x8xf32>
    %39 = vector.multi_reduction <add>, %38, %cst_27 [2] : vector<2x8x8xf32> to vector<2x8xf32>
    %40 = vector.shape_cast %39 : vector<2x8xf32> to vector<2x8x1xf32>
    %41 = tpu.reciprocal %40 {approx = true} : vector<2x8x1xf32> -> vector<2x8x1xf32>
    %42 = vector.broadcast %41 : vector<2x8x1xf32> to vector<2x8x8xf32>
    %43 = arith.mulf %38, %42 : vector<2x8x8xf32>
    %44 = vector.extract_strided_slice %27 {offsets = [0, 0, 0], sizes = [2, 8, 8], strides = [1, 1, 1]} : vector<2x8x32xf32> to vector<2x8x8xf32>
    "tpu.trace_start"() <{level = 10 : i32, message = "bqk,bkd->bqd"}> : () -> ()
    %cst_28 = arith.constant dense<0.000000e+00> : vector<2x8x8xf32>
    %45 = tpu.matmul %43, %44, %cst_28 {dimension_numbers = #tpu.dot_dimension_numbers<[2], [1], [1], [2], [0, 0, 0, 1, 1, 2], [0], [0]>} : vector<2x8x8xf32>, vector<2x8x8xf32>, vector<2x8x8xf32> -> vector<2x8x8xf32>
    "tpu.trace_stop"() : () -> ()
    %46 = vector.shape_cast %45 : vector<2x8x8xf32> to vector<16x8xf32>
    %47 = vector.extract_strided_slice %29 {offsets = [0, 0], sizes = [8, 32], strides = [1, 1]} : vector<32x32xf32> to vector<8x32xf32>
    %cst_29 = arith.constant dense<0.000000e+00> : vector<16x32xf32>
    %48 = tpu.matmul %46, %47, %cst_29 {dimension_numbers = #tpu.dot_dimension_numbers<[1], [0], [0], [1], [0, 0, 1, 1], [], []>} : vector<16x8xf32>, vector<8x32xf32>, vector<16x32xf32> -> vector<16x32xf32>
    %49 = arith.addf %30, %48 : vector<16x32xf32>
    %50 = vector.extract_strided_slice %25 {offsets = [0, 0, 8], sizes = [2, 8, 8], strides = [1, 1, 1]} : vector<2x8x32xf32> to vector<2x8x8xf32>
    %51 = vector.extract_strided_slice %26 {offsets = [0, 0, 8], sizes = [2, 8, 8], strides = [1, 1, 1]} : vector<2x8x32xf32> to vector<2x8x8xf32>
    "tpu.trace_start"() <{level = 10 : i32, message = "bqd,bkd->bqk"}> : () -> ()
    %cst_30 = arith.constant dense<0.000000e+00> : vector<2x8x8xf32>
    %52 = tpu.matmul %50, %51, %cst_30 {dimension_numbers = #tpu.dot_dimension_numbers<[2], [2], [1], [1], [0, 0, 0, 1, 1, 1], [0], [0]>} : vector<2x8x8xf32>, vector<2x8x8xf32>, vector<2x8x8xf32> -> vector<2x8x8xf32>
    "tpu.trace_stop"() : () -> ()
    %cst_31 = arith.constant dense<0xFF800000> : vector<2x8xf32>
    %53 = vector.multi_reduction <maximumf>, %52, %cst_31 [2] : vector<2x8x8xf32> to vector<2x8xf32>
    %54 = vector.shape_cast %53 : vector<2x8xf32> to vector<2x8x1xf32>
    %55 = vector.broadcast %54 : vector<2x8x1xf32> to vector<2x8x8xf32>
    %56 = arith.subf %52, %55 : vector<2x8x8xf32>
    %57 = math.exp %56 : vector<2x8x8xf32>
    %cst_32 = arith.constant dense<0.000000e+00> : vector<2x8xf32>
    %58 = vector.multi_reduction <add>, %57, %cst_32 [2] : vector<2x8x8xf32> to vector<2x8xf32>
    %59 = vector.shape_cast %58 : vector<2x8xf32> to vector<2x8x1xf32>
    %60 = tpu.reciprocal %59 {approx = true} : vector<2x8x1xf32> -> vector<2x8x1xf32>
    %61 = vector.broadcast %60 : vector<2x8x1xf32> to vector<2x8x8xf32>
    %62 = arith.mulf %57, %61 : vector<2x8x8xf32>
    %63 = vector.extract_strided_slice %27 {offsets = [0, 0, 8], sizes = [2, 8, 8], strides = [1, 1, 1]} : vector<2x8x32xf32> to vector<2x8x8xf32>
    "tpu.trace_start"() <{level = 10 : i32, message = "bqk,bkd->bqd"}> : () -> ()
    %cst_33 = arith.constant dense<0.000000e+00> : vector<2x8x8xf32>
    %64 = tpu.matmul %62, %63, %cst_33 {dimension_numbers = #tpu.dot_dimension_numbers<[2], [1], [1], [2], [0, 0, 0, 1, 1, 2], [0], [0]>} : vector<2x8x8xf32>, vector<2x8x8xf32>, vector<2x8x8xf32> -> vector<2x8x8xf32>
    "tpu.trace_stop"() : () -> ()
    %65 = vector.shape_cast %64 : vector<2x8x8xf32> to vector<16x8xf32>
    %66 = vector.extract_strided_slice %29 {offsets = [8, 0], sizes = [8, 32], strides = [1, 1]} : vector<32x32xf32> to vector<8x32xf32>
    %cst_34 = arith.constant dense<0.000000e+00> : vector<16x32xf32>
    %67 = tpu.matmul %65, %66, %cst_34 {dimension_numbers = #tpu.dot_dimension_numbers<[1], [0], [0], [1], [0, 0, 1, 1], [], []>} : vector<16x8xf32>, vector<8x32xf32>, vector<16x32xf32> -> vector<16x32xf32>
    %68 = arith.addf %49, %67 : vector<16x32xf32>
    %69 = vector.extract_strided_slice %25 {offsets = [0, 0, 16], sizes = [2, 8, 8], strides = [1, 1, 1]} : vector<2x8x32xf32> to vector<2x8x8xf32>
    %70 = vector.extract_strided_slice %26 {offsets = [0, 0, 16], sizes = [2, 8, 8], strides = [1, 1, 1]} : vector<2x8x32xf32> to vector<2x8x8xf32>
    "tpu.trace_start"() <{level = 10 : i32, message = "bqd,bkd->bqk"}> : () -> ()
    %cst_35 = arith.constant dense<0.000000e+00> : vector<2x8x8xf32>
    %71 = tpu.matmul %69, %70, %cst_35 {dimension_numbers = #tpu.dot_dimension_numbers<[2], [2], [1], [1], [0, 0, 0, 1, 1, 1], [0], [0]>} : vector<2x8x8xf32>, vector<2x8x8xf32>, vector<2x8x8xf32> -> vector<2x8x8xf32>
    "tpu.trace_stop"() : () -> ()
    %cst_36 = arith.constant dense<0xFF800000> : vector<2x8xf32>
    %72 = vector.multi_reduction <maximumf>, %71, %cst_36 [2] : vector<2x8x8xf32> to vector<2x8xf32>
    %73 = vector.shape_cast %72 : vector<2x8xf32> to vector<2x8x1xf32>
    %74 = vector.broadcast %73 : vector<2x8x1xf32> to vector<2x8x8xf32>
    %75 = arith.subf %71, %74 : vector<2x8x8xf32>
    %76 = math.exp %75 : vector<2x8x8xf32>
    %cst_37 = arith.constant dense<0.000000e+00> : vector<2x8xf32>
    %77 = vector.multi_reduction <add>, %76, %cst_37 [2] : vector<2x8x8xf32> to vector<2x8xf32>
    %78 = vector.shape_cast %77 : vector<2x8xf32> to vector<2x8x1xf32>
    %79 = tpu.reciprocal %78 {approx = true} : vector<2x8x1xf32> -> vector<2x8x1xf32>
    %80 = vector.broadcast %79 : vector<2x8x1xf32> to vector<2x8x8xf32>
    %81 = arith.mulf %76, %80 : vector<2x8x8xf32>
    %82 = vector.extract_strided_slice %27 {offsets = [0, 0, 16], sizes = [2, 8, 8], strides = [1, 1, 1]} : vector<2x8x32xf32> to vector<2x8x8xf32>
    "tpu.trace_start"() <{level = 10 : i32, message = "bqk,bkd->bqd"}> : () -> ()
    %cst_38 = arith.constant dense<0.000000e+00> : vector<2x8x8xf32>
    %83 = tpu.matmul %81, %82, %cst_38 {dimension_numbers = #tpu.dot_dimension_numbers<[2], [1], [1], [2], [0, 0, 0, 1, 1, 2], [0], [0]>} : vector<2x8x8xf32>, vector<2x8x8xf32>, vector<2x8x8xf32> -> vector<2x8x8xf32>
    "tpu.trace_stop"() : () -> ()
    %84 = vector.shape_cast %83 : vector<2x8x8xf32> to vector<16x8xf32>
    %85 = vector.extract_strided_slice %29 {offsets = [16, 0], sizes = [8, 32], strides = [1, 1]} : vector<32x32xf32> to vector<8x32xf32>
    %cst_39 = arith.constant dense<0.000000e+00> : vector<16x32xf32>
    %86 = tpu.matmul %84, %85, %cst_39 {dimension_numbers = #tpu.dot_dimension_numbers<[1], [0], [0], [1], [0, 0, 1, 1], [], []>} : vector<16x8xf32>, vector<8x32xf32>, vector<16x32xf32> -> vector<16x32xf32>
    %87 = arith.addf %68, %86 : vector<16x32xf32>
    %88 = vector.extract_strided_slice %25 {offsets = [0, 0, 24], sizes = [2, 8, 8], strides = [1, 1, 1]} : vector<2x8x32xf32> to vector<2x8x8xf32>
    %89 = vector.extract_strided_slice %26 {offsets = [0, 0, 24], sizes = [2, 8, 8], strides = [1, 1, 1]} : vector<2x8x32xf32> to vector<2x8x8xf32>
    "tpu.trace_start"() <{level = 10 : i32, message = "bqd,bkd->bqk"}> : () -> ()
    %cst_40 = arith.constant dense<0.000000e+00> : vector<2x8x8xf32>
    %90 = tpu.matmul %88, %89, %cst_40 {dimension_numbers = #tpu.dot_dimension_numbers<[2], [2], [1], [1], [0, 0, 0, 1, 1, 1], [0], [0]>} : vector<2x8x8xf32>, vector<2x8x8xf32>, vector<2x8x8xf32> -> vector<2x8x8xf32>
    "tpu.trace_stop"() : () -> ()
    %cst_41 = arith.constant dense<0xFF800000> : vector<2x8xf32>
    %91 = vector.multi_reduction <maximumf>, %90, %cst_41 [2] : vector<2x8x8xf32> to vector<2x8xf32>
    %92 = vector.shape_cast %91 : vector<2x8xf32> to vector<2x8x1xf32>
    %93 = vector.broadcast %92 : vector<2x8x1xf32> to vector<2x8x8xf32>
    %94 = arith.subf %90, %93 : vector<2x8x8xf32>
    %95 = math.exp %94 : vector<2x8x8xf32>
    %cst_42 = arith.constant dense<0.000000e+00> : vector<2x8xf32>
    %96 = vector.multi_reduction <add>, %95, %cst_42 [2] : vector<2x8x8xf32> to vector<2x8xf32>
    %97 = vector.shape_cast %96 : vector<2x8xf32> to vector<2x8x1xf32>
    %98 = tpu.reciprocal %97 {approx = true} : vector<2x8x1xf32> -> vector<2x8x1xf32>
    %99 = vector.broadcast %98 : vector<2x8x1xf32> to vector<2x8x8xf32>
    %100 = arith.mulf %95, %99 : vector<2x8x8xf32>
    %101 = vector.extract_strided_slice %27 {offsets = [0, 0, 24], sizes = [2, 8, 8], strides = [1, 1, 1]} : vector<2x8x32xf32> to vector<2x8x8xf32>
    "tpu.trace_start"() <{level = 10 : i32, message = "bqk,bkd->bqd"}> : () -> ()
    %cst_43 = arith.constant dense<0.000000e+00> : vector<2x8x8xf32>
    %102 = tpu.matmul %100, %101, %cst_43 {dimension_numbers = #tpu.dot_dimension_numbers<[2], [1], [1], [2], [0, 0, 0, 1, 1, 2], [0], [0]>} : vector<2x8x8xf32>, vector<2x8x8xf32>, vector<2x8x8xf32> -> vector<2x8x8xf32>
    "tpu.trace_stop"() : () -> ()
    %103 = vector.shape_cast %102 : vector<2x8x8xf32> to vector<16x8xf32>
    %104 = vector.extract_strided_slice %29 {offsets = [24, 0], sizes = [8, 32], strides = [1, 1]} : vector<32x32xf32> to vector<8x32xf32>
    %cst_44 = arith.constant dense<0.000000e+00> : vector<16x32xf32>
    %105 = tpu.matmul %103, %104, %cst_44 {dimension_numbers = #tpu.dot_dimension_numbers<[1], [0], [0], [1], [0, 0, 1, 1], [], []>} : vector<16x8xf32>, vector<8x32xf32>, vector<16x32xf32> -> vector<16x32xf32>
    %106 = arith.addf %87, %105 : vector<16x32xf32>
    %c6 = arith.constant 6 : index
    %c0_45 = arith.constant 0 : index
    %107 = vector.load %arg8[%c6, %c0_45] : memref<23x2048xf32, #tpu.memory_space<vmem>>, vector<1x32xf32>
    %108 = vector.broadcast %107 : vector<1x32xf32> to vector<16x32xf32>
    %109 = arith.addf %106, %108 : vector<16x32xf32>
    %110 = arith.addf %6, %109 : vector<16x32xf32>
    %c7 = arith.constant 7 : index
    %c0_46 = arith.constant 0 : index
    %111 = vector.load %arg8[%c7, %c0_46] : memref<23x2048xf32, #tpu.memory_space<vmem>>, vector<1x32xf32>
    %c8 = arith.constant 8 : index
    %c0_47 = arith.constant 0 : index
    %112 = vector.load %arg8[%c8, %c0_47] : memref<23x2048xf32, #tpu.memory_space<vmem>>, vector<1x32xf32>
    %cst_48 = arith.constant dense<0.000000e+00> : vector<16xf32>
    %113 = vector.multi_reduction <add>, %110, %cst_48 [1] : vector<16x32xf32> to vector<16xf32>
    %114 = vector.shape_cast %113 : vector<16xf32> to vector<16x1xf32>
    %cst_49 = arith.constant 3.200000e+01 : f32
    %115 = vector.broadcast %cst_49 : f32 to vector<16x1xf32>
    %116 = arith.divf %114, %115 : vector<16x1xf32>
    %117 = vector.broadcast %116 : vector<16x1xf32> to vector<16x32xf32>
    %118 = arith.subf %110, %117 : vector<16x32xf32>
    %119 = arith.mulf %118, %118 : vector<16x32xf32>
    %cst_50 = arith.constant dense<0.000000e+00> : vector<16xf32>
    %120 = vector.multi_reduction <add>, %119, %cst_50 [1] : vector<16x32xf32> to vector<16xf32>
    %121 = vector.shape_cast %120 : vector<16xf32> to vector<16x1xf32>
    %cst_51 = arith.constant 3.200000e+01 : f32
    %122 = vector.broadcast %cst_51 : f32 to vector<16x1xf32>
    %123 = arith.divf %121, %122 : vector<16x1xf32>
    %124 = vector.broadcast %116 : vector<16x1xf32> to vector<16x32xf32>
    %125 = arith.subf %110, %124 : vector<16x32xf32>
    %cst_52 = arith.constant 9.99999974E-6 : f32
    %126 = vector.broadcast %cst_52 : f32 to vector<16x1xf32>
    %127 = arith.addf %123, %126 : vector<16x1xf32>
    %128 = math.rsqrt %127 : vector<16x1xf32>
    %129 = vector.broadcast %128 : vector<16x1xf32> to vector<16x32xf32>
    %130 = arith.mulf %125, %129 : vector<16x32xf32>
    %131 = vector.broadcast %111 : vector<1x32xf32> to vector<16x32xf32>
    %132 = arith.mulf %130, %131 : vector<16x32xf32>
    %133 = vector.broadcast %112 : vector<1x32xf32> to vector<16x32xf32>
    %134 = arith.addf %132, %133 : vector<16x32xf32>
    %135 = arith.truncf %134 : vector<16x32xf32> to vector<16x32xbf16>
    %cst_53 = arith.constant 0.000000e+00 : f32
    %136 = vector.broadcast %cst_53 : f32 to vector<16x32xf32>
    %c0_54 = arith.constant 0 : index
    %c0_55 = arith.constant 0 : index
    %c0_56 = arith.constant 0 : index
    %137 = vector.load %arg4[%c0_54, %c0_55, %c0_56] : memref<2x32x2048xbf16, #tpu.memory_space<vmem>>, vector<1x32x512xbf16>
    %138 = vector.shape_cast %137 : vector<1x32x512xbf16> to vector<32x512xbf16>
    %cst_57 = arith.constant dense<0.000000e+00> : vector<16x512xf32>
    %139 = tpu.matmul %135, %138, %cst_57 {dimension_numbers = #tpu.dot_dimension_numbers<[1], [0], [0], [1], [0, 0, 1, 1], [], []>} : vector<16x32xbf16>, vector<32x512xbf16>, vector<16x512xf32> -> vector<16x512xf32>
    %c9 = arith.constant 9 : index
    %c0_58 = arith.constant 0 : index
    %140 = vector.load %arg8[%c9, %c0_58] : memref<23x2048xf32, #tpu.memory_space<vmem>>, vector<1x512xf32>
    %141 = vector.broadcast %140 : vector<1x512xf32> to vector<16x512xf32>
    %142 = arith.addf %139, %141 : vector<16x512xf32>
    %cst_59 = arith.constant 0.000000e+00 : f32
    %143 = vector.broadcast %cst_59 : f32 to vector<16x512xf32>
    %144 = arith.maximumf %142, %143 : vector<16x512xf32>
    %145 = arith.truncf %144 : vector<16x512xf32> to vector<16x512xbf16>
    %c0_60 = arith.constant 0 : index
    %c0_61 = arith.constant 0 : index
    %c0_62 = arith.constant 0 : index
    %146 = vector.load %arg5[%c0_60, %c0_61, %c0_62] : memref<2x2048x32xbf16, #tpu.memory_space<vmem>>, vector<1x512x32xbf16>
    %147 = vector.shape_cast %146 : vector<1x512x32xbf16> to vector<512x32xbf16>
    %cst_63 = arith.constant dense<0.000000e+00> : vector<16x32xf32>
    %148 = tpu.matmul %145, %147, %cst_63 {dimension_numbers = #tpu.dot_dimension_numbers<[1], [0], [0], [1], [0, 0, 1, 1], [], []>} : vector<16x512xbf16>, vector<512x32xbf16>, vector<16x32xf32> -> vector<16x32xf32>
    %149 = arith.addf %136, %148 : vector<16x32xf32>
    %c0_64 = arith.constant 0 : index
    %c0_65 = arith.constant 0 : index
    %c512 = arith.constant 512 : index
    %150 = vector.load %arg4[%c0_64, %c0_65, %c512] : memref<2x32x2048xbf16, #tpu.memory_space<vmem>>, vector<1x32x512xbf16>
    %151 = vector.shape_cast %150 : vector<1x32x512xbf16> to vector<32x512xbf16>
    %cst_66 = arith.constant dense<0.000000e+00> : vector<16x512xf32>
    %152 = tpu.matmul %135, %151, %cst_66 {dimension_numbers = #tpu.dot_dimension_numbers<[1], [0], [0], [1], [0, 0, 1, 1], [], []>} : vector<16x32xbf16>, vector<32x512xbf16>, vector<16x512xf32> -> vector<16x512xf32>
    %c9_67 = arith.constant 9 : index
    %c512_68 = arith.constant 512 : index
    %153 = vector.load %arg8[%c9_67, %c512_68] : memref<23x2048xf32, #tpu.memory_space<vmem>>, vector<1x512xf32>
    %154 = vector.broadcast %153 : vector<1x512xf32> to vector<16x512xf32>
    %155 = arith.addf %152, %154 : vector<16x512xf32>
    %cst_69 = arith.constant 0.000000e+00 : f32
    %156 = vector.broadcast %cst_69 : f32 to vector<16x512xf32>
    %157 = arith.maximumf %155, %156 : vector<16x512xf32>
    %158 = arith.truncf %157 : vector<16x512xf32> to vector<16x512xbf16>
    %c0_70 = arith.constant 0 : index
    %c512_71 = arith.constant 512 : index
    %c0_72 = arith.constant 0 : index
    %159 = vector.load %arg5[%c0_70, %c512_71, %c0_72] : memref<2x2048x32xbf16, #tpu.memory_space<vmem>>, vector<1x512x32xbf16>
    %160 = vector.shape_cast %159 : vector<1x512x32xbf16> to vector<512x32xbf16>
    %cst_73 = arith.constant dense<0.000000e+00> : vector<16x32xf32>
    %161 = tpu.matmul %158, %160, %cst_73 {dimension_numbers = #tpu.dot_dimension_numbers<[1], [0], [0], [1], [0, 0, 1, 1], [], []>} : vector<16x512xbf16>, vector<512x32xbf16>, vector<16x32xf32> -> vector<16x32xf32>
    %162 = arith.addf %149, %161 : vector<16x32xf32>
    %c0_74 = arith.constant 0 : index
    %c0_75 = arith.constant 0 : index
    %c1024 = arith.constant 1024 : index
    %163 = vector.load %arg4[%c0_74, %c0_75, %c1024] : memref<2x32x2048xbf16, #tpu.memory_space<vmem>>, vector<1x32x512xbf16>
    %164 = vector.shape_cast %163 : vector<1x32x512xbf16> to vector<32x512xbf16>
    %cst_76 = arith.constant dense<0.000000e+00> : vector<16x512xf32>
    %165 = tpu.matmul %135, %164, %cst_76 {dimension_numbers = #tpu.dot_dimension_numbers<[1], [0], [0], [1], [0, 0, 1, 1], [], []>} : vector<16x32xbf16>, vector<32x512xbf16>, vector<16x512xf32> -> vector<16x512xf32>
    %c9_77 = arith.constant 9 : index
    %c1024_78 = arith.constant 1024 : index
    %166 = vector.load %arg8[%c9_77, %c1024_78] : memref<23x2048xf32, #tpu.memory_space<vmem>>, vector<1x512xf32>
    %167 = vector.broadcast %166 : vector<1x512xf32> to vector<16x512xf32>
    %168 = arith.addf %165, %167 : vector<16x512xf32>
    %cst_79 = arith.constant 0.000000e+00 : f32
    %169 = vector.broadcast %cst_79 : f32 to vector<16x512xf32>
    %170 = arith.maximumf %168, %169 : vector<16x512xf32>
    %171 = arith.truncf %170 : vector<16x512xf32> to vector<16x512xbf16>
    %c0_80 = arith.constant 0 : index
    %c1024_81 = arith.constant 1024 : index
    %c0_82 = arith.constant 0 : index
    %172 = vector.load %arg5[%c0_80, %c1024_81, %c0_82] : memref<2x2048x32xbf16, #tpu.memory_space<vmem>>, vector<1x512x32xbf16>
    %173 = vector.shape_cast %172 : vector<1x512x32xbf16> to vector<512x32xbf16>
    %cst_83 = arith.constant dense<0.000000e+00> : vector<16x32xf32>
    %174 = tpu.matmul %171, %173, %cst_83 {dimension_numbers = #tpu.dot_dimension_numbers<[1], [0], [0], [1], [0, 0, 1, 1], [], []>} : vector<16x512xbf16>, vector<512x32xbf16>, vector<16x32xf32> -> vector<16x32xf32>
    %175 = arith.addf %162, %174 : vector<16x32xf32>
    %c0_84 = arith.constant 0 : index
    %c0_85 = arith.constant 0 : index
    %c1536 = arith.constant 1536 : index
    %176 = vector.load %arg4[%c0_84, %c0_85, %c1536] : memref<2x32x2048xbf16, #tpu.memory_space<vmem>>, vector<1x32x512xbf16>
    %177 = vector.shape_cast %176 : vector<1x32x512xbf16> to vector<32x512xbf16>
    %cst_86 = arith.constant dense<0.000000e+00> : vector<16x512xf32>
    %178 = tpu.matmul %135, %177, %cst_86 {dimension_numbers = #tpu.dot_dimension_numbers<[1], [0], [0], [1], [0, 0, 1, 1], [], []>} : vector<16x32xbf16>, vector<32x512xbf16>, vector<16x512xf32> -> vector<16x512xf32>
    %c9_87 = arith.constant 9 : index
    %c1536_88 = arith.constant 1536 : index
    %179 = vector.load %arg8[%c9_87, %c1536_88] : memref<23x2048xf32, #tpu.memory_space<vmem>>, vector<1x512xf32>
    %180 = vector.broadcast %179 : vector<1x512xf32> to vector<16x512xf32>
    %181 = arith.addf %178, %180 : vector<16x512xf32>
    %cst_89 = arith.constant 0.000000e+00 : f32
    %182 = vector.broadcast %cst_89 : f32 to vector<16x512xf32>
    %183 = arith.maximumf %181, %182 : vector<16x512xf32>
    %184 = arith.truncf %183 : vector<16x512xf32> to vector<16x512xbf16>
    %c0_90 = arith.constant 0 : index
    %c1536_91 = arith.constant 1536 : index
    %c0_92 = arith.constant 0 : index
    %185 = vector.load %arg5[%c0_90, %c1536_91, %c0_92] : memref<2x2048x32xbf16, #tpu.memory_space<vmem>>, vector<1x512x32xbf16>
    %186 = vector.shape_cast %185 : vector<1x512x32xbf16> to vector<512x32xbf16>
    %cst_93 = arith.constant dense<0.000000e+00> : vector<16x32xf32>
    %187 = tpu.matmul %184, %186, %cst_93 {dimension_numbers = #tpu.dot_dimension_numbers<[1], [0], [0], [1], [0, 0, 1, 1], [], []>} : vector<16x512xbf16>, vector<512x32xbf16>, vector<16x32xf32> -> vector<16x32xf32>
    %188 = arith.addf %175, %187 : vector<16x32xf32>
    %c10 = arith.constant 10 : index
    %c0_94 = arith.constant 0 : index
    %189 = vector.load %arg8[%c10, %c0_94] : memref<23x2048xf32, #tpu.memory_space<vmem>>, vector<1x32xf32>
    %190 = vector.broadcast %189 : vector<1x32xf32> to vector<16x32xf32>
    %191 = arith.addf %188, %190 : vector<16x32xf32>
    %192 = arith.addf %134, %191 : vector<16x32xf32>
    %c11 = arith.constant 11 : index
    %c0_95 = arith.constant 0 : index
    %193 = vector.load %arg8[%c11, %c0_95] : memref<23x2048xf32, #tpu.memory_space<vmem>>, vector<1x32xf32>
    %c12 = arith.constant 12 : index
    %c0_96 = arith.constant 0 : index
    %194 = vector.load %arg8[%c12, %c0_96] : memref<23x2048xf32, #tpu.memory_space<vmem>>, vector<1x32xf32>
    %cst_97 = arith.constant dense<0.000000e+00> : vector<16xf32>
    %195 = vector.multi_reduction <add>, %192, %cst_97 [1] : vector<16x32xf32> to vector<16xf32>
    %196 = vector.shape_cast %195 : vector<16xf32> to vector<16x1xf32>
    %cst_98 = arith.constant 3.200000e+01 : f32
    %197 = vector.broadcast %cst_98 : f32 to vector<16x1xf32>
    %198 = arith.divf %196, %197 : vector<16x1xf32>
    %199 = vector.broadcast %198 : vector<16x1xf32> to vector<16x32xf32>
    %200 = arith.subf %192, %199 : vector<16x32xf32>
    %201 = arith.mulf %200, %200 : vector<16x32xf32>
    %cst_99 = arith.constant dense<0.000000e+00> : vector<16xf32>
    %202 = vector.multi_reduction <add>, %201, %cst_99 [1] : vector<16x32xf32> to vector<16xf32>
    %203 = vector.shape_cast %202 : vector<16xf32> to vector<16x1xf32>
    %cst_100 = arith.constant 3.200000e+01 : f32
    %204 = vector.broadcast %cst_100 : f32 to vector<16x1xf32>
    %205 = arith.divf %203, %204 : vector<16x1xf32>
    %206 = vector.broadcast %198 : vector<16x1xf32> to vector<16x32xf32>
    %207 = arith.subf %192, %206 : vector<16x32xf32>
    %cst_101 = arith.constant 9.99999974E-6 : f32
    %208 = vector.broadcast %cst_101 : f32 to vector<16x1xf32>
    %209 = arith.addf %205, %208 : vector<16x1xf32>
    %210 = math.rsqrt %209 : vector<16x1xf32>
    %211 = vector.broadcast %210 : vector<16x1xf32> to vector<16x32xf32>
    %212 = arith.mulf %207, %211 : vector<16x32xf32>
    %213 = vector.broadcast %193 : vector<1x32xf32> to vector<16x32xf32>
    %214 = arith.mulf %212, %213 : vector<16x32xf32>
    %215 = vector.broadcast %194 : vector<1x32xf32> to vector<16x32xf32>
    %216 = arith.addf %214, %215 : vector<16x32xf32>
    %c1_102 = arith.constant 1 : index
    %c0_103 = arith.constant 0 : index
    %c0_104 = arith.constant 0 : index
    %c0_105 = arith.constant 0 : index
    %217 = vector.load %arg2[%c1_102, %c0_103, %c0_104, %c0_105] : memref<2x3x32x32xf32, #tpu.memory_space<vmem>>, vector<1x1x32x32xf32>
    %218 = vector.shape_cast %217 : vector<1x1x32x32xf32> to vector<32x32xf32>
    %cst_106 = arith.constant dense<0.000000e+00> : vector<16x32xf32>
    %219 = tpu.matmul %216, %218, %cst_106 {dimension_numbers = #tpu.dot_dimension_numbers<[1], [0], [0], [1], [0, 0, 1, 1], [], []>} : vector<16x32xf32>, vector<32x32xf32>, vector<16x32xf32> -> vector<16x32xf32>
    %c13 = arith.constant 13 : index
    %c0_107 = arith.constant 0 : index
    %220 = vector.load %arg8[%c13, %c0_107] : memref<23x2048xf32, #tpu.memory_space<vmem>>, vector<1x32xf32>
    %221 = vector.broadcast %220 : vector<1x32xf32> to vector<16x32xf32>
    %222 = arith.addf %219, %221 : vector<16x32xf32>
    %c1_108 = arith.constant 1 : index
    %c1_109 = arith.constant 1 : index
    %c0_110 = arith.constant 0 : index
    %c0_111 = arith.constant 0 : index
    %223 = vector.load %arg2[%c1_108, %c1_109, %c0_110, %c0_111] : memref<2x3x32x32xf32, #tpu.memory_space<vmem>>, vector<1x1x32x32xf32>
    %224 = vector.shape_cast %223 : vector<1x1x32x32xf32> to vector<32x32xf32>
    %cst_112 = arith.constant dense<0.000000e+00> : vector<16x32xf32>
    %225 = tpu.matmul %216, %224, %cst_112 {dimension_numbers = #tpu.dot_dimension_numbers<[1], [0], [0], [1], [0, 0, 1, 1], [], []>} : vector<16x32xf32>, vector<32x32xf32>, vector<16x32xf32> -> vector<16x32xf32>
    %c14 = arith.constant 14 : index
    %c0_113 = arith.constant 0 : index
    %226 = vector.load %arg8[%c14, %c0_113] : memref<23x2048xf32, #tpu.memory_space<vmem>>, vector<1x32xf32>
    %227 = vector.broadcast %226 : vector<1x32xf32> to vector<16x32xf32>
    %228 = arith.addf %225, %227 : vector<16x32xf32>
    %c1_114 = arith.constant 1 : index
    %c2_115 = arith.constant 2 : index
    %c0_116 = arith.constant 0 : index
    %c0_117 = arith.constant 0 : index
    %229 = vector.load %arg2[%c1_114, %c2_115, %c0_116, %c0_117] : memref<2x3x32x32xf32, #tpu.memory_space<vmem>>, vector<1x1x32x32xf32>
    %230 = vector.shape_cast %229 : vector<1x1x32x32xf32> to vector<32x32xf32>
    %cst_118 = arith.constant dense<0.000000e+00> : vector<16x32xf32>
    %231 = tpu.matmul %216, %230, %cst_118 {dimension_numbers = #tpu.dot_dimension_numbers<[1], [0], [0], [1], [0, 0, 1, 1], [], []>} : vector<16x32xf32>, vector<32x32xf32>, vector<16x32xf32> -> vector<16x32xf32>
    %c15 = arith.constant 15 : index
    %c0_119 = arith.constant 0 : index
    %232 = vector.load %arg8[%c15, %c0_119] : memref<23x2048xf32, #tpu.memory_space<vmem>>, vector<1x32xf32>
    %233 = vector.broadcast %232 : vector<1x32xf32> to vector<16x32xf32>
    %234 = arith.addf %231, %233 : vector<16x32xf32>
    %235 = vector.shape_cast %222 : vector<16x32xf32> to vector<2x8x32xf32>
    %236 = vector.shape_cast %228 : vector<16x32xf32> to vector<2x8x32xf32>
    %237 = vector.shape_cast %234 : vector<16x32xf32> to vector<2x8x32xf32>
    %c1_120 = arith.constant 1 : index
    %c0_121 = arith.constant 0 : index
    %c0_122 = arith.constant 0 : index
    %238 = vector.load %arg3[%c1_120, %c0_121, %c0_122] : memref<2x32x32xf32, #tpu.memory_space<vmem>>, vector<1x32x32xf32>
    %239 = vector.shape_cast %238 : vector<1x32x32xf32> to vector<32x32xf32>
    %cst_123 = arith.constant 0.000000e+00 : f32
    %240 = vector.broadcast %cst_123 : f32 to vector<16x32xf32>
    %241 = vector.extract_strided_slice %235 {offsets = [0, 0, 0], sizes = [2, 8, 8], strides = [1, 1, 1]} : vector<2x8x32xf32> to vector<2x8x8xf32>
    %242 = vector.extract_strided_slice %236 {offsets = [0, 0, 0], sizes = [2, 8, 8], strides = [1, 1, 1]} : vector<2x8x32xf32> to vector<2x8x8xf32>
    "tpu.trace_start"() <{level = 10 : i32, message = "bqd,bkd->bqk"}> : () -> ()
    %cst_124 = arith.constant dense<0.000000e+00> : vector<2x8x8xf32>
    %243 = tpu.matmul %241, %242, %cst_124 {dimension_numbers = #tpu.dot_dimension_numbers<[2], [2], [1], [1], [0, 0, 0, 1, 1, 1], [0], [0]>} : vector<2x8x8xf32>, vector<2x8x8xf32>, vector<2x8x8xf32> -> vector<2x8x8xf32>
    "tpu.trace_stop"() : () -> ()
    %cst_125 = arith.constant dense<0xFF800000> : vector<2x8xf32>
    %244 = vector.multi_reduction <maximumf>, %243, %cst_125 [2] : vector<2x8x8xf32> to vector<2x8xf32>
    %245 = vector.shape_cast %244 : vector<2x8xf32> to vector<2x8x1xf32>
    %246 = vector.broadcast %245 : vector<2x8x1xf32> to vector<2x8x8xf32>
    %247 = arith.subf %243, %246 : vector<2x8x8xf32>
    %248 = math.exp %247 : vector<2x8x8xf32>
    %cst_126 = arith.constant dense<0.000000e+00> : vector<2x8xf32>
    %249 = vector.multi_reduction <add>, %248, %cst_126 [2] : vector<2x8x8xf32> to vector<2x8xf32>
    %250 = vector.shape_cast %249 : vector<2x8xf32> to vector<2x8x1xf32>
    %251 = tpu.reciprocal %250 {approx = true} : vector<2x8x1xf32> -> vector<2x8x1xf32>
    %252 = vector.broadcast %251 : vector<2x8x1xf32> to vector<2x8x8xf32>
    %253 = arith.mulf %248, %252 : vector<2x8x8xf32>
    %254 = vector.extract_strided_slice %237 {offsets = [0, 0, 0], sizes = [2, 8, 8], strides = [1, 1, 1]} : vector<2x8x32xf32> to vector<2x8x8xf32>
    "tpu.trace_start"() <{level = 10 : i32, message = "bqk,bkd->bqd"}> : () -> ()
    %cst_127 = arith.constant dense<0.000000e+00> : vector<2x8x8xf32>
    %255 = tpu.matmul %253, %254, %cst_127 {dimension_numbers = #tpu.dot_dimension_numbers<[2], [1], [1], [2], [0, 0, 0, 1, 1, 2], [0], [0]>} : vector<2x8x8xf32>, vector<2x8x8xf32>, vector<2x8x8xf32> -> vector<2x8x8xf32>
    "tpu.trace_stop"() : () -> ()
    %256 = vector.shape_cast %255 : vector<2x8x8xf32> to vector<16x8xf32>
    %257 = vector.extract_strided_slice %239 {offsets = [0, 0], sizes = [8, 32], strides = [1, 1]} : vector<32x32xf32> to vector<8x32xf32>
    %cst_128 = arith.constant dense<0.000000e+00> : vector<16x32xf32>
    %258 = tpu.matmul %256, %257, %cst_128 {dimension_numbers = #tpu.dot_dimension_numbers<[1], [0], [0], [1], [0, 0, 1, 1], [], []>} : vector<16x8xf32>, vector<8x32xf32>, vector<16x32xf32> -> vector<16x32xf32>
    %259 = arith.addf %240, %258 : vector<16x32xf32>
    %260 = vector.extract_strided_slice %235 {offsets = [0, 0, 8], sizes = [2, 8, 8], strides = [1, 1, 1]} : vector<2x8x32xf32> to vector<2x8x8xf32>
    %261 = vector.extract_strided_slice %236 {offsets = [0, 0, 8], sizes = [2, 8, 8], strides = [1, 1, 1]} : vector<2x8x32xf32> to vector<2x8x8xf32>
    "tpu.trace_start"() <{level = 10 : i32, message = "bqd,bkd->bqk"}> : () -> ()
    %cst_129 = arith.constant dense<0.000000e+00> : vector<2x8x8xf32>
    %262 = tpu.matmul %260, %261, %cst_129 {dimension_numbers = #tpu.dot_dimension_numbers<[2], [2], [1], [1], [0, 0, 0, 1, 1, 1], [0], [0]>} : vector<2x8x8xf32>, vector<2x8x8xf32>, vector<2x8x8xf32> -> vector<2x8x8xf32>
    "tpu.trace_stop"() : () -> ()
    %cst_130 = arith.constant dense<0xFF800000> : vector<2x8xf32>
    %263 = vector.multi_reduction <maximumf>, %262, %cst_130 [2] : vector<2x8x8xf32> to vector<2x8xf32>
    %264 = vector.shape_cast %263 : vector<2x8xf32> to vector<2x8x1xf32>
    %265 = vector.broadcast %264 : vector<2x8x1xf32> to vector<2x8x8xf32>
    %266 = arith.subf %262, %265 : vector<2x8x8xf32>
    %267 = math.exp %266 : vector<2x8x8xf32>
    %cst_131 = arith.constant dense<0.000000e+00> : vector<2x8xf32>
    %268 = vector.multi_reduction <add>, %267, %cst_131 [2] : vector<2x8x8xf32> to vector<2x8xf32>
    %269 = vector.shape_cast %268 : vector<2x8xf32> to vector<2x8x1xf32>
    %270 = tpu.reciprocal %269 {approx = true} : vector<2x8x1xf32> -> vector<2x8x1xf32>
    %271 = vector.broadcast %270 : vector<2x8x1xf32> to vector<2x8x8xf32>
    %272 = arith.mulf %267, %271 : vector<2x8x8xf32>
    %273 = vector.extract_strided_slice %237 {offsets = [0, 0, 8], sizes = [2, 8, 8], strides = [1, 1, 1]} : vector<2x8x32xf32> to vector<2x8x8xf32>
    "tpu.trace_start"() <{level = 10 : i32, message = "bqk,bkd->bqd"}> : () -> ()
    %cst_132 = arith.constant dense<0.000000e+00> : vector<2x8x8xf32>
    %274 = tpu.matmul %272, %273, %cst_132 {dimension_numbers = #tpu.dot_dimension_numbers<[2], [1], [1], [2], [0, 0, 0, 1, 1, 2], [0], [0]>} : vector<2x8x8xf32>, vector<2x8x8xf32>, vector<2x8x8xf32> -> vector<2x8x8xf32>
    "tpu.trace_stop"() : () -> ()
    %275 = vector.shape_cast %274 : vector<2x8x8xf32> to vector<16x8xf32>
    %276 = vector.extract_strided_slice %239 {offsets = [8, 0], sizes = [8, 32], strides = [1, 1]} : vector<32x32xf32> to vector<8x32xf32>
    %cst_133 = arith.constant dense<0.000000e+00> : vector<16x32xf32>
    %277 = tpu.matmul %275, %276, %cst_133 {dimension_numbers = #tpu.dot_dimension_numbers<[1], [0], [0], [1], [0, 0, 1, 1], [], []>} : vector<16x8xf32>, vector<8x32xf32>, vector<16x32xf32> -> vector<16x32xf32>
    %278 = arith.addf %259, %277 : vector<16x32xf32>
    %279 = vector.extract_strided_slice %235 {offsets = [0, 0, 16], sizes = [2, 8, 8], strides = [1, 1, 1]} : vector<2x8x32xf32> to vector<2x8x8xf32>
    %280 = vector.extract_strided_slice %236 {offsets = [0, 0, 16], sizes = [2, 8, 8], strides = [1, 1, 1]} : vector<2x8x32xf32> to vector<2x8x8xf32>
    "tpu.trace_start"() <{level = 10 : i32, message = "bqd,bkd->bqk"}> : () -> ()
    %cst_134 = arith.constant dense<0.000000e+00> : vector<2x8x8xf32>
    %281 = tpu.matmul %279, %280, %cst_134 {dimension_numbers = #tpu.dot_dimension_numbers<[2], [2], [1], [1], [0, 0, 0, 1, 1, 1], [0], [0]>} : vector<2x8x8xf32>, vector<2x8x8xf32>, vector<2x8x8xf32> -> vector<2x8x8xf32>
    "tpu.trace_stop"() : () -> ()
    %cst_135 = arith.constant dense<0xFF800000> : vector<2x8xf32>
    %282 = vector.multi_reduction <maximumf>, %281, %cst_135 [2] : vector<2x8x8xf32> to vector<2x8xf32>
    %283 = vector.shape_cast %282 : vector<2x8xf32> to vector<2x8x1xf32>
    %284 = vector.broadcast %283 : vector<2x8x1xf32> to vector<2x8x8xf32>
    %285 = arith.subf %281, %284 : vector<2x8x8xf32>
    %286 = math.exp %285 : vector<2x8x8xf32>
    %cst_136 = arith.constant dense<0.000000e+00> : vector<2x8xf32>
    %287 = vector.multi_reduction <add>, %286, %cst_136 [2] : vector<2x8x8xf32> to vector<2x8xf32>
    %288 = vector.shape_cast %287 : vector<2x8xf32> to vector<2x8x1xf32>
    %289 = tpu.reciprocal %288 {approx = true} : vector<2x8x1xf32> -> vector<2x8x1xf32>
    %290 = vector.broadcast %289 : vector<2x8x1xf32> to vector<2x8x8xf32>
    %291 = arith.mulf %286, %290 : vector<2x8x8xf32>
    %292 = vector.extract_strided_slice %237 {offsets = [0, 0, 16], sizes = [2, 8, 8], strides = [1, 1, 1]} : vector<2x8x32xf32> to vector<2x8x8xf32>
    "tpu.trace_start"() <{level = 10 : i32, message = "bqk,bkd->bqd"}> : () -> ()
    %cst_137 = arith.constant dense<0.000000e+00> : vector<2x8x8xf32>
    %293 = tpu.matmul %291, %292, %cst_137 {dimension_numbers = #tpu.dot_dimension_numbers<[2], [1], [1], [2], [0, 0, 0, 1, 1, 2], [0], [0]>} : vector<2x8x8xf32>, vector<2x8x8xf32>, vector<2x8x8xf32> -> vector<2x8x8xf32>
    "tpu.trace_stop"() : () -> ()
    %294 = vector.shape_cast %293 : vector<2x8x8xf32> to vector<16x8xf32>
    %295 = vector.extract_strided_slice %239 {offsets = [16, 0], sizes = [8, 32], strides = [1, 1]} : vector<32x32xf32> to vector<8x32xf32>
    %cst_138 = arith.constant dense<0.000000e+00> : vector<16x32xf32>
    %296 = tpu.matmul %294, %295, %cst_138 {dimension_numbers = #tpu.dot_dimension_numbers<[1], [0], [0], [1], [0, 0, 1, 1], [], []>} : vector<16x8xf32>, vector<8x32xf32>, vector<16x32xf32> -> vector<16x32xf32>
    %297 = arith.addf %278, %296 : vector<16x32xf32>
    %298 = vector.extract_strided_slice %235 {offsets = [0, 0, 24], sizes = [2, 8, 8], strides = [1, 1, 1]} : vector<2x8x32xf32> to vector<2x8x8xf32>
    %299 = vector.extract_strided_slice %236 {offsets = [0, 0, 24], sizes = [2, 8, 8], strides = [1, 1, 1]} : vector<2x8x32xf32> to vector<2x8x8xf32>
    "tpu.trace_start"() <{level = 10 : i32, message = "bqd,bkd->bqk"}> : () -> ()
    %cst_139 = arith.constant dense<0.000000e+00> : vector<2x8x8xf32>
    %300 = tpu.matmul %298, %299, %cst_139 {dimension_numbers = #tpu.dot_dimension_numbers<[2], [2], [1], [1], [0, 0, 0, 1, 1, 1], [0], [0]>} : vector<2x8x8xf32>, vector<2x8x8xf32>, vector<2x8x8xf32> -> vector<2x8x8xf32>
    "tpu.trace_stop"() : () -> ()
    %cst_140 = arith.constant dense<0xFF800000> : vector<2x8xf32>
    %301 = vector.multi_reduction <maximumf>, %300, %cst_140 [2] : vector<2x8x8xf32> to vector<2x8xf32>
    %302 = vector.shape_cast %301 : vector<2x8xf32> to vector<2x8x1xf32>
    %303 = vector.broadcast %302 : vector<2x8x1xf32> to vector<2x8x8xf32>
    %304 = arith.subf %300, %303 : vector<2x8x8xf32>
    %305 = math.exp %304 : vector<2x8x8xf32>
    %cst_141 = arith.constant dense<0.000000e+00> : vector<2x8xf32>
    %306 = vector.multi_reduction <add>, %305, %cst_141 [2] : vector<2x8x8xf32> to vector<2x8xf32>
    %307 = vector.shape_cast %306 : vector<2x8xf32> to vector<2x8x1xf32>
    %308 = tpu.reciprocal %307 {approx = true} : vector<2x8x1xf32> -> vector<2x8x1xf32>
    %309 = vector.broadcast %308 : vector<2x8x1xf32> to vector<2x8x8xf32>
    %310 = arith.mulf %305, %309 : vector<2x8x8xf32>
    %311 = vector.extract_strided_slice %237 {offsets = [0, 0, 24], sizes = [2, 8, 8], strides = [1, 1, 1]} : vector<2x8x32xf32> to vector<2x8x8xf32>
    "tpu.trace_start"() <{level = 10 : i32, message = "bqk,bkd->bqd"}> : () -> ()
    %cst_142 = arith.constant dense<0.000000e+00> : vector<2x8x8xf32>
    %312 = tpu.matmul %310, %311, %cst_142 {dimension_numbers = #tpu.dot_dimension_numbers<[2], [1], [1], [2], [0, 0, 0, 1, 1, 2], [0], [0]>} : vector<2x8x8xf32>, vector<2x8x8xf32>, vector<2x8x8xf32> -> vector<2x8x8xf32>
    "tpu.trace_stop"() : () -> ()
    %313 = vector.shape_cast %312 : vector<2x8x8xf32> to vector<16x8xf32>
    %314 = vector.extract_strided_slice %239 {offsets = [24, 0], sizes = [8, 32], strides = [1, 1]} : vector<32x32xf32> to vector<8x32xf32>
    %cst_143 = arith.constant dense<0.000000e+00> : vector<16x32xf32>
    %315 = tpu.matmul %313, %314, %cst_143 {dimension_numbers = #tpu.dot_dimension_numbers<[1], [0], [0], [1], [0, 0, 1, 1], [], []>} : vector<16x8xf32>, vector<8x32xf32>, vector<16x32xf32> -> vector<16x32xf32>
    %316 = arith.addf %297, %315 : vector<16x32xf32>
    %c16 = arith.constant 16 : index
    %c0_144 = arith.constant 0 : index
    %317 = vector.load %arg8[%c16, %c0_144] : memref<23x2048xf32, #tpu.memory_space<vmem>>, vector<1x32xf32>
    %318 = vector.broadcast %317 : vector<1x32xf32> to vector<16x32xf32>
    %319 = arith.addf %316, %318 : vector<16x32xf32>
    %320 = arith.addf %216, %319 : vector<16x32xf32>
    %c17 = arith.constant 17 : index
    %c0_145 = arith.constant 0 : index
    %321 = vector.load %arg8[%c17, %c0_145] : memref<23x2048xf32, #tpu.memory_space<vmem>>, vector<1x32xf32>
    %c18 = arith.constant 18 : index
    %c0_146 = arith.constant 0 : index
    %322 = vector.load %arg8[%c18, %c0_146] : memref<23x2048xf32, #tpu.memory_space<vmem>>, vector<1x32xf32>
    %cst_147 = arith.constant dense<0.000000e+00> : vector<16xf32>
    %323 = vector.multi_reduction <add>, %320, %cst_147 [1] : vector<16x32xf32> to vector<16xf32>
    %324 = vector.shape_cast %323 : vector<16xf32> to vector<16x1xf32>
    %cst_148 = arith.constant 3.200000e+01 : f32
    %325 = vector.broadcast %cst_148 : f32 to vector<16x1xf32>
    %326 = arith.divf %324, %325 : vector<16x1xf32>
    %327 = vector.broadcast %326 : vector<16x1xf32> to vector<16x32xf32>
    %328 = arith.subf %320, %327 : vector<16x32xf32>
    %329 = arith.mulf %328, %328 : vector<16x32xf32>
    %cst_149 = arith.constant dense<0.000000e+00> : vector<16xf32>
    %330 = vector.multi_reduction <add>, %329, %cst_149 [1] : vector<16x32xf32> to vector<16xf32>
    %331 = vector.shape_cast %330 : vector<16xf32> to vector<16x1xf32>
    %cst_150 = arith.constant 3.200000e+01 : f32
    %332 = vector.broadcast %cst_150 : f32 to vector<16x1xf32>
    %333 = arith.divf %331, %332 : vector<16x1xf32>
    %334 = vector.broadcast %326 : vector<16x1xf32> to vector<16x32xf32>
    %335 = arith.subf %320, %334 : vector<16x32xf32>
    %cst_151 = arith.constant 9.99999974E-6 : f32
    %336 = vector.broadcast %cst_151 : f32 to vector<16x1xf32>
    %337 = arith.addf %333, %336 : vector<16x1xf32>
    %338 = math.rsqrt %337 : vector<16x1xf32>
    %339 = vector.broadcast %338 : vector<16x1xf32> to vector<16x32xf32>
    %340 = arith.mulf %335, %339 : vector<16x32xf32>
    %341 = vector.broadcast %321 : vector<1x32xf32> to vector<16x32xf32>
    %342 = arith.mulf %340, %341 : vector<16x32xf32>
    %343 = vector.broadcast %322 : vector<1x32xf32> to vector<16x32xf32>
    %344 = arith.addf %342, %343 : vector<16x32xf32>
    %345 = arith.truncf %344 : vector<16x32xf32> to vector<16x32xbf16>
    %cst_152 = arith.constant 0.000000e+00 : f32
    %346 = vector.broadcast %cst_152 : f32 to vector<16x32xf32>
    %c1_153 = arith.constant 1 : index
    %c0_154 = arith.constant 0 : index
    %c0_155 = arith.constant 0 : index
    %347 = vector.load %arg4[%c1_153, %c0_154, %c0_155] : memref<2x32x2048xbf16, #tpu.memory_space<vmem>>, vector<1x32x512xbf16>
    %348 = vector.shape_cast %347 : vector<1x32x512xbf16> to vector<32x512xbf16>
    %cst_156 = arith.constant dense<0.000000e+00> : vector<16x512xf32>
    %349 = tpu.matmul %345, %348, %cst_156 {dimension_numbers = #tpu.dot_dimension_numbers<[1], [0], [0], [1], [0, 0, 1, 1], [], []>} : vector<16x32xbf16>, vector<32x512xbf16>, vector<16x512xf32> -> vector<16x512xf32>
    %c19 = arith.constant 19 : index
    %c0_157 = arith.constant 0 : index
    %350 = vector.load %arg8[%c19, %c0_157] : memref<23x2048xf32, #tpu.memory_space<vmem>>, vector<1x512xf32>
    %351 = vector.broadcast %350 : vector<1x512xf32> to vector<16x512xf32>
    %352 = arith.addf %349, %351 : vector<16x512xf32>
    %cst_158 = arith.constant 0.000000e+00 : f32
    %353 = vector.broadcast %cst_158 : f32 to vector<16x512xf32>
    %354 = arith.maximumf %352, %353 : vector<16x512xf32>
    %355 = arith.truncf %354 : vector<16x512xf32> to vector<16x512xbf16>
    %c1_159 = arith.constant 1 : index
    %c0_160 = arith.constant 0 : index
    %c0_161 = arith.constant 0 : index
    %356 = vector.load %arg5[%c1_159, %c0_160, %c0_161] : memref<2x2048x32xbf16, #tpu.memory_space<vmem>>, vector<1x512x32xbf16>
    %357 = vector.shape_cast %356 : vector<1x512x32xbf16> to vector<512x32xbf16>
    %cst_162 = arith.constant dense<0.000000e+00> : vector<16x32xf32>
    %358 = tpu.matmul %355, %357, %cst_162 {dimension_numbers = #tpu.dot_dimension_numbers<[1], [0], [0], [1], [0, 0, 1, 1], [], []>} : vector<16x512xbf16>, vector<512x32xbf16>, vector<16x32xf32> -> vector<16x32xf32>
    %359 = arith.addf %346, %358 : vector<16x32xf32>
    %c1_163 = arith.constant 1 : index
    %c0_164 = arith.constant 0 : index
    %c512_165 = arith.constant 512 : index
    %360 = vector.load %arg4[%c1_163, %c0_164, %c512_165] : memref<2x32x2048xbf16, #tpu.memory_space<vmem>>, vector<1x32x512xbf16>
    %361 = vector.shape_cast %360 : vector<1x32x512xbf16> to vector<32x512xbf16>
    %cst_166 = arith.constant dense<0.000000e+00> : vector<16x512xf32>
    %362 = tpu.matmul %345, %361, %cst_166 {dimension_numbers = #tpu.dot_dimension_numbers<[1], [0], [0], [1], [0, 0, 1, 1], [], []>} : vector<16x32xbf16>, vector<32x512xbf16>, vector<16x512xf32> -> vector<16x512xf32>
    %c19_167 = arith.constant 19 : index
    %c512_168 = arith.constant 512 : index
    %363 = vector.load %arg8[%c19_167, %c512_168] : memref<23x2048xf32, #tpu.memory_space<vmem>>, vector<1x512xf32>
    %364 = vector.broadcast %363 : vector<1x512xf32> to vector<16x512xf32>
    %365 = arith.addf %362, %364 : vector<16x512xf32>
    %cst_169 = arith.constant 0.000000e+00 : f32
    %366 = vector.broadcast %cst_169 : f32 to vector<16x512xf32>
    %367 = arith.maximumf %365, %366 : vector<16x512xf32>
    %368 = arith.truncf %367 : vector<16x512xf32> to vector<16x512xbf16>
    %c1_170 = arith.constant 1 : index
    %c512_171 = arith.constant 512 : index
    %c0_172 = arith.constant 0 : index
    %369 = vector.load %arg5[%c1_170, %c512_171, %c0_172] : memref<2x2048x32xbf16, #tpu.memory_space<vmem>>, vector<1x512x32xbf16>
    %370 = vector.shape_cast %369 : vector<1x512x32xbf16> to vector<512x32xbf16>
    %cst_173 = arith.constant dense<0.000000e+00> : vector<16x32xf32>
    %371 = tpu.matmul %368, %370, %cst_173 {dimension_numbers = #tpu.dot_dimension_numbers<[1], [0], [0], [1], [0, 0, 1, 1], [], []>} : vector<16x512xbf16>, vector<512x32xbf16>, vector<16x32xf32> -> vector<16x32xf32>
    %372 = arith.addf %359, %371 : vector<16x32xf32>
    %c1_174 = arith.constant 1 : index
    %c0_175 = arith.constant 0 : index
    %c1024_176 = arith.constant 1024 : index
    %373 = vector.load %arg4[%c1_174, %c0_175, %c1024_176] : memref<2x32x2048xbf16, #tpu.memory_space<vmem>>, vector<1x32x512xbf16>
    %374 = vector.shape_cast %373 : vector<1x32x512xbf16> to vector<32x512xbf16>
    %cst_177 = arith.constant dense<0.000000e+00> : vector<16x512xf32>
    %375 = tpu.matmul %345, %374, %cst_177 {dimension_numbers = #tpu.dot_dimension_numbers<[1], [0], [0], [1], [0, 0, 1, 1], [], []>} : vector<16x32xbf16>, vector<32x512xbf16>, vector<16x512xf32> -> vector<16x512xf32>
    %c19_178 = arith.constant 19 : index
    %c1024_179 = arith.constant 1024 : index
    %376 = vector.load %arg8[%c19_178, %c1024_179] : memref<23x2048xf32, #tpu.memory_space<vmem>>, vector<1x512xf32>
    %377 = vector.broadcast %376 : vector<1x512xf32> to vector<16x512xf32>
    %378 = arith.addf %375, %377 : vector<16x512xf32>
    %cst_180 = arith.constant 0.000000e+00 : f32
    %379 = vector.broadcast %cst_180 : f32 to vector<16x512xf32>
    %380 = arith.maximumf %378, %379 : vector<16x512xf32>
    %381 = arith.truncf %380 : vector<16x512xf32> to vector<16x512xbf16>
    %c1_181 = arith.constant 1 : index
    %c1024_182 = arith.constant 1024 : index
    %c0_183 = arith.constant 0 : index
    %382 = vector.load %arg5[%c1_181, %c1024_182, %c0_183] : memref<2x2048x32xbf16, #tpu.memory_space<vmem>>, vector<1x512x32xbf16>
    %383 = vector.shape_cast %382 : vector<1x512x32xbf16> to vector<512x32xbf16>
    %cst_184 = arith.constant dense<0.000000e+00> : vector<16x32xf32>
    %384 = tpu.matmul %381, %383, %cst_184 {dimension_numbers = #tpu.dot_dimension_numbers<[1], [0], [0], [1], [0, 0, 1, 1], [], []>} : vector<16x512xbf16>, vector<512x32xbf16>, vector<16x32xf32> -> vector<16x32xf32>
    %385 = arith.addf %372, %384 : vector<16x32xf32>
    %c1_185 = arith.constant 1 : index
    %c0_186 = arith.constant 0 : index
    %c1536_187 = arith.constant 1536 : index
    %386 = vector.load %arg4[%c1_185, %c0_186, %c1536_187] : memref<2x32x2048xbf16, #tpu.memory_space<vmem>>, vector<1x32x512xbf16>
    %387 = vector.shape_cast %386 : vector<1x32x512xbf16> to vector<32x512xbf16>
    %cst_188 = arith.constant dense<0.000000e+00> : vector<16x512xf32>
    %388 = tpu.matmul %345, %387, %cst_188 {dimension_numbers = #tpu.dot_dimension_numbers<[1], [0], [0], [1], [0, 0, 1, 1], [], []>} : vector<16x32xbf16>, vector<32x512xbf16>, vector<16x512xf32> -> vector<16x512xf32>
    %c19_189 = arith.constant 19 : index
    %c1536_190 = arith.constant 1536 : index
    %389 = vector.load %arg8[%c19_189, %c1536_190] : memref<23x2048xf32, #tpu.memory_space<vmem>>, vector<1x512xf32>
    %390 = vector.broadcast %389 : vector<1x512xf32> to vector<16x512xf32>
    %391 = arith.addf %388, %390 : vector<16x512xf32>
    %cst_191 = arith.constant 0.000000e+00 : f32
    %392 = vector.broadcast %cst_191 : f32 to vector<16x512xf32>
    %393 = arith.maximumf %391, %392 : vector<16x512xf32>
    %394 = arith.truncf %393 : vector<16x512xf32> to vector<16x512xbf16>
    %c1_192 = arith.constant 1 : index
    %c1536_193 = arith.constant 1536 : index
    %c0_194 = arith.constant 0 : index
    %395 = vector.load %arg5[%c1_192, %c1536_193, %c0_194] : memref<2x2048x32xbf16, #tpu.memory_space<vmem>>, vector<1x512x32xbf16>
    %396 = vector.shape_cast %395 : vector<1x512x32xbf16> to vector<512x32xbf16>
    %cst_195 = arith.constant dense<0.000000e+00> : vector<16x32xf32>
    %397 = tpu.matmul %394, %396, %cst_195 {dimension_numbers = #tpu.dot_dimension_numbers<[1], [0], [0], [1], [0, 0, 1, 1], [], []>} : vector<16x512xbf16>, vector<512x32xbf16>, vector<16x32xf32> -> vector<16x32xf32>
    %398 = arith.addf %385, %397 : vector<16x32xf32>
    %c20 = arith.constant 20 : index
    %c0_196 = arith.constant 0 : index
    %399 = vector.load %arg8[%c20, %c0_196] : memref<23x2048xf32, #tpu.memory_space<vmem>>, vector<1x32xf32>
    %400 = vector.broadcast %399 : vector<1x32xf32> to vector<16x32xf32>
    %401 = arith.addf %398, %400 : vector<16x32xf32>
    %402 = arith.addf %344, %401 : vector<16x32xf32>
    %c21 = arith.constant 21 : index
    %c0_197 = arith.constant 0 : index
    %403 = vector.load %arg8[%c21, %c0_197] : memref<23x2048xf32, #tpu.memory_space<vmem>>, vector<1x32xf32>
    %c22 = arith.constant 22 : index
    %c0_198 = arith.constant 0 : index
    %404 = vector.load %arg8[%c22, %c0_198] : memref<23x2048xf32, #tpu.memory_space<vmem>>, vector<1x32xf32>
    %cst_199 = arith.constant dense<0.000000e+00> : vector<16xf32>
    %405 = vector.multi_reduction <add>, %402, %cst_199 [1] : vector<16x32xf32> to vector<16xf32>
    %406 = vector.shape_cast %405 : vector<16xf32> to vector<16x1xf32>
    %cst_200 = arith.constant 3.200000e+01 : f32
    %407 = vector.broadcast %cst_200 : f32 to vector<16x1xf32>
    %408 = arith.divf %406, %407 : vector<16x1xf32>
    %409 = vector.broadcast %408 : vector<16x1xf32> to vector<16x32xf32>
    %410 = arith.subf %402, %409 : vector<16x32xf32>
    %411 = arith.mulf %410, %410 : vector<16x32xf32>
    %cst_201 = arith.constant dense<0.000000e+00> : vector<16xf32>
    %412 = vector.multi_reduction <add>, %411, %cst_201 [1] : vector<16x32xf32> to vector<16xf32>
    %413 = vector.shape_cast %412 : vector<16xf32> to vector<16x1xf32>
    %cst_202 = arith.constant 3.200000e+01 : f32
    %414 = vector.broadcast %cst_202 : f32 to vector<16x1xf32>
    %415 = arith.divf %413, %414 : vector<16x1xf32>
    %416 = vector.broadcast %408 : vector<16x1xf32> to vector<16x32xf32>
    %417 = arith.subf %402, %416 : vector<16x32xf32>
    %cst_203 = arith.constant 9.99999974E-6 : f32
    %418 = vector.broadcast %cst_203 : f32 to vector<16x1xf32>
    %419 = arith.addf %415, %418 : vector<16x1xf32>
    %420 = math.rsqrt %419 : vector<16x1xf32>
    %421 = vector.broadcast %420 : vector<16x1xf32> to vector<16x32xf32>
    %422 = arith.mulf %417, %421 : vector<16x32xf32>
    %423 = vector.broadcast %403 : vector<1x32xf32> to vector<16x32xf32>
    %424 = arith.mulf %422, %423 : vector<16x32xf32>
    %425 = vector.broadcast %404 : vector<1x32xf32> to vector<16x32xf32>
    %426 = arith.addf %424, %425 : vector<16x32xf32>
    %427 = vector.shape_cast %426 : vector<16x32xf32> to vector<2x8x32xf32>
    %cst_204 = arith.constant 0.000000e+00 : f32
    %428 = vector.broadcast %cst_204 : f32 to vector<2x16xf32>
    %429 = vector.extract_strided_slice %427 {offsets = [0, 0, 0], sizes = [2, 1, 32], strides = [1, 1, 1]} : vector<2x8x32xf32> to vector<2x1x32xf32>
    %430 = vector.shape_cast %429 : vector<2x1x32xf32> to vector<2x32xf32>
    %c0_205 = arith.constant 0 : index
    %c0_206 = arith.constant 0 : index
    %c0_207 = arith.constant 0 : index
    %431 = vector.load %arg6[%c0_205, %c0_206, %c0_207] : memref<8x32x16xf32, #tpu.memory_space<vmem>>, vector<1x32x16xf32>
    %432 = vector.shape_cast %431 : vector<1x32x16xf32> to vector<32x16xf32>
    %cst_208 = arith.constant dense<0.000000e+00> : vector<2x16xf32>
    %433 = tpu.matmul %430, %432, %cst_208 {dimension_numbers = #tpu.dot_dimension_numbers<[1], [0], [0], [1], [0, 0, 1, 1], [], []>} : vector<2x32xf32>, vector<32x16xf32>, vector<2x16xf32> -> vector<2x16xf32>
    %434 = arith.addf %428, %433 : vector<2x16xf32>
    %435 = vector.extract_strided_slice %427 {offsets = [0, 1, 0], sizes = [2, 1, 32], strides = [1, 1, 1]} : vector<2x8x32xf32> to vector<2x1x32xf32>
    %436 = vector.shape_cast %435 : vector<2x1x32xf32> to vector<2x32xf32>
    %c1_209 = arith.constant 1 : index
    %c0_210 = arith.constant 0 : index
    %c0_211 = arith.constant 0 : index
    %437 = vector.load %arg6[%c1_209, %c0_210, %c0_211] : memref<8x32x16xf32, #tpu.memory_space<vmem>>, vector<1x32x16xf32>
    %438 = vector.shape_cast %437 : vector<1x32x16xf32> to vector<32x16xf32>
    %cst_212 = arith.constant dense<0.000000e+00> : vector<2x16xf32>
    %439 = tpu.matmul %436, %438, %cst_212 {dimension_numbers = #tpu.dot_dimension_numbers<[1], [0], [0], [1], [0, 0, 1, 1], [], []>} : vector<2x32xf32>, vector<32x16xf32>, vector<2x16xf32> -> vector<2x16xf32>
    %440 = arith.addf %434, %439 : vector<2x16xf32>
    %441 = vector.extract_strided_slice %427 {offsets = [0, 2, 0], sizes = [2, 1, 32], strides = [1, 1, 1]} : vector<2x8x32xf32> to vector<2x1x32xf32>
    %442 = vector.shape_cast %441 : vector<2x1x32xf32> to vector<2x32xf32>
    %c2_213 = arith.constant 2 : index
    %c0_214 = arith.constant 0 : index
    %c0_215 = arith.constant 0 : index
    %443 = vector.load %arg6[%c2_213, %c0_214, %c0_215] : memref<8x32x16xf32, #tpu.memory_space<vmem>>, vector<1x32x16xf32>
    %444 = vector.shape_cast %443 : vector<1x32x16xf32> to vector<32x16xf32>
    %cst_216 = arith.constant dense<0.000000e+00> : vector<2x16xf32>
    %445 = tpu.matmul %442, %444, %cst_216 {dimension_numbers = #tpu.dot_dimension_numbers<[1], [0], [0], [1], [0, 0, 1, 1], [], []>} : vector<2x32xf32>, vector<32x16xf32>, vector<2x16xf32> -> vector<2x16xf32>
    %446 = arith.addf %440, %445 : vector<2x16xf32>
    %447 = vector.extract_strided_slice %427 {offsets = [0, 3, 0], sizes = [2, 1, 32], strides = [1, 1, 1]} : vector<2x8x32xf32> to vector<2x1x32xf32>
    %448 = vector.shape_cast %447 : vector<2x1x32xf32> to vector<2x32xf32>
    %c3_217 = arith.constant 3 : index
    %c0_218 = arith.constant 0 : index
    %c0_219 = arith.constant 0 : index
    %449 = vector.load %arg6[%c3_217, %c0_218, %c0_219] : memref<8x32x16xf32, #tpu.memory_space<vmem>>, vector<1x32x16xf32>
    %450 = vector.shape_cast %449 : vector<1x32x16xf32> to vector<32x16xf32>
    %cst_220 = arith.constant dense<0.000000e+00> : vector<2x16xf32>
    %451 = tpu.matmul %448, %450, %cst_220 {dimension_numbers = #tpu.dot_dimension_numbers<[1], [0], [0], [1], [0, 0, 1, 1], [], []>} : vector<2x32xf32>, vector<32x16xf32>, vector<2x16xf32> -> vector<2x16xf32>
    %452 = arith.addf %446, %451 : vector<2x16xf32>
    %453 = vector.extract_strided_slice %427 {offsets = [0, 4, 0], sizes = [2, 1, 32], strides = [1, 1, 1]} : vector<2x8x32xf32> to vector<2x1x32xf32>
    %454 = vector.shape_cast %453 : vector<2x1x32xf32> to vector<2x32xf32>
    %c4_221 = arith.constant 4 : index
    %c0_222 = arith.constant 0 : index
    %c0_223 = arith.constant 0 : index
    %455 = vector.load %arg6[%c4_221, %c0_222, %c0_223] : memref<8x32x16xf32, #tpu.memory_space<vmem>>, vector<1x32x16xf32>
    %456 = vector.shape_cast %455 : vector<1x32x16xf32> to vector<32x16xf32>
    %cst_224 = arith.constant dense<0.000000e+00> : vector<2x16xf32>
    %457 = tpu.matmul %454, %456, %cst_224 {dimension_numbers = #tpu.dot_dimension_numbers<[1], [0], [0], [1], [0, 0, 1, 1], [], []>} : vector<2x32xf32>, vector<32x16xf32>, vector<2x16xf32> -> vector<2x16xf32>
    %458 = arith.addf %452, %457 : vector<2x16xf32>
    %459 = vector.extract_strided_slice %427 {offsets = [0, 5, 0], sizes = [2, 1, 32], strides = [1, 1, 1]} : vector<2x8x32xf32> to vector<2x1x32xf32>
    %460 = vector.shape_cast %459 : vector<2x1x32xf32> to vector<2x32xf32>
    %c5_225 = arith.constant 5 : index
    %c0_226 = arith.constant 0 : index
    %c0_227 = arith.constant 0 : index
    %461 = vector.load %arg6[%c5_225, %c0_226, %c0_227] : memref<8x32x16xf32, #tpu.memory_space<vmem>>, vector<1x32x16xf32>
    %462 = vector.shape_cast %461 : vector<1x32x16xf32> to vector<32x16xf32>
    %cst_228 = arith.constant dense<0.000000e+00> : vector<2x16xf32>
    %463 = tpu.matmul %460, %462, %cst_228 {dimension_numbers = #tpu.dot_dimension_numbers<[1], [0], [0], [1], [0, 0, 1, 1], [], []>} : vector<2x32xf32>, vector<32x16xf32>, vector<2x16xf32> -> vector<2x16xf32>
    %464 = arith.addf %458, %463 : vector<2x16xf32>
    %465 = vector.extract_strided_slice %427 {offsets = [0, 6, 0], sizes = [2, 1, 32], strides = [1, 1, 1]} : vector<2x8x32xf32> to vector<2x1x32xf32>
    %466 = vector.shape_cast %465 : vector<2x1x32xf32> to vector<2x32xf32>
    %c6_229 = arith.constant 6 : index
    %c0_230 = arith.constant 0 : index
    %c0_231 = arith.constant 0 : index
    %467 = vector.load %arg6[%c6_229, %c0_230, %c0_231] : memref<8x32x16xf32, #tpu.memory_space<vmem>>, vector<1x32x16xf32>
    %468 = vector.shape_cast %467 : vector<1x32x16xf32> to vector<32x16xf32>
    %cst_232 = arith.constant dense<0.000000e+00> : vector<2x16xf32>
    %469 = tpu.matmul %466, %468, %cst_232 {dimension_numbers = #tpu.dot_dimension_numbers<[1], [0], [0], [1], [0, 0, 1, 1], [], []>} : vector<2x32xf32>, vector<32x16xf32>, vector<2x16xf32> -> vector<2x16xf32>
    %470 = arith.addf %464, %469 : vector<2x16xf32>
    %471 = vector.extract_strided_slice %427 {offsets = [0, 7, 0], sizes = [2, 1, 32], strides = [1, 1, 1]} : vector<2x8x32xf32> to vector<2x1x32xf32>
    %472 = vector.shape_cast %471 : vector<2x1x32xf32> to vector<2x32xf32>
    %c7_233 = arith.constant 7 : index
    %c0_234 = arith.constant 0 : index
    %c0_235 = arith.constant 0 : index
    %473 = vector.load %arg6[%c7_233, %c0_234, %c0_235] : memref<8x32x16xf32, #tpu.memory_space<vmem>>, vector<1x32x16xf32>
    %474 = vector.shape_cast %473 : vector<1x32x16xf32> to vector<32x16xf32>
    %cst_236 = arith.constant dense<0.000000e+00> : vector<2x16xf32>
    %475 = tpu.matmul %472, %474, %cst_236 {dimension_numbers = #tpu.dot_dimension_numbers<[1], [0], [0], [1], [0, 0, 1, 1], [], []>} : vector<2x32xf32>, vector<32x16xf32>, vector<2x16xf32> -> vector<2x16xf32>
    %476 = arith.addf %470, %475 : vector<2x16xf32>
    %c1_237 = arith.constant 1 : index
    %c0_238 = arith.constant 0 : index
    %477 = vector.load %arg8[%c1_237, %c0_238] : memref<23x2048xf32, #tpu.memory_space<vmem>>, vector<1x16xf32>
    %478 = vector.broadcast %477 : vector<1x16xf32> to vector<2x16xf32>
    %479 = arith.addf %476, %478 : vector<2x16xf32>
    %c0_239 = arith.constant 0 : index
    %c0_240 = arith.constant 0 : index
    %480 = vector.load %arg9[%c0_239, %c0_240] : memref<2x16xf32, #tpu.memory_space<vmem>>, vector<2x16xf32>
    tpu.vector_store %arg9[%c0_239, %c0_240], %479 {strides = array<i32>} : memref<2x16xf32, #tpu.memory_space<vmem>>, vector<2x16xf32>,
    %c0_241 = arith.constant 0 : index
    %c0_242 = arith.constant 0 : index
    %481 = vector.load %arg7[%c0_241, %c0_242] : memref<16x128xf32, #tpu.memory_space<vmem>>, vector<16x128xf32>
    %cst_243 = arith.constant dense<0.000000e+00> : vector<2x128xf32>
    %482 = tpu.matmul %479, %481, %cst_243 {dimension_numbers = #tpu.dot_dimension_numbers<[1], [0], [0], [1], [0, 0, 1, 1], [], []>} : vector<2x16xf32>, vector<16x128xf32>, vector<2x128xf32> -> vector<2x128xf32>
    %c2_244 = arith.constant 2 : index
    %c0_245 = arith.constant 0 : index
    %483 = vector.load %arg8[%c2_244, %c0_245] : memref<23x2048xf32, #tpu.memory_space<vmem>>, vector<1x128xf32>
    %484 = vector.broadcast %483 : vector<1x128xf32> to vector<2x128xf32>
    %485 = arith.addf %482, %484 : vector<2x128xf32>
    %c0_246 = arith.constant 0 : index
    %c0_247 = arith.constant 0 : index
    %486 = vector.load %arg10[%c0_246, %c0_247] : memref<2x128xf32, #tpu.memory_space<vmem>>, vector<2x128xf32>
    tpu.vector_store %arg10[%c0_246, %c0_247], %485 {strides = array<i32>} : memref<2x128xf32, #tpu.memory_space<vmem>>, vector<2x128xf32>,
    return
  }
}

</mosaic_0001>

<llo_original>
// kernel: transformer_reduction_forward.1
$region0: #{transformer_reduction_forward.1}
  #allocation0 [shape = 'u32[]', space=smem, size = 0x4, offset = 0x4, fixed_abs, tag = 'smem constant byte address 0x4 - core index']
  #allocation1 [shape = 'u32[144,128]{1,0:T(1,128)}', space=vmem, size = 0x12000, scoped, tag = 'internal scratch']
  %s0 = inlined_call_operand.vmem [shape: f32[16,16], index: 0, kind: input, shape index: {}]
  %s1 = inlined_call_operand.vmem [shape: f32[16,32], index: 1, kind: input, shape index: {}]
  %s2 = inlined_call_operand.vmem [shape: f32[2,3,32,32], index: 2, kind: input, shape index: {}]
  %s3 = inlined_call_operand.vmem [shape: f32[2,32,32], index: 3, kind: input, shape index: {}]
  %s4 = inlined_call_operand.vmem [shape: bf16[2,32,2048], index: 4, kind: input, shape index: {}]
  %s5 = inlined_call_operand.vmem [shape: bf16[2,2048,32], index: 5, kind: input, shape index: {}]
  %s6 = inlined_call_operand.vmem [shape: f32[8,32,16], index: 6, kind: input, shape index: {}]
  %s7 = inlined_call_operand.vmem [shape: f32[16,128], index: 7, kind: input, shape index: {}]
  %s8 = inlined_call_operand.vmem [shape: f32[23,2048], index: 8, kind: input, shape index: {}]
  %s9 = inlined_call_operand.hbm [shape: f32[2,16], index: 9, kind: output, shape index: {0}]
  %s10 = inlined_call_operand.vmem [shape: f32[2,128], index: 10, kind: output, shape index: {1}]
  %11 = xla_tuple %s9, %s10
  %s12 = sld [smem:[#allocation0]]
  $region54: #{transformer_reduction_forward.1} parent=0
    _
  %s14 = ssub.s32 1, %s12
  %s15 = scalar_select 0, %s14, %s12
  $region1: #{transformer_reduction_forward.1} parent=0
    #allocation2 [shape = 'u8[1024]{0}', space=vmem, size = 0x400, scoped, tag = 'output window, operand 0, single buffered']
    #allocation3 [shape = 's32[1]{0}', space=sflag, size = 0x4, scoped, tag = 'scoped memory for transformer_reduction_forward.1']
    %16 = vsyncpa [#allocation3], 0
    // Predicated region
    $region2: #{transformer_reduction_forward.1} parent=1 // pred_check
      _
    $region3: #{transformer_reduction_forward.1} parent=1 // pred_check_branch
      %18 = sbr.rel (0) target = $region5
    $region4: #{transformer_reduction_forward.1} parent=1 // pred_region
      _
    $region5: #{transformer_reduction_forward.1} parent=1 // pred_fallthru
      _
    // Predicated region
    $region6: #{transformer_reduction_forward.1} parent=1 // pred_check
      _
    $region7: #{transformer_reduction_forward.1} parent=1 // pred_check_branch
      %20 = sbr.rel (0) target = $region9
    $region8: #{transformer_reduction_forward.1} parent=1 // pred_region
      _
    $region9: #{transformer_reduction_forward.1} parent=1 // pred_fallthru
      _
    // Predicated region
    $region10: #{transformer_reduction_forward.1} parent=1 // pred_check
      _
    $region11: #{transformer_reduction_forward.1} parent=1 // pred_check_branch
      %22 = sbr.rel (0) target = $region13
    $region12: #{transformer_reduction_forward.1} parent=1 // pred_region
      _
    $region13: #{transformer_reduction_forward.1} parent=1 // pred_fallthru
      _
    // Predicated region
    $region14: #{transformer_reduction_forward.1} parent=1 // pred_check
      _
    $region15: #{transformer_reduction_forward.1} parent=1 // pred_check_branch
      %24 = sbr.rel (0) target = $region17
    $region16: #{transformer_reduction_forward.1} parent=1 // pred_region
      _
    $region17: #{transformer_reduction_forward.1} parent=1 // pred_fallthru
      _
    // Predicated region
    $region18: #{transformer_reduction_forward.1} parent=1 // pred_check
      _
    $region19: #{transformer_reduction_forward.1} parent=1 // pred_check_branch
      %26 = sbr.rel (0) target = $region21
    $region20: #{transformer_reduction_forward.1} parent=1 // pred_region
      _
    $region21: #{transformer_reduction_forward.1} parent=1 // pred_fallthru
      _
    // Predicated region
    $region22: #{transformer_reduction_forward.1} parent=1 // pred_check
      _
    $region23: #{transformer_reduction_forward.1} parent=1 // pred_check_branch
      %28 = sbr.rel (0) target = $region25
    $region24: #{transformer_reduction_forward.1} parent=1 // pred_region
      _
    $region25: #{transformer_reduction_forward.1} parent=1 // pred_fallthru
      _
    // Predicated region
    $region26: #{transformer_reduction_forward.1} parent=1 // pred_check
      _
    $region27: #{transformer_reduction_forward.1} parent=1 // pred_check_branch
      %30 = sbr.rel (0) target = $region29
    $region28: #{transformer_reduction_forward.1} parent=1 // pred_region
      _
    $region29: #{transformer_reduction_forward.1} parent=1 // pred_fallthru
      _
    // Predicated region
    $region30: #{transformer_reduction_forward.1} parent=1 // pred_check
      _
    $region31: #{transformer_reduction_forward.1} parent=1 // pred_check_branch
      %32 = sbr.rel (0) target = $region33
    $region32: #{transformer_reduction_forward.1} parent=1 // pred_region
      _
    $region33: #{transformer_reduction_forward.1} parent=1 // pred_fallthru
      _
    // Predicated region
    $region34: #{transformer_reduction_forward.1} parent=1 // pred_check
      _
    $region35: #{transformer_reduction_forward.1} parent=1 // pred_check_branch
      %34 = sbr.rel (0) target = $region37
    $region36: #{transformer_reduction_forward.1} parent=1 // pred_region
      _
    $region37: #{transformer_reduction_forward.1} parent=1 // pred_fallthru
      _
    %v36 = vld [vmem:[%s0] sm:$0xff]
    %v37 = vld [vmem:[%s0 + $0x8] sm:$0xff]
    %v38 = vld [vmem:[%s1] sm:$0xff]
    %v39 = vld [vmem:[%s1 + $0x8] sm:$0xff]
    %v40 = vld [vmem:[%s8] ss:$0 sm:$0xff]
    %vm41 = vcmask 130048
    %v43 = vsel %vm41, %v36, 0
    %v46 = vsel %vm41, %v37, 0
    %48 = vmatprep.subr.mxu0 0.0
    %49 = vmatpush1.msra.mxu0 %v38
    %50 = vmatprep.subr.mxu0 0.0
    %51 = vmatpush1.msra.mxu0 %v39
    %52 = vmatprep.subr.mxu0 0.0
    %53 = vmatpush1.msra.mxu0 0.0
    %54 = vmatprep.subr.mxu0 0.0
    %55 = vmatpush1.msra.mxu0 0.0
    %56 = vmatprep.subr.mxu0 0.0
    %57 = vmatpush1.msra.mxu0 0.0
    %58 = vmatprep.subr.mxu0 0.0
    %59 = vmatpush1.msra.mxu0 0.0
    %60 = vmatprep.subr.mxu0 0.0
    %61 = vmatpush1.msra.mxu0 0.0
    %62 = vmatprep.subr.mxu0 0.0
    %63 = vmatpush1.msra.mxu0 0.0
    %64 = vmatprep.subr.mxu0 0.0
    %65 = vmatpush1.msra.mxu0 0.0
    %66 = vmatprep.subr.mxu0 0.0
    %67 = vmatpush1.msra.mxu0 0.0
    %68 = vmatprep.subr.mxu0 0.0
    %69 = vmatpush1.msra.mxu0 0.0
    %70 = vmatprep.subr.mxu0 0.0
    %71 = vmatpush1.msra.mxu0 0.0
    %72 = vmatprep.subr.mxu0 0.0
    %73 = vmatpush1.msra.mxu0 0.0
    %74 = vmatprep.subr.mxu0 0.0
    %75 = vmatpush1.msra.mxu0 0.0
    %76 = vmatprep.subr.mxu0 0.0
    %77 = vmatpush1.msra.mxu0 0.0
    %78 = vmatprep.subr.mxu0 0.0
    %79 = vmatpush1.msra.mxu0 0.0
    %80 = vmatprep.subr.mxu0 0.0
    %81 = vmatpush1.msra.mxu0 0.0
    %82 = vmatprep.subr.mxu0 0.0
    %83 = vmatpush1.msra.mxu0 0.0
    %84 = vmatprep.subr.mxu0 0.0
    %85 = vmatpush1.msra.mxu0 0.0
    %86 = vmatprep.subr.mxu0 0.0
    %87 = vmatpush1.msra.mxu0 0.0
    %88 = vmatprep.subr.mxu0 0.0
    %89 = vmatpush1.msra.mxu0 0.0
    %90 = vmatprep.subr.mxu0 0.0
    %91 = vmatpush1.msra.mxu0 0.0
    %92 = vmatprep.subr.mxu0 0.0
    %93 = vmatpush1.msra.mxu0 0.0
    %94 = vmatprep.subr.mxu0 0.0
    %95 = vmatpush1.msra.mxu0 0.0
    %96 = vmatprep.subr.mxu0 0.0
    %97 = vmatpush1.msra.mxu0 0.0
    %98 = vmatprep.subr.mxu0 0.0
    %99 = vmatpush1.msra.mxu0 0.0
    %100 = vmatprep.subr.mxu0 0.0
    %101 = vmatpush1.msra.mxu0 0.0
    %102 = vmatprep.subr.mxu0 0.0
    %103 = vmatpush1.msra.mxu0 0.0
    %104 = vmatprep.subr.mxu0 0.0
    %105 = vmatpush1.msra.mxu0 0.0
    %106 = vmatprep.subr.mxu0 0.0
    %107 = vmatpush1.msra.mxu0 0.0
    %108 = vmatprep.subr.mxu0 0.0
    %109 = vmatpush1.msra.mxu0 0.0
    %110 = vmatprep.subr.mxu0 0.0
    %111 = vmatpush1.msra.mxu0 0.0
    %112 = vmatprep.mubr.f32.mxu0 0.0
    %113 = vmatmul.mubr.f32.gmra.mrb[0].mxu0 %v43
    %v114 = vpop.f32.mrb[0].mxu0
    %v115 = vadd.f32 %v40, %v114
    %v116 = vpop.f32.mrb[0].mxu0
    %117 = vmatprep.mubr.f32.mxu0 0.0
    %118 = vmatmul.mubr.f32.gmra.mrb[0].mxu0 %v46
    %v119 = vpop.f32.mrb[0].mxu0
    %v120 = vadd.f32 %v40, %v119
    %v121 = vpop.f32.mrb[0].mxu0
    %122 = vdwg.mxu0
    %v123 = vtanh.pop %v115
    %v124 = vtanh.pop %v120
    %v125 = vld [vmem:[%s2] sm:$0xff]
    %v126 = vld [vmem:[%s2 + $0x8] sm:$0xff]
    %v127 = vld [vmem:[%s2 + $0x10] sm:$0xff]
    %v128 = vld [vmem:[%s2 + $0x18] sm:$0xff]
    %v129 = vld [vmem:[%s8 + $0x3] ss:$0 sm:$0xff]
    %vm130 = vcmask 261120
    %v132 = vsel %vm130, %v123, 0
    %v135 = vsel %vm130, %v124, 0
    %137 = vmatprep.subr.mxu0 0.0
    %138 = vmatpush1.msra.mxu0 %v125
    %139 = vmatprep.subr.mxu0 0.0
    %140 = vmatpush1.msra.mxu0 %v126
    %141 = vmatprep.subr.mxu0 0.0
    %142 = vmatpush1.msra.mxu0 %v127
    %143 = vmatprep.subr.mxu0 0.0
    %144 = vmatpush1.msra.mxu0 %v128
    %145 = vmatprep.subr.mxu0 0.0
    %146 = vmatpush1.msra.mxu0 0.0
    %147 = vmatprep.subr.mxu0 0.0
    %148 = vmatpush1.msra.mxu0 0.0
    %149 = vmatprep.subr.mxu0 0.0
    %150 = vmatpush1.msra.mxu0 0.0
    %151 = vmatprep.subr.mxu0 0.0
    %152 = vmatpush1.msra.mxu0 0.0
    %153 = vmatprep.subr.mxu0 0.0
    %154 = vmatpush1.msra.mxu0 0.0
    %155 = vmatprep.subr.mxu0 0.0
    %156 = vmatpush1.msra.mxu0 0.0
    %157 = vmatprep.subr.mxu0 0.0
    %158 = vmatpush1.msra.mxu0 0.0
    %159 = vmatprep.subr.mxu0 0.0
    %160 = vmatpush1.msra.mxu0 0.0
    %161 = vmatprep.subr.mxu0 0.0
    %162 = vmatpush1.msra.mxu0 0.0
    %163 = vmatprep.subr.mxu0 0.0
    %164 = vmatpush1.msra.mxu0 0.0
    %165 = vmatprep.subr.mxu0 0.0
    %166 = vmatpush1.msra.mxu0 0.0
    %167 = vmatprep.subr.mxu0 0.0
    %168 = vmatpush1.msra.mxu0 0.0
    %169 = vmatprep.subr.mxu0 0.0
    %170 = vmatpush1.msra.mxu0 0.0
    %171 = vmatprep.subr.mxu0 0.0
    %172 = vmatpush1.msra.mxu0 0.0
    %173 = vmatprep.subr.mxu0 0.0
    %174 = vmatpush1.msra.mxu0 0.0
    %175 = vmatprep.subr.mxu0 0.0
    %176 = vmatpush1.msra.mxu0 0.0
    %177 = vmatprep.subr.mxu0 0.0
    %178 = vmatpush1.msra.mxu0 0.0
    %179 = vmatprep.subr.mxu0 0.0
    %180 = vmatpush1.msra.mxu0 0.0
    %181 = vmatprep.subr.mxu0 0.0
    %182 = vmatpush1.msra.mxu0 0.0
    %183 = vmatprep.subr.mxu0 0.0
    %184 = vmatpush1.msra.mxu0 0.0
    %185 = vmatprep.subr.mxu0 0.0
    %186 = vmatpush1.msra.mxu0 0.0
    %187 = vmatprep.subr.mxu0 0.0
    %188 = vmatpush1.msra.mxu0 0.0
    %189 = vmatprep.subr.mxu0 0.0
    %190 = vmatpush1.msra.mxu0 0.0
    %191 = vmatprep.subr.mxu0 0.0
    %192 = vmatpush1.msra.mxu0 0.0
    %193 = vmatprep.subr.mxu0 0.0
    %194 = vmatpush1.msra.mxu0 0.0
    %195 = vmatprep.subr.mxu0 0.0
    %196 = vmatpush1.msra.mxu0 0.0
    %197 = vmatprep.subr.mxu0 0.0
    %198 = vmatpush1.msra.mxu0 0.0
    %199 = vmatprep.subr.mxu0 0.0
    %200 = vmatpush1.msra.mxu0 0.0
    %201 = vmatprep.mubr.f32.mxu0 0.0
    %202 = vmatmul.mubr.f32.gmra.mrb[0].mxu0 %v132
    %v203 = vpop.f32.mrb[0].mxu0
    %v204 = vadd.f32 %v129, %v203
    %v205 = vpop.f32.mrb[0].mxu0
    %206 = vmatprep.mubr.f32.mxu0 0.0
    %207 = vmatmul.mubr.f32.gmra.mrb[0].mxu0 %v135
    %v208 = vpop.f32.mrb[0].mxu0
    %v209 = vadd.f32 %v129, %v208
    %v210 = vpop.f32.mrb[0].mxu0
    %211 = vdwg.mxu0
    %s212 = scalar_lea.vmem %s2, 32
    %v213 = vld [vmem:[%s212] sm:$0xff]
    %v214 = vld [vmem:[%s212 + $0x8] sm:$0xff]
    %v215 = vld [vmem:[%s212 + $0x10] sm:$0xff]
    %v216 = vld [vmem:[%s212 + $0x18] sm:$0xff]
    %v217 = vld [vmem:[%s8 + $0x4] ss:$0 sm:$0xff]
    %218 = vmatprep.subr.mxu0 0.0
    %219 = vmatpush1.msra.mxu0 %v213
    %220 = vmatprep.subr.mxu0 0.0
    %221 = vmatpush1.msra.mxu0 %v214
    %222 = vmatprep.subr.mxu0 0.0
    %223 = vmatpush1.msra.mxu0 %v215
    %224 = vmatprep.subr.mxu0 0.0
    %225 = vmatpush1.msra.mxu0 %v216
    %226 = vmatprep.subr.mxu0 0.0
    %227 = vmatpush1.msra.mxu0 0.0
    %228 = vmatprep.subr.mxu0 0.0
    %229 = vmatpush1.msra.mxu0 0.0
    %230 = vmatprep.subr.mxu0 0.0
    %231 = vmatpush1.msra.mxu0 0.0
    %232 = vmatprep.subr.mxu0 0.0
    %233 = vmatpush1.msra.mxu0 0.0
    %234 = vmatprep.subr.mxu0 0.0
    %235 = vmatpush1.msra.mxu0 0.0
    %236 = vmatprep.subr.mxu0 0.0
    %237 = vmatpush1.msra.mxu0 0.0
    %238 = vmatprep.subr.mxu0 0.0
    %239 = vmatpush1.msra.mxu0 0.0
    %240 = vmatprep.subr.mxu0 0.0
    %241 = vmatpush1.msra.mxu0 0.0
    %242 = vmatprep.subr.mxu0 0.0
    %243 = vmatpush1.msra.mxu0 0.0
    %244 = vmatprep.subr.mxu0 0.0
    %245 = vmatpush1.msra.mxu0 0.0
    %246 = vmatprep.subr.mxu0 0.0
    %247 = vmatpush1.msra.mxu0 0.0
    %248 = vmatprep.subr.mxu0 0.0
    %249 = vmatpush1.msra.mxu0 0.0
    %250 = vmatprep.subr.mxu0 0.0
    %251 = vmatpush1.msra.mxu0 0.0
    %252 = vmatprep.subr.mxu0 0.0
    %253 = vmatpush1.msra.mxu0 0.0
    %254 = vmatprep.subr.mxu0 0.0
    %255 = vmatpush1.msra.mxu0 0.0
    %256 = vmatprep.subr.mxu0 0.0
    %257 = vmatpush1.msra.mxu0 0.0
    %258 = vmatprep.subr.mxu0 0.0
    %259 = vmatpush1.msra.mxu0 0.0
    %260 = vmatprep.subr.mxu0 0.0
    %261 = vmatpush1.msra.mxu0 0.0
    %262 = vmatprep.subr.mxu0 0.0
    %263 = vmatpush1.msra.mxu0 0.0
    %264 = vmatprep.subr.mxu0 0.0
    %265 = vmatpush1.msra.mxu0 0.0
    %266 = vmatprep.subr.mxu0 0.0
    %267 = vmatpush1.msra.mxu0 0.0
    %268 = vmatprep.subr.mxu0 0.0
    %269 = vmatpush1.msra.mxu0 0.0
    %270 = vmatprep.subr.mxu0 0.0
    %271 = vmatpush1.msra.mxu0 0.0
    %272 = vmatprep.subr.mxu0 0.0
    %273 = vmatpush1.msra.mxu0 0.0
    %274 = vmatprep.subr.mxu0 0.0
    %275 = vmatpush1.msra.mxu0 0.0
    %276 = vmatprep.subr.mxu0 0.0
    %277 = vmatpush1.msra.mxu0 0.0
    %278 = vmatprep.subr.mxu0 0.0
    %279 = vmatpush1.msra.mxu0 0.0
    %280 = vmatprep.subr.mxu0 0.0
    %281 = vmatpush1.msra.mxu0 0.0
    %282 = vmatprep.mubr.f32.mxu0 0.0
    %283 = vmatmul.mubr.f32.gmra.mrb[0].mxu0 %v132
    %v284 = vpop.f32.mrb[0].mxu0
    %v285 = vadd.f32 %v217, %v284
    %v286 = vpop.f32.mrb[0].mxu0
    %287 = vmatprep.mubr.f32.mxu0 0.0
    %288 = vmatmul.mubr.f32.gmra.mrb[0].mxu0 %v135
    %v289 = vpop.f32.mrb[0].mxu0
    %v290 = vadd.f32 %v217, %v289
    %v291 = vpop.f32.mrb[0].mxu0
    %292 = vdwg.mxu0
    %s293 = scalar_lea.vmem %s2, 64
    %v294 = vld [vmem:[%s293] sm:$0xff]
    %v295 = vld [vmem:[%s293 + $0x8] sm:$0xff]
    %v296 = vld [vmem:[%s293 + $0x10] sm:$0xff]
    %v297 = vld [vmem:[%s293 + $0x18] sm:$0xff]
    %v298 = vld [vmem:[%s8 + $0x5] ss:$0 sm:$0xff]
    %299 = vmatprep.subr.mxu0 0.0
    %300 = vmatpush1.msra.mxu0 %v294
    %301 = vmatprep.subr.mxu0 0.0
    %302 = vmatpush1.msra.mxu0 %v295
    %303 = vmatprep.subr.mxu0 0.0
    %304 = vmatpush1.msra.mxu0 %v296
    %305 = vmatprep.subr.mxu0 0.0
    %306 = vmatpush1.msra.mxu0 %v297
    %307 = vmatprep.subr.mxu0 0.0
    %308 = vmatpush1.msra.mxu0 0.0
    %309 = vmatprep.subr.mxu0 0.0
    %310 = vmatpush1.msra.mxu0 0.0
    %311 = vmatprep.subr.mxu0 0.0
    %312 = vmatpush1.msra.mxu0 0.0
    %313 = vmatprep.subr.mxu0 0.0
    %314 = vmatpush1.msra.mxu0 0.0
    %315 = vmatprep.subr.mxu0 0.0
    %316 = vmatpush1.msra.mxu0 0.0
    %317 = vmatprep.subr.mxu0 0.0
    %318 = vmatpush1.msra.mxu0 0.0
    %319 = vmatprep.subr.mxu0 0.0
    %320 = vmatpush1.msra.mxu0 0.0
    %321 = vmatprep.subr.mxu0 0.0
    %322 = vmatpush1.msra.mxu0 0.0
    %323 = vmatprep.subr.mxu0 0.0
    %324 = vmatpush1.msra.mxu0 0.0
    %325 = vmatprep.subr.mxu0 0.0
    %326 = vmatpush1.msra.mxu0 0.0
    %327 = vmatprep.subr.mxu0 0.0
    %328 = vmatpush1.msra.mxu0 0.0
    %329 = vmatprep.subr.mxu0 0.0
    %330 = vmatpush1.msra.mxu0 0.0
    %331 = vmatprep.subr.mxu0 0.0
    %332 = vmatpush1.msra.mxu0 0.0
    %333 = vmatprep.subr.mxu0 0.0
    %334 = vmatpush1.msra.mxu0 0.0
    %335 = vmatprep.subr.mxu0 0.0
    %336 = vmatpush1.msra.mxu0 0.0
    %337 = vmatprep.subr.mxu0 0.0
    %338 = vmatpush1.msra.mxu0 0.0
    %339 = vmatprep.subr.mxu0 0.0
    %340 = vmatpush1.msra.mxu0 0.0
    %341 = vmatprep.subr.mxu0 0.0
    %342 = vmatpush1.msra.mxu0 0.0
    %343 = vmatprep.subr.mxu0 0.0
    %344 = vmatpush1.msra.mxu0 0.0
    %345 = vmatprep.subr.mxu0 0.0
    %346 = vmatpush1.msra.mxu0 0.0
    %347 = vmatprep.subr.mxu0 0.0
    %348 = vmatpush1.msra.mxu0 0.0
    %349 = vmatprep.subr.mxu0 0.0
    %350 = vmatpush1.msra.mxu0 0.0
    %351 = vmatprep.subr.mxu0 0.0
    %352 = vmatpush1.msra.mxu0 0.0
    %353 = vmatprep.subr.mxu0 0.0
    %354 = vmatpush1.msra.mxu0 0.0
    %355 = vmatprep.subr.mxu0 0.0
    %356 = vmatpush1.msra.mxu0 0.0
    %357 = vmatprep.subr.mxu0 0.0
    %358 = vmatpush1.msra.mxu0 0.0
    %359 = vmatprep.subr.mxu0 0.0
    %360 = vmatpush1.msra.mxu0 0.0
    %361 = vmatprep.subr.mxu0 0.0
    %362 = vmatpush1.msra.mxu0 0.0
    %363 = vmatprep.mubr.f32.mxu0 0.0
    %364 = vmatmul.mubr.f32.gmra.mrb[0].mxu0 %v132
    %v365 = vpop.f32.mrb[0].mxu0
    %v366 = vadd.f32 %v298, %v365
    %v367 = vpop.f32.mrb[0].mxu0
    %368 = vmatprep.mubr.f32.mxu0 0.0
    %369 = vmatmul.mubr.f32.gmra.mrb[0].mxu0 %v135
    %v370 = vpop.f32.mrb[0].mxu0
    %v371 = vadd.f32 %v298, %v370
    %v372 = vpop.f32.mrb[0].mxu0
    %373 = vdwg.mxu0
    %v374 = vld [vmem:[%s3] sm:$0xff]
    %v375 = vld [vmem:[%s3 + $0x8] sm:$0xff]
    %v376 = vld [vmem:[%s3 + $0x10] sm:$0xff]
    %v377 = vld [vmem:[%s3 + $0x18] sm:$0xff]
    %vm378 = vcmask 64512
    %v380 = vsel %vm378, %v204, 0
    %v383 = vsel %vm378, %v285, 0
    %385 = vmatprep.subr.mxu0 0.0
    %386 = vmatpush1.xpose.msra.mxu0 %v383
    %387 = vmatprep.subr.mxu0 0.0
    %388 = vmatpush1.xpose.msra.mxu0 0.0
    %389 = vmatprep.subr.mxu0 0.0
    %390 = vmatpush1.xpose.msra.mxu0 0.0
    %391 = vmatprep.subr.mxu0 0.0
    %392 = vmatpush1.xpose.msra.mxu0 0.0
    %393 = vmatprep.subr.mxu0 0.0
    %394 = vmatpush1.xpose.msra.mxu0 0.0
    %395 = vmatprep.subr.mxu0 0.0
    %396 = vmatpush1.xpose.msra.mxu0 0.0
    %397 = vmatprep.subr.mxu0 0.0
    %398 = vmatpush1.xpose.msra.mxu0 0.0
    %399 = vmatprep.subr.mxu0 0.0
    %400 = vmatpush1.xpose.msra.mxu0 0.0
    %401 = vmatprep.subr.mxu0 0.0
    %402 = vmatpush1.xpose.msra.mxu0 0.0
    %403 = vmatprep.subr.mxu0 0.0
    %404 = vmatpush1.xpose.msra.mxu0 0.0
    %405 = vmatprep.subr.mxu0 0.0
    %406 = vmatpush1.xpose.msra.mxu0 0.0
    %407 = vmatprep.subr.mxu0 0.0
    %408 = vmatpush1.xpose.msra.mxu0 0.0
    %409 = vmatprep.subr.mxu0 0.0
    %410 = vmatpush1.xpose.msra.mxu0 0.0
    %411 = vmatprep.subr.mxu0 0.0
    %412 = vmatpush1.xpose.msra.mxu0 0.0
    %413 = vmatprep.subr.mxu0 0.0
    %414 = vmatpush1.xpose.msra.mxu0 0.0
    %415 = vmatprep.subr.mxu0 0.0
    %416 = vmatpush1.xpose.msra.mxu0 0.0
    %417 = vmatprep.subr.mxu0 0.0
    %418 = vmatpush1.xpose.msra.mxu0 0.0
    %419 = vmatprep.subr.mxu0 0.0
    %420 = vmatpush1.xpose.msra.mxu0 0.0
    %421 = vmatprep.subr.mxu0 0.0
    %422 = vmatpush1.xpose.msra.mxu0 0.0
    %423 = vmatprep.subr.mxu0 0.0
    %424 = vmatpush1.xpose.msra.mxu0 0.0
    %425 = vmatprep.subr.mxu0 0.0
    %426 = vmatpush1.xpose.msra.mxu0 0.0
    %427 = vmatprep.subr.mxu0 0.0
    %428 = vmatpush1.xpose.msra.mxu0 0.0
    %429 = vmatprep.subr.mxu0 0.0
    %430 = vmatpush1.xpose.msra.mxu0 0.0
    %431 = vmatprep.subr.mxu0 0.0
    %432 = vmatpush1.xpose.msra.mxu0 0.0
    %433 = vmatprep.subr.mxu0 0.0
    %434 = vmatpush1.xpose.msra.mxu0 0.0
    %435 = vmatprep.subr.mxu0 0.0
    %436 = vmatpush1.xpose.msra.mxu0 0.0
    %437 = vmatprep.subr.mxu0 0.0
    %438 = vmatpush1.xpose.msra.mxu0 0.0
    %439 = vmatprep.subr.mxu0 0.0
    %440 = vmatpush1.xpose.msra.mxu0 0.0
    %441 = vmatprep.subr.mxu0 0.0
    %442 = vmatpush1.xpose.msra.mxu0 0.0
    %443 = vmatprep.subr.mxu0 0.0
    %444 = vmatpush1.xpose.msra.mxu0 0.0
    %445 = vmatprep.subr.mxu0 0.0
    %446 = vmatpush1.xpose.msra.mxu0 0.0
    %447 = vmatprep.subr.mxu0 0.0
    %448 = vmatpush1.xpose.msra.mxu0 0.0
    %449 = vmatprep.mubr.f32.mxu0 0.0
    %450 = vmatmul.mubr.f32.gmra.mrb[0].mxu0 %v380
    %v451 = vpop.f32.mrb[0].mxu0
    %v452 = vadd.f32 0.0, %v451
    %v453 = vpop.f32.mrb[0].mxu0
    %454 = vdwg.mxu0
    %v456 = vsel %vm378, %v209, 0
    %v459 = vsel %vm378, %v290, 0
    %461 = vmatprep.subr.mxu0 0.0
    %462 = vmatpush1.xpose.msra.mxu0 %v459
    %463 = vmatprep.subr.mxu0 0.0
    %464 = vmatpush1.xpose.msra.mxu0 0.0
    %465 = vmatprep.subr.mxu0 0.0
    %466 = vmatpush1.xpose.msra.mxu0 0.0
    %467 = vmatprep.subr.mxu0 0.0
    %468 = vmatpush1.xpose.msra.mxu0 0.0
    %469 = vmatprep.subr.mxu0 0.0
    %470 = vmatpush1.xpose.msra.mxu0 0.0
    %471 = vmatprep.subr.mxu0 0.0
    %472 = vmatpush1.xpose.msra.mxu0 0.0
    %473 = vmatprep.subr.mxu0 0.0
    %474 = vmatpush1.xpose.msra.mxu0 0.0
    %475 = vmatprep.subr.mxu0 0.0
    %476 = vmatpush1.xpose.msra.mxu0 0.0
    %477 = vmatprep.subr.mxu0 0.0
    %478 = vmatpush1.xpose.msra.mxu0 0.0
    %479 = vmatprep.subr.mxu0 0.0
    %480 = vmatpush1.xpose.msra.mxu0 0.0
    %481 = vmatprep.subr.mxu0 0.0
    %482 = vmatpush1.xpose.msra.mxu0 0.0
    %483 = vmatprep.subr.mxu0 0.0
    %484 = vmatpush1.xpose.msra.mxu0 0.0
    %485 = vmatprep.subr.mxu0 0.0
    %486 = vmatpush1.xpose.msra.mxu0 0.0
    %487 = vmatprep.subr.mxu0 0.0
    %488 = vmatpush1.xpose.msra.mxu0 0.0
    %489 = vmatprep.subr.mxu0 0.0
    %490 = vmatpush1.xpose.msra.mxu0 0.0
    %491 = vmatprep.subr.mxu0 0.0
    %492 = vmatpush1.xpose.msra.mxu0 0.0
    %493 = vmatprep.subr.mxu0 0.0
    %494 = vmatpush1.xpose.msra.mxu0 0.0
    %495 = vmatprep.subr.mxu0 0.0
    %496 = vmatpush1.xpose.msra.mxu0 0.0
    %497 = vmatprep.subr.mxu0 0.0
    %498 = vmatpush1.xpose.msra.mxu0 0.0
    %499 = vmatprep.subr.mxu0 0.0
    %500 = vmatpush1.xpose.msra.mxu0 0.0
    %501 = vmatprep.subr.mxu0 0.0
    %502 = vmatpush1.xpose.msra.mxu0 0.0
    %503 = vmatprep.subr.mxu0 0.0
    %504 = vmatpush1.xpose.msra.mxu0 0.0
    %505 = vmatprep.subr.mxu0 0.0
    %506 = vmatpush1.xpose.msra.mxu0 0.0
    %507 = vmatprep.subr.mxu0 0.0
    %508 = vmatpush1.xpose.msra.mxu0 0.0
    %509 = vmatprep.subr.mxu0 0.0
    %510 = vmatpush1.xpose.msra.mxu0 0.0
    %511 = vmatprep.subr.mxu0 0.0
    %512 = vmatpush1.xpose.msra.mxu0 0.0
    %513 = vmatprep.subr.mxu0 0.0
    %514 = vmatpush1.xpose.msra.mxu0 0.0
    %515 = vmatprep.subr.mxu0 0.0
    %516 = vmatpush1.xpose.msra.mxu0 0.0
    %517 = vmatprep.subr.mxu0 0.0
    %518 = vmatpush1.xpose.msra.mxu0 0.0
    %519 = vmatprep.subr.mxu0 0.0
    %520 = vmatpush1.xpose.msra.mxu0 0.0
    %521 = vmatprep.subr.mxu0 0.0
    %522 = vmatpush1.xpose.msra.mxu0 0.0
    %523 = vmatprep.subr.mxu0 0.0
    %524 = vmatpush1.xpose.msra.mxu0 0.0
    %525 = vmatprep.mubr.f32.mxu0 0.0
    %526 = vmatmul.mubr.f32.gmra.mrb[0].mxu0 %v456
    %v527 = vpop.f32.mrb[0].mxu0
    %v528 = vadd.f32 0.0, %v527
    %v529 = vpop.f32.mrb[0].mxu0
    %530 = vdwg.mxu0
    %v531 = vsel %vm378, %v452, -inf
    %532 = vmax.xlane.f32.xlu0 %v531
    %v533 = vpop.xlane.xlu0 %532
    %v534 = vsel %vm378, %v528, -inf
    %535 = vmax.xlane.f32.xlu0 %v534
    %v536 = vpop.xlane.xlu0 %535
    %v537 = vsub.f32 %v452, %v533
    %v538 = vsub.f32 %v528, %v536
    %v539 = vmul.f32 %v537, 1.442695
    %v540 = vpow.pop %v539
    %v541 = vmul.f32 %v538, 1.442695
    %v542 = vpow.pop %v541
    %v543 = vsel %vm378, %v540, 0.0
    %544 = vadd.xlane.f32.xlu0 %v543
    %v545 = vpop.xlane.xlu0 %544
    %v546 = vsel %vm378, %v542, 0.0
    %547 = vadd.xlane.f32.xlu0 %v546
    %v548 = vpop.xlane.xlu0 %547
    %v549 = vrcp.pop %v545
    %v550 = vrcp.pop %v548
    %v551 = vmul.f32 %v540, %v549
    %v552 = vmul.f32 %v542, %v550
    %v554 = vsel %vm378, %v551, 0
    %556 = vmatprep.subr.mxu0 0.0
    %557 = vmatpush1.msra.mxu0 %v366
    %558 = vmatprep.subr.mxu0 0.0
    %559 = vmatpush1.msra.mxu0 0.0
    %560 = vmatprep.subr.mxu0 0.0
    %561 = vmatpush1.msra.mxu0 0.0
    %562 = vmatprep.subr.mxu0 0.0
    %563 = vmatpush1.msra.mxu0 0.0
    %564 = vmatprep.subr.mxu0 0.0
    %565 = vmatpush1.msra.mxu0 0.0
    %566 = vmatprep.subr.mxu0 0.0
    %567 = vmatpush1.msra.mxu0 0.0
    %568 = vmatprep.subr.mxu0 0.0
    %569 = vmatpush1.msra.mxu0 0.0
    %570 = vmatprep.subr.mxu0 0.0
    %571 = vmatpush1.msra.mxu0 0.0
    %572 = vmatprep.subr.mxu0 0.0
    %573 = vmatpush1.msra.mxu0 0.0
    %574 = vmatprep.subr.mxu0 0.0
    %575 = vmatpush1.msra.mxu0 0.0
    %576 = vmatprep.subr.mxu0 0.0
    %577 = vmatpush1.msra.mxu0 0.0
    %578 = vmatprep.subr.mxu0 0.0
    %579 = vmatpush1.msra.mxu0 0.0
    %580 = vmatprep.subr.mxu0 0.0
    %581 = vmatpush1.msra.mxu0 0.0
    %582 = vmatprep.subr.mxu0 0.0
    %583 = vmatpush1.msra.mxu0 0.0
    %584 = vmatprep.subr.mxu0 0.0
    %585 = vmatpush1.msra.mxu0 0.0
    %586 = vmatprep.subr.mxu0 0.0
    %587 = vmatpush1.msra.mxu0 0.0
    %588 = vmatprep.subr.mxu0 0.0
    %589 = vmatpush1.msra.mxu0 0.0
    %590 = vmatprep.subr.mxu0 0.0
    %591 = vmatpush1.msra.mxu0 0.0
    %592 = vmatprep.subr.mxu0 0.0
    %593 = vmatpush1.msra.mxu0 0.0
    %594 = vmatprep.subr.mxu0 0.0
    %595 = vmatpush1.msra.mxu0 0.0
    %596 = vmatprep.subr.mxu0 0.0
    %597 = vmatpush1.msra.mxu0 0.0
    %598 = vmatprep.subr.mxu0 0.0
    %599 = vmatpush1.msra.mxu0 0.0
    %600 = vmatprep.subr.mxu0 0.0
    %601 = vmatpush1.msra.mxu0 0.0
    %602 = vmatprep.subr.mxu0 0.0
    %603 = vmatpush1.msra.mxu0 0.0
    %604 = vmatprep.subr.mxu0 0.0
    %605 = vmatpush1.msra.mxu0 0.0
    %606 = vmatprep.subr.mxu0 0.0
    %607 = vmatpush1.msra.mxu0 0.0
    %608 = vmatprep.subr.mxu0 0.0
    %609 = vmatpush1.msra.mxu0 0.0
    %610 = vmatprep.subr.mxu0 0.0
    %611 = vmatpush1.msra.mxu0 0.0
    %612 = vmatprep.subr.mxu0 0.0
    %613 = vmatpush1.msra.mxu0 0.0
    %614 = vmatprep.subr.mxu0 0.0
    %615 = vmatpush1.msra.mxu0 0.0
    %616 = vmatprep.subr.mxu0 0.0
    %617 = vmatpush1.msra.mxu0 0.0
    %618 = vmatprep.subr.mxu0 0.0
    %619 = vmatpush1.msra.mxu0 0.0
    %620 = vmatprep.mubr.f32.mxu0 0.0
    %621 = vmatmul.mubr.f32.gmra.mrb[0].mxu0 %v554
    %v622 = vpop.f32.mrb[0].mxu0
    %v623 = vadd.f32 0.0, %v622
    %v624 = vpop.f32.mrb[0].mxu0
    %625 = vdwg.mxu0
    %v627 = vsel %vm378, %v552, 0
    %629 = vmatprep.subr.mxu0 0.0
    %630 = vmatpush1.msra.mxu0 %v371
    %631 = vmatprep.subr.mxu0 0.0
    %632 = vmatpush1.msra.mxu0 0.0
    %633 = vmatprep.subr.mxu0 0.0
    %634 = vmatpush1.msra.mxu0 0.0
    %635 = vmatprep.subr.mxu0 0.0
    %636 = vmatpush1.msra.mxu0 0.0
    %637 = vmatprep.subr.mxu0 0.0
    %638 = vmatpush1.msra.mxu0 0.0
    %639 = vmatprep.subr.mxu0 0.0
    %640 = vmatpush1.msra.mxu0 0.0
    %641 = vmatprep.subr.mxu0 0.0
    %642 = vmatpush1.msra.mxu0 0.0
    %643 = vmatprep.subr.mxu0 0.0
    %644 = vmatpush1.msra.mxu0 0.0
    %645 = vmatprep.subr.mxu0 0.0
    %646 = vmatpush1.msra.mxu0 0.0
    %647 = vmatprep.subr.mxu0 0.0
    %648 = vmatpush1.msra.mxu0 0.0
    %649 = vmatprep.subr.mxu0 0.0
    %650 = vmatpush1.msra.mxu0 0.0
    %651 = vmatprep.subr.mxu0 0.0
    %652 = vmatpush1.msra.mxu0 0.0
    %653 = vmatprep.subr.mxu0 0.0
    %654 = vmatpush1.msra.mxu0 0.0
    %655 = vmatprep.subr.mxu0 0.0
    %656 = vmatpush1.msra.mxu0 0.0
    %657 = vmatprep.subr.mxu0 0.0
    %658 = vmatpush1.msra.mxu0 0.0
    %659 = vmatprep.subr.mxu0 0.0
    %660 = vmatpush1.msra.mxu0 0.0
    %661 = vmatprep.subr.mxu0 0.0
    %662 = vmatpush1.msra.mxu0 0.0
    %663 = vmatprep.subr.mxu0 0.0
    %664 = vmatpush1.msra.mxu0 0.0
    %665 = vmatprep.subr.mxu0 0.0
    %666 = vmatpush1.msra.mxu0 0.0
    %667 = vmatprep.subr.mxu0 0.0
    %668 = vmatpush1.msra.mxu0 0.0
    %669 = vmatprep.subr.mxu0 0.0
    %670 = vmatpush1.msra.mxu0 0.0
    %671 = vmatprep.subr.mxu0 0.0
    %672 = vmatpush1.msra.mxu0 0.0
    %673 = vmatprep.subr.mxu0 0.0
    %674 = vmatpush1.msra.mxu0 0.0
    %675 = vmatprep.subr.mxu0 0.0
    %676 = vmatpush1.msra.mxu0 0.0
    %677 = vmatprep.subr.mxu0 0.0
    %678 = vmatpush1.msra.mxu0 0.0
    %679 = vmatprep.subr.mxu0 0.0
    %680 = vmatpush1.msra.mxu0 0.0
    %681 = vmatprep.subr.mxu0 0.0
    %682 = vmatpush1.msra.mxu0 0.0
    %683 = vmatprep.subr.mxu0 0.0
    %684 = vmatpush1.msra.mxu0 0.0
    %685 = vmatprep.subr.mxu0 0.0
    %686 = vmatpush1.msra.mxu0 0.0
    %687 = vmatprep.subr.mxu0 0.0
    %688 = vmatpush1.msra.mxu0 0.0
    %689 = vmatprep.subr.mxu0 0.0
    %690 = vmatpush1.msra.mxu0 0.0
    %691 = vmatprep.subr.mxu0 0.0
    %692 = vmatpush1.msra.mxu0 0.0
    %693 = vmatprep.mubr.f32.mxu0 0.0
    %694 = vmatmul.mubr.f32.gmra.mrb[0].mxu0 %v627
    %v695 = vpop.f32.mrb[0].mxu0
    %v696 = vadd.f32 0.0, %v695
    %v697 = vpop.f32.mrb[0].mxu0
    %698 = vdwg.mxu0
    %699 = vrot.lane.b32.xlu0 %v204, 120
    %v700 = vpop.permute.xlu0 %699
    %701 = vrot.lane.b32.xlu0 %v285, 120
    %v702 = vpop.permute.xlu0 %701
    %v703 = vsel %vm378, %v700, 0
    %v705 = vsel %vm378, %v702, 0
    %707 = vmatprep.subr.mxu0 0.0
    %708 = vmatpush1.xpose.msra.mxu0 %v705
    %709 = vmatprep.subr.mxu0 0.0
    %710 = vmatpush1.xpose.msra.mxu0 0.0
    %711 = vmatprep.subr.mxu0 0.0
    %712 = vmatpush1.xpose.msra.mxu0 0.0
    %713 = vmatprep.subr.mxu0 0.0
    %714 = vmatpush1.xpose.msra.mxu0 0.0
    %715 = vmatprep.subr.mxu0 0.0
    %716 = vmatpush1.xpose.msra.mxu0 0.0
    %717 = vmatprep.subr.mxu0 0.0
    %718 = vmatpush1.xpose.msra.mxu0 0.0
    %719 = vmatprep.subr.mxu0 0.0
    %720 = vmatpush1.xpose.msra.mxu0 0.0
    %721 = vmatprep.subr.mxu0 0.0
    %722 = vmatpush1.xpose.msra.mxu0 0.0
    %723 = vmatprep.subr.mxu0 0.0
    %724 = vmatpush1.xpose.msra.mxu0 0.0
    %725 = vmatprep.subr.mxu0 0.0
    %726 = vmatpush1.xpose.msra.mxu0 0.0
    %727 = vmatprep.subr.mxu0 0.0
    %728 = vmatpush1.xpose.msra.mxu0 0.0
    %729 = vmatprep.subr.mxu0 0.0
    %730 = vmatpush1.xpose.msra.mxu0 0.0
    %731 = vmatprep.subr.mxu0 0.0
    %732 = vmatpush1.xpose.msra.mxu0 0.0
    %733 = vmatprep.subr.mxu0 0.0
    %734 = vmatpush1.xpose.msra.mxu0 0.0
    %735 = vmatprep.subr.mxu0 0.0
    %736 = vmatpush1.xpose.msra.mxu0 0.0
    %737 = vmatprep.subr.mxu0 0.0
    %738 = vmatpush1.xpose.msra.mxu0 0.0
    %739 = vmatprep.subr.mxu0 0.0
    %740 = vmatpush1.xpose.msra.mxu0 0.0
    %741 = vmatprep.subr.mxu0 0.0
    %742 = vmatpush1.xpose.msra.mxu0 0.0
    %743 = vmatprep.subr.mxu0 0.0
    %744 = vmatpush1.xpose.msra.mxu0 0.0
    %745 = vmatprep.subr.mxu0 0.0
    %746 = vmatpush1.xpose.msra.mxu0 0.0
    %747 = vmatprep.subr.mxu0 0.0
    %748 = vmatpush1.xpose.msra.mxu0 0.0
    %749 = vmatprep.subr.mxu0 0.0
    %750 = vmatpush1.xpose.msra.mxu0 0.0
    %751 = vmatprep.subr.mxu0 0.0
    %752 = vmatpush1.xpose.msra.mxu0 0.0
    %753 = vmatprep.subr.mxu0 0.0
    %754 = vmatpush1.xpose.msra.mxu0 0.0
    %755 = vmatprep.subr.mxu0 0.0
    %756 = vmatpush1.xpose.msra.mxu0 0.0
    %757 = vmatprep.subr.mxu0 0.0
    %758 = vmatpush1.xpose.msra.mxu0 0.0
    %759 = vmatprep.subr.mxu0 0.0
    %760 = vmatpush1.xpose.msra.mxu0 0.0
    %761 = vmatprep.subr.mxu0 0.0
    %762 = vmatpush1.xpose.msra.mxu0 0.0
    %763 = vmatprep.subr.mxu0 0.0
    %764 = vmatpush1.xpose.msra.mxu0 0.0
    %765 = vmatprep.subr.mxu0 0.0
    %766 = vmatpush1.xpose.msra.mxu0 0.0
    %767 = vmatprep.subr.mxu0 0.0
    %768 = vmatpush1.xpose.msra.mxu0 0.0
    %769 = vmatprep.subr.mxu0 0.0
    %770 = vmatpush1.xpose.msra.mxu0 0.0
    %771 = vmatprep.mubr.f32.mxu0 0.0
    %772 = vmatmul.mubr.f32.gmra.mrb[0].mxu0 %v703
    %v773 = vpop.f32.mrb[0].mxu0
    %v774 = vadd.f32 0.0, %v773
    %v775 = vpop.f32.mrb[0].mxu0
    %776 = vdwg.mxu0
    %777 = vrot.lane.b32.xlu0 %v209, 120
    %v778 = vpop.permute.xlu0 %777
    %779 = vrot.lane.b32.xlu0 %v290, 120
    %v780 = vpop.permute.xlu0 %779
    %v781 = vsel %vm378, %v778, 0
    %v783 = vsel %vm378, %v780, 0
    %785 = vmatprep.subr.mxu0 0.0
    %786 = vmatpush1.xpose.msra.mxu0 %v783
    %787 = vmatprep.subr.mxu0 0.0
    %788 = vmatpush1.xpose.msra.mxu0 0.0
    %789 = vmatprep.subr.mxu0 0.0
    %790 = vmatpush1.xpose.msra.mxu0 0.0
    %791 = vmatprep.subr.mxu0 0.0
    %792 = vmatpush1.xpose.msra.mxu0 0.0
    %793 = vmatprep.subr.mxu0 0.0
    %794 = vmatpush1.xpose.msra.mxu0 0.0
    %795 = vmatprep.subr.mxu0 0.0
    %796 = vmatpush1.xpose.msra.mxu0 0.0
    %797 = vmatprep.subr.mxu0 0.0
    %798 = vmatpush1.xpose.msra.mxu0 0.0
    %799 = vmatprep.subr.mxu0 0.0
    %800 = vmatpush1.xpose.msra.mxu0 0.0
    %801 = vmatprep.subr.mxu0 0.0
    %802 = vmatpush1.xpose.msra.mxu0 0.0
    %803 = vmatprep.subr.mxu0 0.0
    %804 = vmatpush1.xpose.msra.mxu0 0.0
    %805 = vmatprep.subr.mxu0 0.0
    %806 = vmatpush1.xpose.msra.mxu0 0.0
    %807 = vmatprep.subr.mxu0 0.0
    %808 = vmatpush1.xpose.msra.mxu0 0.0
    %809 = vmatprep.subr.mxu0 0.0
    %810 = vmatpush1.xpose.msra.mxu0 0.0
    %811 = vmatprep.subr.mxu0 0.0
    %812 = vmatpush1.xpose.msra.mxu0 0.0
    %813 = vmatprep.subr.mxu0 0.0
    %814 = vmatpush1.xpose.msra.mxu0 0.0
    %815 = vmatprep.subr.mxu0 0.0
    %816 = vmatpush1.xpose.msra.mxu0 0.0
    %817 = vmatprep.subr.mxu0 0.0
    %818 = vmatpush1.xpose.msra.mxu0 0.0
    %819 = vmatprep.subr.mxu0 0.0
    %820 = vmatpush1.xpose.msra.mxu0 0.0
    %821 = vmatprep.subr.mxu0 0.0
    %822 = vmatpush1.xpose.msra.mxu0 0.0
    %823 = vmatprep.subr.mxu0 0.0
    %824 = vmatpush1.xpose.msra.mxu0 0.0
    %825 = vmatprep.subr.mxu0 0.0
    %826 = vmatpush1.xpose.msra.mxu0 0.0
    %827 = vmatprep.subr.mxu0 0.0
    %828 = vmatpush1.xpose.msra.mxu0 0.0
    %829 = vmatprep.subr.mxu0 0.0
    %830 = vmatpush1.xpose.msra.mxu0 0.0
    %831 = vmatprep.subr.mxu0 0.0
    %832 = vmatpush1.xpose.msra.mxu0 0.0
    %833 = vmatprep.subr.mxu0 0.0
    %834 = vmatpush1.xpose.msra.mxu0 0.0
    %835 = vmatprep.subr.mxu0 0.0
    %836 = vmatpush1.xpose.msra.mxu0 0.0
    %837 = vmatprep.subr.mxu0 0.0
    %838 = vmatpush1.xpose.msra.mxu0 0.0
    %839 = vmatprep.subr.mxu0 0.0
    %840 = vmatpush1.xpose.msra.mxu0 0.0
    %841 = vmatprep.subr.mxu0 0.0
    %842 = vmatpush1.xpose.msra.mxu0 0.0
    %843 = vmatprep.subr.mxu0 0.0
    %844 = vmatpush1.xpose.msra.mxu0 0.0
    %845 = vmatprep.subr.mxu0 0.0
    %846 = vmatpush1.xpose.msra.mxu0 0.0
    %847 = vmatprep.subr.mxu0 0.0
    %848 = vmatpush1.xpose.msra.mxu0 0.0
    %849 = vmatprep.mubr.f32.mxu0 0.0
    %850 = vmatmul.mubr.f32.gmra.mrb[0].mxu0 %v781
    %v851 = vpop.f32.mrb[0].mxu0
    %v852 = vadd.f32 0.0, %v851
    %v853 = vpop.f32.mrb[0].mxu0
    %854 = vdwg.mxu0
    %v855 = vsel %vm378, %v774, -inf
    %856 = vmax.xlane.f32.xlu0 %v855
    %v857 = vpop.xlane.xlu0 %856
    %v858 = vsel %vm378, %v852, -inf
    %859 = vmax.xlane.f32.xlu0 %v858
    %v860 = vpop.xlane.xlu0 %859
    %v861 = vsub.f32 %v774, %v857
    %v862 = vsub.f32 %v852, %v860
    %v863 = vmul.f32 %v861, 1.442695
    %v864 = vpow.pop %v863
    %v865 = vmul.f32 %v862, 1.442695
    %v866 = vpow.pop %v865
    %v867 = vsel %vm378, %v864, 0.0
    %868 = vadd.xlane.f32.xlu0 %v867
    %v869 = vpop.xlane.xlu0 %868
    %v870 = vsel %vm378, %v866, 0.0
    %871 = vadd.xlane.f32.xlu0 %v870
    %v872 = vpop.xlane.xlu0 %871
    %v873 = vrcp.pop %v869
    %v874 = vrcp.pop %v872
    %v875 = vmul.f32 %v864, %v873
    %v876 = vmul.f32 %v866, %v874
    %878 = vrot.lane.b32.xlu0 %v366, 120
    %v879 = vpop.permute.xlu0 %878
    %v882 = vsel %vm378, %v875, 0
    %884 = vmatprep.subr.mxu0 0.0
    %885 = vmatpush1.msra.mxu0 %v879
    %886 = vmatprep.subr.mxu0 0.0
    %887 = vmatpush1.msra.mxu0 0.0
    %888 = vmatprep.subr.mxu0 0.0
    %889 = vmatpush1.msra.mxu0 0.0
    %890 = vmatprep.subr.mxu0 0.0
    %891 = vmatpush1.msra.mxu0 0.0
    %892 = vmatprep.subr.mxu0 0.0
    %893 = vmatpush1.msra.mxu0 0.0
    %894 = vmatprep.subr.mxu0 0.0
    %895 = vmatpush1.msra.mxu0 0.0
    %896 = vmatprep.subr.mxu0 0.0
    %897 = vmatpush1.msra.mxu0 0.0
    %898 = vmatprep.subr.mxu0 0.0
    %899 = vmatpush1.msra.mxu0 0.0
    %900 = vmatprep.subr.mxu0 0.0
    %901 = vmatpush1.msra.mxu0 0.0
    %902 = vmatprep.subr.mxu0 0.0
    %903 = vmatpush1.msra.mxu0 0.0
    %904 = vmatprep.subr.mxu0 0.0
    %905 = vmatpush1.msra.mxu0 0.0
    %906 = vmatprep.subr.mxu0 0.0
    %907 = vmatpush1.msra.mxu0 0.0
    %908 = vmatprep.subr.mxu0 0.0
    %909 = vmatpush1.msra.mxu0 0.0
    %910 = vmatprep.subr.mxu0 0.0
    %911 = vmatpush1.msra.mxu0 0.0
    %912 = vmatprep.subr.mxu0 0.0
    %913 = vmatpush1.msra.mxu0 0.0
    %914 = vmatprep.subr.mxu0 0.0
    %915 = vmatpush1.msra.mxu0 0.0
    %916 = vmatprep.subr.mxu0 0.0
    %917 = vmatpush1.msra.mxu0 0.0
    %918 = vmatprep.subr.mxu0 0.0
    %919 = vmatpush1.msra.mxu0 0.0
    %920 = vmatprep.subr.mxu0 0.0
    %921 = vmatpush1.msra.mxu0 0.0
    %922 = vmatprep.subr.mxu0 0.0
    %923 = vmatpush1.msra.mxu0 0.0
    %924 = vmatprep.subr.mxu0 0.0
    %925 = vmatpush1.msra.mxu0 0.0
    %926 = vmatprep.subr.mxu0 0.0
    %927 = vmatpush1.msra.mxu0 0.0
    %928 = vmatprep.subr.mxu0 0.0
    %929 = vmatpush1.msra.mxu0 0.0
    %930 = vmatprep.subr.mxu0 0.0
    %931 = vmatpush1.msra.mxu0 0.0
    %932 = vmatprep.subr.mxu0 0.0
    %933 = vmatpush1.msra.mxu0 0.0
    %934 = vmatprep.subr.mxu0 0.0
    %935 = vmatpush1.msra.mxu0 0.0
    %936 = vmatprep.subr.mxu0 0.0
    %937 = vmatpush1.msra.mxu0 0.0
    %938 = vmatprep.subr.mxu0 0.0
    %939 = vmatpush1.msra.mxu0 0.0
    %940 = vmatprep.subr.mxu0 0.0
    %941 = vmatpush1.msra.mxu0 0.0
    %942 = vmatprep.subr.mxu0 0.0
    %943 = vmatpush1.msra.mxu0 0.0
    %944 = vmatprep.subr.mxu0 0.0
    %945 = vmatpush1.msra.mxu0 0.0
    %946 = vmatprep.subr.mxu0 0.0
    %947 = vmatpush1.msra.mxu0 0.0
    %948 = vmatprep.mubr.f32.mxu0 0.0
    %949 = vmatmul.mubr.f32.gmra.mrb[0].mxu0 %v882
    %v950 = vpop.f32.mrb[0].mxu0
    %v951 = vadd.f32 0.0, %v950
    %v952 = vpop.f32.mrb[0].mxu0
    %953 = vdwg.mxu0
    %955 = vrot.lane.b32.xlu0 %v371, 120
    %v956 = vpop.permute.xlu0 %955
    %v959 = vsel %vm378, %v876, 0
    %961 = vmatprep.subr.mxu0 0.0
    %962 = vmatpush1.msra.mxu0 %v956
    %963 = vmatprep.subr.mxu0 0.0
    %964 = vmatpush1.msra.mxu0 0.0
    %965 = vmatprep.subr.mxu0 0.0
    %966 = vmatpush1.msra.mxu0 0.0
    %967 = vmatprep.subr.mxu0 0.0
    %968 = vmatpush1.msra.mxu0 0.0
    %969 = vmatprep.subr.mxu0 0.0
    %970 = vmatpush1.msra.mxu0 0.0
    %971 = vmatprep.subr.mxu0 0.0
    %972 = vmatpush1.msra.mxu0 0.0
    %973 = vmatprep.subr.mxu0 0.0
    %974 = vmatpush1.msra.mxu0 0.0
    %975 = vmatprep.subr.mxu0 0.0
    %976 = vmatpush1.msra.mxu0 0.0
    %977 = vmatprep.subr.mxu0 0.0
    %978 = vmatpush1.msra.mxu0 0.0
    %979 = vmatprep.subr.mxu0 0.0
    %980 = vmatpush1.msra.mxu0 0.0
    %981 = vmatprep.subr.mxu0 0.0
    %982 = vmatpush1.msra.mxu0 0.0
    %983 = vmatprep.subr.mxu0 0.0
    %984 = vmatpush1.msra.mxu0 0.0
    %985 = vmatprep.subr.mxu0 0.0
    %986 = vmatpush1.msra.mxu0 0.0
    %987 = vmatprep.subr.mxu0 0.0
    %988 = vmatpush1.msra.mxu0 0.0
    %989 = vmatprep.subr.mxu0 0.0
    %990 = vmatpush1.msra.mxu0 0.0
    %991 = vmatprep.subr.mxu0 0.0
    %992 = vmatpush1.msra.mxu0 0.0
    %993 = vmatprep.subr.mxu0 0.0
    %994 = vmatpush1.msra.mxu0 0.0
    %995 = vmatprep.subr.mxu0 0.0
    %996 = vmatpush1.msra.mxu0 0.0
    %997 = vmatprep.subr.mxu0 0.0
    %998 = vmatpush1.msra.mxu0 0.0
    %999 = vmatprep.subr.mxu0 0.0
    %1000 = vmatpush1.msra.mxu0 0.0
    %1001 = vmatprep.subr.mxu0 0.0
    %1002 = vmatpush1.msra.mxu0 0.0
    %1003 = vmatprep.subr.mxu0 0.0
    %1004 = vmatpush1.msra.mxu0 0.0
    %1005 = vmatprep.subr.mxu0 0.0
    %1006 = vmatpush1.msra.mxu0 0.0
    %1007 = vmatprep.subr.mxu0 0.0
    %1008 = vmatpush1.msra.mxu0 0.0
    %1009 = vmatprep.subr.mxu0 0.0
    %1010 = vmatpush1.msra.mxu0 0.0
    %1011 = vmatprep.subr.mxu0 0.0
    %1012 = vmatpush1.msra.mxu0 0.0
    %1013 = vmatprep.subr.mxu0 0.0
    %1014 = vmatpush1.msra.mxu0 0.0
    %1015 = vmatprep.subr.mxu0 0.0
    %1016 = vmatpush1.msra.mxu0 0.0
    %1017 = vmatprep.subr.mxu0 0.0
    %1018 = vmatpush1.msra.mxu0 0.0
    %1019 = vmatprep.subr.mxu0 0.0
    %1020 = vmatpush1.msra.mxu0 0.0
    %1021 = vmatprep.subr.mxu0 0.0
    %1022 = vmatpush1.msra.mxu0 0.0
    %1023 = vmatprep.subr.mxu0 0.0
    %1024 = vmatpush1.msra.mxu0 0.0
    %1025 = vmatprep.mubr.f32.mxu0 0.0
    %1026 = vmatmul.mubr.f32.gmra.mrb[0].mxu0 %v959
    %v1027 = vpop.f32.mrb[0].mxu0
    %v1028 = vadd.f32 0.0, %v1027
    %v1029 = vpop.f32.mrb[0].mxu0
    %1030 = vdwg.mxu0
    %v1032 = vsel %vm378, %v951, 0
    %v1035 = vsel %vm378, %v1028, 0
    %1037 = vmatprep.subr.mxu0 0.0
    %1038 = vmatpush1.msra.mxu0 %v375
    %1039 = vmatprep.subr.mxu0 0.0
    %1040 = vmatpush1.msra.mxu0 0.0
    %1041 = vmatprep.subr.mxu0 0.0
    %1042 = vmatpush1.msra.mxu0 0.0
    %1043 = vmatprep.subr.mxu0 0.0
    %1044 = vmatpush1.msra.mxu0 0.0
    %1045 = vmatprep.subr.mxu0 0.0
    %1046 = vmatpush1.msra.mxu0 0.0
    %1047 = vmatprep.subr.mxu0 0.0
    %1048 = vmatpush1.msra.mxu0 0.0
    %1049 = vmatprep.subr.mxu0 0.0
    %1050 = vmatpush1.msra.mxu0 0.0
    %1051 = vmatprep.subr.mxu0 0.0
    %1052 = vmatpush1.msra.mxu0 0.0
    %1053 = vmatprep.subr.mxu0 0.0
    %1054 = vmatpush1.msra.mxu0 0.0
    %1055 = vmatprep.subr.mxu0 0.0
    %1056 = vmatpush1.msra.mxu0 0.0
    %1057 = vmatprep.subr.mxu0 0.0
    %1058 = vmatpush1.msra.mxu0 0.0
    %1059 = vmatprep.subr.mxu0 0.0
    %1060 = vmatpush1.msra.mxu0 0.0
    %1061 = vmatprep.subr.mxu0 0.0
    %1062 = vmatpush1.msra.mxu0 0.0
    %1063 = vmatprep.subr.mxu0 0.0
    %1064 = vmatpush1.msra.mxu0 0.0
    %1065 = vmatprep.subr.mxu0 0.0
    %1066 = vmatpush1.msra.mxu0 0.0
    %1067 = vmatprep.subr.mxu0 0.0
    %1068 = vmatpush1.msra.mxu0 0.0
    %1069 = vmatprep.subr.mxu0 0.0
    %1070 = vmatpush1.msra.mxu0 0.0
    %1071 = vmatprep.subr.mxu0 0.0
    %1072 = vmatpush1.msra.mxu0 0.0
    %1073 = vmatprep.subr.mxu0 0.0
    %1074 = vmatpush1.msra.mxu0 0.0
    %1075 = vmatprep.subr.mxu0 0.0
    %1076 = vmatpush1.msra.mxu0 0.0
    %1077 = vmatprep.subr.mxu0 0.0
    %1078 = vmatpush1.msra.mxu0 0.0
    %1079 = vmatprep.subr.mxu0 0.0
    %1080 = vmatpush1.msra.mxu0 0.0
    %1081 = vmatprep.subr.mxu0 0.0
    %1082 = vmatpush1.msra.mxu0 0.0
    %1083 = vmatprep.subr.mxu0 0.0
    %1084 = vmatpush1.msra.mxu0 0.0
    %1085 = vmatprep.subr.mxu0 0.0
    %1086 = vmatpush1.msra.mxu0 0.0
    %1087 = vmatprep.subr.mxu0 0.0
    %1088 = vmatpush1.msra.mxu0 0.0
    %1089 = vmatprep.subr.mxu0 0.0
    %1090 = vmatpush1.msra.mxu0 0.0
    %1091 = vmatprep.subr.mxu0 0.0
    %1092 = vmatpush1.msra.mxu0 0.0
    %1093 = vmatprep.subr.mxu0 0.0
    %1094 = vmatpush1.msra.mxu0 0.0
    %1095 = vmatprep.subr.mxu0 0.0
    %1096 = vmatpush1.msra.mxu0 0.0
    %1097 = vmatprep.subr.mxu0 0.0
    %1098 = vmatpush1.msra.mxu0 0.0
    %1099 = vmatprep.subr.mxu0 0.0
    %1100 = vmatpush1.msra.mxu0 0.0
    %1101 = vmatprep.mubr.f32.mxu0 0.0
    %1102 = vmatmul.mubr.f32.gmra.mrb[0].mxu0 %v1032
    %v1103 = vpop.f32.mrb[0].mxu0
    %v1104 = vadd.f32 0.0, %v1103
    %v1105 = vpop.f32.mrb[0].mxu0
    %1106 = vmatprep.mubr.f32.mxu0 0.0
    %1107 = vmatmul.mubr.f32.gmra.mrb[0].mxu0 %v1035
    %v1108 = vpop.f32.mrb[0].mxu0
    %v1109 = vadd.f32 0.0, %v1108
    %v1110 = vpop.f32.mrb[0].mxu0
    %1111 = vdwg.mxu0
    %v1113 = vsel %vm378, %v623, 0
    %v1116 = vsel %vm378, %v696, 0
    %1118 = vmatprep.subr.mxu0 0.0
    %1119 = vmatpush1.msra.mxu0 %v374
    %1120 = vmatprep.subr.mxu0 0.0
    %1121 = vmatpush1.msra.mxu0 0.0
    %1122 = vmatprep.subr.mxu0 0.0
    %1123 = vmatpush1.msra.mxu0 0.0
    %1124 = vmatprep.subr.mxu0 0.0
    %1125 = vmatpush1.msra.mxu0 0.0
    %1126 = vmatprep.subr.mxu0 0.0
    %1127 = vmatpush1.msra.mxu0 0.0
    %1128 = vmatprep.subr.mxu0 0.0
    %1129 = vmatpush1.msra.mxu0 0.0
    %1130 = vmatprep.subr.mxu0 0.0
    %1131 = vmatpush1.msra.mxu0 0.0
    %1132 = vmatprep.subr.mxu0 0.0
    %1133 = vmatpush1.msra.mxu0 0.0
    %1134 = vmatprep.subr.mxu0 0.0
    %1135 = vmatpush1.msra.mxu0 0.0
    %1136 = vmatprep.subr.mxu0 0.0
    %1137 = vmatpush1.msra.mxu0 0.0
    %1138 = vmatprep.subr.mxu0 0.0
    %1139 = vmatpush1.msra.mxu0 0.0
    %1140 = vmatprep.subr.mxu0 0.0
    %1141 = vmatpush1.msra.mxu0 0.0
    %1142 = vmatprep.subr.mxu0 0.0
    %1143 = vmatpush1.msra.mxu0 0.0
    %1144 = vmatprep.subr.mxu0 0.0
    %1145 = vmatpush1.msra.mxu0 0.0
    %1146 = vmatprep.subr.mxu0 0.0
    %1147 = vmatpush1.msra.mxu0 0.0
    %1148 = vmatprep.subr.mxu0 0.0
    %1149 = vmatpush1.msra.mxu0 0.0
    %1150 = vmatprep.subr.mxu0 0.0
    %1151 = vmatpush1.msra.mxu0 0.0
    %1152 = vmatprep.subr.mxu0 0.0
    %1153 = vmatpush1.msra.mxu0 0.0
    %1154 = vmatprep.subr.mxu0 0.0
    %1155 = vmatpush1.msra.mxu0 0.0
    %1156 = vmatprep.subr.mxu0 0.0
    %1157 = vmatpush1.msra.mxu0 0.0
    %1158 = vmatprep.subr.mxu0 0.0
    %1159 = vmatpush1.msra.mxu0 0.0
    %1160 = vmatprep.subr.mxu0 0.0
    %1161 = vmatpush1.msra.mxu0 0.0
    %1162 = vmatprep.subr.mxu0 0.0
    %1163 = vmatpush1.msra.mxu0 0.0
    %1164 = vmatprep.subr.mxu0 0.0
    %1165 = vmatpush1.msra.mxu0 0.0
    %1166 = vmatprep.subr.mxu0 0.0
    %1167 = vmatpush1.msra.mxu0 0.0
    %1168 = vmatprep.subr.mxu0 0.0
    %1169 = vmatpush1.msra.mxu0 0.0
    %1170 = vmatprep.subr.mxu0 0.0
    %1171 = vmatpush1.msra.mxu0 0.0
    %1172 = vmatprep.subr.mxu0 0.0
    %1173 = vmatpush1.msra.mxu0 0.0
    %1174 = vmatprep.subr.mxu0 0.0
    %1175 = vmatpush1.msra.mxu0 0.0
    %1176 = vmatprep.subr.mxu0 0.0
    %1177 = vmatpush1.msra.mxu0 0.0
    %1178 = vmatprep.subr.mxu0 0.0
    %1179 = vmatpush1.msra.mxu0 0.0
    %1180 = vmatprep.subr.mxu0 0.0
    %1181 = vmatpush1.msra.mxu0 0.0
    %1182 = vmatprep.mubr.f32.mxu0 0.0
    %1183 = vmatmul.mubr.f32.gmra.mrb[0].mxu0 %v1113
    %v1184 = vpop.f32.mrb[0].mxu0
    %v1185 = vadd.f32 %v1104, %v1184
    %v1186 = vpop.f32.mrb[0].mxu0
    %1187 = vmatprep.mubr.f32.mxu0 0.0
    %1188 = vmatmul.mubr.f32.gmra.mrb[0].mxu0 %v1116
    %v1189 = vpop.f32.mrb[0].mxu0
    %v1190 = vadd.f32 %v1109, %v1189
    %v1191 = vpop.f32.mrb[0].mxu0
    %1192 = vdwg.mxu0
    %1193 = vrot.lane.b32.xlu0 %v204, 112
    %v1194 = vpop.permute.xlu0 %1193
    %1195 = vrot.lane.b32.xlu0 %v285, 112
    %v1196 = vpop.permute.xlu0 %1195
    %v1197 = vsel %vm378, %v1194, 0
    %v1199 = vsel %vm378, %v1196, 0
    %1201 = vmatprep.subr.mxu0 0.0
    %1202 = vmatpush1.xpose.msra.mxu0 %v1199
    %1203 = vmatprep.subr.mxu0 0.0
    %1204 = vmatpush1.xpose.msra.mxu0 0.0
    %1205 = vmatprep.subr.mxu0 0.0
    %1206 = vmatpush1.xpose.msra.mxu0 0.0
    %1207 = vmatprep.subr.mxu0 0.0
    %1208 = vmatpush1.xpose.msra.mxu0 0.0
    %1209 = vmatprep.subr.mxu0 0.0
    %1210 = vmatpush1.xpose.msra.mxu0 0.0
    %1211 = vmatprep.subr.mxu0 0.0
    %1212 = vmatpush1.xpose.msra.mxu0 0.0
    %1213 = vmatprep.subr.mxu0 0.0
    %1214 = vmatpush1.xpose.msra.mxu0 0.0
    %1215 = vmatprep.subr.mxu0 0.0
    %1216 = vmatpush1.xpose.msra.mxu0 0.0
    %1217 = vmatprep.subr.mxu0 0.0
    %1218 = vmatpush1.xpose.msra.mxu0 0.0
    %1219 = vmatprep.subr.mxu0 0.0
    %1220 = vmatpush1.xpose.msra.mxu0 0.0
    %1221 = vmatprep.subr.mxu0 0.0
    %1222 = vmatpush1.xpose.msra.mxu0 0.0
    %1223 = vmatprep.subr.mxu0 0.0
    %1224 = vmatpush1.xpose.msra.mxu0 0.0
    %1225 = vmatprep.subr.mxu0 0.0
    %1226 = vmatpush1.xpose.msra.mxu0 0.0
    %1227 = vmatprep.subr.mxu0 0.0
    %1228 = vmatpush1.xpose.msra.mxu0 0.0
    %1229 = vmatprep.subr.mxu0 0.0
    %1230 = vmatpush1.xpose.msra.mxu0 0.0
    %1231 = vmatprep.subr.mxu0 0.0
    %1232 = vmatpush1.xpose.msra.mxu0 0.0
    %1233 = vmatprep.subr.mxu0 0.0
    %1234 = vmatpush1.xpose.msra.mxu0 0.0
    %1235 = vmatprep.subr.mxu0 0.0
    %1236 = vmatpush1.xpose.msra.mxu0 0.0
    %1237 = vmatprep.subr.mxu0 0.0
    %1238 = vmatpush1.xpose.msra.mxu0 0.0
    %1239 = vmatprep.subr.mxu0 0.0
    %1240 = vmatpush1.xpose.msra.mxu0 0.0
    %1241 = vmatprep.subr.mxu0 0.0
    %1242 = vmatpush1.xpose.msra.mxu0 0.0
    %1243 = vmatprep.subr.mxu0 0.0
    %1244 = vmatpush1.xpose.msra.mxu0 0.0
    %1245 = vmatprep.subr.mxu0 0.0
    %1246 = vmatpush1.xpose.msra.mxu0 0.0
    %1247 = vmatprep.subr.mxu0 0.0
    %1248 = vmatpush1.xpose.msra.mxu0 0.0
    %1249 = vmatprep.subr.mxu0 0.0
    %1250 = vmatpush1.xpose.msra.mxu0 0.0
    %1251 = vmatprep.subr.mxu0 0.0
    %1252 = vmatpush1.xpose.msra.mxu0 0.0
    %1253 = vmatprep.subr.mxu0 0.0
    %1254 = vmatpush1.xpose.msra.mxu0 0.0
    %1255 = vmatprep.subr.mxu0 0.0
    %1256 = vmatpush1.xpose.msra.mxu0 0.0
    %1257 = vmatprep.subr.mxu0 0.0
    %1258 = vmatpush1.xpose.msra.mxu0 0.0
    %1259 = vmatprep.subr.mxu0 0.0
    %1260 = vmatpush1.xpose.msra.mxu0 0.0
    %1261 = vmatprep.subr.mxu0 0.0
    %1262 = vmatpush1.xpose.msra.mxu0 0.0
    %1263 = vmatprep.subr.mxu0 0.0
    %1264 = vmatpush1.xpose.msra.mxu0 0.0
    %1265 = vmatprep.mubr.f32.mxu0 0.0
    %1266 = vmatmul.mubr.f32.gmra.mrb[0].mxu0 %v1197
    %v1267 = vpop.f32.mrb[0].mxu0
    %v1268 = vadd.f32 0.0, %v1267
    %v1269 = vpop.f32.mrb[0].mxu0
    %1270 = vdwg.mxu0
    %1271 = vrot.lane.b32.xlu0 %v209, 112
    %v1272 = vpop.permute.xlu0 %1271
    %1273 = vrot.lane.b32.xlu0 %v290, 112
    %v1274 = vpop.permute.xlu0 %1273
    %v1275 = vsel %vm378, %v1272, 0
    %v1277 = vsel %vm378, %v1274, 0
    %1279 = vmatprep.subr.mxu0 0.0
    %1280 = vmatpush1.xpose.msra.mxu0 %v1277
    %1281 = vmatprep.subr.mxu0 0.0
    %1282 = vmatpush1.xpose.msra.mxu0 0.0
    %1283 = vmatprep.subr.mxu0 0.0
    %1284 = vmatpush1.xpose.msra.mxu0 0.0
    %1285 = vmatprep.subr.mxu0 0.0
    %1286 = vmatpush1.xpose.msra.mxu0 0.0
    %1287 = vmatprep.subr.mxu0 0.0
    %1288 = vmatpush1.xpose.msra.mxu0 0.0
    %1289 = vmatprep.subr.mxu0 0.0
    %1290 = vmatpush1.xpose.msra.mxu0 0.0
    %1291 = vmatprep.subr.mxu0 0.0
    %1292 = vmatpush1.xpose.msra.mxu0 0.0
    %1293 = vmatprep.subr.mxu0 0.0
    %1294 = vmatpush1.xpose.msra.mxu0 0.0
    %1295 = vmatprep.subr.mxu0 0.0
    %1296 = vmatpush1.xpose.msra.mxu0 0.0
    %1297 = vmatprep.subr.mxu0 0.0
    %1298 = vmatpush1.xpose.msra.mxu0 0.0
    %1299 = vmatprep.subr.mxu0 0.0
    %1300 = vmatpush1.xpose.msra.mxu0 0.0
    %1301 = vmatprep.subr.mxu0 0.0
    %1302 = vmatpush1.xpose.msra.mxu0 0.0
    %1303 = vmatprep.subr.mxu0 0.0
    %1304 = vmatpush1.xpose.msra.mxu0 0.0
    %1305 = vmatprep.subr.mxu0 0.0
    %1306 = vmatpush1.xpose.msra.mxu0 0.0
    %1307 = vmatprep.subr.mxu0 0.0
    %1308 = vmatpush1.xpose.msra.mxu0 0.0
    %1309 = vmatprep.subr.mxu0 0.0
    %1310 = vmatpush1.xpose.msra.mxu0 0.0
    %1311 = vmatprep.subr.mxu0 0.0
    %1312 = vmatpush1.xpose.msra.mxu0 0.0
    %1313 = vmatprep.subr.mxu0 0.0
    %1314 = vmatpush1.xpose.msra.mxu0 0.0
    %1315 = vmatprep.subr.mxu0 0.0
    %1316 = vmatpush1.xpose.msra.mxu0 0.0
    %1317 = vmatprep.subr.mxu0 0.0
    %1318 = vmatpush1.xpose.msra.mxu0 0.0
    %1319 = vmatprep.subr.mxu0 0.0
    %1320 = vmatpush1.xpose.msra.mxu0 0.0
    %1321 = vmatprep.subr.mxu0 0.0
    %1322 = vmatpush1.xpose.msra.mxu0 0.0
    %1323 = vmatprep.subr.mxu0 0.0
    %1324 = vmatpush1.xpose.msra.mxu0 0.0
    %1325 = vmatprep.subr.mxu0 0.0
    %1326 = vmatpush1.xpose.msra.mxu0 0.0
    %1327 = vmatprep.subr.mxu0 0.0
    %1328 = vmatpush1.xpose.msra.mxu0 0.0
    %1329 = vmatprep.subr.mxu0 0.0
    %1330 = vmatpush1.xpose.msra.mxu0 0.0
    %1331 = vmatprep.subr.mxu0 0.0
    %1332 = vmatpush1.xpose.msra.mxu0 0.0
    %1333 = vmatprep.subr.mxu0 0.0
    %1334 = vmatpush1.xpose.msra.mxu0 0.0
    %1335 = vmatprep.subr.mxu0 0.0
    %1336 = vmatpush1.xpose.msra.mxu0 0.0
    %1337 = vmatprep.subr.mxu0 0.0
    %1338 = vmatpush1.xpose.msra.mxu0 0.0
    %1339 = vmatprep.subr.mxu0 0.0
    %1340 = vmatpush1.xpose.msra.mxu0 0.0
    %1341 = vmatprep.subr.mxu0 0.0
    %1342 = vmatpush1.xpose.msra.mxu0 0.0
    %1343 = vmatprep.mubr.f32.mxu0 0.0
    %1344 = vmatmul.mubr.f32.gmra.mrb[0].mxu0 %v1275
    %v1345 = vpop.f32.mrb[0].mxu0
    %v1346 = vadd.f32 0.0, %v1345
    %v1347 = vpop.f32.mrb[0].mxu0
    %1348 = vdwg.mxu0
    %v1349 = vsel %vm378, %v1268, -inf
    %1350 = vmax.xlane.f32.xlu0 %v1349
    %v1351 = vpop.xlane.xlu0 %1350
    %v1352 = vsel %vm378, %v1346, -inf
    %1353 = vmax.xlane.f32.xlu0 %v1352
    %v1354 = vpop.xlane.xlu0 %1353
    %v1355 = vsub.f32 %v1268, %v1351
    %v1356 = vsub.f32 %v1346, %v1354
    %v1357 = vmul.f32 %v1355, 1.442695
    %v1358 = vpow.pop %v1357
    %v1359 = vmul.f32 %v1356, 1.442695
    %v1360 = vpow.pop %v1359
    %v1361 = vsel %vm378, %v1358, 0.0
    %1362 = vadd.xlane.f32.xlu0 %v1361
    %v1363 = vpop.xlane.xlu0 %1362
    %v1364 = vsel %vm378, %v1360, 0.0
    %1365 = vadd.xlane.f32.xlu0 %v1364
    %v1366 = vpop.xlane.xlu0 %1365
    %v1367 = vrcp.pop %v1363
    %v1368 = vrcp.pop %v1366
    %v1369 = vmul.f32 %v1358, %v1367
    %v1370 = vmul.f32 %v1360, %v1368
    %1371 = vrot.lane.b32.xlu0 %v366, 112
    %v1372 = vpop.permute.xlu0 %1371
    %v1375 = vsel %vm378, %v1369, 0
    %1377 = vmatprep.subr.mxu0 0.0
    %1378 = vmatpush1.msra.mxu0 %v1372
    %1379 = vmatprep.subr.mxu0 0.0
    %1380 = vmatpush1.msra.mxu0 0.0
    %1381 = vmatprep.subr.mxu0 0.0
    %1382 = vmatpush1.msra.mxu0 0.0
    %1383 = vmatprep.subr.mxu0 0.0
    %1384 = vmatpush1.msra.mxu0 0.0
    %1385 = vmatprep.subr.mxu0 0.0
    %1386 = vmatpush1.msra.mxu0 0.0
    %1387 = vmatprep.subr.mxu0 0.0
    %1388 = vmatpush1.msra.mxu0 0.0
    %1389 = vmatprep.subr.mxu0 0.0
    %1390 = vmatpush1.msra.mxu0 0.0
    %1391 = vmatprep.subr.mxu0 0.0
    %1392 = vmatpush1.msra.mxu0 0.0
    %1393 = vmatprep.subr.mxu0 0.0
    %1394 = vmatpush1.msra.mxu0 0.0
    %1395 = vmatprep.subr.mxu0 0.0
    %1396 = vmatpush1.msra.mxu0 0.0
    %1397 = vmatprep.subr.mxu0 0.0
    %1398 = vmatpush1.msra.mxu0 0.0
    %1399 = vmatprep.subr.mxu0 0.0
    %1400 = vmatpush1.msra.mxu0 0.0
    %1401 = vmatprep.subr.mxu0 0.0
    %1402 = vmatpush1.msra.mxu0 0.0
    %1403 = vmatprep.subr.mxu0 0.0
    %1404 = vmatpush1.msra.mxu0 0.0
    %1405 = vmatprep.subr.mxu0 0.0
    %1406 = vmatpush1.msra.mxu0 0.0
    %1407 = vmatprep.subr.mxu0 0.0
    %1408 = vmatpush1.msra.mxu0 0.0
    %1409 = vmatprep.subr.mxu0 0.0
    %1410 = vmatpush1.msra.mxu0 0.0
    %1411 = vmatprep.subr.mxu0 0.0
    %1412 = vmatpush1.msra.mxu0 0.0
    %1413 = vmatprep.subr.mxu0 0.0
    %1414 = vmatpush1.msra.mxu0 0.0
    %1415 = vmatprep.subr.mxu0 0.0
    %1416 = vmatpush1.msra.mxu0 0.0
    %1417 = vmatprep.subr.mxu0 0.0
    %1418 = vmatpush1.msra.mxu0 0.0
    %1419 = vmatprep.subr.mxu0 0.0
    %1420 = vmatpush1.msra.mxu0 0.0
    %1421 = vmatprep.subr.mxu0 0.0
    %1422 = vmatpush1.msra.mxu0 0.0
    %1423 = vmatprep.subr.mxu0 0.0
    %1424 = vmatpush1.msra.mxu0 0.0
    %1425 = vmatprep.subr.mxu0 0.0
    %1426 = vmatpush1.msra.mxu0 0.0
    %1427 = vmatprep.subr.mxu0 0.0
    %1428 = vmatpush1.msra.mxu0 0.0
    %1429 = vmatprep.subr.mxu0 0.0
    %1430 = vmatpush1.msra.mxu0 0.0
    %1431 = vmatprep.subr.mxu0 0.0
    %1432 = vmatpush1.msra.mxu0 0.0
    %1433 = vmatprep.subr.mxu0 0.0
    %1434 = vmatpush1.msra.mxu0 0.0
    %1435 = vmatprep.subr.mxu0 0.0
    %1436 = vmatpush1.msra.mxu0 0.0
    %1437 = vmatprep.subr.mxu0 0.0
    %1438 = vmatpush1.msra.mxu0 0.0
    %1439 = vmatprep.subr.mxu0 0.0
    %1440 = vmatpush1.msra.mxu0 0.0
    %1441 = vmatprep.mubr.f32.mxu0 0.0
    %1442 = vmatmul.mubr.f32.gmra.mrb[0].mxu0 %v1375
    %v1443 = vpop.f32.mrb[0].mxu0
    %v1444 = vadd.f32 0.0, %v1443
    %v1445 = vpop.f32.mrb[0].mxu0
    %1446 = vdwg.mxu0
    %1447 = vrot.lane.b32.xlu0 %v371, 112
    %v1448 = vpop.permute.xlu0 %1447
    %v1451 = vsel %vm378, %v1370, 0
    %1453 = vmatprep.subr.mxu0 0.0
    %1454 = vmatpush1.msra.mxu0 %v1448
    %1455 = vmatprep.subr.mxu0 0.0
    %1456 = vmatpush1.msra.mxu0 0.0
    %1457 = vmatprep.subr.mxu0 0.0
    %1458 = vmatpush1.msra.mxu0 0.0
    %1459 = vmatprep.subr.mxu0 0.0
    %1460 = vmatpush1.msra.mxu0 0.0
    %1461 = vmatprep.subr.mxu0 0.0
    %1462 = vmatpush1.msra.mxu0 0.0
    %1463 = vmatprep.subr.mxu0 0.0
    %1464 = vmatpush1.msra.mxu0 0.0
    %1465 = vmatprep.subr.mxu0 0.0
    %1466 = vmatpush1.msra.mxu0 0.0
    %1467 = vmatprep.subr.mxu0 0.0
    %1468 = vmatpush1.msra.mxu0 0.0
    %1469 = vmatprep.subr.mxu0 0.0
    %1470 = vmatpush1.msra.mxu0 0.0
    %1471 = vmatprep.subr.mxu0 0.0
    %1472 = vmatpush1.msra.mxu0 0.0
    %1473 = vmatprep.subr.mxu0 0.0
    %1474 = vmatpush1.msra.mxu0 0.0
    %1475 = vmatprep.subr.mxu0 0.0
    %1476 = vmatpush1.msra.mxu0 0.0
    %1477 = vmatprep.subr.mxu0 0.0
    %1478 = vmatpush1.msra.mxu0 0.0
    %1479 = vmatprep.subr.mxu0 0.0
    %1480 = vmatpush1.msra.mxu0 0.0
    %1481 = vmatprep.subr.mxu0 0.0
    %1482 = vmatpush1.msra.mxu0 0.0
    %1483 = vmatprep.subr.mxu0 0.0
    %1484 = vmatpush1.msra.mxu0 0.0
    %1485 = vmatprep.subr.mxu0 0.0
    %1486 = vmatpush1.msra.mxu0 0.0
    %1487 = vmatprep.subr.mxu0 0.0
    %1488 = vmatpush1.msra.mxu0 0.0
    %1489 = vmatprep.subr.mxu0 0.0
    %1490 = vmatpush1.msra.mxu0 0.0
    %1491 = vmatprep.subr.mxu0 0.0
    %1492 = vmatpush1.msra.mxu0 0.0
    %1493 = vmatprep.subr.mxu0 0.0
    %1494 = vmatpush1.msra.mxu0 0.0
    %1495 = vmatprep.subr.mxu0 0.0
    %1496 = vmatpush1.msra.mxu0 0.0
    %1497 = vmatprep.subr.mxu0 0.0
    %1498 = vmatpush1.msra.mxu0 0.0
    %1499 = vmatprep.subr.mxu0 0.0
    %1500 = vmatpush1.msra.mxu0 0.0
    %1501 = vmatprep.subr.mxu0 0.0
    %1502 = vmatpush1.msra.mxu0 0.0
    %1503 = vmatprep.subr.mxu0 0.0
    %1504 = vmatpush1.msra.mxu0 0.0
    %1505 = vmatprep.subr.mxu0 0.0
    %1506 = vmatpush1.msra.mxu0 0.0
    %1507 = vmatprep.subr.mxu0 0.0
    %1508 = vmatpush1.msra.mxu0 0.0
    %1509 = vmatprep.subr.mxu0 0.0
    %1510 = vmatpush1.msra.mxu0 0.0
    %1511 = vmatprep.subr.mxu0 0.0
    %1512 = vmatpush1.msra.mxu0 0.0
    %1513 = vmatprep.subr.mxu0 0.0
    %1514 = vmatpush1.msra.mxu0 0.0
    %1515 = vmatprep.subr.mxu0 0.0
    %1516 = vmatpush1.msra.mxu0 0.0
    %1517 = vmatprep.mubr.f32.mxu0 0.0
    %1518 = vmatmul.mubr.f32.gmra.mrb[0].mxu0 %v1451
    %v1519 = vpop.f32.mrb[0].mxu0
    %v1520 = vadd.f32 0.0, %v1519
    %v1521 = vpop.f32.mrb[0].mxu0
    %1522 = vdwg.mxu0
    %v1524 = vsel %vm378, %v1444, 0
    %v1527 = vsel %vm378, %v1520, 0
    %1529 = vmatprep.subr.mxu0 0.0
    %1530 = vmatpush1.msra.mxu0 %v376
    %1531 = vmatprep.subr.mxu0 0.0
    %1532 = vmatpush1.msra.mxu0 0.0
    %1533 = vmatprep.subr.mxu0 0.0
    %1534 = vmatpush1.msra.mxu0 0.0
    %1535 = vmatprep.subr.mxu0 0.0
    %1536 = vmatpush1.msra.mxu0 0.0
    %1537 = vmatprep.subr.mxu0 0.0
    %1538 = vmatpush1.msra.mxu0 0.0
    %1539 = vmatprep.subr.mxu0 0.0
    %1540 = vmatpush1.msra.mxu0 0.0
    %1541 = vmatprep.subr.mxu0 0.0
    %1542 = vmatpush1.msra.mxu0 0.0
    %1543 = vmatprep.subr.mxu0 0.0
    %1544 = vmatpush1.msra.mxu0 0.0
    %1545 = vmatprep.subr.mxu0 0.0
    %1546 = vmatpush1.msra.mxu0 0.0
    %1547 = vmatprep.subr.mxu0 0.0
    %1548 = vmatpush1.msra.mxu0 0.0
    %1549 = vmatprep.subr.mxu0 0.0
    %1550 = vmatpush1.msra.mxu0 0.0
    %1551 = vmatprep.subr.mxu0 0.0
    %1552 = vmatpush1.msra.mxu0 0.0
    %1553 = vmatprep.subr.mxu0 0.0
    %1554 = vmatpush1.msra.mxu0 0.0
    %1555 = vmatprep.subr.mxu0 0.0
    %1556 = vmatpush1.msra.mxu0 0.0
    %1557 = vmatprep.subr.mxu0 0.0
    %1558 = vmatpush1.msra.mxu0 0.0
    %1559 = vmatprep.subr.mxu0 0.0
    %1560 = vmatpush1.msra.mxu0 0.0
    %1561 = vmatprep.subr.mxu0 0.0
    %1562 = vmatpush1.msra.mxu0 0.0
    %1563 = vmatprep.subr.mxu0 0.0
    %1564 = vmatpush1.msra.mxu0 0.0
    %1565 = vmatprep.subr.mxu0 0.0
    %1566 = vmatpush1.msra.mxu0 0.0
    %1567 = vmatprep.subr.mxu0 0.0
    %1568 = vmatpush1.msra.mxu0 0.0
    %1569 = vmatprep.subr.mxu0 0.0
    %1570 = vmatpush1.msra.mxu0 0.0
    %1571 = vmatprep.subr.mxu0 0.0
    %1572 = vmatpush1.msra.mxu0 0.0
    %1573 = vmatprep.subr.mxu0 0.0
    %1574 = vmatpush1.msra.mxu0 0.0
    %1575 = vmatprep.subr.mxu0 0.0
    %1576 = vmatpush1.msra.mxu0 0.0
    %1577 = vmatprep.subr.mxu0 0.0
    %1578 = vmatpush1.msra.mxu0 0.0
    %1579 = vmatprep.subr.mxu0 0.0
    %1580 = vmatpush1.msra.mxu0 0.0
    %1581 = vmatprep.subr.mxu0 0.0
    %1582 = vmatpush1.msra.mxu0 0.0
    %1583 = vmatprep.subr.mxu0 0.0
    %1584 = vmatpush1.msra.mxu0 0.0
    %1585 = vmatprep.subr.mxu0 0.0
    %1586 = vmatpush1.msra.mxu0 0.0
    %1587 = vmatprep.subr.mxu0 0.0
    %1588 = vmatpush1.msra.mxu0 0.0
    %1589 = vmatprep.subr.mxu0 0.0
    %1590 = vmatpush1.msra.mxu0 0.0
    %1591 = vmatprep.subr.mxu0 0.0
    %1592 = vmatpush1.msra.mxu0 0.0
    %1593 = vmatprep.mubr.f32.mxu0 0.0
    %1594 = vmatmul.mubr.f32.gmra.mrb[0].mxu0 %v1524
    %v1595 = vpop.f32.mrb[0].mxu0
    %v1596 = vadd.f32 0.0, %v1595
    %v1597 = vpop.f32.mrb[0].mxu0
    %1598 = vmatprep.mubr.f32.mxu0 0.0
    %1599 = vmatmul.mubr.f32.gmra.mrb[0].mxu0 %v1527
    %v1600 = vpop.f32.mrb[0].mxu0
    %v1601 = vadd.f32 0.0, %v1600
    %v1602 = vpop.f32.mrb[0].mxu0
    %1603 = vdwg.mxu0
    %v1604 = vadd.f32 %v1185, %v1596
    %v1605 = vadd.f32 %v1190, %v1601
    %1606 = vrot.lane.b32.xlu0 %v204, 104
    %v1607 = vpop.permute.xlu0 %1606
    %1608 = vrot.lane.b32.xlu0 %v285, 104
    %v1609 = vpop.permute.xlu0 %1608
    %v1610 = vsel %vm378, %v1607, 0
    %v1612 = vsel %vm378, %v1609, 0
    %1614 = vmatprep.subr.mxu0 0.0
    %1615 = vmatpush1.xpose.msra.mxu0 %v1612
    %1616 = vmatprep.subr.mxu0 0.0
    %1617 = vmatpush1.xpose.msra.mxu0 0.0
    %1618 = vmatprep.subr.mxu0 0.0
    %1619 = vmatpush1.xpose.msra.mxu0 0.0
    %1620 = vmatprep.subr.mxu0 0.0
    %1621 = vmatpush1.xpose.msra.mxu0 0.0
    %1622 = vmatprep.subr.mxu0 0.0
    %1623 = vmatpush1.xpose.msra.mxu0 0.0
    %1624 = vmatprep.subr.mxu0 0.0
    %1625 = vmatpush1.xpose.msra.mxu0 0.0
    %1626 = vmatprep.subr.mxu0 0.0
    %1627 = vmatpush1.xpose.msra.mxu0 0.0
    %1628 = vmatprep.subr.mxu0 0.0
    %1629 = vmatpush1.xpose.msra.mxu0 0.0
    %1630 = vmatprep.subr.mxu0 0.0
    %1631 = vmatpush1.xpose.msra.mxu0 0.0
    %1632 = vmatprep.subr.mxu0 0.0
    %1633 = vmatpush1.xpose.msra.mxu0 0.0
    %1634 = vmatprep.subr.mxu0 0.0
    %1635 = vmatpush1.xpose.msra.mxu0 0.0
    %1636 = vmatprep.subr.mxu0 0.0
    %1637 = vmatpush1.xpose.msra.mxu0 0.0
    %1638 = vmatprep.subr.mxu0 0.0
    %1639 = vmatpush1.xpose.msra.mxu0 0.0
    %1640 = vmatprep.subr.mxu0 0.0
    %1641 = vmatpush1.xpose.msra.mxu0 0.0
    %1642 = vmatprep.subr.mxu0 0.0
    %1643 = vmatpush1.xpose.msra.mxu0 0.0
    %1644 = vmatprep.subr.mxu0 0.0
    %1645 = vmatpush1.xpose.msra.mxu0 0.0
    %1646 = vmatprep.subr.mxu0 0.0
    %1647 = vmatpush1.xpose.msra.mxu0 0.0
    %1648 = vmatprep.subr.mxu0 0.0
    %1649 = vmatpush1.xpose.msra.mxu0 0.0
    %1650 = vmatprep.subr.mxu0 0.0
    %1651 = vmatpush1.xpose.msra.mxu0 0.0
    %1652 = vmatprep.subr.mxu0 0.0
    %1653 = vmatpush1.xpose.msra.mxu0 0.0
    %1654 = vmatprep.subr.mxu0 0.0
    %1655 = vmatpush1.xpose.msra.mxu0 0.0
    %1656 = vmatprep.subr.mxu0 0.0
    %1657 = vmatpush1.xpose.msra.mxu0 0.0
    %1658 = vmatprep.subr.mxu0 0.0
    %1659 = vmatpush1.xpose.msra.mxu0 0.0
    %1660 = vmatprep.subr.mxu0 0.0
    %1661 = vmatpush1.xpose.msra.mxu0 0.0
    %1662 = vmatprep.subr.mxu0 0.0
    %1663 = vmatpush1.xpose.msra.mxu0 0.0
    %1664 = vmatprep.subr.mxu0 0.0
    %1665 = vmatpush1.xpose.msra.mxu0 0.0
    %1666 = vmatprep.subr.mxu0 0.0
    %1667 = vmatpush1.xpose.msra.mxu0 0.0
    %1668 = vmatprep.subr.mxu0 0.0
    %1669 = vmatpush1.xpose.msra.mxu0 0.0
    %1670 = vmatprep.subr.mxu0 0.0
    %1671 = vmatpush1.xpose.msra.mxu0 0.0
    %1672 = vmatprep.subr.mxu0 0.0
    %1673 = vmatpush1.xpose.msra.mxu0 0.0
    %1674 = vmatprep.subr.mxu0 0.0
    %1675 = vmatpush1.xpose.msra.mxu0 0.0
    %1676 = vmatprep.subr.mxu0 0.0
    %1677 = vmatpush1.xpose.msra.mxu0 0.0
    %1678 = vmatprep.mubr.f32.mxu0 0.0
    %1679 = vmatmul.mubr.f32.gmra.mrb[0].mxu0 %v1610
    %v1680 = vpop.f32.mrb[0].mxu0
    %v1681 = vadd.f32 0.0, %v1680
    %v1682 = vpop.f32.mrb[0].mxu0
    %1683 = vdwg.mxu0
    %1684 = vrot.lane.b32.xlu0 %v209, 104
    %v1685 = vpop.permute.xlu0 %1684
    %1686 = vrot.lane.b32.xlu0 %v290, 104
    %v1687 = vpop.permute.xlu0 %1686
    %v1688 = vsel %vm378, %v1685, 0
    %v1690 = vsel %vm378, %v1687, 0
    %1692 = vmatprep.subr.mxu0 0.0
    %1693 = vmatpush1.xpose.msra.mxu0 %v1690
    %1694 = vmatprep.subr.mxu0 0.0
    %1695 = vmatpush1.xpose.msra.mxu0 0.0
    %1696 = vmatprep.subr.mxu0 0.0
    %1697 = vmatpush1.xpose.msra.mxu0 0.0
    %1698 = vmatprep.subr.mxu0 0.0
    %1699 = vmatpush1.xpose.msra.mxu0 0.0
    %1700 = vmatprep.subr.mxu0 0.0
    %1701 = vmatpush1.xpose.msra.mxu0 0.0
    %1702 = vmatprep.subr.mxu0 0.0
    %1703 = vmatpush1.xpose.msra.mxu0 0.0
    %1704 = vmatprep.subr.mxu0 0.0
    %1705 = vmatpush1.xpose.msra.mxu0 0.0
    %1706 = vmatprep.subr.mxu0 0.0
    %1707 = vmatpush1.xpose.msra.mxu0 0.0
    %1708 = vmatprep.subr.mxu0 0.0
    %1709 = vmatpush1.xpose.msra.mxu0 0.0
    %1710 = vmatprep.subr.mxu0 0.0
    %1711 = vmatpush1.xpose.msra.mxu0 0.0
    %1712 = vmatprep.subr.mxu0 0.0
    %1713 = vmatpush1.xpose.msra.mxu0 0.0
    %1714 = vmatprep.subr.mxu0 0.0
    %1715 = vmatpush1.xpose.msra.mxu0 0.0
    %1716 = vmatprep.subr.mxu0 0.0
    %1717 = vmatpush1.xpose.msra.mxu0 0.0
    %1718 = vmatprep.subr.mxu0 0.0
    %1719 = vmatpush1.xpose.msra.mxu0 0.0
    %1720 = vmatprep.subr.mxu0 0.0
    %1721 = vmatpush1.xpose.msra.mxu0 0.0
    %1722 = vmatprep.subr.mxu0 0.0
    %1723 = vmatpush1.xpose.msra.mxu0 0.0
    %1724 = vmatprep.subr.mxu0 0.0
    %1725 = vmatpush1.xpose.msra.mxu0 0.0
    %1726 = vmatprep.subr.mxu0 0.0
    %1727 = vmatpush1.xpose.msra.mxu0 0.0
    %1728 = vmatprep.subr.mxu0 0.0
    %1729 = vmatpush1.xpose.msra.mxu0 0.0
    %1730 = vmatprep.subr.mxu0 0.0
    %1731 = vmatpush1.xpose.msra.mxu0 0.0
    %1732 = vmatprep.subr.mxu0 0.0
    %1733 = vmatpush1.xpose.msra.mxu0 0.0
    %1734 = vmatprep.subr.mxu0 0.0
    %1735 = vmatpush1.xpose.msra.mxu0 0.0
    %1736 = vmatprep.subr.mxu0 0.0
    %1737 = vmatpush1.xpose.msra.mxu0 0.0
    %1738 = vmatprep.subr.mxu0 0.0
    %1739 = vmatpush1.xpose.msra.mxu0 0.0
    %1740 = vmatprep.subr.mxu0 0.0
    %1741 = vmatpush1.xpose.msra.mxu0 0.0
    %1742 = vmatprep.subr.mxu0 0.0
    %1743 = vmatpush1.xpose.msra.mxu0 0.0
    %1744 = vmatprep.subr.mxu0 0.0
    %1745 = vmatpush1.xpose.msra.mxu0 0.0
    %1746 = vmatprep.subr.mxu0 0.0
    %1747 = vmatpush1.xpose.msra.mxu0 0.0
    %1748 = vmatprep.subr.mxu0 0.0
    %1749 = vmatpush1.xpose.msra.mxu0 0.0
    %1750 = vmatprep.subr.mxu0 0.0
    %1751 = vmatpush1.xpose.msra.mxu0 0.0
    %1752 = vmatprep.subr.mxu0 0.0
    %1753 = vmatpush1.xpose.msra.mxu0 0.0
    %1754 = vmatprep.subr.mxu0 0.0
    %1755 = vmatpush1.xpose.msra.mxu0 0.0
    %1756 = vmatprep.mubr.f32.mxu0 0.0
    %1757 = vmatmul.mubr.f32.gmra.mrb[0].mxu0 %v1688
    %v1758 = vpop.f32.mrb[0].mxu0
    %v1759 = vadd.f32 0.0, %v1758
    %v1760 = vpop.f32.mrb[0].mxu0
    %1761 = vdwg.mxu0
    %v1762 = vsel %vm378, %v1681, -inf
    %1763 = vmax.xlane.f32.xlu0 %v1762
    %v1764 = vpop.xlane.xlu0 %1763
    %v1765 = vsel %vm378, %v1759, -inf
    %1766 = vmax.xlane.f32.xlu0 %v1765
    %v1767 = vpop.xlane.xlu0 %1766
    %v1768 = vsub.f32 %v1681, %v1764
    %v1769 = vsub.f32 %v1759, %v1767
    %v1770 = vmul.f32 %v1768, 1.442695
    %v1771 = vpow.pop %v1770
    %v1772 = vmul.f32 %v1769, 1.442695
    %v1773 = vpow.pop %v1772
    %v1774 = vsel %vm378, %v1771, 0.0
    %1775 = vadd.xlane.f32.xlu0 %v1774
    %v1776 = vpop.xlane.xlu0 %1775
    %v1777 = vsel %vm378, %v1773, 0.0
    %1778 = vadd.xlane.f32.xlu0 %v1777
    %v1779 = vpop.xlane.xlu0 %1778
    %v1780 = vrcp.pop %v1776
    %v1781 = vrcp.pop %v1779
    %v1782 = vmul.f32 %v1771, %v1780
    %v1783 = vmul.f32 %v1773, %v1781
    %1784 = vrot.lane.b32.xlu0 %v366, 104
    %v1785 = vpop.permute.xlu0 %1784
    %v1788 = vsel %vm378, %v1782, 0
    %1790 = vmatprep.subr.mxu0 0.0
    %1791 = vmatpush1.msra.mxu0 %v1785
    %1792 = vmatprep.subr.mxu0 0.0
    %1793 = vmatpush1.msra.mxu0 0.0
    %1794 = vmatprep.subr.mxu0 0.0
    %1795 = vmatpush1.msra.mxu0 0.0
    %1796 = vmatprep.subr.mxu0 0.0
    %1797 = vmatpush1.msra.mxu0 0.0
    %1798 = vmatprep.subr.mxu0 0.0
    %1799 = vmatpush1.msra.mxu0 0.0
    %1800 = vmatprep.subr.mxu0 0.0
    %1801 = vmatpush1.msra.mxu0 0.0
    %1802 = vmatprep.subr.mxu0 0.0
    %1803 = vmatpush1.msra.mxu0 0.0
    %1804 = vmatprep.subr.mxu0 0.0
    %1805 = vmatpush1.msra.mxu0 0.0
    %1806 = vmatprep.subr.mxu0 0.0
    %1807 = vmatpush1.msra.mxu0 0.0
    %1808 = vmatprep.subr.mxu0 0.0
    %1809 = vmatpush1.msra.mxu0 0.0
    %1810 = vmatprep.subr.mxu0 0.0
    %1811 = vmatpush1.msra.mxu0 0.0
    %1812 = vmatprep.subr.mxu0 0.0
    %1813 = vmatpush1.msra.mxu0 0.0
    %1814 = vmatprep.subr.mxu0 0.0
    %1815 = vmatpush1.msra.mxu0 0.0
    %1816 = vmatprep.subr.mxu0 0.0
    %1817 = vmatpush1.msra.mxu0 0.0
    %1818 = vmatprep.subr.mxu0 0.0
    %1819 = vmatpush1.msra.mxu0 0.0
    %1820 = vmatprep.subr.mxu0 0.0
    %1821 = vmatpush1.msra.mxu0 0.0
    %1822 = vmatprep.subr.mxu0 0.0
    %1823 = vmatpush1.msra.mxu0 0.0
    %1824 = vmatprep.subr.mxu0 0.0
    %1825 = vmatpush1.msra.mxu0 0.0
    %1826 = vmatprep.subr.mxu0 0.0
    %1827 = vmatpush1.msra.mxu0 0.0
    %1828 = vmatprep.subr.mxu0 0.0
    %1829 = vmatpush1.msra.mxu0 0.0
    %1830 = vmatprep.subr.mxu0 0.0
    %1831 = vmatpush1.msra.mxu0 0.0
    %1832 = vmatprep.subr.mxu0 0.0
    %1833 = vmatpush1.msra.mxu0 0.0
    %1834 = vmatprep.subr.mxu0 0.0
    %1835 = vmatpush1.msra.mxu0 0.0
    %1836 = vmatprep.subr.mxu0 0.0
    %1837 = vmatpush1.msra.mxu0 0.0
    %1838 = vmatprep.subr.mxu0 0.0
    %1839 = vmatpush1.msra.mxu0 0.0
    %1840 = vmatprep.subr.mxu0 0.0
    %1841 = vmatpush1.msra.mxu0 0.0
    %1842 = vmatprep.subr.mxu0 0.0
    %1843 = vmatpush1.msra.mxu0 0.0
    %1844 = vmatprep.subr.mxu0 0.0
    %1845 = vmatpush1.msra.mxu0 0.0
    %1846 = vmatprep.subr.mxu0 0.0
    %1847 = vmatpush1.msra.mxu0 0.0
    %1848 = vmatprep.subr.mxu0 0.0
    %1849 = vmatpush1.msra.mxu0 0.0
    %1850 = vmatprep.subr.mxu0 0.0
    %1851 = vmatpush1.msra.mxu0 0.0
    %1852 = vmatprep.subr.mxu0 0.0
    %1853 = vmatpush1.msra.mxu0 0.0
    %1854 = vmatprep.mubr.f32.mxu0 0.0
    %1855 = vmatmul.mubr.f32.gmra.mrb[0].mxu0 %v1788
    %v1856 = vpop.f32.mrb[0].mxu0
    %v1857 = vadd.f32 0.0, %v1856
    %v1858 = vpop.f32.mrb[0].mxu0
    %1859 = vdwg.mxu0
    %1860 = vrot.lane.b32.xlu0 %v371, 104
    %v1861 = vpop.permute.xlu0 %1860
    %v1864 = vsel %vm378, %v1783, 0
    %1866 = vmatprep.subr.mxu0 0.0
    %1867 = vmatpush1.msra.mxu0 %v1861
    %1868 = vmatprep.subr.mxu0 0.0
    %1869 = vmatpush1.msra.mxu0 0.0
    %1870 = vmatprep.subr.mxu0 0.0
    %1871 = vmatpush1.msra.mxu0 0.0
    %1872 = vmatprep.subr.mxu0 0.0
    %1873 = vmatpush1.msra.mxu0 0.0
    %1874 = vmatprep.subr.mxu0 0.0
    %1875 = vmatpush1.msra.mxu0 0.0
    %1876 = vmatprep.subr.mxu0 0.0
    %1877 = vmatpush1.msra.mxu0 0.0
    %1878 = vmatprep.subr.mxu0 0.0
    %1879 = vmatpush1.msra.mxu0 0.0
    %1880 = vmatprep.subr.mxu0 0.0
    %1881 = vmatpush1.msra.mxu0 0.0
    %1882 = vmatprep.subr.mxu0 0.0
    %1883 = vmatpush1.msra.mxu0 0.0
    %1884 = vmatprep.subr.mxu0 0.0
    %1885 = vmatpush1.msra.mxu0 0.0
    %1886 = vmatprep.subr.mxu0 0.0
    %1887 = vmatpush1.msra.mxu0 0.0
    %1888 = vmatprep.subr.mxu0 0.0
    %1889 = vmatpush1.msra.mxu0 0.0
    %1890 = vmatprep.subr.mxu0 0.0
    %1891 = vmatpush1.msra.mxu0 0.0
    %1892 = vmatprep.subr.mxu0 0.0
    %1893 = vmatpush1.msra.mxu0 0.0
    %1894 = vmatprep.subr.mxu0 0.0
    %1895 = vmatpush1.msra.mxu0 0.0
    %1896 = vmatprep.subr.mxu0 0.0
    %1897 = vmatpush1.msra.mxu0 0.0
    %1898 = vmatprep.subr.mxu0 0.0
    %1899 = vmatpush1.msra.mxu0 0.0
    %1900 = vmatprep.subr.mxu0 0.0
    %1901 = vmatpush1.msra.mxu0 0.0
    %1902 = vmatprep.subr.mxu0 0.0
    %1903 = vmatpush1.msra.mxu0 0.0
    %1904 = vmatprep.subr.mxu0 0.0
    %1905 = vmatpush1.msra.mxu0 0.0
    %1906 = vmatprep.subr.mxu0 0.0
    %1907 = vmatpush1.msra.mxu0 0.0
    %1908 = vmatprep.subr.mxu0 0.0
    %1909 = vmatpush1.msra.mxu0 0.0
    %1910 = vmatprep.subr.mxu0 0.0
    %1911 = vmatpush1.msra.mxu0 0.0
    %1912 = vmatprep.subr.mxu0 0.0
    %1913 = vmatpush1.msra.mxu0 0.0
    %1914 = vmatprep.subr.mxu0 0.0
    %1915 = vmatpush1.msra.mxu0 0.0
    %1916 = vmatprep.subr.mxu0 0.0
    %1917 = vmatpush1.msra.mxu0 0.0
    %1918 = vmatprep.subr.mxu0 0.0
    %1919 = vmatpush1.msra.mxu0 0.0
    %1920 = vmatprep.subr.mxu0 0.0
    %1921 = vmatpush1.msra.mxu0 0.0
    %1922 = vmatprep.subr.mxu0 0.0
    %1923 = vmatpush1.msra.mxu0 0.0
    %1924 = vmatprep.subr.mxu0 0.0
    %1925 = vmatpush1.msra.mxu0 0.0
    %1926 = vmatprep.subr.mxu0 0.0
    %1927 = vmatpush1.msra.mxu0 0.0
    %1928 = vmatprep.subr.mxu0 0.0
    %1929 = vmatpush1.msra.mxu0 0.0
    %1930 = vmatprep.mubr.f32.mxu0 0.0
    %1931 = vmatmul.mubr.f32.gmra.mrb[0].mxu0 %v1864
    %v1932 = vpop.f32.mrb[0].mxu0
    %v1933 = vadd.f32 0.0, %v1932
    %v1934 = vpop.f32.mrb[0].mxu0
    %1935 = vdwg.mxu0
    %v1937 = vsel %vm378, %v1857, 0
    %v1940 = vsel %vm378, %v1933, 0
    %1942 = vmatprep.subr.mxu0 0.0
    %1943 = vmatpush1.msra.mxu0 %v377
    %1944 = vmatprep.subr.mxu0 0.0
    %1945 = vmatpush1.msra.mxu0 0.0
    %1946 = vmatprep.subr.mxu0 0.0
    %1947 = vmatpush1.msra.mxu0 0.0
    %1948 = vmatprep.subr.mxu0 0.0
    %1949 = vmatpush1.msra.mxu0 0.0
    %1950 = vmatprep.subr.mxu0 0.0
    %1951 = vmatpush1.msra.mxu0 0.0
    %1952 = vmatprep.subr.mxu0 0.0
    %1953 = vmatpush1.msra.mxu0 0.0
    %1954 = vmatprep.subr.mxu0 0.0
    %1955 = vmatpush1.msra.mxu0 0.0
    %1956 = vmatprep.subr.mxu0 0.0
    %1957 = vmatpush1.msra.mxu0 0.0
    %1958 = vmatprep.subr.mxu0 0.0
    %1959 = vmatpush1.msra.mxu0 0.0
    %1960 = vmatprep.subr.mxu0 0.0
    %1961 = vmatpush1.msra.mxu0 0.0
    %1962 = vmatprep.subr.mxu0 0.0
    %1963 = vmatpush1.msra.mxu0 0.0
    %1964 = vmatprep.subr.mxu0 0.0
    %1965 = vmatpush1.msra.mxu0 0.0
    %1966 = vmatprep.subr.mxu0 0.0
    %1967 = vmatpush1.msra.mxu0 0.0
    %1968 = vmatprep.subr.mxu0 0.0
    %1969 = vmatpush1.msra.mxu0 0.0
    %1970 = vmatprep.subr.mxu0 0.0
    %1971 = vmatpush1.msra.mxu0 0.0
    %1972 = vmatprep.subr.mxu0 0.0
    %1973 = vmatpush1.msra.mxu0 0.0
    %1974 = vmatprep.subr.mxu0 0.0
    %1975 = vmatpush1.msra.mxu0 0.0
    %1976 = vmatprep.subr.mxu0 0.0
    %1977 = vmatpush1.msra.mxu0 0.0
    %1978 = vmatprep.subr.mxu0 0.0
    %1979 = vmatpush1.msra.mxu0 0.0
    %1980 = vmatprep.subr.mxu0 0.0
    %1981 = vmatpush1.msra.mxu0 0.0
    %1982 = vmatprep.subr.mxu0 0.0
    %1983 = vmatpush1.msra.mxu0 0.0
    %1984 = vmatprep.subr.mxu0 0.0
    %1985 = vmatpush1.msra.mxu0 0.0
    %1986 = vmatprep.subr.mxu0 0.0
    %1987 = vmatpush1.msra.mxu0 0.0
    %1988 = vmatprep.subr.mxu0 0.0
    %1989 = vmatpush1.msra.mxu0 0.0
    %1990 = vmatprep.subr.mxu0 0.0
    %1991 = vmatpush1.msra.mxu0 0.0
    %1992 = vmatprep.subr.mxu0 0.0
    %1993 = vmatpush1.msra.mxu0 0.0
    %1994 = vmatprep.subr.mxu0 0.0
    %1995 = vmatpush1.msra.mxu0 0.0
    %1996 = vmatprep.subr.mxu0 0.0
    %1997 = vmatpush1.msra.mxu0 0.0
    %1998 = vmatprep.subr.mxu0 0.0
    %1999 = vmatpush1.msra.mxu0 0.0
    %2000 = vmatprep.subr.mxu0 0.0
    %2001 = vmatpush1.msra.mxu0 0.0
    %2002 = vmatprep.subr.mxu0 0.0
    %2003 = vmatpush1.msra.mxu0 0.0
    %2004 = vmatprep.subr.mxu0 0.0
    %2005 = vmatpush1.msra.mxu0 0.0
    %2006 = vmatprep.mubr.f32.mxu0 0.0
    %2007 = vmatmul.mubr.f32.gmra.mrb[0].mxu0 %v1937
    %v2008 = vpop.f32.mrb[0].mxu0
    %v2009 = vadd.f32 0.0, %v2008
    %v2010 = vpop.f32.mrb[0].mxu0
    %2011 = vmatprep.mubr.f32.mxu0 0.0
    %2012 = vmatmul.mubr.f32.gmra.mrb[0].mxu0 %v1940
    %v2013 = vpop.f32.mrb[0].mxu0
    %v2014 = vadd.f32 0.0, %v2013
    %v2015 = vpop.f32.mrb[0].mxu0
    %2016 = vdwg.mxu0
    %v2017 = vadd.f32 %v1604, %v2009
    %v2018 = vadd.f32 %v1605, %v2014
    %v2019 = vld [vmem:[%s8 + $0x6] ss:$0 sm:$0xff]
    %v2020 = vadd.f32 %v2017, %v2019
    %v2021 = vadd.f32 %v2018, %v2019
    %v2022 = vadd.f32 %v123, %v2020
    %v2023 = vadd.f32 %v124, %v2021
    %v2024 = vld [vmem:[%s8 + $0x7] ss:$0 sm:$0xff]
    %v2025 = vld [vmem:[%s8 + $0x80] ss:$0 sm:$0xff]
    %v2026 = vsel %vm130, %v2022, 0.0
    %2027 = vadd.xlane.f32.xlu0 %v2026
    %v2028 = vpop.xlane.xlu0 %2027
    %v2029 = vsel %vm130, %v2023, 0.0
    %2030 = vadd.xlane.f32.xlu0 %v2029
    %v2031 = vpop.xlane.xlu0 %2030
    %v2032 = vrcp.pop 32.0
    %v2033 = vmul.f32 %v2028, %v2032
    %v2034 = vmul.f32 %v2031, %v2032
    %v2035 = vsub.f32 %v2022, %v2033
    %v2036 = vsub.f32 %v2023, %v2034
    %v2037 = vmul.f32 %v2035, %v2035
    %v2038 = vmul.f32 %v2036, %v2036
    %v2039 = vsel %vm130, %v2037, 0.0
    %2040 = vadd.xlane.f32.xlu0 %v2039
    %v2041 = vpop.xlane.xlu0 %2040
    %v2042 = vsel %vm130, %v2038, 0.0
    %2043 = vadd.xlane.f32.xlu0 %v2042
    %v2044 = vpop.xlane.xlu0 %2043
    %v2045 = vmul.f32 %v2041, %v2032
    %v2046 = vmul.f32 %v2044, %v2032
    %v2047 = vadd.f32 %v2045, 1e-05
    %v2048 = vadd.f32 %v2046, 1e-05
    %v2049 = vrsqrt.pop %v2047
    %v2050 = vrsqrt.pop %v2048
    %v2051 = vmul.f32 %v2035, %v2049
    %v2052 = vmul.f32 %v2036, %v2050
    %v2053 = vmul.f32 %v2051, %v2024
    %v2054 = vmul.f32 %v2052, %v2024
    %v2055 = vadd.f32 %v2053, %v2025
    %v2056 = vadd.f32 %v2054, %v2025
    %v2057 = vpack.c.bf16 %v2056, %v2055
    %v2058 = vld [vmem:[%s4] sm:$0xff]
    %v2059 = vld [vmem:[%s4 + $0x8] sm:$0xff]
    %v2060 = vld [vmem:[%s4 + $0x40] sm:$0xff]
    %v2061 = vld [vmem:[%s4 + $0x48] sm:$0xff]
    %v2062 = vld [vmem:[%s4 + $0x80] sm:$0xff]
    %v2063 = vld [vmem:[%s4 + $0x88] sm:$0xff]
    %v2064 = vld [vmem:[%s4 + $0xc0] sm:$0xff]
    %v2065 = vld [vmem:[%s4 + $0xc8] sm:$0xff]
    %s2066 = scalar_lea.vmem %s8, 129
    %v2067 = vld [vmem:[%s2066] ss:$8 sm:$0xf]
    %v2069 = vlaneseq
    %v2070 = vshrl.u32 %v2069, 7
    %v2071 = vsub.s32 0, %v2070
    %v2072 = vrot.slane %v2067, %v2071
    %v2073 = vlaneseq
    %v2074 = vshrl.u32 %v2073, 7
    %v2075 = vsub.s32 1, %v2074
    %v2076 = vrot.slane %v2067, %v2075
    %v2077 = vlaneseq
    %v2078 = vshrl.u32 %v2077, 7
    %v2079 = vsub.s32 2, %v2078
    %v2080 = vrot.slane %v2067, %v2079
    %v2081 = vlaneseq
    %v2082 = vshrl.u32 %v2081, 7
    %v2083 = vsub.s32 3, %v2082
    %v2084 = vrot.slane %v2067, %v2083
    %v2097 = vunpack.c.l.b16 %v2058
    %v2098 = vunpack.c.h.b16 %v2058
    %v2099 = vunpack.c.l.b16 %v2059
    %v2100 = vunpack.c.h.b16 %v2059
    %v2101 = vunpack.c.l.b16 %v2060
    %v2102 = vunpack.c.h.b16 %v2060
    %v2103 = vunpack.c.l.b16 %v2061
    %v2104 = vunpack.c.h.b16 %v2061
    %v2105 = vunpack.c.l.b16 %v2062
    %v2106 = vunpack.c.h.b16 %v2062
    %v2107 = vunpack.c.l.b16 %v2063
    %v2108 = vunpack.c.h.b16 %v2063
    %v2109 = vunpack.c.l.b16 %v2064
    %v2110 = vunpack.c.h.b16 %v2064
    %v2111 = vunpack.c.l.b16 %v2065
    %v2112 = vunpack.c.h.b16 %v2065
    %v2113 = vpack.c.b16 %v2101, %v2097
    %v2114 = vpack.c.b16 %v2102, %v2098
    %v2115 = vpack.c.b16 %v2103, %v2099
    %v2116 = vpack.c.b16 %v2104, %v2100
    %v2117 = vpack.c.b16 %v2109, %v2105
    %v2118 = vpack.c.b16 %v2110, %v2106
    %v2119 = vpack.c.b16 %v2111, %v2107
    %v2120 = vpack.c.b16 %v2112, %v2108
    %v2130 = vsel %vm130, %v2057, 0
    %2132 = vmatprep.subr.bf16.mxu0 %v2114
    %2133 = vmatpush1.bf16.msra.mxu0 %v2113
    %2134 = vmatprep.subr.bf16.mxu0 %v2118
    %2135 = vmatpush1.bf16.msra.mxu0 %v2117
    %2136 = vmatprep.subr.bf16.mxu0 0
    %2137 = vmatpush1.bf16.msra.mxu0 0
    %2138 = vmatprep.subr.bf16.mxu0 0
    %2139 = vmatpush1.bf16.msra.mxu0 0
    %2140 = vmatprep.subr.bf16.mxu0 0
    %2141 = vmatpush1.bf16.msra.mxu0 0
    %2142 = vmatprep.subr.bf16.mxu0 0
    %2143 = vmatpush1.bf16.msra.mxu0 0
    %2144 = vmatprep.subr.bf16.mxu0 0
    %2145 = vmatpush1.bf16.msra.mxu0 0
    %2146 = vmatprep.subr.bf16.mxu0 0
    %2147 = vmatpush1.bf16.msra.mxu0 0
    %2148 = vmatprep.subr.bf16.mxu0 0
    %2149 = vmatpush1.bf16.msra.mxu0 0
    %2150 = vmatprep.subr.bf16.mxu0 0
    %2151 = vmatpush1.bf16.msra.mxu0 0
    %2152 = vmatprep.subr.bf16.mxu0 0
    %2153 = vmatpush1.bf16.msra.mxu0 0
    %2154 = vmatprep.subr.bf16.mxu0 0
    %2155 = vmatpush1.bf16.msra.mxu0 0
    %2156 = vmatprep.subr.bf16.mxu0 0
    %2157 = vmatpush1.bf16.msra.mxu0 0
    %2158 = vmatprep.subr.bf16.mxu0 0
    %2159 = vmatpush1.bf16.msra.mxu0 0
    %2160 = vmatprep.subr.bf16.mxu0 0
    %2161 = vmatpush1.bf16.msra.mxu0 0
    %2162 = vmatprep.subr.bf16.mxu0 0
    %2163 = vmatpush1.bf16.msra.mxu0 0
    %2164 = vmatprep.mubr.bf16.mxu0 0
    %2165 = vmatmul.mubr.bf16.gmra.mrb[0].mxu0 %v2130
    %v2166 = vpop.f32.mrb[0].mxu0
    %v2167 = vadd.f32 %v2072, %v2166
    %v2168 = vpop.f32.mrb[0].mxu0
    %v2169 = vadd.f32 %v2076, %v2168
    %v2170 = vpop.f32.mrb[0].mxu0
    %v2171 = vadd.f32 %v2072, %v2170
    %v2172 = vpop.f32.mrb[0].mxu0
    %v2173 = vadd.f32 %v2076, %v2172
    %2174 = vdwg.mxu0
    %2175 = vmatprep.subr.bf16.mxu0 %v2116
    %2176 = vmatpush1.bf16.msra.mxu0 %v2115
    %2177 = vmatprep.subr.bf16.mxu0 %v2120
    %2178 = vmatpush1.bf16.msra.mxu0 %v2119
    %2179 = vmatprep.subr.bf16.mxu0 0
    %2180 = vmatpush1.bf16.msra.mxu0 0
    %2181 = vmatprep.subr.bf16.mxu0 0
    %2182 = vmatpush1.bf16.msra.mxu0 0
    %2183 = vmatprep.subr.bf16.mxu0 0
    %2184 = vmatpush1.bf16.msra.mxu0 0
    %2185 = vmatprep.subr.bf16.mxu0 0
    %2186 = vmatpush1.bf16.msra.mxu0 0
    %2187 = vmatprep.subr.bf16.mxu0 0
    %2188 = vmatpush1.bf16.msra.mxu0 0
    %2189 = vmatprep.subr.bf16.mxu0 0
    %2190 = vmatpush1.bf16.msra.mxu0 0
    %2191 = vmatprep.subr.bf16.mxu0 0
    %2192 = vmatpush1.bf16.msra.mxu0 0
    %2193 = vmatprep.subr.bf16.mxu0 0
    %2194 = vmatpush1.bf16.msra.mxu0 0
    %2195 = vmatprep.subr.bf16.mxu0 0
    %2196 = vmatpush1.bf16.msra.mxu0 0
    %2197 = vmatprep.subr.bf16.mxu0 0
    %2198 = vmatpush1.bf16.msra.mxu0 0
    %2199 = vmatprep.subr.bf16.mxu0 0
    %2200 = vmatpush1.bf16.msra.mxu0 0
    %2201 = vmatprep.subr.bf16.mxu0 0
    %2202 = vmatpush1.bf16.msra.mxu0 0
    %2203 = vmatprep.subr.bf16.mxu0 0
    %2204 = vmatpush1.bf16.msra.mxu0 0
    %2205 = vmatprep.subr.bf16.mxu0 0
    %2206 = vmatpush1.bf16.msra.mxu0 0
    %2207 = vmatprep.mubr.bf16.mxu0 0
    %2208 = vmatmul.mubr.bf16.gmra.mrb[0].mxu0 %v2130
    %v2209 = vpop.f32.mrb[0].mxu0
    %v2210 = vadd.f32 %v2080, %v2209
    %v2211 = vpop.f32.mrb[0].mxu0
    %v2212 = vadd.f32 %v2084, %v2211
    %v2213 = vpop.f32.mrb[0].mxu0
    %v2214 = vadd.f32 %v2080, %v2213
    %v2215 = vpop.f32.mrb[0].mxu0
    %v2216 = vadd.f32 %v2084, %v2215
    %2217 = vdwg.mxu0
    %v2218 = vmax.f32 %v2167, 0.0
    %v2219 = vmax.f32 %v2169, 0.0
    %v2220 = vmax.f32 %v2210, 0.0
    %v2221 = vmax.f32 %v2212, 0.0
    %v2222 = vmax.f32 %v2171, 0.0
    %v2223 = vmax.f32 %v2173, 0.0
    %v2224 = vmax.f32 %v2214, 0.0
    %v2225 = vmax.f32 %v2216, 0.0
    %v2226 = vpack.c.bf16 %v2222, %v2218
    %v2227 = vpack.c.bf16 %v2223, %v2219
    %v2228 = vpack.c.bf16 %v2224, %v2220
    %v2229 = vpack.c.bf16 %v2225, %v2221
    %v2230 = vld [vmem:[%s5] sm:$0xf]
    %v2231 = vld [vmem:[%s5 + $0x4] sm:$0xf]
    %v2232 = vld [vmem:[%s5 + $0x8] sm:$0xf]
    %v2233 = vld [vmem:[%s5 + $0xc] sm:$0xf]
    %v2234 = vld [vmem:[%s5 + $0x10] sm:$0xf]
    %v2235 = vld [vmem:[%s5 + $0x14] sm:$0xf]
    %v2236 = vld [vmem:[%s5 + $0x18] sm:$0xf]
    %v2237 = vld [vmem:[%s5 + $0x1c] sm:$0xf]
    %v2238 = vld [vmem:[%s5 + $0x20] sm:$0xf]
    %v2239 = vld [vmem:[%s5 + $0x24] sm:$0xf]
    %v2240 = vld [vmem:[%s5 + $0x28] sm:$0xf]
    %v2241 = vld [vmem:[%s5 + $0x2c] sm:$0xf]
    %v2242 = vld [vmem:[%s5 + $0x30] sm:$0xf]
    %v2243 = vld [vmem:[%s5 + $0x34] sm:$0xf]
    %v2244 = vld [vmem:[%s5 + $0x38] sm:$0xf]
    %v2245 = vld [vmem:[%s5 + $0x3c] sm:$0xf]
    %v2246 = vld [vmem:[%s5 + $0x40] sm:$0xf]
    %v2247 = vld [vmem:[%s5 + $0x44] sm:$0xf]
    %v2248 = vld [vmem:[%s5 + $0x48] sm:$0xf]
    %v2249 = vld [vmem:[%s5 + $0x4c] sm:$0xf]
    %v2250 = vld [vmem:[%s5 + $0x50] sm:$0xf]
    %v2251 = vld [vmem:[%s5 + $0x54] sm:$0xf]
    %v2252 = vld [vmem:[%s5 + $0x58] sm:$0xf]
    %v2253 = vld [vmem:[%s5 + $0x5c] sm:$0xf]
    %v2254 = vld [vmem:[%s5 + $0x60] sm:$0xf]
    %v2255 = vld [vmem:[%s5 + $0x64] sm:$0xf]
    %v2256 = vld [vmem:[%s5 + $0x68] sm:$0xf]
    %v2257 = vld [vmem:[%s5 + $0x6c] sm:$0xf]
    %v2258 = vld [vmem:[%s5 + $0x70] sm:$0xf]
    %v2259 = vld [vmem:[%s5 + $0x74] sm:$0xf]
    %v2260 = vld [vmem:[%s5 + $0x78] sm:$0xf]
    %v2261 = vld [vmem:[%s5 + $0x7c] sm:$0xf]
    %v2262 = vld [vmem:[%s5 + $0x80] sm:$0xf]
    %v2263 = vld [vmem:[%s5 + $0x84] sm:$0xf]
    %v2264 = vld [vmem:[%s5 + $0x88] sm:$0xf]
    %v2265 = vld [vmem:[%s5 + $0x8c] sm:$0xf]
    %v2266 = vld [vmem:[%s5 + $0x90] sm:$0xf]
    %v2267 = vld [vmem:[%s5 + $0x94] sm:$0xf]
    %v2268 = vld [vmem:[%s5 + $0x98] sm:$0xf]
    %v2269 = vld [vmem:[%s5 + $0x9c] sm:$0xf]
    %v2270 = vld [vmem:[%s5 + $0xa0] sm:$0xf]
    %v2271 = vld [vmem:[%s5 + $0xa4] sm:$0xf]
    %v2272 = vld [vmem:[%s5 + $0xa8] sm:$0xf]
    %v2273 = vld [vmem:[%s5 + $0xac] sm:$0xf]
    %v2274 = vld [vmem:[%s5 + $0xb0] sm:$0xf]
    %v2275 = vld [vmem:[%s5 + $0xb4] sm:$0xf]
    %v2276 = vld [vmem:[%s5 + $0xb8] sm:$0xf]
    %v2277 = vld [vmem:[%s5 + $0xbc] sm:$0xf]
    %v2278 = vld [vmem:[%s5 + $0xc0] sm:$0xf]
    %v2279 = vld [vmem:[%s5 + $0xc4] sm:$0xf]
    %v2280 = vld [vmem:[%s5 + $0xc8] sm:$0xf]
    %v2281 = vld [vmem:[%s5 + $0xcc] sm:$0xf]
    %v2282 = vld [vmem:[%s5 + $0xd0] sm:$0xf]
    %v2283 = vld [vmem:[%s5 + $0xd4] sm:$0xf]
    %v2284 = vld [vmem:[%s5 + $0xd8] sm:$0xf]
    %v2285 = vld [vmem:[%s5 + $0xdc] sm:$0xf]
    %v2286 = vld [vmem:[%s5 + $0xe0] sm:$0xf]
    %v2287 = vld [vmem:[%s5 + $0xe4] sm:$0xf]
    %v2288 = vld [vmem:[%s5 + $0xe8] sm:$0xf]
    %v2289 = vld [vmem:[%s5 + $0xec] sm:$0xf]
    %v2290 = vld [vmem:[%s5 + $0xf0] sm:$0xf]
    %v2291 = vld [vmem:[%s5 + $0xf4] sm:$0xf]
    %v2292 = vld [vmem:[%s5 + $0xf8] sm:$0xf]
    %v2293 = vld [vmem:[%s5 + $0xfc] sm:$0xf]
    %v2294 = vld [vmem:[%s4 + $0x10] sm:$0xff]
    %v2295 = vld [vmem:[%s4 + $0x18] sm:$0xff]
    %v2296 = vld [vmem:[%s4 + $0x50] sm:$0xff]
    %v2297 = vld [vmem:[%s4 + $0x58] sm:$0xff]
    %v2298 = vld [vmem:[%s4 + $0x90] sm:$0xff]
    %v2299 = vld [vmem:[%s4 + $0x98] sm:$0xff]
    %v2300 = vld [vmem:[%s4 + $0xd0] sm:$0xff]
    %v2301 = vld [vmem:[%s4 + $0xd8] sm:$0xff]
    %s2302 = scalar_lea.vmem %s8, 161
    %v2303 = vld [vmem:[%s2302] ss:$8 sm:$0xf]
    %v2305 = vlaneseq
    %v2306 = vshrl.u32 %v2305, 7
    %v2307 = vsub.s32 0, %v2306
    %v2308 = vrot.slane %v2303, %v2307
    %v2309 = vlaneseq
    %v2310 = vshrl.u32 %v2309, 7
    %v2311 = vsub.s32 1, %v2310
    %v2312 = vrot.slane %v2303, %v2311
    %v2313 = vlaneseq
    %v2314 = vshrl.u32 %v2313, 7
    %v2315 = vsub.s32 2, %v2314
    %v2316 = vrot.slane %v2303, %v2315
    %v2317 = vlaneseq
    %v2318 = vshrl.u32 %v2317, 7
    %v2319 = vsub.s32 3, %v2318
    %v2320 = vrot.slane %v2303, %v2319
    %v2333 = vunpack.c.l.b16 %v2294
    %v2334 = vunpack.c.h.b16 %v2294
    %v2335 = vunpack.c.l.b16 %v2295
    %v2336 = vunpack.c.h.b16 %v2295
    %v2337 = vunpack.c.l.b16 %v2296
    %v2338 = vunpack.c.h.b16 %v2296
    %v2339 = vunpack.c.l.b16 %v2297
    %v2340 = vunpack.c.h.b16 %v2297
    %v2341 = vunpack.c.l.b16 %v2298
    %v2342 = vunpack.c.h.b16 %v2298
    %v2343 = vunpack.c.l.b16 %v2299
    %v2344 = vunpack.c.h.b16 %v2299
    %v2345 = vunpack.c.l.b16 %v2300
    %v2346 = vunpack.c.h.b16 %v2300
    %v2347 = vunpack.c.l.b16 %v2301
    %v2348 = vunpack.c.h.b16 %v2301
    %v2349 = vpack.c.b16 %v2337, %v2333
    %v2350 = vpack.c.b16 %v2338, %v2334
    %v2351 = vpack.c.b16 %v2339, %v2335
    %v2352 = vpack.c.b16 %v2340, %v2336
    %v2353 = vpack.c.b16 %v2345, %v2341
    %v2354 = vpack.c.b16 %v2346, %v2342
    %v2355 = vpack.c.b16 %v2347, %v2343
    %v2356 = vpack.c.b16 %v2348, %v2344
    %2365 = vmatprep.subr.bf16.mxu0 %v2350
    %2366 = vmatpush1.bf16.msra.mxu0 %v2349
    %2367 = vmatprep.subr.bf16.mxu0 %v2354
    %2368 = vmatpush1.bf16.msra.mxu0 %v2353
    %2369 = vmatprep.subr.bf16.mxu0 0
    %2370 = vmatpush1.bf16.msra.mxu0 0
    %2371 = vmatprep.subr.bf16.mxu0 0
    %2372 = vmatpush1.bf16.msra.mxu0 0
    %2373 = vmatprep.subr.bf16.mxu0 0
    %2374 = vmatpush1.bf16.msra.mxu0 0
    %2375 = vmatprep.subr.bf16.mxu0 0
    %2376 = vmatpush1.bf16.msra.mxu0 0
    %2377 = vmatprep.subr.bf16.mxu0 0
    %2378 = vmatpush1.bf16.msra.mxu0 0
    %2379 = vmatprep.subr.bf16.mxu0 0
    %2380 = vmatpush1.bf16.msra.mxu0 0
    %2381 = vmatprep.subr.bf16.mxu0 0
    %2382 = vmatpush1.bf16.msra.mxu0 0
    %2383 = vmatprep.subr.bf16.mxu0 0
    %2384 = vmatpush1.bf16.msra.mxu0 0
    %2385 = vmatprep.subr.bf16.mxu0 0
    %2386 = vmatpush1.bf16.msra.mxu0 0
    %2387 = vmatprep.subr.bf16.mxu0 0
    %2388 = vmatpush1.bf16.msra.mxu0 0
    %2389 = vmatprep.subr.bf16.mxu0 0
    %2390 = vmatpush1.bf16.msra.mxu0 0
    %2391 = vmatprep.subr.bf16.mxu0 0
    %2392 = vmatpush1.bf16.msra.mxu0 0
    %2393 = vmatprep.subr.bf16.mxu0 0
    %2394 = vmatpush1.bf16.msra.mxu0 0
    %2395 = vmatprep.subr.bf16.mxu0 0
    %2396 = vmatpush1.bf16.msra.mxu0 0
    %2397 = vmatprep.mubr.bf16.mxu0 0
    %2398 = vmatmul.mubr.bf16.gmra.mrb[0].mxu0 %v2130
    %v2399 = vpop.f32.mrb[0].mxu0
    %v2400 = vadd.f32 %v2308, %v2399
    %v2401 = vpop.f32.mrb[0].mxu0
    %v2402 = vadd.f32 %v2312, %v2401
    %v2403 = vpop.f32.mrb[0].mxu0
    %v2404 = vadd.f32 %v2308, %v2403
    %v2405 = vpop.f32.mrb[0].mxu0
    %v2406 = vadd.f32 %v2312, %v2405
    %2407 = vdwg.mxu0
    %2408 = vmatprep.subr.bf16.mxu0 %v2352
    %2409 = vmatpush1.bf16.msra.mxu0 %v2351
    %2410 = vmatprep.subr.bf16.mxu0 %v2356
    %2411 = vmatpush1.bf16.msra.mxu0 %v2355
    %2412 = vmatprep.subr.bf16.mxu0 0
    %2413 = vmatpush1.bf16.msra.mxu0 0
    %2414 = vmatprep.subr.bf16.mxu0 0
    %2415 = vmatpush1.bf16.msra.mxu0 0
    %2416 = vmatprep.subr.bf16.mxu0 0
    %2417 = vmatpush1.bf16.msra.mxu0 0
    %2418 = vmatprep.subr.bf16.mxu0 0
    %2419 = vmatpush1.bf16.msra.mxu0 0
    %2420 = vmatprep.subr.bf16.mxu0 0
    %2421 = vmatpush1.bf16.msra.mxu0 0
    %2422 = vmatprep.subr.bf16.mxu0 0
    %2423 = vmatpush1.bf16.msra.mxu0 0
    %2424 = vmatprep.subr.bf16.mxu0 0
    %2425 = vmatpush1.bf16.msra.mxu0 0
    %2426 = vmatprep.subr.bf16.mxu0 0
    %2427 = vmatpush1.bf16.msra.mxu0 0
    %2428 = vmatprep.subr.bf16.mxu0 0
    %2429 = vmatpush1.bf16.msra.mxu0 0
    %2430 = vmatprep.subr.bf16.mxu0 0
    %2431 = vmatpush1.bf16.msra.mxu0 0
    %2432 = vmatprep.subr.bf16.mxu0 0
    %2433 = vmatpush1.bf16.msra.mxu0 0
    %2434 = vmatprep.subr.bf16.mxu0 0
    %2435 = vmatpush1.bf16.msra.mxu0 0
    %2436 = vmatprep.subr.bf16.mxu0 0
    %2437 = vmatpush1.bf16.msra.mxu0 0
    %2438 = vmatprep.subr.bf16.mxu0 0
    %2439 = vmatpush1.bf16.msra.mxu0 0
    %2440 = vmatprep.mubr.bf16.mxu0 0
    %2441 = vmatmul.mubr.bf16.gmra.mrb[0].mxu0 %v2130
    %v2442 = vpop.f32.mrb[0].mxu0
    %v2443 = vadd.f32 %v2316, %v2442
    %v2444 = vpop.f32.mrb[0].mxu0
    %v2445 = vadd.f32 %v2320, %v2444
    %v2446 = vpop.f32.mrb[0].mxu0
    %v2447 = vadd.f32 %v2316, %v2446
    %v2448 = vpop.f32.mrb[0].mxu0
    %v2449 = vadd.f32 %v2320, %v2448
    %2450 = vdwg.mxu0
    %v2451 = vmax.f32 %v2400, 0.0
    %v2452 = vmax.f32 %v2402, 0.0
    %v2453 = vmax.f32 %v2443, 0.0
    %v2454 = vmax.f32 %v2445, 0.0
    %v2455 = vmax.f32 %v2404, 0.0
    %v2456 = vmax.f32 %v2406, 0.0
    %v2457 = vmax.f32 %v2447, 0.0
    %v2458 = vmax.f32 %v2449, 0.0
    %v2459 = vpack.c.bf16 %v2455, %v2451
    %v2460 = vpack.c.bf16 %v2456, %v2452
    %v2461 = vpack.c.bf16 %v2457, %v2453
    %v2462 = vpack.c.bf16 %v2458, %v2454
    %v2463 = vld [vmem:[%s5 + $0x100] sm:$0xf]
    %v2464 = vld [vmem:[%s5 + $0x104] sm:$0xf]
    %v2465 = vld [vmem:[%s5 + $0x108] sm:$0xf]
    %v2466 = vld [vmem:[%s5 + $0x10c] sm:$0xf]
    %v2467 = vld [vmem:[%s5 + $0x110] sm:$0xf]
    %v2468 = vld [vmem:[%s5 + $0x114] sm:$0xf]
    %v2469 = vld [vmem:[%s5 + $0x118] sm:$0xf]
    %v2470 = vld [vmem:[%s5 + $0x11c] sm:$0xf]
    %v2471 = vld [vmem:[%s5 + $0x120] sm:$0xf]
    %v2472 = vld [vmem:[%s5 + $0x124] sm:$0xf]
    %v2473 = vld [vmem:[%s5 + $0x128] sm:$0xf]
    %v2474 = vld [vmem:[%s5 + $0x12c] sm:$0xf]
    %v2475 = vld [vmem:[%s5 + $0x130] sm:$0xf]
    %v2476 = vld [vmem:[%s5 + $0x134] sm:$0xf]
    %v2477 = vld [vmem:[%s5 + $0x138] sm:$0xf]
    %v2478 = vld [vmem:[%s5 + $0x13c] sm:$0xf]
    %v2479 = vld [vmem:[%s5 + $0x140] sm:$0xf]
    %v2480 = vld [vmem:[%s5 + $0x144] sm:$0xf]
    %v2481 = vld [vmem:[%s5 + $0x148] sm:$0xf]
    %v2482 = vld [vmem:[%s5 + $0x14c] sm:$0xf]
    %v2483 = vld [vmem:[%s5 + $0x150] sm:$0xf]
    %v2484 = vld [vmem:[%s5 + $0x154] sm:$0xf]
    %v2485 = vld [vmem:[%s5 + $0x158] sm:$0xf]
    %v2486 = vld [vmem:[%s5 + $0x15c] sm:$0xf]
    %v2487 = vld [vmem:[%s5 + $0x160] sm:$0xf]
    %v2488 = vld [vmem:[%s5 + $0x164] sm:$0xf]
    %v2489 = vld [vmem:[%s5 + $0x168] sm:$0xf]
    %v2490 = vld [vmem:[%s5 + $0x16c] sm:$0xf]
    %v2491 = vld [vmem:[%s5 + $0x170] sm:$0xf]
    %v2492 = vld [vmem:[%s5 + $0x174] sm:$0xf]
    %v2493 = vld [vmem:[%s5 + $0x178] sm:$0xf]
    %v2494 = vld [vmem:[%s5 + $0x17c] sm:$0xf]
    %v2495 = vld [vmem:[%s5 + $0x180] sm:$0xf]
    %v2496 = vld [vmem:[%s5 + $0x184] sm:$0xf]
    %v2497 = vld [vmem:[%s5 + $0x188] sm:$0xf]
    %v2498 = vld [vmem:[%s5 + $0x18c] sm:$0xf]
    %v2499 = vld [vmem:[%s5 + $0x190] sm:$0xf]
    %v2500 = vld [vmem:[%s5 + $0x194] sm:$0xf]
    %v2501 = vld [vmem:[%s5 + $0x198] sm:$0xf]
    %v2502 = vld [vmem:[%s5 + $0x19c] sm:$0xf]
    %v2503 = vld [vmem:[%s5 + $0x1a0] sm:$0xf]
    %v2504 = vld [vmem:[%s5 + $0x1a4] sm:$0xf]
    %v2505 = vld [vmem:[%s5 + $0x1a8] sm:$0xf]
    %v2506 = vld [vmem:[%s5 + $0x1ac] sm:$0xf]
    %v2507 = vld [vmem:[%s5 + $0x1b0] sm:$0xf]
    %v2508 = vld [vmem:[%s5 + $0x1b4] sm:$0xf]
    %v2509 = vld [vmem:[%s5 + $0x1b8] sm:$0xf]
    %v2510 = vld [vmem:[%s5 + $0x1bc] sm:$0xf]
    %v2511 = vld [vmem:[%s5 + $0x1c0] sm:$0xf]
    %v2512 = vld [vmem:[%s5 + $0x1c4] sm:$0xf]
    %v2513 = vld [vmem:[%s5 + $0x1c8] sm:$0xf]
    %v2514 = vld [vmem:[%s5 + $0x1cc] sm:$0xf]
    %v2515 = vld [vmem:[%s5 + $0x1d0] sm:$0xf]
    %v2516 = vld [vmem:[%s5 + $0x1d4] sm:$0xf]
    %v2517 = vld [vmem:[%s5 + $0x1d8] sm:$0xf]
    %v2518 = vld [vmem:[%s5 + $0x1dc] sm:$0xf]
    %v2519 = vld [vmem:[%s5 + $0x1e0] sm:$0xf]
    %v2520 = vld [vmem:[%s5 + $0x1e4] sm:$0xf]
    %v2521 = vld [vmem:[%s5 + $0x1e8] sm:$0xf]
    %v2522 = vld [vmem:[%s5 + $0x1ec] sm:$0xf]
    %v2523 = vld [vmem:[%s5 + $0x1f0] sm:$0xf]
    %v2524 = vld [vmem:[%s5 + $0x1f4] sm:$0xf]
    %v2525 = vld [vmem:[%s5 + $0x1f8] sm:$0xf]
    %v2526 = vld [vmem:[%s5 + $0x1fc] sm:$0xf]
    %v2591 = vunpack.c.l.b16 %v2463
    %v2592 = vunpack.c.l.b16 %v2464
    %v2593 = vunpack.c.l.b16 %v2465
    %v2594 = vunpack.c.l.b16 %v2466
    %v2595 = vunpack.c.l.b16 %v2467
    %v2596 = vunpack.c.l.b16 %v2468
    %v2597 = vunpack.c.l.b16 %v2469
    %v2598 = vunpack.c.l.b16 %v2470
    %v2599 = vunpack.c.l.b16 %v2471
    %v2600 = vunpack.c.l.b16 %v2472
    %v2601 = vunpack.c.l.b16 %v2473
    %v2602 = vunpack.c.l.b16 %v2474
    %v2603 = vunpack.c.l.b16 %v2475
    %v2604 = vunpack.c.l.b16 %v2476
    %v2605 = vunpack.c.l.b16 %v2477
    %v2606 = vunpack.c.l.b16 %v2478
    %v2607 = vunpack.c.l.b16 %v2479
    %v2608 = vunpack.c.l.b16 %v2480
    %v2609 = vunpack.c.l.b16 %v2481
    %v2610 = vunpack.c.l.b16 %v2482
    %v2611 = vunpack.c.l.b16 %v2483
    %v2612 = vunpack.c.l.b16 %v2484
    %v2613 = vunpack.c.l.b16 %v2485
    %v2614 = vunpack.c.l.b16 %v2486
    %v2615 = vunpack.c.l.b16 %v2487
    %v2616 = vunpack.c.l.b16 %v2488
    %v2617 = vunpack.c.l.b16 %v2489
    %v2618 = vunpack.c.l.b16 %v2490
    %v2619 = vunpack.c.l.b16 %v2491
    %v2620 = vunpack.c.l.b16 %v2492
    %v2621 = vunpack.c.l.b16 %v2493
    %v2622 = vunpack.c.l.b16 %v2494
    %v2623 = vunpack.c.l.b16 %v2495
    %v2624 = vunpack.c.l.b16 %v2496
    %v2625 = vunpack.c.l.b16 %v2497
    %v2626 = vunpack.c.l.b16 %v2498
    %v2627 = vunpack.c.l.b16 %v2499
    %v2628 = vunpack.c.l.b16 %v2500
    %v2629 = vunpack.c.l.b16 %v2501
    %v2630 = vunpack.c.l.b16 %v2502
    %v2631 = vunpack.c.l.b16 %v2503
    %v2632 = vunpack.c.l.b16 %v2504
    %v2633 = vunpack.c.l.b16 %v2505
    %v2634 = vunpack.c.l.b16 %v2506
    %v2635 = vunpack.c.l.b16 %v2507
    %v2636 = vunpack.c.l.b16 %v2508
    %v2637 = vunpack.c.l.b16 %v2509
    %v2638 = vunpack.c.l.b16 %v2510
    %v2639 = vunpack.c.l.b16 %v2511
    %v2640 = vunpack.c.l.b16 %v2512
    %v2641 = vunpack.c.l.b16 %v2513
    %v2642 = vunpack.c.l.b16 %v2514
    %v2643 = vunpack.c.l.b16 %v2515
    %v2644 = vunpack.c.l.b16 %v2516
    %v2645 = vunpack.c.l.b16 %v2517
    %v2646 = vunpack.c.l.b16 %v2518
    %v2647 = vunpack.c.l.b16 %v2519
    %v2648 = vunpack.c.l.b16 %v2520
    %v2649 = vunpack.c.l.b16 %v2521
    %v2650 = vunpack.c.l.b16 %v2522
    %v2651 = vunpack.c.l.b16 %v2523
    %v2652 = vunpack.c.l.b16 %v2524
    %v2653 = vunpack.c.l.b16 %v2525
    %v2654 = vunpack.c.l.b16 %v2526
    %v2655 = vpack.c.b16 %v2592, %v2591
    %v2656 = vpack.c.b16 %v2594, %v2593
    %v2657 = vpack.c.b16 %v2596, %v2595
    %v2658 = vpack.c.b16 %v2598, %v2597
    %v2659 = vpack.c.b16 %v2600, %v2599
    %v2660 = vpack.c.b16 %v2602, %v2601
    %v2661 = vpack.c.b16 %v2604, %v2603
    %v2662 = vpack.c.b16 %v2606, %v2605
    %v2663 = vpack.c.b16 %v2608, %v2607
    %v2664 = vpack.c.b16 %v2610, %v2609
    %v2665 = vpack.c.b16 %v2612, %v2611
    %v2666 = vpack.c.b16 %v2614, %v2613
    %v2667 = vpack.c.b16 %v2616, %v2615
    %v2668 = vpack.c.b16 %v2618, %v2617
    %v2669 = vpack.c.b16 %v2620, %v2619
    %v2670 = vpack.c.b16 %v2622, %v2621
    %v2671 = vpack.c.b16 %v2624, %v2623
    %v2672 = vpack.c.b16 %v2626, %v2625
    %v2673 = vpack.c.b16 %v2628, %v2627
    %v2674 = vpack.c.b16 %v2630, %v2629
    %v2675 = vpack.c.b16 %v2632, %v2631
    %v2676 = vpack.c.b16 %v2634, %v2633
    %v2677 = vpack.c.b16 %v2636, %v2635
    %v2678 = vpack.c.b16 %v2638, %v2637
    %v2679 = vpack.c.b16 %v2640, %v2639
    %v2680 = vpack.c.b16 %v2642, %v2641
    %v2681 = vpack.c.b16 %v2644, %v2643
    %v2682 = vpack.c.b16 %v2646, %v2645
    %v2683 = vpack.c.b16 %v2648, %v2647
    %v2684 = vpack.c.b16 %v2650, %v2649
    %v2685 = vpack.c.b16 %v2652, %v2651
    %v2686 = vpack.c.b16 %v2654, %v2653
    %2719 = vmatprep.subr.bf16.mxu0 0
    %2720 = vmatpush1.bf16.msra.mxu0 %v2655
    %2721 = vmatprep.subr.bf16.mxu0 0
    %2722 = vmatpush1.bf16.msra.mxu0 %v2656
    %2723 = vmatprep.subr.bf16.mxu0 0
    %2724 = vmatpush1.bf16.msra.mxu0 %v2657
    %2725 = vmatprep.subr.bf16.mxu0 0
    %2726 = vmatpush1.bf16.msra.mxu0 %v2658
    %2727 = vmatprep.subr.bf16.mxu0 0
    %2728 = vmatpush1.bf16.msra.mxu0 %v2659
    %2729 = vmatprep.subr.bf16.mxu0 0
    %2730 = vmatpush1.bf16.msra.mxu0 %v2660
    %2731 = vmatprep.subr.bf16.mxu0 0
    %2732 = vmatpush1.bf16.msra.mxu0 %v2661
    %2733 = vmatprep.subr.bf16.mxu0 0
    %2734 = vmatpush1.bf16.msra.mxu0 %v2662
    %2735 = vmatprep.subr.bf16.mxu0 0
    %2736 = vmatpush1.bf16.msra.mxu0 %v2663
    %2737 = vmatprep.subr.bf16.mxu0 0
    %2738 = vmatpush1.bf16.msra.mxu0 %v2664
    %2739 = vmatprep.subr.bf16.mxu0 0
    %2740 = vmatpush1.bf16.msra.mxu0 %v2665
    %2741 = vmatprep.subr.bf16.mxu0 0
    %2742 = vmatpush1.bf16.msra.mxu0 %v2666
    %2743 = vmatprep.subr.bf16.mxu0 0
    %2744 = vmatpush1.bf16.msra.mxu0 %v2667
    %2745 = vmatprep.subr.bf16.mxu0 0
    %2746 = vmatpush1.bf16.msra.mxu0 %v2668
    %2747 = vmatprep.subr.bf16.mxu0 0
    %2748 = vmatpush1.bf16.msra.mxu0 %v2669
    %2749 = vmatprep.subr.bf16.mxu0 0
    %2750 = vmatpush1.bf16.msra.mxu0 %v2670
    %2751 = vmatprep.mubr.bf16.mxu0 %v2460
    %2752 = vmatmul.mubr.bf16.gmra.mrb[0].mxu0 %v2459
    %v2753 = vpop.f32.mrb[0].mxu0
    %v2754 = vadd.f32 0.0, %v2753
    %v2755 = vpop.f32.mrb[0].mxu0
    %v2756 = vpop.f32.mrb[0].mxu0
    %v2757 = vadd.f32 0.0, %v2756
    %v2758 = vpop.f32.mrb[0].mxu0
    %2759 = vdwg.mxu0
    %2760 = vmatprep.subr.bf16.mxu0 0
    %2761 = vmatpush1.bf16.msra.mxu0 %v2671
    %2762 = vmatprep.subr.bf16.mxu0 0
    %2763 = vmatpush1.bf16.msra.mxu0 %v2672
    %2764 = vmatprep.subr.bf16.mxu0 0
    %2765 = vmatpush1.bf16.msra.mxu0 %v2673
    %2766 = vmatprep.subr.bf16.mxu0 0
    %2767 = vmatpush1.bf16.msra.mxu0 %v2674
    %2768 = vmatprep.subr.bf16.mxu0 0
    %2769 = vmatpush1.bf16.msra.mxu0 %v2675
    %2770 = vmatprep.subr.bf16.mxu0 0
    %2771 = vmatpush1.bf16.msra.mxu0 %v2676
    %2772 = vmatprep.subr.bf16.mxu0 0
    %2773 = vmatpush1.bf16.msra.mxu0 %v2677
    %2774 = vmatprep.subr.bf16.mxu0 0
    %2775 = vmatpush1.bf16.msra.mxu0 %v2678
    %2776 = vmatprep.subr.bf16.mxu0 0
    %2777 = vmatpush1.bf16.msra.mxu0 %v2679
    %2778 = vmatprep.subr.bf16.mxu0 0
    %2779 = vmatpush1.bf16.msra.mxu0 %v2680
    %2780 = vmatprep.subr.bf16.mxu0 0
    %2781 = vmatpush1.bf16.msra.mxu0 %v2681
    %2782 = vmatprep.subr.bf16.mxu0 0
    %2783 = vmatpush1.bf16.msra.mxu0 %v2682
    %2784 = vmatprep.subr.bf16.mxu0 0
    %2785 = vmatpush1.bf16.msra.mxu0 %v2683
    %2786 = vmatprep.subr.bf16.mxu0 0
    %2787 = vmatpush1.bf16.msra.mxu0 %v2684
    %2788 = vmatprep.subr.bf16.mxu0 0
    %2789 = vmatpush1.bf16.msra.mxu0 %v2685
    %2790 = vmatprep.subr.bf16.mxu0 0
    %2791 = vmatpush1.bf16.msra.mxu0 %v2686
    %2792 = vmatprep.mubr.bf16.mxu0 %v2462
    %2793 = vmatmul.mubr.bf16.gmra.mrb[0].mxu0 %v2461
    %v2794 = vpop.f32.mrb[0].mxu0
    %v2795 = vadd.f32 %v2754, %v2794
    %v2796 = vpop.f32.mrb[0].mxu0
    %v2797 = vpop.f32.mrb[0].mxu0
    %v2798 = vadd.f32 %v2757, %v2797
    %v2799 = vpop.f32.mrb[0].mxu0
    %2800 = vdwg.mxu0
    %v2865 = vunpack.c.l.b16 %v2230
    %v2866 = vunpack.c.l.b16 %v2231
    %v2867 = vunpack.c.l.b16 %v2232
    %v2868 = vunpack.c.l.b16 %v2233
    %v2869 = vunpack.c.l.b16 %v2234
    %v2870 = vunpack.c.l.b16 %v2235
    %v2871 = vunpack.c.l.b16 %v2236
    %v2872 = vunpack.c.l.b16 %v2237
    %v2873 = vunpack.c.l.b16 %v2238
    %v2874 = vunpack.c.l.b16 %v2239
    %v2875 = vunpack.c.l.b16 %v2240
    %v2876 = vunpack.c.l.b16 %v2241
    %v2877 = vunpack.c.l.b16 %v2242
    %v2878 = vunpack.c.l.b16 %v2243
    %v2879 = vunpack.c.l.b16 %v2244
    %v2880 = vunpack.c.l.b16 %v2245
    %v2881 = vunpack.c.l.b16 %v2246
    %v2882 = vunpack.c.l.b16 %v2247
    %v2883 = vunpack.c.l.b16 %v2248
    %v2884 = vunpack.c.l.b16 %v2249
    %v2885 = vunpack.c.l.b16 %v2250
    %v2886 = vunpack.c.l.b16 %v2251
    %v2887 = vunpack.c.l.b16 %v2252
    %v2888 = vunpack.c.l.b16 %v2253
    %v2889 = vunpack.c.l.b16 %v2254
    %v2890 = vunpack.c.l.b16 %v2255
    %v2891 = vunpack.c.l.b16 %v2256
    %v2892 = vunpack.c.l.b16 %v2257
    %v2893 = vunpack.c.l.b16 %v2258
    %v2894 = vunpack.c.l.b16 %v2259
    %v2895 = vunpack.c.l.b16 %v2260
    %v2896 = vunpack.c.l.b16 %v2261
    %v2897 = vunpack.c.l.b16 %v2262
    %v2898 = vunpack.c.l.b16 %v2263
    %v2899 = vunpack.c.l.b16 %v2264
    %v2900 = vunpack.c.l.b16 %v2265
    %v2901 = vunpack.c.l.b16 %v2266
    %v2902 = vunpack.c.l.b16 %v2267
    %v2903 = vunpack.c.l.b16 %v2268
    %v2904 = vunpack.c.l.b16 %v2269
    %v2905 = vunpack.c.l.b16 %v2270
    %v2906 = vunpack.c.l.b16 %v2271
    %v2907 = vunpack.c.l.b16 %v2272
    %v2908 = vunpack.c.l.b16 %v2273
    %v2909 = vunpack.c.l.b16 %v2274
    %v2910 = vunpack.c.l.b16 %v2275
    %v2911 = vunpack.c.l.b16 %v2276
    %v2912 = vunpack.c.l.b16 %v2277
    %v2913 = vunpack.c.l.b16 %v2278
    %v2914 = vunpack.c.l.b16 %v2279
    %v2915 = vunpack.c.l.b16 %v2280
    %v2916 = vunpack.c.l.b16 %v2281
    %v2917 = vunpack.c.l.b16 %v2282
    %v2918 = vunpack.c.l.b16 %v2283
    %v2919 = vunpack.c.l.b16 %v2284
    %v2920 = vunpack.c.l.b16 %v2285
    %v2921 = vunpack.c.l.b16 %v2286
    %v2922 = vunpack.c.l.b16 %v2287
    %v2923 = vunpack.c.l.b16 %v2288
    %v2924 = vunpack.c.l.b16 %v2289
    %v2925 = vunpack.c.l.b16 %v2290
    %v2926 = vunpack.c.l.b16 %v2291
    %v2927 = vunpack.c.l.b16 %v2292
    %v2928 = vunpack.c.l.b16 %v2293
    %v2929 = vpack.c.b16 %v2866, %v2865
    %v2930 = vpack.c.b16 %v2868, %v2867
    %v2931 = vpack.c.b16 %v2870, %v2869
    %v2932 = vpack.c.b16 %v2872, %v2871
    %v2933 = vpack.c.b16 %v2874, %v2873
    %v2934 = vpack.c.b16 %v2876, %v2875
    %v2935 = vpack.c.b16 %v2878, %v2877
    %v2936 = vpack.c.b16 %v2880, %v2879
    %v2937 = vpack.c.b16 %v2882, %v2881
    %v2938 = vpack.c.b16 %v2884, %v2883
    %v2939 = vpack.c.b16 %v2886, %v2885
    %v2940 = vpack.c.b16 %v2888, %v2887
    %v2941 = vpack.c.b16 %v2890, %v2889
    %v2942 = vpack.c.b16 %v2892, %v2891
    %v2943 = vpack.c.b16 %v2894, %v2893
    %v2944 = vpack.c.b16 %v2896, %v2895
    %v2945 = vpack.c.b16 %v2898, %v2897
    %v2946 = vpack.c.b16 %v2900, %v2899
    %v2947 = vpack.c.b16 %v2902, %v2901
    %v2948 = vpack.c.b16 %v2904, %v2903
    %v2949 = vpack.c.b16 %v2906, %v2905
    %v2950 = vpack.c.b16 %v2908, %v2907
    %v2951 = vpack.c.b16 %v2910, %v2909
    %v2952 = vpack.c.b16 %v2912, %v2911
    %v2953 = vpack.c.b16 %v2914, %v2913
    %v2954 = vpack.c.b16 %v2916, %v2915
    %v2955 = vpack.c.b16 %v2918, %v2917
    %v2956 = vpack.c.b16 %v2920, %v2919
    %v2957 = vpack.c.b16 %v2922, %v2921
    %v2958 = vpack.c.b16 %v2924, %v2923
    %v2959 = vpack.c.b16 %v2926, %v2925
    %v2960 = vpack.c.b16 %v2928, %v2927
    %2993 = vmatprep.subr.bf16.mxu0 0
    %2994 = vmatpush1.bf16.msra.mxu0 %v2929
    %2995 = vmatprep.subr.bf16.mxu0 0
    %2996 = vmatpush1.bf16.msra.mxu0 %v2930
    %2997 = vmatprep.subr.bf16.mxu0 0
    %2998 = vmatpush1.bf16.msra.mxu0 %v2931
    %2999 = vmatprep.subr.bf16.mxu0 0
    %3000 = vmatpush1.bf16.msra.mxu0 %v2932
    %3001 = vmatprep.subr.bf16.mxu0 0
    %3002 = vmatpush1.bf16.msra.mxu0 %v2933
    %3003 = vmatprep.subr.bf16.mxu0 0
    %3004 = vmatpush1.bf16.msra.mxu0 %v2934
    %3005 = vmatprep.subr.bf16.mxu0 0
    %3006 = vmatpush1.bf16.msra.mxu0 %v2935
    %3007 = vmatprep.subr.bf16.mxu0 0
    %3008 = vmatpush1.bf16.msra.mxu0 %v2936
    %3009 = vmatprep.subr.bf16.mxu0 0
    %3010 = vmatpush1.bf16.msra.mxu0 %v2937
    %3011 = vmatprep.subr.bf16.mxu0 0
    %3012 = vmatpush1.bf16.msra.mxu0 %v2938
    %3013 = vmatprep.subr.bf16.mxu0 0
    %3014 = vmatpush1.bf16.msra.mxu0 %v2939
    %3015 = vmatprep.subr.bf16.mxu0 0
    %3016 = vmatpush1.bf16.msra.mxu0 %v2940
    %3017 = vmatprep.subr.bf16.mxu0 0
    %3018 = vmatpush1.bf16.msra.mxu0 %v2941
    %3019 = vmatprep.subr.bf16.mxu0 0
    %3020 = vmatpush1.bf16.msra.mxu0 %v2942
    %3021 = vmatprep.subr.bf16.mxu0 0
    %3022 = vmatpush1.bf16.msra.mxu0 %v2943
    %3023 = vmatprep.subr.bf16.mxu0 0
    %3024 = vmatpush1.bf16.msra.mxu0 %v2944
    %3025 = vmatprep.mubr.bf16.mxu0 %v2227
    %3026 = vmatmul.mubr.bf16.gmra.mrb[0].mxu0 %v2226
    %v3027 = vpop.f32.mrb[0].mxu0
    %v3028 = vadd.f32 %v2795, %v3027
    %v3029 = vpop.f32.mrb[0].mxu0
    %v3030 = vpop.f32.mrb[0].mxu0
    %v3031 = vadd.f32 %v2798, %v3030
    %v3032 = vpop.f32.mrb[0].mxu0
    %3033 = vdwg.mxu0
    %3034 = vmatprep.subr.bf16.mxu0 0
    %3035 = vmatpush1.bf16.msra.mxu0 %v2945
    %3036 = vmatprep.subr.bf16.mxu0 0
    %3037 = vmatpush1.bf16.msra.mxu0 %v2946
    %3038 = vmatprep.subr.bf16.mxu0 0
    %3039 = vmatpush1.bf16.msra.mxu0 %v2947
    %3040 = vmatprep.subr.bf16.mxu0 0
    %3041 = vmatpush1.bf16.msra.mxu0 %v2948
    %3042 = vmatprep.subr.bf16.mxu0 0
    %3043 = vmatpush1.bf16.msra.mxu0 %v2949
    %3044 = vmatprep.subr.bf16.mxu0 0
    %3045 = vmatpush1.bf16.msra.mxu0 %v2950
    %3046 = vmatprep.subr.bf16.mxu0 0
    %3047 = vmatpush1.bf16.msra.mxu0 %v2951
    %3048 = vmatprep.subr.bf16.mxu0 0
    %3049 = vmatpush1.bf16.msra.mxu0 %v2952
    %3050 = vmatprep.subr.bf16.mxu0 0
    %3051 = vmatpush1.bf16.msra.mxu0 %v2953
    %3052 = vmatprep.subr.bf16.mxu0 0
    %3053 = vmatpush1.bf16.msra.mxu0 %v2954
    %3054 = vmatprep.subr.bf16.mxu0 0
    %3055 = vmatpush1.bf16.msra.mxu0 %v2955
    %3056 = vmatprep.subr.bf16.mxu0 0
    %3057 = vmatpush1.bf16.msra.mxu0 %v2956
    %3058 = vmatprep.subr.bf16.mxu0 0
    %3059 = vmatpush1.bf16.msra.mxu0 %v2957
    %3060 = vmatprep.subr.bf16.mxu0 0
    %3061 = vmatpush1.bf16.msra.mxu0 %v2958
    %3062 = vmatprep.subr.bf16.mxu0 0
    %3063 = vmatpush1.bf16.msra.mxu0 %v2959
    %3064 = vmatprep.subr.bf16.mxu0 0
    %3065 = vmatpush1.bf16.msra.mxu0 %v2960
    %3066 = vmatprep.mubr.bf16.mxu0 %v2229
    %3067 = vmatmul.mubr.bf16.gmra.mrb[0].mxu0 %v2228
    %v3068 = vpop.f32.mrb[0].mxu0
    %v3069 = vadd.f32 %v3028, %v3068
    %v3070 = vpop.f32.mrb[0].mxu0
    %v3071 = vpop.f32.mrb[0].mxu0
    %v3072 = vadd.f32 %v3031, %v3071
    %v3073 = vpop.f32.mrb[0].mxu0
    %3074 = vdwg.mxu0
    %v3075 = vld [vmem:[%s4 + $0x20] sm:$0xff]
    %v3076 = vld [vmem:[%s4 + $0x28] sm:$0xff]
    %v3077 = vld [vmem:[%s4 + $0x60] sm:$0xff]
    %v3078 = vld [vmem:[%s4 + $0x68] sm:$0xff]
    %v3079 = vld [vmem:[%s4 + $0xa0] sm:$0xff]
    %v3080 = vld [vmem:[%s4 + $0xa8] sm:$0xff]
    %v3081 = vld [vmem:[%s4 + $0xe0] sm:$0xff]
    %v3082 = vld [vmem:[%s4 + $0xe8] sm:$0xff]
    %s3083 = scalar_lea.vmem %s8, 193
    %v3084 = vld [vmem:[%s3083] ss:$8 sm:$0xf]
    %v3086 = vlaneseq
    %v3087 = vshrl.u32 %v3086, 7
    %v3088 = vsub.s32 0, %v3087
    %v3089 = vrot.slane %v3084, %v3088
    %v3090 = vlaneseq
    %v3091 = vshrl.u32 %v3090, 7
    %v3092 = vsub.s32 1, %v3091
    %v3093 = vrot.slane %v3084, %v3092
    %v3094 = vlaneseq
    %v3095 = vshrl.u32 %v3094, 7
    %v3096 = vsub.s32 2, %v3095
    %v3097 = vrot.slane %v3084, %v3096
    %v3098 = vlaneseq
    %v3099 = vshrl.u32 %v3098, 7
    %v3100 = vsub.s32 3, %v3099
    %v3101 = vrot.slane %v3084, %v3100
    %v3114 = vunpack.c.l.b16 %v3075
    %v3115 = vunpack.c.h.b16 %v3075
    %v3116 = vunpack.c.l.b16 %v3076
    %v3117 = vunpack.c.h.b16 %v3076
    %v3118 = vunpack.c.l.b16 %v3077
    %v3119 = vunpack.c.h.b16 %v3077
    %v3120 = vunpack.c.l.b16 %v3078
    %v3121 = vunpack.c.h.b16 %v3078
    %v3122 = vunpack.c.l.b16 %v3079
    %v3123 = vunpack.c.h.b16 %v3079
    %v3124 = vunpack.c.l.b16 %v3080
    %v3125 = vunpack.c.h.b16 %v3080
    %v3126 = vunpack.c.l.b16 %v3081
    %v3127 = vunpack.c.h.b16 %v3081
    %v3128 = vunpack.c.l.b16 %v3082
    %v3129 = vunpack.c.h.b16 %v3082
    %v3130 = vpack.c.b16 %v3118, %v3114
    %v3131 = vpack.c.b16 %v3119, %v3115
    %v3132 = vpack.c.b16 %v3120, %v3116
    %v3133 = vpack.c.b16 %v3121, %v3117
    %v3134 = vpack.c.b16 %v3126, %v3122
    %v3135 = vpack.c.b16 %v3127, %v3123
    %v3136 = vpack.c.b16 %v3128, %v3124
    %v3137 = vpack.c.b16 %v3129, %v3125
    %3146 = vmatprep.subr.bf16.mxu0 %v3131
    %3147 = vmatpush1.bf16.msra.mxu0 %v3130
    %3148 = vmatprep.subr.bf16.mxu0 %v3135
    %3149 = vmatpush1.bf16.msra.mxu0 %v3134
    %3150 = vmatprep.subr.bf16.mxu0 0
    %3151 = vmatpush1.bf16.msra.mxu0 0
    %3152 = vmatprep.subr.bf16.mxu0 0
    %3153 = vmatpush1.bf16.msra.mxu0 0
    %3154 = vmatprep.subr.bf16.mxu0 0
    %3155 = vmatpush1.bf16.msra.mxu0 0
    %3156 = vmatprep.subr.bf16.mxu0 0
    %3157 = vmatpush1.bf16.msra.mxu0 0
    %3158 = vmatprep.subr.bf16.mxu0 0
    %3159 = vmatpush1.bf16.msra.mxu0 0
    %3160 = vmatprep.subr.bf16.mxu0 0
    %3161 = vmatpush1.bf16.msra.mxu0 0
    %3162 = vmatprep.subr.bf16.mxu0 0
    %3163 = vmatpush1.bf16.msra.mxu0 0
    %3164 = vmatprep.subr.bf16.mxu0 0
    %3165 = vmatpush1.bf16.msra.mxu0 0
    %3166 = vmatprep.subr.bf16.mxu0 0
    %3167 = vmatpush1.bf16.msra.mxu0 0
    %3168 = vmatprep.subr.bf16.mxu0 0
    %3169 = vmatpush1.bf16.msra.mxu0 0
    %3170 = vmatprep.subr.bf16.mxu0 0
    %3171 = vmatpush1.bf16.msra.mxu0 0
    %3172 = vmatprep.subr.bf16.mxu0 0
    %3173 = vmatpush1.bf16.msra.mxu0 0
    %3174 = vmatprep.subr.bf16.mxu0 0
    %3175 = vmatpush1.bf16.msra.mxu0 0
    %3176 = vmatprep.subr.bf16.mxu0 0
    %3177 = vmatpush1.bf16.msra.mxu0 0
    %3178 = vmatprep.mubr.bf16.mxu0 0
    %3179 = vmatmul.mubr.bf16.gmra.mrb[0].mxu0 %v2130
    %v3180 = vpop.f32.mrb[0].mxu0
    %v3181 = vadd.f32 %v3089, %v3180
    %v3182 = vpop.f32.mrb[0].mxu0
    %v3183 = vadd.f32 %v3093, %v3182
    %v3184 = vpop.f32.mrb[0].mxu0
    %v3185 = vadd.f32 %v3089, %v3184
    %v3186 = vpop.f32.mrb[0].mxu0
    %v3187 = vadd.f32 %v3093, %v3186
    %3188 = vdwg.mxu0
    %3189 = vmatprep.subr.bf16.mxu0 %v3133
    %3190 = vmatpush1.bf16.msra.mxu0 %v3132
    %3191 = vmatprep.subr.bf16.mxu0 %v3137
    %3192 = vmatpush1.bf16.msra.mxu0 %v3136
    %3193 = vmatprep.subr.bf16.mxu0 0
    %3194 = vmatpush1.bf16.msra.mxu0 0
    %3195 = vmatprep.subr.bf16.mxu0 0
    %3196 = vmatpush1.bf16.msra.mxu0 0
    %3197 = vmatprep.subr.bf16.mxu0 0
    %3198 = vmatpush1.bf16.msra.mxu0 0
    %3199 = vmatprep.subr.bf16.mxu0 0
    %3200 = vmatpush1.bf16.msra.mxu0 0
    %3201 = vmatprep.subr.bf16.mxu0 0
    %3202 = vmatpush1.bf16.msra.mxu0 0
    %3203 = vmatprep.subr.bf16.mxu0 0
    %3204 = vmatpush1.bf16.msra.mxu0 0
    %3205 = vmatprep.subr.bf16.mxu0 0
    %3206 = vmatpush1.bf16.msra.mxu0 0
    %3207 = vmatprep.subr.bf16.mxu0 0
    %3208 = vmatpush1.bf16.msra.mxu0 0
    %3209 = vmatprep.subr.bf16.mxu0 0
    %3210 = vmatpush1.bf16.msra.mxu0 0
    %3211 = vmatprep.subr.bf16.mxu0 0
    %3212 = vmatpush1.bf16.msra.mxu0 0
    %3213 = vmatprep.subr.bf16.mxu0 0
    %3214 = vmatpush1.bf16.msra.mxu0 0
    %3215 = vmatprep.subr.bf16.mxu0 0
    %3216 = vmatpush1.bf16.msra.mxu0 0
    %3217 = vmatprep.subr.bf16.mxu0 0
    %3218 = vmatpush1.bf16.msra.mxu0 0
    %3219 = vmatprep.subr.bf16.mxu0 0
    %3220 = vmatpush1.bf16.msra.mxu0 0
    %3221 = vmatprep.mubr.bf16.mxu0 0
    %3222 = vmatmul.mubr.bf16.gmra.mrb[0].mxu0 %v2130
    %v3223 = vpop.f32.mrb[0].mxu0
    %v3224 = vadd.f32 %v3097, %v3223
    %v3225 = vpop.f32.mrb[0].mxu0
    %v3226 = vadd.f32 %v3101, %v3225
    %v3227 = vpop.f32.mrb[0].mxu0
    %v3228 = vadd.f32 %v3097, %v3227
    %v3229 = vpop.f32.mrb[0].mxu0
    %v3230 = vadd.f32 %v3101, %v3229
    %3231 = vdwg.mxu0
    %v3232 = vmax.f32 %v3181, 0.0
    %v3233 = vmax.f32 %v3183, 0.0
    %v3234 = vmax.f32 %v3224, 0.0
    %v3235 = vmax.f32 %v3226, 0.0
    %v3236 = vmax.f32 %v3185, 0.0
    %v3237 = vmax.f32 %v3187, 0.0
    %v3238 = vmax.f32 %v3228, 0.0
    %v3239 = vmax.f32 %v3230, 0.0
    %v3240 = vpack.c.bf16 %v3236, %v3232
    %v3241 = vpack.c.bf16 %v3237, %v3233
    %v3242 = vpack.c.bf16 %v3238, %v3234
    %v3243 = vpack.c.bf16 %v3239, %v3235
    %v3244 = vld [vmem:[%s5 + $0x200] sm:$0xf]
    %v3245 = vld [vmem:[%s5 + $0x204] sm:$0xf]
    %v3246 = vld [vmem:[%s5 + $0x208] sm:$0xf]
    %v3247 = vld [vmem:[%s5 + $0x20c] sm:$0xf]
    %v3248 = vld [vmem:[%s5 + $0x210] sm:$0xf]
    %v3249 = vld [vmem:[%s5 + $0x214] sm:$0xf]
    %v3250 = vld [vmem:[%s5 + $0x218] sm:$0xf]
    %v3251 = vld [vmem:[%s5 + $0x21c] sm:$0xf]
    %v3252 = vld [vmem:[%s5 + $0x220] sm:$0xf]
    %v3253 = vld [vmem:[%s5 + $0x224] sm:$0xf]
    %v3254 = vld [vmem:[%s5 + $0x228] sm:$0xf]
    %v3255 = vld [vmem:[%s5 + $0x22c] sm:$0xf]
    %v3256 = vld [vmem:[%s5 + $0x230] sm:$0xf]
    %v3257 = vld [vmem:[%s5 + $0x234] sm:$0xf]
    %v3258 = vld [vmem:[%s5 + $0x238] sm:$0xf]
    %v3259 = vld [vmem:[%s5 + $0x23c] sm:$0xf]
    %v3260 = vld [vmem:[%s5 + $0x240] sm:$0xf]
    %v3261 = vld [vmem:[%s5 + $0x244] sm:$0xf]
    %v3262 = vld [vmem:[%s5 + $0x248] sm:$0xf]
    %v3263 = vld [vmem:[%s5 + $0x24c] sm:$0xf]
    %v3264 = vld [vmem:[%s5 + $0x250] sm:$0xf]
    %v3265 = vld [vmem:[%s5 + $0x254] sm:$0xf]
    %v3266 = vld [vmem:[%s5 + $0x258] sm:$0xf]
    %v3267 = vld [vmem:[%s5 + $0x25c] sm:$0xf]
    %v3268 = vld [vmem:[%s5 + $0x260] sm:$0xf]
    %v3269 = vld [vmem:[%s5 + $0x264] sm:$0xf]
    %v3270 = vld [vmem:[%s5 + $0x268] sm:$0xf]
    %v3271 = vld [vmem:[%s5 + $0x26c] sm:$0xf]
    %v3272 = vld [vmem:[%s5 + $0x270] sm:$0xf]
    %v3273 = vld [vmem:[%s5 + $0x274] sm:$0xf]
    %v3274 = vld [vmem:[%s5 + $0x278] sm:$0xf]
    %v3275 = vld [vmem:[%s5 + $0x27c] sm:$0xf]
    %v3276 = vld [vmem:[%s5 + $0x280] sm:$0xf]
    %v3277 = vld [vmem:[%s5 + $0x284] sm:$0xf]
    %v3278 = vld [vmem:[%s5 + $0x288] sm:$0xf]
    %v3279 = vld [vmem:[%s5 + $0x28c] sm:$0xf]
    %v3280 = vld [vmem:[%s5 + $0x290] sm:$0xf]
    %v3281 = vld [vmem:[%s5 + $0x294] sm:$0xf]
    %v3282 = vld [vmem:[%s5 + $0x298] sm:$0xf]
    %v3283 = vld [vmem:[%s5 + $0x29c] sm:$0xf]
    %v3284 = vld [vmem:[%s5 + $0x2a0] sm:$0xf]
    %v3285 = vld [vmem:[%s5 + $0x2a4] sm:$0xf]
    %v3286 = vld [vmem:[%s5 + $0x2a8] sm:$0xf]
    %v3287 = vld [vmem:[%s5 + $0x2ac] sm:$0xf]
    %v3288 = vld [vmem:[%s5 + $0x2b0] sm:$0xf]
    %v3289 = vld [vmem:[%s5 + $0x2b4] sm:$0xf]
    %v3290 = vld [vmem:[%s5 + $0x2b8] sm:$0xf]
    %v3291 = vld [vmem:[%s5 + $0x2bc] sm:$0xf]
    %v3292 = vld [vmem:[%s5 + $0x2c0] sm:$0xf]
    %v3293 = vld [vmem:[%s5 + $0x2c4] sm:$0xf]
    %v3294 = vld [vmem:[%s5 + $0x2c8] sm:$0xf]
    %v3295 = vld [vmem:[%s5 + $0x2cc] sm:$0xf]
    %v3296 = vld [vmem:[%s5 + $0x2d0] sm:$0xf]
    %v3297 = vld [vmem:[%s5 + $0x2d4] sm:$0xf]
    %v3298 = vld [vmem:[%s5 + $0x2d8] sm:$0xf]
    %v3299 = vld [vmem:[%s5 + $0x2dc] sm:$0xf]
    %v3300 = vld [vmem:[%s5 + $0x2e0] sm:$0xf]
    %v3301 = vld [vmem:[%s5 + $0x2e4] sm:$0xf]
    %v3302 = vld [vmem:[%s5 + $0x2e8] sm:$0xf]
    %v3303 = vld [vmem:[%s5 + $0x2ec] sm:$0xf]
    %v3304 = vld [vmem:[%s5 + $0x2f0] sm:$0xf]
    %v3305 = vld [vmem:[%s5 + $0x2f4] sm:$0xf]
    %v3306 = vld [vmem:[%s5 + $0x2f8] sm:$0xf]
    %v3307 = vld [vmem:[%s5 + $0x2fc] sm:$0xf]
    %v3372 = vunpack.c.l.b16 %v3244
    %v3373 = vunpack.c.l.b16 %v3245
    %v3374 = vunpack.c.l.b16 %v3246
    %v3375 = vunpack.c.l.b16 %v3247
    %v3376 = vunpack.c.l.b16 %v3248
    %v3377 = vunpack.c.l.b16 %v3249
    %v3378 = vunpack.c.l.b16 %v3250
    %v3379 = vunpack.c.l.b16 %v3251
    %v3380 = vunpack.c.l.b16 %v3252
    %v3381 = vunpack.c.l.b16 %v3253
    %v3382 = vunpack.c.l.b16 %v3254
    %v3383 = vunpack.c.l.b16 %v3255
    %v3384 = vunpack.c.l.b16 %v3256
    %v3385 = vunpack.c.l.b16 %v3257
    %v3386 = vunpack.c.l.b16 %v3258
    %v3387 = vunpack.c.l.b16 %v3259
    %v3388 = vunpack.c.l.b16 %v3260
    %v3389 = vunpack.c.l.b16 %v3261
    %v3390 = vunpack.c.l.b16 %v3262
    %v3391 = vunpack.c.l.b16 %v3263
    %v3392 = vunpack.c.l.b16 %v3264
    %v3393 = vunpack.c.l.b16 %v3265
    %v3394 = vunpack.c.l.b16 %v3266
    %v3395 = vunpack.c.l.b16 %v3267
    %v3396 = vunpack.c.l.b16 %v3268
    %v3397 = vunpack.c.l.b16 %v3269
    %v3398 = vunpack.c.l.b16 %v3270
    %v3399 = vunpack.c.l.b16 %v3271
    %v3400 = vunpack.c.l.b16 %v3272
    %v3401 = vunpack.c.l.b16 %v3273
    %v3402 = vunpack.c.l.b16 %v3274
    %v3403 = vunpack.c.l.b16 %v3275
    %v3404 = vunpack.c.l.b16 %v3276
    %v3405 = vunpack.c.l.b16 %v3277
    %v3406 = vunpack.c.l.b16 %v3278
    %v3407 = vunpack.c.l.b16 %v3279
    %v3408 = vunpack.c.l.b16 %v3280
    %v3409 = vunpack.c.l.b16 %v3281
    %v3410 = vunpack.c.l.b16 %v3282
    %v3411 = vunpack.c.l.b16 %v3283
    %v3412 = vunpack.c.l.b16 %v3284
    %v3413 = vunpack.c.l.b16 %v3285
    %v3414 = vunpack.c.l.b16 %v3286
    %v3415 = vunpack.c.l.b16 %v3287
    %v3416 = vunpack.c.l.b16 %v3288
    %v3417 = vunpack.c.l.b16 %v3289
    %v3418 = vunpack.c.l.b16 %v3290
    %v3419 = vunpack.c.l.b16 %v3291
    %v3420 = vunpack.c.l.b16 %v3292
    %v3421 = vunpack.c.l.b16 %v3293
    %v3422 = vunpack.c.l.b16 %v3294
    %v3423 = vunpack.c.l.b16 %v3295
    %v3424 = vunpack.c.l.b16 %v3296
    %v3425 = vunpack.c.l.b16 %v3297
    %v3426 = vunpack.c.l.b16 %v3298
    %v3427 = vunpack.c.l.b16 %v3299
    %v3428 = vunpack.c.l.b16 %v3300
    %v3429 = vunpack.c.l.b16 %v3301
    %v3430 = vunpack.c.l.b16 %v3302
    %v3431 = vunpack.c.l.b16 %v3303
    %v3432 = vunpack.c.l.b16 %v3304
    %v3433 = vunpack.c.l.b16 %v3305
    %v3434 = vunpack.c.l.b16 %v3306
    %v3435 = vunpack.c.l.b16 %v3307
    %v3436 = vpack.c.b16 %v3373, %v3372
    %v3437 = vpack.c.b16 %v3375, %v3374
    %v3438 = vpack.c.b16 %v3377, %v3376
    %v3439 = vpack.c.b16 %v3379, %v3378
    %v3440 = vpack.c.b16 %v3381, %v3380
    %v3441 = vpack.c.b16 %v3383, %v3382
    %v3442 = vpack.c.b16 %v3385, %v3384
    %v3443 = vpack.c.b16 %v3387, %v3386
    %v3444 = vpack.c.b16 %v3389, %v3388
    %v3445 = vpack.c.b16 %v3391, %v3390
    %v3446 = vpack.c.b16 %v3393, %v3392
    %v3447 = vpack.c.b16 %v3395, %v3394
    %v3448 = vpack.c.b16 %v3397, %v3396
    %v3449 = vpack.c.b16 %v3399, %v3398
    %v3450 = vpack.c.b16 %v3401, %v3400
    %v3451 = vpack.c.b16 %v3403, %v3402
    %v3452 = vpack.c.b16 %v3405, %v3404
    %v3453 = vpack.c.b16 %v3407, %v3406
    %v3454 = vpack.c.b16 %v3409, %v3408
    %v3455 = vpack.c.b16 %v3411, %v3410
    %v3456 = vpack.c.b16 %v3413, %v3412
    %v3457 = vpack.c.b16 %v3415, %v3414
    %v3458 = vpack.c.b16 %v3417, %v3416
    %v3459 = vpack.c.b16 %v3419, %v3418
    %v3460 = vpack.c.b16 %v3421, %v3420
    %v3461 = vpack.c.b16 %v3423, %v3422
    %v3462 = vpack.c.b16 %v3425, %v3424
    %v3463 = vpack.c.b16 %v3427, %v3426
    %v3464 = vpack.c.b16 %v3429, %v3428
    %v3465 = vpack.c.b16 %v3431, %v3430
    %v3466 = vpack.c.b16 %v3433, %v3432
    %v3467 = vpack.c.b16 %v3435, %v3434
    %3500 = vmatprep.subr.bf16.mxu0 0
    %3501 = vmatpush1.bf16.msra.mxu0 %v3436
    %3502 = vmatprep.subr.bf16.mxu0 0
    %3503 = vmatpush1.bf16.msra.mxu0 %v3437
    %3504 = vmatprep.subr.bf16.mxu0 0
    %3505 = vmatpush1.bf16.msra.mxu0 %v3438
    %3506 = vmatprep.subr.bf16.mxu0 0
    %3507 = vmatpush1.bf16.msra.mxu0 %v3439
    %3508 = vmatprep.subr.bf16.mxu0 0
    %3509 = vmatpush1.bf16.msra.mxu0 %v3440
    %3510 = vmatprep.subr.bf16.mxu0 0
    %3511 = vmatpush1.bf16.msra.mxu0 %v3441
    %3512 = vmatprep.subr.bf16.mxu0 0
    %3513 = vmatpush1.bf16.msra.mxu0 %v3442
    %3514 = vmatprep.subr.bf16.mxu0 0
    %3515 = vmatpush1.bf16.msra.mxu0 %v3443
    %3516 = vmatprep.subr.bf16.mxu0 0
    %3517 = vmatpush1.bf16.msra.mxu0 %v3444
    %3518 = vmatprep.subr.bf16.mxu0 0
    %3519 = vmatpush1.bf16.msra.mxu0 %v3445
    %3520 = vmatprep.subr.bf16.mxu0 0
    %3521 = vmatpush1.bf16.msra.mxu0 %v3446
    %3522 = vmatprep.subr.bf16.mxu0 0
    %3523 = vmatpush1.bf16.msra.mxu0 %v3447
    %3524 = vmatprep.subr.bf16.mxu0 0
    %3525 = vmatpush1.bf16.msra.mxu0 %v3448
    %3526 = vmatprep.subr.bf16.mxu0 0
    %3527 = vmatpush1.bf16.msra.mxu0 %v3449
    %3528 = vmatprep.subr.bf16.mxu0 0
    %3529 = vmatpush1.bf16.msra.mxu0 %v3450
    %3530 = vmatprep.subr.bf16.mxu0 0
    %3531 = vmatpush1.bf16.msra.mxu0 %v3451
    %3532 = vmatprep.mubr.bf16.mxu0 %v3241
    %3533 = vmatmul.mubr.bf16.gmra.mrb[0].mxu0 %v3240
    %v3534 = vpop.f32.mrb[0].mxu0
    %v3535 = vadd.f32 0.0, %v3534
    %v3536 = vpop.f32.mrb[0].mxu0
    %v3537 = vpop.f32.mrb[0].mxu0
    %v3538 = vadd.f32 0.0, %v3537
    %v3539 = vpop.f32.mrb[0].mxu0
    %3540 = vdwg.mxu0
    %3541 = vmatprep.subr.bf16.mxu0 0
    %3542 = vmatpush1.bf16.msra.mxu0 %v3452
    %3543 = vmatprep.subr.bf16.mxu0 0
    %3544 = vmatpush1.bf16.msra.mxu0 %v3453
    %3545 = vmatprep.subr.bf16.mxu0 0
    %3546 = vmatpush1.bf16.msra.mxu0 %v3454
    %3547 = vmatprep.subr.bf16.mxu0 0
    %3548 = vmatpush1.bf16.msra.mxu0 %v3455
    %3549 = vmatprep.subr.bf16.mxu0 0
    %3550 = vmatpush1.bf16.msra.mxu0 %v3456
    %3551 = vmatprep.subr.bf16.mxu0 0
    %3552 = vmatpush1.bf16.msra.mxu0 %v3457
    %3553 = vmatprep.subr.bf16.mxu0 0
    %3554 = vmatpush1.bf16.msra.mxu0 %v3458
    %3555 = vmatprep.subr.bf16.mxu0 0
    %3556 = vmatpush1.bf16.msra.mxu0 %v3459
    %3557 = vmatprep.subr.bf16.mxu0 0
    %3558 = vmatpush1.bf16.msra.mxu0 %v3460
    %3559 = vmatprep.subr.bf16.mxu0 0
    %3560 = vmatpush1.bf16.msra.mxu0 %v3461
    %3561 = vmatprep.subr.bf16.mxu0 0
    %3562 = vmatpush1.bf16.msra.mxu0 %v3462
    %3563 = vmatprep.subr.bf16.mxu0 0
    %3564 = vmatpush1.bf16.msra.mxu0 %v3463
    %3565 = vmatprep.subr.bf16.mxu0 0
    %3566 = vmatpush1.bf16.msra.mxu0 %v3464
    %3567 = vmatprep.subr.bf16.mxu0 0
    %3568 = vmatpush1.bf16.msra.mxu0 %v3465
    %3569 = vmatprep.subr.bf16.mxu0 0
    %3570 = vmatpush1.bf16.msra.mxu0 %v3466
    %3571 = vmatprep.subr.bf16.mxu0 0
    %3572 = vmatpush1.bf16.msra.mxu0 %v3467
    %3573 = vmatprep.mubr.bf16.mxu0 %v3243
    %3574 = vmatmul.mubr.bf16.gmra.mrb[0].mxu0 %v3242
    %v3575 = vpop.f32.mrb[0].mxu0
    %v3576 = vadd.f32 %v3535, %v3575
    %v3577 = vpop.f32.mrb[0].mxu0
    %v3578 = vpop.f32.mrb[0].mxu0
    %v3579 = vadd.f32 %v3538, %v3578
    %v3580 = vpop.f32.mrb[0].mxu0
    %3581 = vdwg.mxu0
    %v3582 = vadd.f32 %v3069, %v3576
    %v3583 = vadd.f32 %v3072, %v3579
    %v3584 = vld [vmem:[%s4 + $0x30] sm:$0xff]
    %v3585 = vld [vmem:[%s4 + $0x38] sm:$0xff]
    %v3586 = vld [vmem:[%s4 + $0x70] sm:$0xff]
    %v3587 = vld [vmem:[%s4 + $0x78] sm:$0xff]
    %v3588 = vld [vmem:[%s4 + $0xb0] sm:$0xff]
    %v3589 = vld [vmem:[%s4 + $0xb8] sm:$0xff]
    %v3590 = vld [vmem:[%s4 + $0xf0] sm:$0xff]
    %v3591 = vld [vmem:[%s4 + $0xf8] sm:$0xff]
    %s3592 = scalar_lea.vmem %s8, 225
    %v3593 = vld [vmem:[%s3592] ss:$8 sm:$0xf]
    %v3595 = vlaneseq
    %v3596 = vshrl.u32 %v3595, 7
    %v3597 = vsub.s32 0, %v3596
    %v3598 = vrot.slane %v3593, %v3597
    %v3599 = vlaneseq
    %v3600 = vshrl.u32 %v3599, 7
    %v3601 = vsub.s32 1, %v3600
    %v3602 = vrot.slane %v3593, %v3601
    %v3603 = vlaneseq
    %v3604 = vshrl.u32 %v3603, 7
    %v3605 = vsub.s32 2, %v3604
    %v3606 = vrot.slane %v3593, %v3605
    %v3607 = vlaneseq
    %v3608 = vshrl.u32 %v3607, 7
    %v3609 = vsub.s32 3, %v3608
    %v3610 = vrot.slane %v3593, %v3609
    %v3623 = vunpack.c.l.b16 %v3584
    %v3624 = vunpack.c.h.b16 %v3584
    %v3625 = vunpack.c.l.b16 %v3585
    %v3626 = vunpack.c.h.b16 %v3585
    %v3627 = vunpack.c.l.b16 %v3586
    %v3628 = vunpack.c.h.b16 %v3586
    %v3629 = vunpack.c.l.b16 %v3587
    %v3630 = vunpack.c.h.b16 %v3587
    %v3631 = vunpack.c.l.b16 %v3588
    %v3632 = vunpack.c.h.b16 %v3588
    %v3633 = vunpack.c.l.b16 %v3589
    %v3634 = vunpack.c.h.b16 %v3589
    %v3635 = vunpack.c.l.b16 %v3590
    %v3636 = vunpack.c.h.b16 %v3590
    %v3637 = vunpack.c.l.b16 %v3591
    %v3638 = vunpack.c.h.b16 %v3591
    %v3639 = vpack.c.b16 %v3627, %v3623
    %v3640 = vpack.c.b16 %v3628, %v3624
    %v3641 = vpack.c.b16 %v3629, %v3625
    %v3642 = vpack.c.b16 %v3630, %v3626
    %v3643 = vpack.c.b16 %v3635, %v3631
    %v3644 = vpack.c.b16 %v3636, %v3632
    %v3645 = vpack.c.b16 %v3637, %v3633
    %v3646 = vpack.c.b16 %v3638, %v3634
    %3655 = vmatprep.subr.bf16.mxu0 %v3640
    %3656 = vmatpush1.bf16.msra.mxu0 %v3639
    %3657 = vmatprep.subr.bf16.mxu0 %v3644
    %3658 = vmatpush1.bf16.msra.mxu0 %v3643
    %3659 = vmatprep.subr.bf16.mxu0 0
    %3660 = vmatpush1.bf16.msra.mxu0 0
    %3661 = vmatprep.subr.bf16.mxu0 0
    %3662 = vmatpush1.bf16.msra.mxu0 0
    %3663 = vmatprep.subr.bf16.mxu0 0
    %3664 = vmatpush1.bf16.msra.mxu0 0
    %3665 = vmatprep.subr.bf16.mxu0 0
    %3666 = vmatpush1.bf16.msra.mxu0 0
    %3667 = vmatprep.subr.bf16.mxu0 0
    %3668 = vmatpush1.bf16.msra.mxu0 0
    %3669 = vmatprep.subr.bf16.mxu0 0
    %3670 = vmatpush1.bf16.msra.mxu0 0
    %3671 = vmatprep.subr.bf16.mxu0 0
    %3672 = vmatpush1.bf16.msra.mxu0 0
    %3673 = vmatprep.subr.bf16.mxu0 0
    %3674 = vmatpush1.bf16.msra.mxu0 0
    %3675 = vmatprep.subr.bf16.mxu0 0
    %3676 = vmatpush1.bf16.msra.mxu0 0
    %3677 = vmatprep.subr.bf16.mxu0 0
    %3678 = vmatpush1.bf16.msra.mxu0 0
    %3679 = vmatprep.subr.bf16.mxu0 0
    %3680 = vmatpush1.bf16.msra.mxu0 0
    %3681 = vmatprep.subr.bf16.mxu0 0
    %3682 = vmatpush1.bf16.msra.mxu0 0
    %3683 = vmatprep.subr.bf16.mxu0 0
    %3684 = vmatpush1.bf16.msra.mxu0 0
    %3685 = vmatprep.subr.bf16.mxu0 0
    %3686 = vmatpush1.bf16.msra.mxu0 0
    %3687 = vmatprep.mubr.bf16.mxu0 0
    %3688 = vmatmul.mubr.bf16.gmra.mrb[0].mxu0 %v2130
    %v3689 = vpop.f32.mrb[0].mxu0
    %v3690 = vadd.f32 %v3598, %v3689
    %v3691 = vpop.f32.mrb[0].mxu0
    %v3692 = vadd.f32 %v3602, %v3691
    %v3693 = vpop.f32.mrb[0].mxu0
    %v3694 = vadd.f32 %v3598, %v3693
    %v3695 = vpop.f32.mrb[0].mxu0
    %v3696 = vadd.f32 %v3602, %v3695
    %3697 = vdwg.mxu0
    %3698 = vmatprep.subr.bf16.mxu0 %v3642
    %3699 = vmatpush1.bf16.msra.mxu0 %v3641
    %3700 = vmatprep.subr.bf16.mxu0 %v3646
    %3701 = vmatpush1.bf16.msra.mxu0 %v3645
    %3702 = vmatprep.subr.bf16.mxu0 0
    %3703 = vmatpush1.bf16.msra.mxu0 0
    %3704 = vmatprep.subr.bf16.mxu0 0
    %3705 = vmatpush1.bf16.msra.mxu0 0
    %3706 = vmatprep.subr.bf16.mxu0 0
    %3707 = vmatpush1.bf16.msra.mxu0 0
    %3708 = vmatprep.subr.bf16.mxu0 0
    %3709 = vmatpush1.bf16.msra.mxu0 0
    %3710 = vmatprep.subr.bf16.mxu0 0
    %3711 = vmatpush1.bf16.msra.mxu0 0
    %3712 = vmatprep.subr.bf16.mxu0 0
    %3713 = vmatpush1.bf16.msra.mxu0 0
    %3714 = vmatprep.subr.bf16.mxu0 0
    %3715 = vmatpush1.bf16.msra.mxu0 0
    %3716 = vmatprep.subr.bf16.mxu0 0
    %3717 = vmatpush1.bf16.msra.mxu0 0
    %3718 = vmatprep.subr.bf16.mxu0 0
    %3719 = vmatpush1.bf16.msra.mxu0 0
    %3720 = vmatprep.subr.bf16.mxu0 0
    %3721 = vmatpush1.bf16.msra.mxu0 0
    %3722 = vmatprep.subr.bf16.mxu0 0
    %3723 = vmatpush1.bf16.msra.mxu0 0
    %3724 = vmatprep.subr.bf16.mxu0 0
    %3725 = vmatpush1.bf16.msra.mxu0 0
    %3726 = vmatprep.subr.bf16.mxu0 0
    %3727 = vmatpush1.bf16.msra.mxu0 0
    %3728 = vmatprep.subr.bf16.mxu0 0
    %3729 = vmatpush1.bf16.msra.mxu0 0
    %3730 = vmatprep.mubr.bf16.mxu0 0
    %3731 = vmatmul.mubr.bf16.gmra.mrb[0].mxu0 %v2130
    %v3732 = vpop.f32.mrb[0].mxu0
    %v3733 = vadd.f32 %v3606, %v3732
    %v3734 = vpop.f32.mrb[0].mxu0
    %v3735 = vadd.f32 %v3610, %v3734
    %v3736 = vpop.f32.mrb[0].mxu0
    %v3737 = vadd.f32 %v3606, %v3736
    %v3738 = vpop.f32.mrb[0].mxu0
    %v3739 = vadd.f32 %v3610, %v3738
    %3740 = vdwg.mxu0
    %v3741 = vmax.f32 %v3690, 0.0
    %v3742 = vmax.f32 %v3692, 0.0
    %v3743 = vmax.f32 %v3733, 0.0
    %v3744 = vmax.f32 %v3735, 0.0
    %v3745 = vmax.f32 %v3694, 0.0
    %v3746 = vmax.f32 %v3696, 0.0
    %v3747 = vmax.f32 %v3737, 0.0
    %v3748 = vmax.f32 %v3739, 0.0
    %v3749 = vpack.c.bf16 %v3745, %v3741
    %v3750 = vpack.c.bf16 %v3746, %v3742
    %v3751 = vpack.c.bf16 %v3747, %v3743
    %v3752 = vpack.c.bf16 %v3748, %v3744
    %v3753 = vld [vmem:[%s5 + $0x300] sm:$0xf]
    %v3754 = vld [vmem:[%s5 + $0x304] sm:$0xf]
    %v3755 = vld [vmem:[%s5 + $0x308] sm:$0xf]
    %v3756 = vld [vmem:[%s5 + $0x30c] sm:$0xf]
    %v3757 = vld [vmem:[%s5 + $0x310] sm:$0xf]
    %v3758 = vld [vmem:[%s5 + $0x314] sm:$0xf]
    %v3759 = vld [vmem:[%s5 + $0x318] sm:$0xf]
    %v3760 = vld [vmem:[%s5 + $0x31c] sm:$0xf]
    %v3761 = vld [vmem:[%s5 + $0x320] sm:$0xf]
    %v3762 = vld [vmem:[%s5 + $0x324] sm:$0xf]
    %v3763 = vld [vmem:[%s5 + $0x328] sm:$0xf]
    %v3764 = vld [vmem:[%s5 + $0x32c] sm:$0xf]
    %v3765 = vld [vmem:[%s5 + $0x330] sm:$0xf]
    %v3766 = vld [vmem:[%s5 + $0x334] sm:$0xf]
    %v3767 = vld [vmem:[%s5 + $0x338] sm:$0xf]
    %v3768 = vld [vmem:[%s5 + $0x33c] sm:$0xf]
    %v3769 = vld [vmem:[%s5 + $0x340] sm:$0xf]
    %v3770 = vld [vmem:[%s5 + $0x344] sm:$0xf]
    %v3771 = vld [vmem:[%s5 + $0x348] sm:$0xf]
    %v3772 = vld [vmem:[%s5 + $0x34c] sm:$0xf]
    %v3773 = vld [vmem:[%s5 + $0x350] sm:$0xf]
    %v3774 = vld [vmem:[%s5 + $0x354] sm:$0xf]
    %v3775 = vld [vmem:[%s5 + $0x358] sm:$0xf]
    %v3776 = vld [vmem:[%s5 + $0x35c] sm:$0xf]
    %v3777 = vld [vmem:[%s5 + $0x360] sm:$0xf]
    %v3778 = vld [vmem:[%s5 + $0x364] sm:$0xf]
    %v3779 = vld [vmem:[%s5 + $0x368] sm:$0xf]
    %v3780 = vld [vmem:[%s5 + $0x36c] sm:$0xf]
    %v3781 = vld [vmem:[%s5 + $0x370] sm:$0xf]
    %v3782 = vld [vmem:[%s5 + $0x374] sm:$0xf]
    %v3783 = vld [vmem:[%s5 + $0x378] sm:$0xf]
    %v3784 = vld [vmem:[%s5 + $0x37c] sm:$0xf]
    %v3785 = vld [vmem:[%s5 + $0x380] sm:$0xf]
    %v3786 = vld [vmem:[%s5 + $0x384] sm:$0xf]
    %v3787 = vld [vmem:[%s5 + $0x388] sm:$0xf]
    %v3788 = vld [vmem:[%s5 + $0x38c] sm:$0xf]
    %v3789 = vld [vmem:[%s5 + $0x390] sm:$0xf]
    %v3790 = vld [vmem:[%s5 + $0x394] sm:$0xf]
    %v3791 = vld [vmem:[%s5 + $0x398] sm:$0xf]
    %v3792 = vld [vmem:[%s5 + $0x39c] sm:$0xf]
    %v3793 = vld [vmem:[%s5 + $0x3a0] sm:$0xf]
    %v3794 = vld [vmem:[%s5 + $0x3a4] sm:$0xf]
    %v3795 = vld [vmem:[%s5 + $0x3a8] sm:$0xf]
    %v3796 = vld [vmem:[%s5 + $0x3ac] sm:$0xf]
    %v3797 = vld [vmem:[%s5 + $0x3b0] sm:$0xf]
    %v3798 = vld [vmem:[%s5 + $0x3b4] sm:$0xf]
    %v3799 = vld [vmem:[%s5 + $0x3b8] sm:$0xf]
    %v3800 = vld [vmem:[%s5 + $0x3bc] sm:$0xf]
    %v3801 = vld [vmem:[%s5 + $0x3c0] sm:$0xf]
    %v3802 = vld [vmem:[%s5 + $0x3c4] sm:$0xf]
    %v3803 = vld [vmem:[%s5 + $0x3c8] sm:$0xf]
    %v3804 = vld [vmem:[%s5 + $0x3cc] sm:$0xf]
    %v3805 = vld [vmem:[%s5 + $0x3d0] sm:$0xf]
    %v3806 = vld [vmem:[%s5 + $0x3d4] sm:$0xf]
    %v3807 = vld [vmem:[%s5 + $0x3d8] sm:$0xf]
    %v3808 = vld [vmem:[%s5 + $0x3dc] sm:$0xf]
    %v3809 = vld [vmem:[%s5 + $0x3e0] sm:$0xf]
    %v3810 = vld [vmem:[%s5 + $0x3e4] sm:$0xf]
    %v3811 = vld [vmem:[%s5 + $0x3e8] sm:$0xf]
    %v3812 = vld [vmem:[%s5 + $0x3ec] sm:$0xf]
    %v3813 = vld [vmem:[%s5 + $0x3f0] sm:$0xf]
    %v3814 = vld [vmem:[%s5 + $0x3f4] sm:$0xf]
    %v3815 = vld [vmem:[%s5 + $0x3f8] sm:$0xf]
    %v3816 = vld [vmem:[%s5 + $0x3fc] sm:$0xf]
    %v3881 = vunpack.c.l.b16 %v3753
    %v3882 = vunpack.c.l.b16 %v3754
    %v3883 = vunpack.c.l.b16 %v3755
    %v3884 = vunpack.c.l.b16 %v3756
    %v3885 = vunpack.c.l.b16 %v3757
    %v3886 = vunpack.c.l.b16 %v3758
    %v3887 = vunpack.c.l.b16 %v3759
    %v3888 = vunpack.c.l.b16 %v3760
    %v3889 = vunpack.c.l.b16 %v3761
    %v3890 = vunpack.c.l.b16 %v3762
    %v3891 = vunpack.c.l.b16 %v3763
    %v3892 = vunpack.c.l.b16 %v3764
    %v3893 = vunpack.c.l.b16 %v3765
    %v3894 = vunpack.c.l.b16 %v3766
    %v3895 = vunpack.c.l.b16 %v3767
    %v3896 = vunpack.c.l.b16 %v3768
    %v3897 = vunpack.c.l.b16 %v3769
    %v3898 = vunpack.c.l.b16 %v3770
    %v3899 = vunpack.c.l.b16 %v3771
    %v3900 = vunpack.c.l.b16 %v3772
    %v3901 = vunpack.c.l.b16 %v3773
    %v3902 = vunpack.c.l.b16 %v3774
    %v3903 = vunpack.c.l.b16 %v3775
    %v3904 = vunpack.c.l.b16 %v3776
    %v3905 = vunpack.c.l.b16 %v3777
    %v3906 = vunpack.c.l.b16 %v3778
    %v3907 = vunpack.c.l.b16 %v3779
    %v3908 = vunpack.c.l.b16 %v3780
    %v3909 = vunpack.c.l.b16 %v3781
    %v3910 = vunpack.c.l.b16 %v3782
    %v3911 = vunpack.c.l.b16 %v3783
    %v3912 = vunpack.c.l.b16 %v3784
    %v3913 = vunpack.c.l.b16 %v3785
    %v3914 = vunpack.c.l.b16 %v3786
    %v3915 = vunpack.c.l.b16 %v3787
    %v3916 = vunpack.c.l.b16 %v3788
    %v3917 = vunpack.c.l.b16 %v3789
    %v3918 = vunpack.c.l.b16 %v3790
    %v3919 = vunpack.c.l.b16 %v3791
    %v3920 = vunpack.c.l.b16 %v3792
    %v3921 = vunpack.c.l.b16 %v3793
    %v3922 = vunpack.c.l.b16 %v3794
    %v3923 = vunpack.c.l.b16 %v3795
    %v3924 = vunpack.c.l.b16 %v3796
    %v3925 = vunpack.c.l.b16 %v3797
    %v3926 = vunpack.c.l.b16 %v3798
    %v3927 = vunpack.c.l.b16 %v3799
    %v3928 = vunpack.c.l.b16 %v3800
    %v3929 = vunpack.c.l.b16 %v3801
    %v3930 = vunpack.c.l.b16 %v3802
    %v3931 = vunpack.c.l.b16 %v3803
    %v3932 = vunpack.c.l.b16 %v3804
    %v3933 = vunpack.c.l.b16 %v3805
    %v3934 = vunpack.c.l.b16 %v3806
    %v3935 = vunpack.c.l.b16 %v3807
    %v3936 = vunpack.c.l.b16 %v3808
    %v3937 = vunpack.c.l.b16 %v3809
    %v3938 = vunpack.c.l.b16 %v3810
    %v3939 = vunpack.c.l.b16 %v3811
    %v3940 = vunpack.c.l.b16 %v3812
    %v3941 = vunpack.c.l.b16 %v3813
    %v3942 = vunpack.c.l.b16 %v3814
    %v3943 = vunpack.c.l.b16 %v3815
    %v3944 = vunpack.c.l.b16 %v3816
    %v3945 = vpack.c.b16 %v3882, %v3881
    %v3946 = vpack.c.b16 %v3884, %v3883
    %v3947 = vpack.c.b16 %v3886, %v3885
    %v3948 = vpack.c.b16 %v3888, %v3887
    %v3949 = vpack.c.b16 %v3890, %v3889
    %v3950 = vpack.c.b16 %v3892, %v3891
    %v3951 = vpack.c.b16 %v3894, %v3893
    %v3952 = vpack.c.b16 %v3896, %v3895
    %v3953 = vpack.c.b16 %v3898, %v3897
    %v3954 = vpack.c.b16 %v3900, %v3899
    %v3955 = vpack.c.b16 %v3902, %v3901
    %v3956 = vpack.c.b16 %v3904, %v3903
    %v3957 = vpack.c.b16 %v3906, %v3905
    %v3958 = vpack.c.b16 %v3908, %v3907
    %v3959 = vpack.c.b16 %v3910, %v3909
    %v3960 = vpack.c.b16 %v3912, %v3911
    %v3961 = vpack.c.b16 %v3914, %v3913
    %v3962 = vpack.c.b16 %v3916, %v3915
    %v3963 = vpack.c.b16 %v3918, %v3917
    %v3964 = vpack.c.b16 %v3920, %v3919
    %v3965 = vpack.c.b16 %v3922, %v3921
    %v3966 = vpack.c.b16 %v3924, %v3923
    %v3967 = vpack.c.b16 %v3926, %v3925
    %v3968 = vpack.c.b16 %v3928, %v3927
    %v3969 = vpack.c.b16 %v3930, %v3929
    %v3970 = vpack.c.b16 %v3932, %v3931
    %v3971 = vpack.c.b16 %v3934, %v3933
    %v3972 = vpack.c.b16 %v3936, %v3935
    %v3973 = vpack.c.b16 %v3938, %v3937
    %v3974 = vpack.c.b16 %v3940, %v3939
    %v3975 = vpack.c.b16 %v3942, %v3941
    %v3976 = vpack.c.b16 %v3944, %v3943
    %4009 = vmatprep.subr.bf16.mxu0 0
    %4010 = vmatpush1.bf16.msra.mxu0 %v3945
    %4011 = vmatprep.subr.bf16.mxu0 0
    %4012 = vmatpush1.bf16.msra.mxu0 %v3946
    %4013 = vmatprep.subr.bf16.mxu0 0
    %4014 = vmatpush1.bf16.msra.mxu0 %v3947
    %4015 = vmatprep.subr.bf16.mxu0 0
    %4016 = vmatpush1.bf16.msra.mxu0 %v3948
    %4017 = vmatprep.subr.bf16.mxu0 0
    %4018 = vmatpush1.bf16.msra.mxu0 %v3949
    %4019 = vmatprep.subr.bf16.mxu0 0
    %4020 = vmatpush1.bf16.msra.mxu0 %v3950
    %4021 = vmatprep.subr.bf16.mxu0 0
    %4022 = vmatpush1.bf16.msra.mxu0 %v3951
    %4023 = vmatprep.subr.bf16.mxu0 0
    %4024 = vmatpush1.bf16.msra.mxu0 %v3952
    %4025 = vmatprep.subr.bf16.mxu0 0
    %4026 = vmatpush1.bf16.msra.mxu0 %v3953
    %4027 = vmatprep.subr.bf16.mxu0 0
    %4028 = vmatpush1.bf16.msra.mxu0 %v3954
    %4029 = vmatprep.subr.bf16.mxu0 0
    %4030 = vmatpush1.bf16.msra.mxu0 %v3955
    %4031 = vmatprep.subr.bf16.mxu0 0
    %4032 = vmatpush1.bf16.msra.mxu0 %v3956
    %4033 = vmatprep.subr.bf16.mxu0 0
    %4034 = vmatpush1.bf16.msra.mxu0 %v3957
    %4035 = vmatprep.subr.bf16.mxu0 0
    %4036 = vmatpush1.bf16.msra.mxu0 %v3958
    %4037 = vmatprep.subr.bf16.mxu0 0
    %4038 = vmatpush1.bf16.msra.mxu0 %v3959
    %4039 = vmatprep.subr.bf16.mxu0 0
    %4040 = vmatpush1.bf16.msra.mxu0 %v3960
    %4041 = vmatprep.mubr.bf16.mxu0 %v3750
    %4042 = vmatmul.mubr.bf16.gmra.mrb[0].mxu0 %v3749
    %v4043 = vpop.f32.mrb[0].mxu0
    %v4044 = vadd.f32 0.0, %v4043
    %v4045 = vpop.f32.mrb[0].mxu0
    %v4046 = vpop.f32.mrb[0].mxu0
    %v4047 = vadd.f32 0.0, %v4046
    %v4048 = vpop.f32.mrb[0].mxu0
    %4049 = vdwg.mxu0
    %4050 = vmatprep.subr.bf16.mxu0 0
    %4051 = vmatpush1.bf16.msra.mxu0 %v3961
    %4052 = vmatprep.subr.bf16.mxu0 0
    %4053 = vmatpush1.bf16.msra.mxu0 %v3962
    %4054 = vmatprep.subr.bf16.mxu0 0
    %4055 = vmatpush1.bf16.msra.mxu0 %v3963
    %4056 = vmatprep.subr.bf16.mxu0 0
    %4057 = vmatpush1.bf16.msra.mxu0 %v3964
    %4058 = vmatprep.subr.bf16.mxu0 0
    %4059 = vmatpush1.bf16.msra.mxu0 %v3965
    %4060 = vmatprep.subr.bf16.mxu0 0
    %4061 = vmatpush1.bf16.msra.mxu0 %v3966
    %4062 = vmatprep.subr.bf16.mxu0 0
    %4063 = vmatpush1.bf16.msra.mxu0 %v3967
    %4064 = vmatprep.subr.bf16.mxu0 0
    %4065 = vmatpush1.bf16.msra.mxu0 %v3968
    %4066 = vmatprep.subr.bf16.mxu0 0
    %4067 = vmatpush1.bf16.msra.mxu0 %v3969
    %4068 = vmatprep.subr.bf16.mxu0 0
    %4069 = vmatpush1.bf16.msra.mxu0 %v3970
    %4070 = vmatprep.subr.bf16.mxu0 0
    %4071 = vmatpush1.bf16.msra.mxu0 %v3971
    %4072 = vmatprep.subr.bf16.mxu0 0
    %4073 = vmatpush1.bf16.msra.mxu0 %v3972
    %4074 = vmatprep.subr.bf16.mxu0 0
    %4075 = vmatpush1.bf16.msra.mxu0 %v3973
    %4076 = vmatprep.subr.bf16.mxu0 0
    %4077 = vmatpush1.bf16.msra.mxu0 %v3974
    %4078 = vmatprep.subr.bf16.mxu0 0
    %4079 = vmatpush1.bf16.msra.mxu0 %v3975
    %4080 = vmatprep.subr.bf16.mxu0 0
    %4081 = vmatpush1.bf16.msra.mxu0 %v3976
    %4082 = vmatprep.mubr.bf16.mxu0 %v3752
    %4083 = vmatmul.mubr.bf16.gmra.mrb[0].mxu0 %v3751
    %v4084 = vpop.f32.mrb[0].mxu0
    %v4085 = vadd.f32 %v4044, %v4084
    %v4086 = vpop.f32.mrb[0].mxu0
    %v4087 = vpop.f32.mrb[0].mxu0
    %v4088 = vadd.f32 %v4047, %v4087
    %v4089 = vpop.f32.mrb[0].mxu0
    %4090 = vdwg.mxu0
    %v4091 = vadd.f32 %v3582, %v4085
    %v4092 = vadd.f32 %v3583, %v4088
    %v4093 = vld [vmem:[%s8 + $0x82] ss:$0 sm:$0xff]
    %v4094 = vadd.f32 %v4091, %v4093
    %v4095 = vadd.f32 %v4092, %v4093
    %v4096 = vadd.f32 %v2055, %v4094
    %v4097 = vadd.f32 %v2056, %v4095
    %v4098 = vld [vmem:[%s8 + $0x83] ss:$0 sm:$0xff]
    %v4099 = vld [vmem:[%s8 + $0x84] ss:$0 sm:$0xff]
    %v4100 = vsel %vm130, %v4096, 0.0
    %4101 = vadd.xlane.f32.xlu0 %v4100
    %v4102 = vpop.xlane.xlu0 %4101
    %v4103 = vsel %vm130, %v4097, 0.0
    %4104 = vadd.xlane.f32.xlu0 %v4103
    %v4105 = vpop.xlane.xlu0 %4104
    %v4106 = vmul.f32 %v4102, %v2032
    %v4107 = vmul.f32 %v4105, %v2032
    %v4108 = vsub.f32 %v4096, %v4106
    %v4109 = vsub.f32 %v4097, %v4107
    %v4110 = vmul.f32 %v4108, %v4108
    %v4111 = vmul.f32 %v4109, %v4109
    %v4112 = vsel %vm130, %v4110, 0.0
    %4113 = vadd.xlane.f32.xlu0 %v4112
    %v4114 = vpop.xlane.xlu0 %4113
    %v4115 = vsel %vm130, %v4111, 0.0
    %4116 = vadd.xlane.f32.xlu0 %v4115
    %v4117 = vpop.xlane.xlu0 %4116
    %v4118 = vmul.f32 %v4114, %v2032
    %v4119 = vmul.f32 %v4117, %v2032
    %v4120 = vadd.f32 %v4118, 1e-05
    %v4121 = vadd.f32 %v4119, 1e-05
    %v4122 = vrsqrt.pop %v4120
    %v4123 = vrsqrt.pop %v4121
    %v4124 = vmul.f32 %v4108, %v4122
    %v4125 = vmul.f32 %v4109, %v4123
    %v4126 = vmul.f32 %v4124, %v4098
    %v4127 = vmul.f32 %v4125, %v4098
    %v4128 = vadd.f32 %v4126, %v4099
    %v4129 = vadd.f32 %v4127, %v4099
    %s4130 = scalar_lea.vmem %s2, 96
    %v4131 = vld [vmem:[%s4130] sm:$0xff]
    %v4132 = vld [vmem:[%s4130 + $0x8] sm:$0xff]
    %v4133 = vld [vmem:[%s4130 + $0x10] sm:$0xff]
    %v4134 = vld [vmem:[%s4130 + $0x18] sm:$0xff]
    %v4135 = vld [vmem:[%s8 + $0x85] ss:$0 sm:$0xff]
    %v4137 = vsel %vm130, %v4128, 0
    %v4140 = vsel %vm130, %v4129, 0
    %4142 = vmatprep.subr.mxu0 0.0
    %4143 = vmatpush1.msra.mxu0 %v4131
    %4144 = vmatprep.subr.mxu0 0.0
    %4145 = vmatpush1.msra.mxu0 %v4132
    %4146 = vmatprep.subr.mxu0 0.0
    %4147 = vmatpush1.msra.mxu0 %v4133
    %4148 = vmatprep.subr.mxu0 0.0
    %4149 = vmatpush1.msra.mxu0 %v4134
    %4150 = vmatprep.subr.mxu0 0.0
    %4151 = vmatpush1.msra.mxu0 0.0
    %4152 = vmatprep.subr.mxu0 0.0
    %4153 = vmatpush1.msra.mxu0 0.0
    %4154 = vmatprep.subr.mxu0 0.0
    %4155 = vmatpush1.msra.mxu0 0.0
    %4156 = vmatprep.subr.mxu0 0.0
    %4157 = vmatpush1.msra.mxu0 0.0
    %4158 = vmatprep.subr.mxu0 0.0
    %4159 = vmatpush1.msra.mxu0 0.0
    %4160 = vmatprep.subr.mxu0 0.0
    %4161 = vmatpush1.msra.mxu0 0.0
    %4162 = vmatprep.subr.mxu0 0.0
    %4163 = vmatpush1.msra.mxu0 0.0
    %4164 = vmatprep.subr.mxu0 0.0
    %4165 = vmatpush1.msra.mxu0 0.0
    %4166 = vmatprep.subr.mxu0 0.0
    %4167 = vmatpush1.msra.mxu0 0.0
    %4168 = vmatprep.subr.mxu0 0.0
    %4169 = vmatpush1.msra.mxu0 0.0
    %4170 = vmatprep.subr.mxu0 0.0
    %4171 = vmatpush1.msra.mxu0 0.0
    %4172 = vmatprep.subr.mxu0 0.0
    %4173 = vmatpush1.msra.mxu0 0.0
    %4174 = vmatprep.subr.mxu0 0.0
    %4175 = vmatpush1.msra.mxu0 0.0
    %4176 = vmatprep.subr.mxu0 0.0
    %4177 = vmatpush1.msra.mxu0 0.0
    %4178 = vmatprep.subr.mxu0 0.0
    %4179 = vmatpush1.msra.mxu0 0.0
    %4180 = vmatprep.subr.mxu0 0.0
    %4181 = vmatpush1.msra.mxu0 0.0
    %4182 = vmatprep.subr.mxu0 0.0
    %4183 = vmatpush1.msra.mxu0 0.0
    %4184 = vmatprep.subr.mxu0 0.0
    %4185 = vmatpush1.msra.mxu0 0.0
    %4186 = vmatprep.subr.mxu0 0.0
    %4187 = vmatpush1.msra.mxu0 0.0
    %4188 = vmatprep.subr.mxu0 0.0
    %4189 = vmatpush1.msra.mxu0 0.0
    %4190 = vmatprep.subr.mxu0 0.0
    %4191 = vmatpush1.msra.mxu0 0.0
    %4192 = vmatprep.subr.mxu0 0.0
    %4193 = vmatpush1.msra.mxu0 0.0
    %4194 = vmatprep.subr.mxu0 0.0
    %4195 = vmatpush1.msra.mxu0 0.0
    %4196 = vmatprep.subr.mxu0 0.0
    %4197 = vmatpush1.msra.mxu0 0.0
    %4198 = vmatprep.subr.mxu0 0.0
    %4199 = vmatpush1.msra.mxu0 0.0
    %4200 = vmatprep.subr.mxu0 0.0
    %4201 = vmatpush1.msra.mxu0 0.0
    %4202 = vmatprep.subr.mxu0 0.0
    %4203 = vmatpush1.msra.mxu0 0.0
    %4204 = vmatprep.subr.mxu0 0.0
    %4205 = vmatpush1.msra.mxu0 0.0
    %4206 = vmatprep.mubr.f32.mxu0 0.0
    %4207 = vmatmul.mubr.f32.gmra.mrb[0].mxu0 %v4137
    %v4208 = vpop.f32.mrb[0].mxu0
    %v4209 = vadd.f32 %v4135, %v4208
    %v4210 = vpop.f32.mrb[0].mxu0
    %4211 = vmatprep.mubr.f32.mxu0 0.0
    %4212 = vmatmul.mubr.f32.gmra.mrb[0].mxu0 %v4140
    %v4213 = vpop.f32.mrb[0].mxu0
    %v4214 = vadd.f32 %v4135, %v4213
    %v4215 = vpop.f32.mrb[0].mxu0
    %4216 = vdwg.mxu0
    %s4217 = scalar_lea.vmem %s2, 128
    %v4218 = vld [vmem:[%s4217] sm:$0xff]
    %v4219 = vld [vmem:[%s4217 + $0x8] sm:$0xff]
    %v4220 = vld [vmem:[%s4217 + $0x10] sm:$0xff]
    %v4221 = vld [vmem:[%s4217 + $0x18] sm:$0xff]
    %v4222 = vld [vmem:[%s8 + $0x86] ss:$0 sm:$0xff]
    %4223 = vmatprep.subr.mxu0 0.0
    %4224 = vmatpush1.msra.mxu0 %v4218
    %4225 = vmatprep.subr.mxu0 0.0
    %4226 = vmatpush1.msra.mxu0 %v4219
    %4227 = vmatprep.subr.mxu0 0.0
    %4228 = vmatpush1.msra.mxu0 %v4220
    %4229 = vmatprep.subr.mxu0 0.0
    %4230 = vmatpush1.msra.mxu0 %v4221
    %4231 = vmatprep.subr.mxu0 0.0
    %4232 = vmatpush1.msra.mxu0 0.0
    %4233 = vmatprep.subr.mxu0 0.0
    %4234 = vmatpush1.msra.mxu0 0.0
    %4235 = vmatprep.subr.mxu0 0.0
    %4236 = vmatpush1.msra.mxu0 0.0
    %4237 = vmatprep.subr.mxu0 0.0
    %4238 = vmatpush1.msra.mxu0 0.0
    %4239 = vmatprep.subr.mxu0 0.0
    %4240 = vmatpush1.msra.mxu0 0.0
    %4241 = vmatprep.subr.mxu0 0.0
    %4242 = vmatpush1.msra.mxu0 0.0
    %4243 = vmatprep.subr.mxu0 0.0
    %4244 = vmatpush1.msra.mxu0 0.0
    %4245 = vmatprep.subr.mxu0 0.0
    %4246 = vmatpush1.msra.mxu0 0.0
    %4247 = vmatprep.subr.mxu0 0.0
    %4248 = vmatpush1.msra.mxu0 0.0
    %4249 = vmatprep.subr.mxu0 0.0
    %4250 = vmatpush1.msra.mxu0 0.0
    %4251 = vmatprep.subr.mxu0 0.0
    %4252 = vmatpush1.msra.mxu0 0.0
    %4253 = vmatprep.subr.mxu0 0.0
    %4254 = vmatpush1.msra.mxu0 0.0
    %4255 = vmatprep.subr.mxu0 0.0
    %4256 = vmatpush1.msra.mxu0 0.0
    %4257 = vmatprep.subr.mxu0 0.0
    %4258 = vmatpush1.msra.mxu0 0.0
    %4259 = vmatprep.subr.mxu0 0.0
    %4260 = vmatpush1.msra.mxu0 0.0
    %4261 = vmatprep.subr.mxu0 0.0
    %4262 = vmatpush1.msra.mxu0 0.0
    %4263 = vmatprep.subr.mxu0 0.0
    %4264 = vmatpush1.msra.mxu0 0.0
    %4265 = vmatprep.subr.mxu0 0.0
    %4266 = vmatpush1.msra.mxu0 0.0
    %4267 = vmatprep.subr.mxu0 0.0
    %4268 = vmatpush1.msra.mxu0 0.0
    %4269 = vmatprep.subr.mxu0 0.0
    %4270 = vmatpush1.msra.mxu0 0.0
    %4271 = vmatprep.subr.mxu0 0.0
    %4272 = vmatpush1.msra.mxu0 0.0
    %4273 = vmatprep.subr.mxu0 0.0
    %4274 = vmatpush1.msra.mxu0 0.0
    %4275 = vmatprep.subr.mxu0 0.0
    %4276 = vmatpush1.msra.mxu0 0.0
    %4277 = vmatprep.subr.mxu0 0.0
    %4278 = vmatpush1.msra.mxu0 0.0
    %4279 = vmatprep.subr.mxu0 0.0
    %4280 = vmatpush1.msra.mxu0 0.0
    %4281 = vmatprep.subr.mxu0 0.0
    %4282 = vmatpush1.msra.mxu0 0.0
    %4283 = vmatprep.subr.mxu0 0.0
    %4284 = vmatpush1.msra.mxu0 0.0
    %4285 = vmatprep.subr.mxu0 0.0
    %4286 = vmatpush1.msra.mxu0 0.0
    %4287 = vmatprep.mubr.f32.mxu0 0.0
    %4288 = vmatmul.mubr.f32.gmra.mrb[0].mxu0 %v4137
    %v4289 = vpop.f32.mrb[0].mxu0
    %v4290 = vadd.f32 %v4222, %v4289
    %v4291 = vpop.f32.mrb[0].mxu0
    %4292 = vmatprep.mubr.f32.mxu0 0.0
    %4293 = vmatmul.mubr.f32.gmra.mrb[0].mxu0 %v4140
    %v4294 = vpop.f32.mrb[0].mxu0
    %v4295 = vadd.f32 %v4222, %v4294
    %v4296 = vpop.f32.mrb[0].mxu0
    %4297 = vdwg.mxu0
    %s4298 = scalar_lea.vmem %s2, 160
    %v4299 = vld [vmem:[%s4298] sm:$0xff]
    %v4300 = vld [vmem:[%s4298 + $0x8] sm:$0xff]
    %v4301 = vld [vmem:[%s4298 + $0x10] sm:$0xff]
    %v4302 = vld [vmem:[%s4298 + $0x18] sm:$0xff]
    %v4303 = vld [vmem:[%s8 + $0x87] ss:$0 sm:$0xff]
    %4304 = vmatprep.subr.mxu0 0.0
    %4305 = vmatpush1.msra.mxu0 %v4299
    %4306 = vmatprep.subr.mxu0 0.0
    %4307 = vmatpush1.msra.mxu0 %v4300
    %4308 = vmatprep.subr.mxu0 0.0
    %4309 = vmatpush1.msra.mxu0 %v4301
    %4310 = vmatprep.subr.mxu0 0.0
    %4311 = vmatpush1.msra.mxu0 %v4302
    %4312 = vmatprep.subr.mxu0 0.0
    %4313 = vmatpush1.msra.mxu0 0.0
    %4314 = vmatprep.subr.mxu0 0.0
    %4315 = vmatpush1.msra.mxu0 0.0
    %4316 = vmatprep.subr.mxu0 0.0
    %4317 = vmatpush1.msra.mxu0 0.0
    %4318 = vmatprep.subr.mxu0 0.0
    %4319 = vmatpush1.msra.mxu0 0.0
    %4320 = vmatprep.subr.mxu0 0.0
    %4321 = vmatpush1.msra.mxu0 0.0
    %4322 = vmatprep.subr.mxu0 0.0
    %4323 = vmatpush1.msra.mxu0 0.0
    %4324 = vmatprep.subr.mxu0 0.0
    %4325 = vmatpush1.msra.mxu0 0.0
    %4326 = vmatprep.subr.mxu0 0.0
    %4327 = vmatpush1.msra.mxu0 0.0
    %4328 = vmatprep.subr.mxu0 0.0
    %4329 = vmatpush1.msra.mxu0 0.0
    %4330 = vmatprep.subr.mxu0 0.0
    %4331 = vmatpush1.msra.mxu0 0.0
    %4332 = vmatprep.subr.mxu0 0.0
    %4333 = vmatpush1.msra.mxu0 0.0
    %4334 = vmatprep.subr.mxu0 0.0
    %4335 = vmatpush1.msra.mxu0 0.0
    %4336 = vmatprep.subr.mxu0 0.0
    %4337 = vmatpush1.msra.mxu0 0.0
    %4338 = vmatprep.subr.mxu0 0.0
    %4339 = vmatpush1.msra.mxu0 0.0
    %4340 = vmatprep.subr.mxu0 0.0
    %4341 = vmatpush1.msra.mxu0 0.0
    %4342 = vmatprep.subr.mxu0 0.0
    %4343 = vmatpush1.msra.mxu0 0.0
    %4344 = vmatprep.subr.mxu0 0.0
    %4345 = vmatpush1.msra.mxu0 0.0
    %4346 = vmatprep.subr.mxu0 0.0
    %4347 = vmatpush1.msra.mxu0 0.0
    %4348 = vmatprep.subr.mxu0 0.0
    %4349 = vmatpush1.msra.mxu0 0.0
    %4350 = vmatprep.subr.mxu0 0.0
    %4351 = vmatpush1.msra.mxu0 0.0
    %4352 = vmatprep.subr.mxu0 0.0
    %4353 = vmatpush1.msra.mxu0 0.0
    %4354 = vmatprep.subr.mxu0 0.0
    %4355 = vmatpush1.msra.mxu0 0.0
    %4356 = vmatprep.subr.mxu0 0.0
    %4357 = vmatpush1.msra.mxu0 0.0
    %4358 = vmatprep.subr.mxu0 0.0
    %4359 = vmatpush1.msra.mxu0 0.0
    %4360 = vmatprep.subr.mxu0 0.0
    %4361 = vmatpush1.msra.mxu0 0.0
    %4362 = vmatprep.subr.mxu0 0.0
    %4363 = vmatpush1.msra.mxu0 0.0
    %4364 = vmatprep.subr.mxu0 0.0
    %4365 = vmatpush1.msra.mxu0 0.0
    %4366 = vmatprep.subr.mxu0 0.0
    %4367 = vmatpush1.msra.mxu0 0.0
    %4368 = vmatprep.mubr.f32.mxu0 0.0
    %4369 = vmatmul.mubr.f32.gmra.mrb[0].mxu0 %v4137
    %v4370 = vpop.f32.mrb[0].mxu0
    %v4371 = vadd.f32 %v4303, %v4370
    %v4372 = vpop.f32.mrb[0].mxu0
    %4373 = vmatprep.mubr.f32.mxu0 0.0
    %4374 = vmatmul.mubr.f32.gmra.mrb[0].mxu0 %v4140
    %v4375 = vpop.f32.mrb[0].mxu0
    %v4376 = vadd.f32 %v4303, %v4375
    %v4377 = vpop.f32.mrb[0].mxu0
    %4378 = vdwg.mxu0
    %s4379 = scalar_lea.vmem %s3, 32
    %v4380 = vld [vmem:[%s4379] sm:$0xff]
    %v4381 = vld [vmem:[%s4379 + $0x8] sm:$0xff]
    %v4382 = vld [vmem:[%s4379 + $0x10] sm:$0xff]
    %v4383 = vld [vmem:[%s4379 + $0x18] sm:$0xff]
    %v4385 = vsel %vm378, %v4209, 0
    %v4388 = vsel %vm378, %v4290, 0
    %4390 = vmatprep.subr.mxu0 0.0
    %4391 = vmatpush1.xpose.msra.mxu0 %v4388
    %4392 = vmatprep.subr.mxu0 0.0
    %4393 = vmatpush1.xpose.msra.mxu0 0.0
    %4394 = vmatprep.subr.mxu0 0.0
    %4395 = vmatpush1.xpose.msra.mxu0 0.0
    %4396 = vmatprep.subr.mxu0 0.0
    %4397 = vmatpush1.xpose.msra.mxu0 0.0
    %4398 = vmatprep.subr.mxu0 0.0
    %4399 = vmatpush1.xpose.msra.mxu0 0.0
    %4400 = vmatprep.subr.mxu0 0.0
    %4401 = vmatpush1.xpose.msra.mxu0 0.0
    %4402 = vmatprep.subr.mxu0 0.0
    %4403 = vmatpush1.xpose.msra.mxu0 0.0
    %4404 = vmatprep.subr.mxu0 0.0
    %4405 = vmatpush1.xpose.msra.mxu0 0.0
    %4406 = vmatprep.subr.mxu0 0.0
    %4407 = vmatpush1.xpose.msra.mxu0 0.0
    %4408 = vmatprep.subr.mxu0 0.0
    %4409 = vmatpush1.xpose.msra.mxu0 0.0
    %4410 = vmatprep.subr.mxu0 0.0
    %4411 = vmatpush1.xpose.msra.mxu0 0.0
    %4412 = vmatprep.subr.mxu0 0.0
    %4413 = vmatpush1.xpose.msra.mxu0 0.0
    %4414 = vmatprep.subr.mxu0 0.0
    %4415 = vmatpush1.xpose.msra.mxu0 0.0
    %4416 = vmatprep.subr.mxu0 0.0
    %4417 = vmatpush1.xpose.msra.mxu0 0.0
    %4418 = vmatprep.subr.mxu0 0.0
    %4419 = vmatpush1.xpose.msra.mxu0 0.0
    %4420 = vmatprep.subr.mxu0 0.0
    %4421 = vmatpush1.xpose.msra.mxu0 0.0
    %4422 = vmatprep.subr.mxu0 0.0
    %4423 = vmatpush1.xpose.msra.mxu0 0.0
    %4424 = vmatprep.subr.mxu0 0.0
    %4425 = vmatpush1.xpose.msra.mxu0 0.0
    %4426 = vmatprep.subr.mxu0 0.0
    %4427 = vmatpush1.xpose.msra.mxu0 0.0
    %4428 = vmatprep.subr.mxu0 0.0
    %4429 = vmatpush1.xpose.msra.mxu0 0.0
    %4430 = vmatprep.subr.mxu0 0.0
    %4431 = vmatpush1.xpose.msra.mxu0 0.0
    %4432 = vmatprep.subr.mxu0 0.0
    %4433 = vmatpush1.xpose.msra.mxu0 0.0
    %4434 = vmatprep.subr.mxu0 0.0
    %4435 = vmatpush1.xpose.msra.mxu0 0.0
    %4436 = vmatprep.subr.mxu0 0.0
    %4437 = vmatpush1.xpose.msra.mxu0 0.0
    %4438 = vmatprep.subr.mxu0 0.0
    %4439 = vmatpush1.xpose.msra.mxu0 0.0
    %4440 = vmatprep.subr.mxu0 0.0
    %4441 = vmatpush1.xpose.msra.mxu0 0.0
    %4442 = vmatprep.subr.mxu0 0.0
    %4443 = vmatpush1.xpose.msra.mxu0 0.0
    %4444 = vmatprep.subr.mxu0 0.0
    %4445 = vmatpush1.xpose.msra.mxu0 0.0
    %4446 = vmatprep.subr.mxu0 0.0
    %4447 = vmatpush1.xpose.msra.mxu0 0.0
    %4448 = vmatprep.subr.mxu0 0.0
    %4449 = vmatpush1.xpose.msra.mxu0 0.0
    %4450 = vmatprep.subr.mxu0 0.0
    %4451 = vmatpush1.xpose.msra.mxu0 0.0
    %4452 = vmatprep.subr.mxu0 0.0
    %4453 = vmatpush1.xpose.msra.mxu0 0.0
    %4454 = vmatprep.mubr.f32.mxu0 0.0
    %4455 = vmatmul.mubr.f32.gmra.mrb[0].mxu0 %v4385
    %v4456 = vpop.f32.mrb[0].mxu0
    %v4457 = vadd.f32 0.0, %v4456
    %v4458 = vpop.f32.mrb[0].mxu0
    %4459 = vdwg.mxu0
    %v4461 = vsel %vm378, %v4214, 0
    %v4464 = vsel %vm378, %v4295, 0
    %4466 = vmatprep.subr.mxu0 0.0
    %4467 = vmatpush1.xpose.msra.mxu0 %v4464
    %4468 = vmatprep.subr.mxu0 0.0
    %4469 = vmatpush1.xpose.msra.mxu0 0.0
    %4470 = vmatprep.subr.mxu0 0.0
    %4471 = vmatpush1.xpose.msra.mxu0 0.0
    %4472 = vmatprep.subr.mxu0 0.0
    %4473 = vmatpush1.xpose.msra.mxu0 0.0
    %4474 = vmatprep.subr.mxu0 0.0
    %4475 = vmatpush1.xpose.msra.mxu0 0.0
    %4476 = vmatprep.subr.mxu0 0.0
    %4477 = vmatpush1.xpose.msra.mxu0 0.0
    %4478 = vmatprep.subr.mxu0 0.0
    %4479 = vmatpush1.xpose.msra.mxu0 0.0
    %4480 = vmatprep.subr.mxu0 0.0
    %4481 = vmatpush1.xpose.msra.mxu0 0.0
    %4482 = vmatprep.subr.mxu0 0.0
    %4483 = vmatpush1.xpose.msra.mxu0 0.0
    %4484 = vmatprep.subr.mxu0 0.0
    %4485 = vmatpush1.xpose.msra.mxu0 0.0
    %4486 = vmatprep.subr.mxu0 0.0
    %4487 = vmatpush1.xpose.msra.mxu0 0.0
    %4488 = vmatprep.subr.mxu0 0.0
    %4489 = vmatpush1.xpose.msra.mxu0 0.0
    %4490 = vmatprep.subr.mxu0 0.0
    %4491 = vmatpush1.xpose.msra.mxu0 0.0
    %4492 = vmatprep.subr.mxu0 0.0
    %4493 = vmatpush1.xpose.msra.mxu0 0.0
    %4494 = vmatprep.subr.mxu0 0.0
    %4495 = vmatpush1.xpose.msra.mxu0 0.0
    %4496 = vmatprep.subr.mxu0 0.0
    %4497 = vmatpush1.xpose.msra.mxu0 0.0
    %4498 = vmatprep.subr.mxu0 0.0
    %4499 = vmatpush1.xpose.msra.mxu0 0.0
    %4500 = vmatprep.subr.mxu0 0.0
    %4501 = vmatpush1.xpose.msra.mxu0 0.0
    %4502 = vmatprep.subr.mxu0 0.0
    %4503 = vmatpush1.xpose.msra.mxu0 0.0
    %4504 = vmatprep.subr.mxu0 0.0
    %4505 = vmatpush1.xpose.msra.mxu0 0.0
    %4506 = vmatprep.subr.mxu0 0.0
    %4507 = vmatpush1.xpose.msra.mxu0 0.0
    %4508 = vmatprep.subr.mxu0 0.0
    %4509 = vmatpush1.xpose.msra.mxu0 0.0
    %4510 = vmatprep.subr.mxu0 0.0
    %4511 = vmatpush1.xpose.msra.mxu0 0.0
    %4512 = vmatprep.subr.mxu0 0.0
    %4513 = vmatpush1.xpose.msra.mxu0 0.0
    %4514 = vmatprep.subr.mxu0 0.0
    %4515 = vmatpush1.xpose.msra.mxu0 0.0
    %4516 = vmatprep.subr.mxu0 0.0
    %4517 = vmatpush1.xpose.msra.mxu0 0.0
    %4518 = vmatprep.subr.mxu0 0.0
    %4519 = vmatpush1.xpose.msra.mxu0 0.0
    %4520 = vmatprep.subr.mxu0 0.0
    %4521 = vmatpush1.xpose.msra.mxu0 0.0
    %4522 = vmatprep.subr.mxu0 0.0
    %4523 = vmatpush1.xpose.msra.mxu0 0.0
    %4524 = vmatprep.subr.mxu0 0.0
    %4525 = vmatpush1.xpose.msra.mxu0 0.0
    %4526 = vmatprep.subr.mxu0 0.0
    %4527 = vmatpush1.xpose.msra.mxu0 0.0
    %4528 = vmatprep.subr.mxu0 0.0
    %4529 = vmatpush1.xpose.msra.mxu0 0.0
    %4530 = vmatprep.mubr.f32.mxu0 0.0
    %4531 = vmatmul.mubr.f32.gmra.mrb[0].mxu0 %v4461
    %v4532 = vpop.f32.mrb[0].mxu0
    %v4533 = vadd.f32 0.0, %v4532
    %v4534 = vpop.f32.mrb[0].mxu0
    %4535 = vdwg.mxu0
    %v4536 = vsel %vm378, %v4457, -inf
    %4537 = vmax.xlane.f32.xlu0 %v4536
    %v4538 = vpop.xlane.xlu0 %4537
    %v4539 = vsel %vm378, %v4533, -inf
    %4540 = vmax.xlane.f32.xlu0 %v4539
    %v4541 = vpop.xlane.xlu0 %4540
    %v4542 = vsub.f32 %v4457, %v4538
    %v4543 = vsub.f32 %v4533, %v4541
    %v4544 = vmul.f32 %v4542, 1.442695
    %v4545 = vpow.pop %v4544
    %v4546 = vmul.f32 %v4543, 1.442695
    %v4547 = vpow.pop %v4546
    %v4548 = vsel %vm378, %v4545, 0.0
    %4549 = vadd.xlane.f32.xlu0 %v4548
    %v4550 = vpop.xlane.xlu0 %4549
    %v4551 = vsel %vm378, %v4547, 0.0
    %4552 = vadd.xlane.f32.xlu0 %v4551
    %v4553 = vpop.xlane.xlu0 %4552
    %v4554 = vrcp.pop %v4550
    %v4555 = vrcp.pop %v4553
    %v4556 = vmul.f32 %v4545, %v4554
    %v4557 = vmul.f32 %v4547, %v4555
    %v4559 = vsel %vm378, %v4556, 0
    %4561 = vmatprep.subr.mxu0 0.0
    %4562 = vmatpush1.msra.mxu0 %v4371
    %4563 = vmatprep.subr.mxu0 0.0
    %4564 = vmatpush1.msra.mxu0 0.0
    %4565 = vmatprep.subr.mxu0 0.0
    %4566 = vmatpush1.msra.mxu0 0.0
    %4567 = vmatprep.subr.mxu0 0.0
    %4568 = vmatpush1.msra.mxu0 0.0
    %4569 = vmatprep.subr.mxu0 0.0
    %4570 = vmatpush1.msra.mxu0 0.0
    %4571 = vmatprep.subr.mxu0 0.0
    %4572 = vmatpush1.msra.mxu0 0.0
    %4573 = vmatprep.subr.mxu0 0.0
    %4574 = vmatpush1.msra.mxu0 0.0
    %4575 = vmatprep.subr.mxu0 0.0
    %4576 = vmatpush1.msra.mxu0 0.0
    %4577 = vmatprep.subr.mxu0 0.0
    %4578 = vmatpush1.msra.mxu0 0.0
    %4579 = vmatprep.subr.mxu0 0.0
    %4580 = vmatpush1.msra.mxu0 0.0
    %4581 = vmatprep.subr.mxu0 0.0
    %4582 = vmatpush1.msra.mxu0 0.0
    %4583 = vmatprep.subr.mxu0 0.0
    %4584 = vmatpush1.msra.mxu0 0.0
    %4585 = vmatprep.subr.mxu0 0.0
    %4586 = vmatpush1.msra.mxu0 0.0
    %4587 = vmatprep.subr.mxu0 0.0
    %4588 = vmatpush1.msra.mxu0 0.0
    %4589 = vmatprep.subr.mxu0 0.0
    %4590 = vmatpush1.msra.mxu0 0.0
    %4591 = vmatprep.subr.mxu0 0.0
    %4592 = vmatpush1.msra.mxu0 0.0
    %4593 = vmatprep.subr.mxu0 0.0
    %4594 = vmatpush1.msra.mxu0 0.0
    %4595 = vmatprep.subr.mxu0 0.0
    %4596 = vmatpush1.msra.mxu0 0.0
    %4597 = vmatprep.subr.mxu0 0.0
    %4598 = vmatpush1.msra.mxu0 0.0
    %4599 = vmatprep.subr.mxu0 0.0
    %4600 = vmatpush1.msra.mxu0 0.0
    %4601 = vmatprep.subr.mxu0 0.0
    %4602 = vmatpush1.msra.mxu0 0.0
    %4603 = vmatprep.subr.mxu0 0.0
    %4604 = vmatpush1.msra.mxu0 0.0
    %4605 = vmatprep.subr.mxu0 0.0
    %4606 = vmatpush1.msra.mxu0 0.0
    %4607 = vmatprep.subr.mxu0 0.0
    %4608 = vmatpush1.msra.mxu0 0.0
    %4609 = vmatprep.subr.mxu0 0.0
    %4610 = vmatpush1.msra.mxu0 0.0
    %4611 = vmatprep.subr.mxu0 0.0
    %4612 = vmatpush1.msra.mxu0 0.0
    %4613 = vmatprep.subr.mxu0 0.0
    %4614 = vmatpush1.msra.mxu0 0.0
    %4615 = vmatprep.subr.mxu0 0.0
    %4616 = vmatpush1.msra.mxu0 0.0
    %4617 = vmatprep.subr.mxu0 0.0
    %4618 = vmatpush1.msra.mxu0 0.0
    %4619 = vmatprep.subr.mxu0 0.0
    %4620 = vmatpush1.msra.mxu0 0.0
    %4621 = vmatprep.subr.mxu0 0.0
    %4622 = vmatpush1.msra.mxu0 0.0
    %4623 = vmatprep.subr.mxu0 0.0
    %4624 = vmatpush1.msra.mxu0 0.0
    %4625 = vmatprep.mubr.f32.mxu0 0.0
    %4626 = vmatmul.mubr.f32.gmra.mrb[0].mxu0 %v4559
    %v4627 = vpop.f32.mrb[0].mxu0
    %v4628 = vadd.f32 0.0, %v4627
    %v4629 = vpop.f32.mrb[0].mxu0
    %4630 = vdwg.mxu0
    %v4632 = vsel %vm378, %v4557, 0
    %4634 = vmatprep.subr.mxu0 0.0
    %4635 = vmatpush1.msra.mxu0 %v4376
    %4636 = vmatprep.subr.mxu0 0.0
    %4637 = vmatpush1.msra.mxu0 0.0
    %4638 = vmatprep.subr.mxu0 0.0
    %4639 = vmatpush1.msra.mxu0 0.0
    %4640 = vmatprep.subr.mxu0 0.0
    %4641 = vmatpush1.msra.mxu0 0.0
    %4642 = vmatprep.subr.mxu0 0.0
    %4643 = vmatpush1.msra.mxu0 0.0
    %4644 = vmatprep.subr.mxu0 0.0
    %4645 = vmatpush1.msra.mxu0 0.0
    %4646 = vmatprep.subr.mxu0 0.0
    %4647 = vmatpush1.msra.mxu0 0.0
    %4648 = vmatprep.subr.mxu0 0.0
    %4649 = vmatpush1.msra.mxu0 0.0
    %4650 = vmatprep.subr.mxu0 0.0
    %4651 = vmatpush1.msra.mxu0 0.0
    %4652 = vmatprep.subr.mxu0 0.0
    %4653 = vmatpush1.msra.mxu0 0.0
    %4654 = vmatprep.subr.mxu0 0.0
    %4655 = vmatpush1.msra.mxu0 0.0
    %4656 = vmatprep.subr.mxu0 0.0
    %4657 = vmatpush1.msra.mxu0 0.0
    %4658 = vmatprep.subr.mxu0 0.0
    %4659 = vmatpush1.msra.mxu0 0.0
    %4660 = vmatprep.subr.mxu0 0.0
    %4661 = vmatpush1.msra.mxu0 0.0
    %4662 = vmatprep.subr.mxu0 0.0
    %4663 = vmatpush1.msra.mxu0 0.0
    %4664 = vmatprep.subr.mxu0 0.0
    %4665 = vmatpush1.msra.mxu0 0.0
    %4666 = vmatprep.subr.mxu0 0.0
    %4667 = vmatpush1.msra.mxu0 0.0
    %4668 = vmatprep.subr.mxu0 0.0
    %4669 = vmatpush1.msra.mxu0 0.0
    %4670 = vmatprep.subr.mxu0 0.0
    %4671 = vmatpush1.msra.mxu0 0.0
    %4672 = vmatprep.subr.mxu0 0.0
    %4673 = vmatpush1.msra.mxu0 0.0
    %4674 = vmatprep.subr.mxu0 0.0
    %4675 = vmatpush1.msra.mxu0 0.0
    %4676 = vmatprep.subr.mxu0 0.0
    %4677 = vmatpush1.msra.mxu0 0.0
    %4678 = vmatprep.subr.mxu0 0.0
    %4679 = vmatpush1.msra.mxu0 0.0
    %4680 = vmatprep.subr.mxu0 0.0
    %4681 = vmatpush1.msra.mxu0 0.0
    %4682 = vmatprep.subr.mxu0 0.0
    %4683 = vmatpush1.msra.mxu0 0.0
    %4684 = vmatprep.subr.mxu0 0.0
    %4685 = vmatpush1.msra.mxu0 0.0
    %4686 = vmatprep.subr.mxu0 0.0
    %4687 = vmatpush1.msra.mxu0 0.0
    %4688 = vmatprep.subr.mxu0 0.0
    %4689 = vmatpush1.msra.mxu0 0.0
    %4690 = vmatprep.subr.mxu0 0.0
    %4691 = vmatpush1.msra.mxu0 0.0
    %4692 = vmatprep.subr.mxu0 0.0
    %4693 = vmatpush1.msra.mxu0 0.0
    %4694 = vmatprep.subr.mxu0 0.0
    %4695 = vmatpush1.msra.mxu0 0.0
    %4696 = vmatprep.subr.mxu0 0.0
    %4697 = vmatpush1.msra.mxu0 0.0
    %4698 = vmatprep.mubr.f32.mxu0 0.0
    %4699 = vmatmul.mubr.f32.gmra.mrb[0].mxu0 %v4632
    %v4700 = vpop.f32.mrb[0].mxu0
    %v4701 = vadd.f32 0.0, %v4700
    %v4702 = vpop.f32.mrb[0].mxu0
    %4703 = vdwg.mxu0
    %4704 = vrot.lane.b32.xlu0 %v4209, 120
    %v4705 = vpop.permute.xlu0 %4704
    %4706 = vrot.lane.b32.xlu0 %v4290, 120
    %v4707 = vpop.permute.xlu0 %4706
    %v4708 = vsel %vm378, %v4705, 0
    %v4710 = vsel %vm378, %v4707, 0
    %4712 = vmatprep.subr.mxu0 0.0
    %4713 = vmatpush1.xpose.msra.mxu0 %v4710
    %4714 = vmatprep.subr.mxu0 0.0
    %4715 = vmatpush1.xpose.msra.mxu0 0.0
    %4716 = vmatprep.subr.mxu0 0.0
    %4717 = vmatpush1.xpose.msra.mxu0 0.0
    %4718 = vmatprep.subr.mxu0 0.0
    %4719 = vmatpush1.xpose.msra.mxu0 0.0
    %4720 = vmatprep.subr.mxu0 0.0
    %4721 = vmatpush1.xpose.msra.mxu0 0.0
    %4722 = vmatprep.subr.mxu0 0.0
    %4723 = vmatpush1.xpose.msra.mxu0 0.0
    %4724 = vmatprep.subr.mxu0 0.0
    %4725 = vmatpush1.xpose.msra.mxu0 0.0
    %4726 = vmatprep.subr.mxu0 0.0
    %4727 = vmatpush1.xpose.msra.mxu0 0.0
    %4728 = vmatprep.subr.mxu0 0.0
    %4729 = vmatpush1.xpose.msra.mxu0 0.0
    %4730 = vmatprep.subr.mxu0 0.0
    %4731 = vmatpush1.xpose.msra.mxu0 0.0
    %4732 = vmatprep.subr.mxu0 0.0
    %4733 = vmatpush1.xpose.msra.mxu0 0.0
    %4734 = vmatprep.subr.mxu0 0.0
    %4735 = vmatpush1.xpose.msra.mxu0 0.0
    %4736 = vmatprep.subr.mxu0 0.0
    %4737 = vmatpush1.xpose.msra.mxu0 0.0
    %4738 = vmatprep.subr.mxu0 0.0
    %4739 = vmatpush1.xpose.msra.mxu0 0.0
    %4740 = vmatprep.subr.mxu0 0.0
    %4741 = vmatpush1.xpose.msra.mxu0 0.0
    %4742 = vmatprep.subr.mxu0 0.0
    %4743 = vmatpush1.xpose.msra.mxu0 0.0
    %4744 = vmatprep.subr.mxu0 0.0
    %4745 = vmatpush1.xpose.msra.mxu0 0.0
    %4746 = vmatprep.subr.mxu0 0.0
    %4747 = vmatpush1.xpose.msra.mxu0 0.0
    %4748 = vmatprep.subr.mxu0 0.0
    %4749 = vmatpush1.xpose.msra.mxu0 0.0
    %4750 = vmatprep.subr.mxu0 0.0
    %4751 = vmatpush1.xpose.msra.mxu0 0.0
    %4752 = vmatprep.subr.mxu0 0.0
    %4753 = vmatpush1.xpose.msra.mxu0 0.0
    %4754 = vmatprep.subr.mxu0 0.0
    %4755 = vmatpush1.xpose.msra.mxu0 0.0
    %4756 = vmatprep.subr.mxu0 0.0
    %4757 = vmatpush1.xpose.msra.mxu0 0.0
    %4758 = vmatprep.subr.mxu0 0.0
    %4759 = vmatpush1.xpose.msra.mxu0 0.0
    %4760 = vmatprep.subr.mxu0 0.0
    %4761 = vmatpush1.xpose.msra.mxu0 0.0
    %4762 = vmatprep.subr.mxu0 0.0
    %4763 = vmatpush1.xpose.msra.mxu0 0.0
    %4764 = vmatprep.subr.mxu0 0.0
    %4765 = vmatpush1.xpose.msra.mxu0 0.0
    %4766 = vmatprep.subr.mxu0 0.0
    %4767 = vmatpush1.xpose.msra.mxu0 0.0
    %4768 = vmatprep.subr.mxu0 0.0
    %4769 = vmatpush1.xpose.msra.mxu0 0.0
    %4770 = vmatprep.subr.mxu0 0.0
    %4771 = vmatpush1.xpose.msra.mxu0 0.0
    %4772 = vmatprep.subr.mxu0 0.0
    %4773 = vmatpush1.xpose.msra.mxu0 0.0
    %4774 = vmatprep.subr.mxu0 0.0
    %4775 = vmatpush1.xpose.msra.mxu0 0.0
    %4776 = vmatprep.mubr.f32.mxu0 0.0
    %4777 = vmatmul.mubr.f32.gmra.mrb[0].mxu0 %v4708
    %v4778 = vpop.f32.mrb[0].mxu0
    %v4779 = vadd.f32 0.0, %v4778
    %v4780 = vpop.f32.mrb[0].mxu0
    %4781 = vdwg.mxu0
    %4782 = vrot.lane.b32.xlu0 %v4214, 120
    %v4783 = vpop.permute.xlu0 %4782
    %4784 = vrot.lane.b32.xlu0 %v4295, 120
    %v4785 = vpop.permute.xlu0 %4784
    %v4786 = vsel %vm378, %v4783, 0
    %v4788 = vsel %vm378, %v4785, 0
    %4790 = vmatprep.subr.mxu0 0.0
    %4791 = vmatpush1.xpose.msra.mxu0 %v4788
    %4792 = vmatprep.subr.mxu0 0.0
    %4793 = vmatpush1.xpose.msra.mxu0 0.0
    %4794 = vmatprep.subr.mxu0 0.0
    %4795 = vmatpush1.xpose.msra.mxu0 0.0
    %4796 = vmatprep.subr.mxu0 0.0
    %4797 = vmatpush1.xpose.msra.mxu0 0.0
    %4798 = vmatprep.subr.mxu0 0.0
    %4799 = vmatpush1.xpose.msra.mxu0 0.0
    %4800 = vmatprep.subr.mxu0 0.0
    %4801 = vmatpush1.xpose.msra.mxu0 0.0
    %4802 = vmatprep.subr.mxu0 0.0
    %4803 = vmatpush1.xpose.msra.mxu0 0.0
    %4804 = vmatprep.subr.mxu0 0.0
    %4805 = vmatpush1.xpose.msra.mxu0 0.0
    %4806 = vmatprep.subr.mxu0 0.0
    %4807 = vmatpush1.xpose.msra.mxu0 0.0
    %4808 = vmatprep.subr.mxu0 0.0
    %4809 = vmatpush1.xpose.msra.mxu0 0.0
    %4810 = vmatprep.subr.mxu0 0.0
    %4811 = vmatpush1.xpose.msra.mxu0 0.0
    %4812 = vmatprep.subr.mxu0 0.0
    %4813 = vmatpush1.xpose.msra.mxu0 0.0
    %4814 = vmatprep.subr.mxu0 0.0
    %4815 = vmatpush1.xpose.msra.mxu0 0.0
    %4816 = vmatprep.subr.mxu0 0.0
    %4817 = vmatpush1.xpose.msra.mxu0 0.0
    %4818 = vmatprep.subr.mxu0 0.0
    %4819 = vmatpush1.xpose.msra.mxu0 0.0
    %4820 = vmatprep.subr.mxu0 0.0
    %4821 = vmatpush1.xpose.msra.mxu0 0.0
    %4822 = vmatprep.subr.mxu0 0.0
    %4823 = vmatpush1.xpose.msra.mxu0 0.0
    %4824 = vmatprep.subr.mxu0 0.0
    %4825 = vmatpush1.xpose.msra.mxu0 0.0
    %4826 = vmatprep.subr.mxu0 0.0
    %4827 = vmatpush1.xpose.msra.mxu0 0.0
    %4828 = vmatprep.subr.mxu0 0.0
    %4829 = vmatpush1.xpose.msra.mxu0 0.0
    %4830 = vmatprep.subr.mxu0 0.0
    %4831 = vmatpush1.xpose.msra.mxu0 0.0
    %4832 = vmatprep.subr.mxu0 0.0
    %4833 = vmatpush1.xpose.msra.mxu0 0.0
    %4834 = vmatprep.subr.mxu0 0.0
    %4835 = vmatpush1.xpose.msra.mxu0 0.0
    %4836 = vmatprep.subr.mxu0 0.0
    %4837 = vmatpush1.xpose.msra.mxu0 0.0
    %4838 = vmatprep.subr.mxu0 0.0
    %4839 = vmatpush1.xpose.msra.mxu0 0.0
    %4840 = vmatprep.subr.mxu0 0.0
    %4841 = vmatpush1.xpose.msra.mxu0 0.0
    %4842 = vmatprep.subr.mxu0 0.0
    %4843 = vmatpush1.xpose.msra.mxu0 0.0
    %4844 = vmatprep.subr.mxu0 0.0
    %4845 = vmatpush1.xpose.msra.mxu0 0.0
    %4846 = vmatprep.subr.mxu0 0.0
    %4847 = vmatpush1.xpose.msra.mxu0 0.0
    %4848 = vmatprep.subr.mxu0 0.0
    %4849 = vmatpush1.xpose.msra.mxu0 0.0
    %4850 = vmatprep.subr.mxu0 0.0
    %4851 = vmatpush1.xpose.msra.mxu0 0.0
    %4852 = vmatprep.subr.mxu0 0.0
    %4853 = vmatpush1.xpose.msra.mxu0 0.0
    %4854 = vmatprep.mubr.f32.mxu0 0.0
    %4855 = vmatmul.mubr.f32.gmra.mrb[0].mxu0 %v4786
    %v4856 = vpop.f32.mrb[0].mxu0
    %v4857 = vadd.f32 0.0, %v4856
    %v4858 = vpop.f32.mrb[0].mxu0
    %4859 = vdwg.mxu0
    %v4860 = vsel %vm378, %v4779, -inf
    %4861 = vmax.xlane.f32.xlu0 %v4860
    %v4862 = vpop.xlane.xlu0 %4861
    %v4863 = vsel %vm378, %v4857, -inf
    %4864 = vmax.xlane.f32.xlu0 %v4863
    %v4865 = vpop.xlane.xlu0 %4864
    %v4866 = vsub.f32 %v4779, %v4862
    %v4867 = vsub.f32 %v4857, %v4865
    %v4868 = vmul.f32 %v4866, 1.442695
    %v4869 = vpow.pop %v4868
    %v4870 = vmul.f32 %v4867, 1.442695
    %v4871 = vpow.pop %v4870
    %v4872 = vsel %vm378, %v4869, 0.0
    %4873 = vadd.xlane.f32.xlu0 %v4872
    %v4874 = vpop.xlane.xlu0 %4873
    %v4875 = vsel %vm378, %v4871, 0.0
    %4876 = vadd.xlane.f32.xlu0 %v4875
    %v4877 = vpop.xlane.xlu0 %4876
    %v4878 = vrcp.pop %v4874
    %v4879 = vrcp.pop %v4877
    %v4880 = vmul.f32 %v4869, %v4878
    %v4881 = vmul.f32 %v4871, %v4879
    %4883 = vrot.lane.b32.xlu0 %v4371, 120
    %v4884 = vpop.permute.xlu0 %4883
    %v4887 = vsel %vm378, %v4880, 0
    %4889 = vmatprep.subr.mxu0 0.0
    %4890 = vmatpush1.msra.mxu0 %v4884
    %4891 = vmatprep.subr.mxu0 0.0
    %4892 = vmatpush1.msra.mxu0 0.0
    %4893 = vmatprep.subr.mxu0 0.0
    %4894 = vmatpush1.msra.mxu0 0.0
    %4895 = vmatprep.subr.mxu0 0.0
    %4896 = vmatpush1.msra.mxu0 0.0
    %4897 = vmatprep.subr.mxu0 0.0
    %4898 = vmatpush1.msra.mxu0 0.0
    %4899 = vmatprep.subr.mxu0 0.0
    %4900 = vmatpush1.msra.mxu0 0.0
    %4901 = vmatprep.subr.mxu0 0.0
    %4902 = vmatpush1.msra.mxu0 0.0
    %4903 = vmatprep.subr.mxu0 0.0
    %4904 = vmatpush1.msra.mxu0 0.0
    %4905 = vmatprep.subr.mxu0 0.0
    %4906 = vmatpush1.msra.mxu0 0.0
    %4907 = vmatprep.subr.mxu0 0.0
    %4908 = vmatpush1.msra.mxu0 0.0
    %4909 = vmatprep.subr.mxu0 0.0
    %4910 = vmatpush1.msra.mxu0 0.0
    %4911 = vmatprep.subr.mxu0 0.0
    %4912 = vmatpush1.msra.mxu0 0.0
    %4913 = vmatprep.subr.mxu0 0.0
    %4914 = vmatpush1.msra.mxu0 0.0
    %4915 = vmatprep.subr.mxu0 0.0
    %4916 = vmatpush1.msra.mxu0 0.0
    %4917 = vmatprep.subr.mxu0 0.0
    %4918 = vmatpush1.msra.mxu0 0.0
    %4919 = vmatprep.subr.mxu0 0.0
    %4920 = vmatpush1.msra.mxu0 0.0
    %4921 = vmatprep.subr.mxu0 0.0
    %4922 = vmatpush1.msra.mxu0 0.0
    %4923 = vmatprep.subr.mxu0 0.0
    %4924 = vmatpush1.msra.mxu0 0.0
    %4925 = vmatprep.subr.mxu0 0.0
    %4926 = vmatpush1.msra.mxu0 0.0
    %4927 = vmatprep.subr.mxu0 0.0
    %4928 = vmatpush1.msra.mxu0 0.0
    %4929 = vmatprep.subr.mxu0 0.0
    %4930 = vmatpush1.msra.mxu0 0.0
    %4931 = vmatprep.subr.mxu0 0.0
    %4932 = vmatpush1.msra.mxu0 0.0
    %4933 = vmatprep.subr.mxu0 0.0
    %4934 = vmatpush1.msra.mxu0 0.0
    %4935 = vmatprep.subr.mxu0 0.0
    %4936 = vmatpush1.msra.mxu0 0.0
    %4937 = vmatprep.subr.mxu0 0.0
    %4938 = vmatpush1.msra.mxu0 0.0
    %4939 = vmatprep.subr.mxu0 0.0
    %4940 = vmatpush1.msra.mxu0 0.0
    %4941 = vmatprep.subr.mxu0 0.0
    %4942 = vmatpush1.msra.mxu0 0.0
    %4943 = vmatprep.subr.mxu0 0.0
    %4944 = vmatpush1.msra.mxu0 0.0
    %4945 = vmatprep.subr.mxu0 0.0
    %4946 = vmatpush1.msra.mxu0 0.0
    %4947 = vmatprep.subr.mxu0 0.0
    %4948 = vmatpush1.msra.mxu0 0.0
    %4949 = vmatprep.subr.mxu0 0.0
    %4950 = vmatpush1.msra.mxu0 0.0
    %4951 = vmatprep.subr.mxu0 0.0
    %4952 = vmatpush1.msra.mxu0 0.0
    %4953 = vmatprep.mubr.f32.mxu0 0.0
    %4954 = vmatmul.mubr.f32.gmra.mrb[0].mxu0 %v4887
    %v4955 = vpop.f32.mrb[0].mxu0
    %v4956 = vadd.f32 0.0, %v4955
    %v4957 = vpop.f32.mrb[0].mxu0
    %4958 = vdwg.mxu0
    %4960 = vrot.lane.b32.xlu0 %v4376, 120
    %v4961 = vpop.permute.xlu0 %4960
    %v4964 = vsel %vm378, %v4881, 0
    %4966 = vmatprep.subr.mxu0 0.0
    %4967 = vmatpush1.msra.mxu0 %v4961
    %4968 = vmatprep.subr.mxu0 0.0
    %4969 = vmatpush1.msra.mxu0 0.0
    %4970 = vmatprep.subr.mxu0 0.0
    %4971 = vmatpush1.msra.mxu0 0.0
    %4972 = vmatprep.subr.mxu0 0.0
    %4973 = vmatpush1.msra.mxu0 0.0
    %4974 = vmatprep.subr.mxu0 0.0
    %4975 = vmatpush1.msra.mxu0 0.0
    %4976 = vmatprep.subr.mxu0 0.0
    %4977 = vmatpush1.msra.mxu0 0.0
    %4978 = vmatprep.subr.mxu0 0.0
    %4979 = vmatpush1.msra.mxu0 0.0
    %4980 = vmatprep.subr.mxu0 0.0
    %4981 = vmatpush1.msra.mxu0 0.0
    %4982 = vmatprep.subr.mxu0 0.0
    %4983 = vmatpush1.msra.mxu0 0.0
    %4984 = vmatprep.subr.mxu0 0.0
    %4985 = vmatpush1.msra.mxu0 0.0
    %4986 = vmatprep.subr.mxu0 0.0
    %4987 = vmatpush1.msra.mxu0 0.0
    %4988 = vmatprep.subr.mxu0 0.0
    %4989 = vmatpush1.msra.mxu0 0.0
    %4990 = vmatprep.subr.mxu0 0.0
    %4991 = vmatpush1.msra.mxu0 0.0
    %4992 = vmatprep.subr.mxu0 0.0
    %4993 = vmatpush1.msra.mxu0 0.0
    %4994 = vmatprep.subr.mxu0 0.0
    %4995 = vmatpush1.msra.mxu0 0.0
    %4996 = vmatprep.subr.mxu0 0.0
    %4997 = vmatpush1.msra.mxu0 0.0
    %4998 = vmatprep.subr.mxu0 0.0
    %4999 = vmatpush1.msra.mxu0 0.0
    %5000 = vmatprep.subr.mxu0 0.0
    %5001 = vmatpush1.msra.mxu0 0.0
    %5002 = vmatprep.subr.mxu0 0.0
    %5003 = vmatpush1.msra.mxu0 0.0
    %5004 = vmatprep.subr.mxu0 0.0
    %5005 = vmatpush1.msra.mxu0 0.0
    %5006 = vmatprep.subr.mxu0 0.0
    %5007 = vmatpush1.msra.mxu0 0.0
    %5008 = vmatprep.subr.mxu0 0.0
    %5009 = vmatpush1.msra.mxu0 0.0
    %5010 = vmatprep.subr.mxu0 0.0
    %5011 = vmatpush1.msra.mxu0 0.0
    %5012 = vmatprep.subr.mxu0 0.0
    %5013 = vmatpush1.msra.mxu0 0.0
    %5014 = vmatprep.subr.mxu0 0.0
    %5015 = vmatpush1.msra.mxu0 0.0
    %5016 = vmatprep.subr.mxu0 0.0
    %5017 = vmatpush1.msra.mxu0 0.0
    %5018 = vmatprep.subr.mxu0 0.0
    %5019 = vmatpush1.msra.mxu0 0.0
    %5020 = vmatprep.subr.mxu0 0.0
    %5021 = vmatpush1.msra.mxu0 0.0
    %5022 = vmatprep.subr.mxu0 0.0
    %5023 = vmatpush1.msra.mxu0 0.0
    %5024 = vmatprep.subr.mxu0 0.0
    %5025 = vmatpush1.msra.mxu0 0.0
    %5026 = vmatprep.subr.mxu0 0.0
    %5027 = vmatpush1.msra.mxu0 0.0
    %5028 = vmatprep.subr.mxu0 0.0
    %5029 = vmatpush1.msra.mxu0 0.0
    %5030 = vmatprep.mubr.f32.mxu0 0.0
    %5031 = vmatmul.mubr.f32.gmra.mrb[0].mxu0 %v4964
    %v5032 = vpop.f32.mrb[0].mxu0
    %v5033 = vadd.f32 0.0, %v5032
    %v5034 = vpop.f32.mrb[0].mxu0
    %5035 = vdwg.mxu0
    %v5037 = vsel %vm378, %v4956, 0
    %v5040 = vsel %vm378, %v5033, 0
    %5042 = vmatprep.subr.mxu0 0.0
    %5043 = vmatpush1.msra.mxu0 %v4381
    %5044 = vmatprep.subr.mxu0 0.0
    %5045 = vmatpush1.msra.mxu0 0.0
    %5046 = vmatprep.subr.mxu0 0.0
    %5047 = vmatpush1.msra.mxu0 0.0
    %5048 = vmatprep.subr.mxu0 0.0
    %5049 = vmatpush1.msra.mxu0 0.0
    %5050 = vmatprep.subr.mxu0 0.0
    %5051 = vmatpush1.msra.mxu0 0.0
    %5052 = vmatprep.subr.mxu0 0.0
    %5053 = vmatpush1.msra.mxu0 0.0
    %5054 = vmatprep.subr.mxu0 0.0
    %5055 = vmatpush1.msra.mxu0 0.0
    %5056 = vmatprep.subr.mxu0 0.0
    %5057 = vmatpush1.msra.mxu0 0.0
    %5058 = vmatprep.subr.mxu0 0.0
    %5059 = vmatpush1.msra.mxu0 0.0
    %5060 = vmatprep.subr.mxu0 0.0
    %5061 = vmatpush1.msra.mxu0 0.0
    %5062 = vmatprep.subr.mxu0 0.0
    %5063 = vmatpush1.msra.mxu0 0.0
    %5064 = vmatprep.subr.mxu0 0.0
    %5065 = vmatpush1.msra.mxu0 0.0
    %5066 = vmatprep.subr.mxu0 0.0
    %5067 = vmatpush1.msra.mxu0 0.0
    %5068 = vmatprep.subr.mxu0 0.0
    %5069 = vmatpush1.msra.mxu0 0.0
    %5070 = vmatprep.subr.mxu0 0.0
    %5071 = vmatpush1.msra.mxu0 0.0
    %5072 = vmatprep.subr.mxu0 0.0
    %5073 = vmatpush1.msra.mxu0 0.0
    %5074 = vmatprep.subr.mxu0 0.0
    %5075 = vmatpush1.msra.mxu0 0.0
    %5076 = vmatprep.subr.mxu0 0.0
    %5077 = vmatpush1.msra.mxu0 0.0
    %5078 = vmatprep.subr.mxu0 0.0
    %5079 = vmatpush1.msra.mxu0 0.0
    %5080 = vmatprep.subr.mxu0 0.0
    %5081 = vmatpush1.msra.mxu0 0.0
    %5082 = vmatprep.subr.mxu0 0.0
    %5083 = vmatpush1.msra.mxu0 0.0
    %5084 = vmatprep.subr.mxu0 0.0
    %5085 = vmatpush1.msra.mxu0 0.0
    %5086 = vmatprep.subr.mxu0 0.0
    %5087 = vmatpush1.msra.mxu0 0.0
    %5088 = vmatprep.subr.mxu0 0.0
    %5089 = vmatpush1.msra.mxu0 0.0
    %5090 = vmatprep.subr.mxu0 0.0
    %5091 = vmatpush1.msra.mxu0 0.0
    %5092 = vmatprep.subr.mxu0 0.0
    %5093 = vmatpush1.msra.mxu0 0.0
    %5094 = vmatprep.subr.mxu0 0.0
    %5095 = vmatpush1.msra.mxu0 0.0
    %5096 = vmatprep.subr.mxu0 0.0
    %5097 = vmatpush1.msra.mxu0 0.0
    %5098 = vmatprep.subr.mxu0 0.0
    %5099 = vmatpush1.msra.mxu0 0.0
    %5100 = vmatprep.subr.mxu0 0.0
    %5101 = vmatpush1.msra.mxu0 0.0
    %5102 = vmatprep.subr.mxu0 0.0
    %5103 = vmatpush1.msra.mxu0 0.0
    %5104 = vmatprep.subr.mxu0 0.0
    %5105 = vmatpush1.msra.mxu0 0.0
    %5106 = vmatprep.mubr.f32.mxu0 0.0
    %5107 = vmatmul.mubr.f32.gmra.mrb[0].mxu0 %v5037
    %v5108 = vpop.f32.mrb[0].mxu0
    %v5109 = vadd.f32 0.0, %v5108
    %v5110 = vpop.f32.mrb[0].mxu0
    %5111 = vmatprep.mubr.f32.mxu0 0.0
    %5112 = vmatmul.mubr.f32.gmra.mrb[0].mxu0 %v5040
    %v5113 = vpop.f32.mrb[0].mxu0
    %v5114 = vadd.f32 0.0, %v5113
    %v5115 = vpop.f32.mrb[0].mxu0
    %5116 = vdwg.mxu0
    %v5118 = vsel %vm378, %v4628, 0
    %v5121 = vsel %vm378, %v4701, 0
    %5123 = vmatprep.subr.mxu0 0.0
    %5124 = vmatpush1.msra.mxu0 %v4380
    %5125 = vmatprep.subr.mxu0 0.0
    %5126 = vmatpush1.msra.mxu0 0.0
    %5127 = vmatprep.subr.mxu0 0.0
    %5128 = vmatpush1.msra.mxu0 0.0
    %5129 = vmatprep.subr.mxu0 0.0
    %5130 = vmatpush1.msra.mxu0 0.0
    %5131 = vmatprep.subr.mxu0 0.0
    %5132 = vmatpush1.msra.mxu0 0.0
    %5133 = vmatprep.subr.mxu0 0.0
    %5134 = vmatpush1.msra.mxu0 0.0
    %5135 = vmatprep.subr.mxu0 0.0
    %5136 = vmatpush1.msra.mxu0 0.0
    %5137 = vmatprep.subr.mxu0 0.0
    %5138 = vmatpush1.msra.mxu0 0.0
    %5139 = vmatprep.subr.mxu0 0.0
    %5140 = vmatpush1.msra.mxu0 0.0
    %5141 = vmatprep.subr.mxu0 0.0
    %5142 = vmatpush1.msra.mxu0 0.0
    %5143 = vmatprep.subr.mxu0 0.0
    %5144 = vmatpush1.msra.mxu0 0.0
    %5145 = vmatprep.subr.mxu0 0.0
    %5146 = vmatpush1.msra.mxu0 0.0
    %5147 = vmatprep.subr.mxu0 0.0
    %5148 = vmatpush1.msra.mxu0 0.0
    %5149 = vmatprep.subr.mxu0 0.0
    %5150 = vmatpush1.msra.mxu0 0.0
    %5151 = vmatprep.subr.mxu0 0.0
    %5152 = vmatpush1.msra.mxu0 0.0
    %5153 = vmatprep.subr.mxu0 0.0
    %5154 = vmatpush1.msra.mxu0 0.0
    %5155 = vmatprep.subr.mxu0 0.0
    %5156 = vmatpush1.msra.mxu0 0.0
    %5157 = vmatprep.subr.mxu0 0.0
    %5158 = vmatpush1.msra.mxu0 0.0
    %5159 = vmatprep.subr.mxu0 0.0
    %5160 = vmatpush1.msra.mxu0 0.0
    %5161 = vmatprep.subr.mxu0 0.0
    %5162 = vmatpush1.msra.mxu0 0.0
    %5163 = vmatprep.subr.mxu0 0.0
    %5164 = vmatpush1.msra.mxu0 0.0
    %5165 = vmatprep.subr.mxu0 0.0
    %5166 = vmatpush1.msra.mxu0 0.0
    %5167 = vmatprep.subr.mxu0 0.0
    %5168 = vmatpush1.msra.mxu0 0.0
    %5169 = vmatprep.subr.mxu0 0.0
    %5170 = vmatpush1.msra.mxu0 0.0
    %5171 = vmatprep.subr.mxu0 0.0
    %5172 = vmatpush1.msra.mxu0 0.0
    %5173 = vmatprep.subr.mxu0 0.0
    %5174 = vmatpush1.msra.mxu0 0.0
    %5175 = vmatprep.subr.mxu0 0.0
    %5176 = vmatpush1.msra.mxu0 0.0
    %5177 = vmatprep.subr.mxu0 0.0
    %5178 = vmatpush1.msra.mxu0 0.0
    %5179 = vmatprep.subr.mxu0 0.0
    %5180 = vmatpush1.msra.mxu0 0.0
    %5181 = vmatprep.subr.mxu0 0.0
    %5182 = vmatpush1.msra.mxu0 0.0
    %5183 = vmatprep.subr.mxu0 0.0
    %5184 = vmatpush1.msra.mxu0 0.0
    %5185 = vmatprep.subr.mxu0 0.0
    %5186 = vmatpush1.msra.mxu0 0.0
    %5187 = vmatprep.mubr.f32.mxu0 0.0
    %5188 = vmatmul.mubr.f32.gmra.mrb[0].mxu0 %v5118
    %v5189 = vpop.f32.mrb[0].mxu0
    %v5190 = vadd.f32 %v5109, %v5189
    %v5191 = vpop.f32.mrb[0].mxu0
    %5192 = vmatprep.mubr.f32.mxu0 0.0
    %5193 = vmatmul.mubr.f32.gmra.mrb[0].mxu0 %v5121
    %v5194 = vpop.f32.mrb[0].mxu0
    %v5195 = vadd.f32 %v5114, %v5194
    %v5196 = vpop.f32.mrb[0].mxu0
    %5197 = vdwg.mxu0
    %5198 = vrot.lane.b32.xlu0 %v4209, 112
    %v5199 = vpop.permute.xlu0 %5198
    %5200 = vrot.lane.b32.xlu0 %v4290, 112
    %v5201 = vpop.permute.xlu0 %5200
    %v5202 = vsel %vm378, %v5199, 0
    %v5204 = vsel %vm378, %v5201, 0
    %5206 = vmatprep.subr.mxu0 0.0
    %5207 = vmatpush1.xpose.msra.mxu0 %v5204
    %5208 = vmatprep.subr.mxu0 0.0
    %5209 = vmatpush1.xpose.msra.mxu0 0.0
    %5210 = vmatprep.subr.mxu0 0.0
    %5211 = vmatpush1.xpose.msra.mxu0 0.0
    %5212 = vmatprep.subr.mxu0 0.0
    %5213 = vmatpush1.xpose.msra.mxu0 0.0
    %5214 = vmatprep.subr.mxu0 0.0
    %5215 = vmatpush1.xpose.msra.mxu0 0.0
    %5216 = vmatprep.subr.mxu0 0.0
    %5217 = vmatpush1.xpose.msra.mxu0 0.0
    %5218 = vmatprep.subr.mxu0 0.0
    %5219 = vmatpush1.xpose.msra.mxu0 0.0
    %5220 = vmatprep.subr.mxu0 0.0
    %5221 = vmatpush1.xpose.msra.mxu0 0.0
    %5222 = vmatprep.subr.mxu0 0.0
    %5223 = vmatpush1.xpose.msra.mxu0 0.0
    %5224 = vmatprep.subr.mxu0 0.0
    %5225 = vmatpush1.xpose.msra.mxu0 0.0
    %5226 = vmatprep.subr.mxu0 0.0
    %5227 = vmatpush1.xpose.msra.mxu0 0.0
    %5228 = vmatprep.subr.mxu0 0.0
    %5229 = vmatpush1.xpose.msra.mxu0 0.0
    %5230 = vmatprep.subr.mxu0 0.0
    %5231 = vmatpush1.xpose.msra.mxu0 0.0
    %5232 = vmatprep.subr.mxu0 0.0
    %5233 = vmatpush1.xpose.msra.mxu0 0.0
    %5234 = vmatprep.subr.mxu0 0.0
    %5235 = vmatpush1.xpose.msra.mxu0 0.0
    %5236 = vmatprep.subr.mxu0 0.0
    %5237 = vmatpush1.xpose.msra.mxu0 0.0
    %5238 = vmatprep.subr.mxu0 0.0
    %5239 = vmatpush1.xpose.msra.mxu0 0.0
    %5240 = vmatprep.subr.mxu0 0.0
    %5241 = vmatpush1.xpose.msra.mxu0 0.0
    %5242 = vmatprep.subr.mxu0 0.0
    %5243 = vmatpush1.xpose.msra.mxu0 0.0
    %5244 = vmatprep.subr.mxu0 0.0
    %5245 = vmatpush1.xpose.msra.mxu0 0.0
    %5246 = vmatprep.subr.mxu0 0.0
    %5247 = vmatpush1.xpose.msra.mxu0 0.0
    %5248 = vmatprep.subr.mxu0 0.0
    %5249 = vmatpush1.xpose.msra.mxu0 0.0
    %5250 = vmatprep.subr.mxu0 0.0
    %5251 = vmatpush1.xpose.msra.mxu0 0.0
    %5252 = vmatprep.subr.mxu0 0.0
    %5253 = vmatpush1.xpose.msra.mxu0 0.0
    %5254 = vmatprep.subr.mxu0 0.0
    %5255 = vmatpush1.xpose.msra.mxu0 0.0
    %5256 = vmatprep.subr.mxu0 0.0
    %5257 = vmatpush1.xpose.msra.mxu0 0.0
    %5258 = vmatprep.subr.mxu0 0.0
    %5259 = vmatpush1.xpose.msra.mxu0 0.0
    %5260 = vmatprep.subr.mxu0 0.0
    %5261 = vmatpush1.xpose.msra.mxu0 0.0
    %5262 = vmatprep.subr.mxu0 0.0
    %5263 = vmatpush1.xpose.msra.mxu0 0.0
    %5264 = vmatprep.subr.mxu0 0.0
    %5265 = vmatpush1.xpose.msra.mxu0 0.0
    %5266 = vmatprep.subr.mxu0 0.0
    %5267 = vmatpush1.xpose.msra.mxu0 0.0
    %5268 = vmatprep.subr.mxu0 0.0
    %5269 = vmatpush1.xpose.msra.mxu0 0.0
    %5270 = vmatprep.mubr.f32.mxu0 0.0
    %5271 = vmatmul.mubr.f32.gmra.mrb[0].mxu0 %v5202
    %v5272 = vpop.f32.mrb[0].mxu0
    %v5273 = vadd.f32 0.0, %v5272
    %v5274 = vpop.f32.mrb[0].mxu0
    %5275 = vdwg.mxu0
    %5276 = vrot.lane.b32.xlu0 %v4214, 112
    %v5277 = vpop.permute.xlu0 %5276
    %5278 = vrot.lane.b32.xlu0 %v4295, 112
    %v5279 = vpop.permute.xlu0 %5278
    %v5280 = vsel %vm378, %v5277, 0
    %v5282 = vsel %vm378, %v5279, 0
    %5284 = vmatprep.subr.mxu0 0.0
    %5285 = vmatpush1.xpose.msra.mxu0 %v5282
    %5286 = vmatprep.subr.mxu0 0.0
    %5287 = vmatpush1.xpose.msra.mxu0 0.0
    %5288 = vmatprep.subr.mxu0 0.0
    %5289 = vmatpush1.xpose.msra.mxu0 0.0
    %5290 = vmatprep.subr.mxu0 0.0
    %5291 = vmatpush1.xpose.msra.mxu0 0.0
    %5292 = vmatprep.subr.mxu0 0.0
    %5293 = vmatpush1.xpose.msra.mxu0 0.0
    %5294 = vmatprep.subr.mxu0 0.0
    %5295 = vmatpush1.xpose.msra.mxu0 0.0
    %5296 = vmatprep.subr.mxu0 0.0
    %5297 = vmatpush1.xpose.msra.mxu0 0.0
    %5298 = vmatprep.subr.mxu0 0.0
    %5299 = vmatpush1.xpose.msra.mxu0 0.0
    %5300 = vmatprep.subr.mxu0 0.0
    %5301 = vmatpush1.xpose.msra.mxu0 0.0
    %5302 = vmatprep.subr.mxu0 0.0
    %5303 = vmatpush1.xpose.msra.mxu0 0.0
    %5304 = vmatprep.subr.mxu0 0.0
    %5305 = vmatpush1.xpose.msra.mxu0 0.0
    %5306 = vmatprep.subr.mxu0 0.0
    %5307 = vmatpush1.xpose.msra.mxu0 0.0
    %5308 = vmatprep.subr.mxu0 0.0
    %5309 = vmatpush1.xpose.msra.mxu0 0.0
    %5310 = vmatprep.subr.mxu0 0.0
    %5311 = vmatpush1.xpose.msra.mxu0 0.0
    %5312 = vmatprep.subr.mxu0 0.0
    %5313 = vmatpush1.xpose.msra.mxu0 0.0
    %5314 = vmatprep.subr.mxu0 0.0
    %5315 = vmatpush1.xpose.msra.mxu0 0.0
    %5316 = vmatprep.subr.mxu0 0.0
    %5317 = vmatpush1.xpose.msra.mxu0 0.0
    %5318 = vmatprep.subr.mxu0 0.0
    %5319 = vmatpush1.xpose.msra.mxu0 0.0
    %5320 = vmatprep.subr.mxu0 0.0
    %5321 = vmatpush1.xpose.msra.mxu0 0.0
    %5322 = vmatprep.subr.mxu0 0.0
    %5323 = vmatpush1.xpose.msra.mxu0 0.0
    %5324 = vmatprep.subr.mxu0 0.0
    %5325 = vmatpush1.xpose.msra.mxu0 0.0
    %5326 = vmatprep.subr.mxu0 0.0
    %5327 = vmatpush1.xpose.msra.mxu0 0.0
    %5328 = vmatprep.subr.mxu0 0.0
    %5329 = vmatpush1.xpose.msra.mxu0 0.0
    %5330 = vmatprep.subr.mxu0 0.0
    %5331 = vmatpush1.xpose.msra.mxu0 0.0
    %5332 = vmatprep.subr.mxu0 0.0
    %5333 = vmatpush1.xpose.msra.mxu0 0.0
    %5334 = vmatprep.subr.mxu0 0.0
    %5335 = vmatpush1.xpose.msra.mxu0 0.0
    %5336 = vmatprep.subr.mxu0 0.0
    %5337 = vmatpush1.xpose.msra.mxu0 0.0
    %5338 = vmatprep.subr.mxu0 0.0
    %5339 = vmatpush1.xpose.msra.mxu0 0.0
    %5340 = vmatprep.subr.mxu0 0.0
    %5341 = vmatpush1.xpose.msra.mxu0 0.0
    %5342 = vmatprep.subr.mxu0 0.0
    %5343 = vmatpush1.xpose.msra.mxu0 0.0
    %5344 = vmatprep.subr.mxu0 0.0
    %5345 = vmatpush1.xpose.msra.mxu0 0.0
    %5346 = vmatprep.subr.mxu0 0.0
    %5347 = vmatpush1.xpose.msra.mxu0 0.0
    %5348 = vmatprep.mubr.f32.mxu0 0.0
    %5349 = vmatmul.mubr.f32.gmra.mrb[0].mxu0 %v5280
    %v5350 = vpop.f32.mrb[0].mxu0
    %v5351 = vadd.f32 0.0, %v5350
    %v5352 = vpop.f32.mrb[0].mxu0
    %5353 = vdwg.mxu0
    %v5354 = vsel %vm378, %v5273, -inf
    %5355 = vmax.xlane.f32.xlu0 %v5354
    %v5356 = vpop.xlane.xlu0 %5355
    %v5357 = vsel %vm378, %v5351, -inf
    %5358 = vmax.xlane.f32.xlu0 %v5357
    %v5359 = vpop.xlane.xlu0 %5358
    %v5360 = vsub.f32 %v5273, %v5356
    %v5361 = vsub.f32 %v5351, %v5359
    %v5362 = vmul.f32 %v5360, 1.442695
    %v5363 = vpow.pop %v5362
    %v5364 = vmul.f32 %v5361, 1.442695
    %v5365 = vpow.pop %v5364
    %v5366 = vsel %vm378, %v5363, 0.0
    %5367 = vadd.xlane.f32.xlu0 %v5366
    %v5368 = vpop.xlane.xlu0 %5367
    %v5369 = vsel %vm378, %v5365, 0.0
    %5370 = vadd.xlane.f32.xlu0 %v5369
    %v5371 = vpop.xlane.xlu0 %5370
    %v5372 = vrcp.pop %v5368
    %v5373 = vrcp.pop %v5371
    %v5374 = vmul.f32 %v5363, %v5372
    %v5375 = vmul.f32 %v5365, %v5373
    %5376 = vrot.lane.b32.xlu0 %v4371, 112
    %v5377 = vpop.permute.xlu0 %5376
    %v5380 = vsel %vm378, %v5374, 0
    %5382 = vmatprep.subr.mxu0 0.0
    %5383 = vmatpush1.msra.mxu0 %v5377
    %5384 = vmatprep.subr.mxu0 0.0
    %5385 = vmatpush1.msra.mxu0 0.0
    %5386 = vmatprep.subr.mxu0 0.0
    %5387 = vmatpush1.msra.mxu0 0.0
    %5388 = vmatprep.subr.mxu0 0.0
    %5389 = vmatpush1.msra.mxu0 0.0
    %5390 = vmatprep.subr.mxu0 0.0
    %5391 = vmatpush1.msra.mxu0 0.0
    %5392 = vmatprep.subr.mxu0 0.0
    %5393 = vmatpush1.msra.mxu0 0.0
    %5394 = vmatprep.subr.mxu0 0.0
    %5395 = vmatpush1.msra.mxu0 0.0
    %5396 = vmatprep.subr.mxu0 0.0
    %5397 = vmatpush1.msra.mxu0 0.0
    %5398 = vmatprep.subr.mxu0 0.0
    %5399 = vmatpush1.msra.mxu0 0.0
    %5400 = vmatprep.subr.mxu0 0.0
    %5401 = vmatpush1.msra.mxu0 0.0
    %5402 = vmatprep.subr.mxu0 0.0
    %5403 = vmatpush1.msra.mxu0 0.0
    %5404 = vmatprep.subr.mxu0 0.0
    %5405 = vmatpush1.msra.mxu0 0.0
    %5406 = vmatprep.subr.mxu0 0.0
    %5407 = vmatpush1.msra.mxu0 0.0
    %5408 = vmatprep.subr.mxu0 0.0
    %5409 = vmatpush1.msra.mxu0 0.0
    %5410 = vmatprep.subr.mxu0 0.0
    %5411 = vmatpush1.msra.mxu0 0.0
    %5412 = vmatprep.subr.mxu0 0.0
    %5413 = vmatpush1.msra.mxu0 0.0
    %5414 = vmatprep.subr.mxu0 0.0
    %5415 = vmatpush1.msra.mxu0 0.0
    %5416 = vmatprep.subr.mxu0 0.0
    %5417 = vmatpush1.msra.mxu0 0.0
    %5418 = vmatprep.subr.mxu0 0.0
    %5419 = vmatpush1.msra.mxu0 0.0
    %5420 = vmatprep.subr.mxu0 0.0
    %5421 = vmatpush1.msra.mxu0 0.0
    %5422 = vmatprep.subr.mxu0 0.0
    %5423 = vmatpush1.msra.mxu0 0.0
    %5424 = vmatprep.subr.mxu0 0.0
    %5425 = vmatpush1.msra.mxu0 0.0
    %5426 = vmatprep.subr.mxu0 0.0
    %5427 = vmatpush1.msra.mxu0 0.0
    %5428 = vmatprep.subr.mxu0 0.0
    %5429 = vmatpush1.msra.mxu0 0.0
    %5430 = vmatprep.subr.mxu0 0.0
    %5431 = vmatpush1.msra.mxu0 0.0
    %5432 = vmatprep.subr.mxu0 0.0
    %5433 = vmatpush1.msra.mxu0 0.0
    %5434 = vmatprep.subr.mxu0 0.0
    %5435 = vmatpush1.msra.mxu0 0.0
    %5436 = vmatprep.subr.mxu0 0.0
    %5437 = vmatpush1.msra.mxu0 0.0
    %5438 = vmatprep.subr.mxu0 0.0
    %5439 = vmatpush1.msra.mxu0 0.0
    %5440 = vmatprep.subr.mxu0 0.0
    %5441 = vmatpush1.msra.mxu0 0.0
    %5442 = vmatprep.subr.mxu0 0.0
    %5443 = vmatpush1.msra.mxu0 0.0
    %5444 = vmatprep.subr.mxu0 0.0
    %5445 = vmatpush1.msra.mxu0 0.0
    %5446 = vmatprep.mubr.f32.mxu0 0.0
    %5447 = vmatmul.mubr.f32.gmra.mrb[0].mxu0 %v5380
    %v5448 = vpop.f32.mrb[0].mxu0
    %v5449 = vadd.f32 0.0, %v5448
    %v5450 = vpop.f32.mrb[0].mxu0
    %5451 = vdwg.mxu0
    %5452 = vrot.lane.b32.xlu0 %v4376, 112
    %v5453 = vpop.permute.xlu0 %5452
    %v5456 = vsel %vm378, %v5375, 0
    %5458 = vmatprep.subr.mxu0 0.0
    %5459 = vmatpush1.msra.mxu0 %v5453
    %5460 = vmatprep.subr.mxu0 0.0
    %5461 = vmatpush1.msra.mxu0 0.0
    %5462 = vmatprep.subr.mxu0 0.0
    %5463 = vmatpush1.msra.mxu0 0.0
    %5464 = vmatprep.subr.mxu0 0.0
    %5465 = vmatpush1.msra.mxu0 0.0
    %5466 = vmatprep.subr.mxu0 0.0
    %5467 = vmatpush1.msra.mxu0 0.0
    %5468 = vmatprep.subr.mxu0 0.0
    %5469 = vmatpush1.msra.mxu0 0.0
    %5470 = vmatprep.subr.mxu0 0.0
    %5471 = vmatpush1.msra.mxu0 0.0
    %5472 = vmatprep.subr.mxu0 0.0
    %5473 = vmatpush1.msra.mxu0 0.0
    %5474 = vmatprep.subr.mxu0 0.0
    %5475 = vmatpush1.msra.mxu0 0.0
    %5476 = vmatprep.subr.mxu0 0.0
    %5477 = vmatpush1.msra.mxu0 0.0
    %5478 = vmatprep.subr.mxu0 0.0
    %5479 = vmatpush1.msra.mxu0 0.0
    %5480 = vmatprep.subr.mxu0 0.0
    %5481 = vmatpush1.msra.mxu0 0.0
    %5482 = vmatprep.subr.mxu0 0.0
    %5483 = vmatpush1.msra.mxu0 0.0
    %5484 = vmatprep.subr.mxu0 0.0
    %5485 = vmatpush1.msra.mxu0 0.0
    %5486 = vmatprep.subr.mxu0 0.0
    %5487 = vmatpush1.msra.mxu0 0.0
    %5488 = vmatprep.subr.mxu0 0.0
    %5489 = vmatpush1.msra.mxu0 0.0
    %5490 = vmatprep.subr.mxu0 0.0
    %5491 = vmatpush1.msra.mxu0 0.0
    %5492 = vmatprep.subr.mxu0 0.0
    %5493 = vmatpush1.msra.mxu0 0.0
    %5494 = vmatprep.subr.mxu0 0.0
    %5495 = vmatpush1.msra.mxu0 0.0
    %5496 = vmatprep.subr.mxu0 0.0
    %5497 = vmatpush1.msra.mxu0 0.0
    %5498 = vmatprep.subr.mxu0 0.0
    %5499 = vmatpush1.msra.mxu0 0.0
    %5500 = vmatprep.subr.mxu0 0.0
    %5501 = vmatpush1.msra.mxu0 0.0
    %5502 = vmatprep.subr.mxu0 0.0
    %5503 = vmatpush1.msra.mxu0 0.0
    %5504 = vmatprep.subr.mxu0 0.0
    %5505 = vmatpush1.msra.mxu0 0.0
    %5506 = vmatprep.subr.mxu0 0.0
    %5507 = vmatpush1.msra.mxu0 0.0
    %5508 = vmatprep.subr.mxu0 0.0
    %5509 = vmatpush1.msra.mxu0 0.0
    %5510 = vmatprep.subr.mxu0 0.0
    %5511 = vmatpush1.msra.mxu0 0.0
    %5512 = vmatprep.subr.mxu0 0.0
    %5513 = vmatpush1.msra.mxu0 0.0
    %5514 = vmatprep.subr.mxu0 0.0
    %5515 = vmatpush1.msra.mxu0 0.0
    %5516 = vmatprep.subr.mxu0 0.0
    %5517 = vmatpush1.msra.mxu0 0.0
    %5518 = vmatprep.subr.mxu0 0.0
    %5519 = vmatpush1.msra.mxu0 0.0
    %5520 = vmatprep.subr.mxu0 0.0
    %5521 = vmatpush1.msra.mxu0 0.0
    %5522 = vmatprep.mubr.f32.mxu0 0.0
    %5523 = vmatmul.mubr.f32.gmra.mrb[0].mxu0 %v5456
    %v5524 = vpop.f32.mrb[0].mxu0
    %v5525 = vadd.f32 0.0, %v5524
    %v5526 = vpop.f32.mrb[0].mxu0
    %5527 = vdwg.mxu0
    %v5529 = vsel %vm378, %v5449, 0
    %v5532 = vsel %vm378, %v5525, 0
    %5534 = vmatprep.subr.mxu0 0.0
    %5535 = vmatpush1.msra.mxu0 %v4382
    %5536 = vmatprep.subr.mxu0 0.0
    %5537 = vmatpush1.msra.mxu0 0.0
    %5538 = vmatprep.subr.mxu0 0.0
    %5539 = vmatpush1.msra.mxu0 0.0
    %5540 = vmatprep.subr.mxu0 0.0
    %5541 = vmatpush1.msra.mxu0 0.0
    %5542 = vmatprep.subr.mxu0 0.0
    %5543 = vmatpush1.msra.mxu0 0.0
    %5544 = vmatprep.subr.mxu0 0.0
    %5545 = vmatpush1.msra.mxu0 0.0
    %5546 = vmatprep.subr.mxu0 0.0
    %5547 = vmatpush1.msra.mxu0 0.0
    %5548 = vmatprep.subr.mxu0 0.0
    %5549 = vmatpush1.msra.mxu0 0.0
    %5550 = vmatprep.subr.mxu0 0.0
    %5551 = vmatpush1.msra.mxu0 0.0
    %5552 = vmatprep.subr.mxu0 0.0
    %5553 = vmatpush1.msra.mxu0 0.0
    %5554 = vmatprep.subr.mxu0 0.0
    %5555 = vmatpush1.msra.mxu0 0.0
    %5556 = vmatprep.subr.mxu0 0.0
    %5557 = vmatpush1.msra.mxu0 0.0
    %5558 = vmatprep.subr.mxu0 0.0
    %5559 = vmatpush1.msra.mxu0 0.0
    %5560 = vmatprep.subr.mxu0 0.0
    %5561 = vmatpush1.msra.mxu0 0.0
    %5562 = vmatprep.subr.mxu0 0.0
    %5563 = vmatpush1.msra.mxu0 0.0
    %5564 = vmatprep.subr.mxu0 0.0
    %5565 = vmatpush1.msra.mxu0 0.0
    %5566 = vmatprep.subr.mxu0 0.0
    %5567 = vmatpush1.msra.mxu0 0.0
    %5568 = vmatprep.subr.mxu0 0.0
    %5569 = vmatpush1.msra.mxu0 0.0
    %5570 = vmatprep.subr.mxu0 0.0
    %5571 = vmatpush1.msra.mxu0 0.0
    %5572 = vmatprep.subr.mxu0 0.0
    %5573 = vmatpush1.msra.mxu0 0.0
    %5574 = vmatprep.subr.mxu0 0.0
    %5575 = vmatpush1.msra.mxu0 0.0
    %5576 = vmatprep.subr.mxu0 0.0
    %5577 = vmatpush1.msra.mxu0 0.0
    %5578 = vmatprep.subr.mxu0 0.0
    %5579 = vmatpush1.msra.mxu0 0.0
    %5580 = vmatprep.subr.mxu0 0.0
    %5581 = vmatpush1.msra.mxu0 0.0
    %5582 = vmatprep.subr.mxu0 0.0
    %5583 = vmatpush1.msra.mxu0 0.0
    %5584 = vmatprep.subr.mxu0 0.0
    %5585 = vmatpush1.msra.mxu0 0.0
    %5586 = vmatprep.subr.mxu0 0.0
    %5587 = vmatpush1.msra.mxu0 0.0
    %5588 = vmatprep.subr.mxu0 0.0
    %5589 = vmatpush1.msra.mxu0 0.0
    %5590 = vmatprep.subr.mxu0 0.0
    %5591 = vmatpush1.msra.mxu0 0.0
    %5592 = vmatprep.subr.mxu0 0.0
    %5593 = vmatpush1.msra.mxu0 0.0
    %5594 = vmatprep.subr.mxu0 0.0
    %5595 = vmatpush1.msra.mxu0 0.0
    %5596 = vmatprep.subr.mxu0 0.0
    %5597 = vmatpush1.msra.mxu0 0.0
    %5598 = vmatprep.mubr.f32.mxu0 0.0
    %5599 = vmatmul.mubr.f32.gmra.mrb[0].mxu0 %v5529
    %v5600 = vpop.f32.mrb[0].mxu0
    %v5601 = vadd.f32 0.0, %v5600
    %v5602 = vpop.f32.mrb[0].mxu0
    %5603 = vmatprep.mubr.f32.mxu0 0.0
    %5604 = vmatmul.mubr.f32.gmra.mrb[0].mxu0 %v5532
    %v5605 = vpop.f32.mrb[0].mxu0
    %v5606 = vadd.f32 0.0, %v5605
    %v5607 = vpop.f32.mrb[0].mxu0
    %5608 = vdwg.mxu0
    %v5609 = vadd.f32 %v5190, %v5601
    %v5610 = vadd.f32 %v5195, %v5606
    %5611 = vrot.lane.b32.xlu0 %v4209, 104
    %v5612 = vpop.permute.xlu0 %5611
    %5613 = vrot.lane.b32.xlu0 %v4290, 104
    %v5614 = vpop.permute.xlu0 %5613
    %v5615 = vsel %vm378, %v5612, 0
    %v5617 = vsel %vm378, %v5614, 0
    %5619 = vmatprep.subr.mxu0 0.0
    %5620 = vmatpush1.xpose.msra.mxu0 %v5617
    %5621 = vmatprep.subr.mxu0 0.0
    %5622 = vmatpush1.xpose.msra.mxu0 0.0
    %5623 = vmatprep.subr.mxu0 0.0
    %5624 = vmatpush1.xpose.msra.mxu0 0.0
    %5625 = vmatprep.subr.mxu0 0.0
    %5626 = vmatpush1.xpose.msra.mxu0 0.0
    %5627 = vmatprep.subr.mxu0 0.0
    %5628 = vmatpush1.xpose.msra.mxu0 0.0
    %5629 = vmatprep.subr.mxu0 0.0
    %5630 = vmatpush1.xpose.msra.mxu0 0.0
    %5631 = vmatprep.subr.mxu0 0.0
    %5632 = vmatpush1.xpose.msra.mxu0 0.0
    %5633 = vmatprep.subr.mxu0 0.0
    %5634 = vmatpush1.xpose.msra.mxu0 0.0
    %5635 = vmatprep.subr.mxu0 0.0
    %5636 = vmatpush1.xpose.msra.mxu0 0.0
    %5637 = vmatprep.subr.mxu0 0.0
    %5638 = vmatpush1.xpose.msra.mxu0 0.0
    %5639 = vmatprep.subr.mxu0 0.0
    %5640 = vmatpush1.xpose.msra.mxu0 0.0
    %5641 = vmatprep.subr.mxu0 0.0
    %5642 = vmatpush1.xpose.msra.mxu0 0.0
    %5643 = vmatprep.subr.mxu0 0.0
    %5644 = vmatpush1.xpose.msra.mxu0 0.0
    %5645 = vmatprep.subr.mxu0 0.0
    %5646 = vmatpush1.xpose.msra.mxu0 0.0
    %5647 = vmatprep.subr.mxu0 0.0
    %5648 = vmatpush1.xpose.msra.mxu0 0.0
    %5649 = vmatprep.subr.mxu0 0.0
    %5650 = vmatpush1.xpose.msra.mxu0 0.0
    %5651 = vmatprep.subr.mxu0 0.0
    %5652 = vmatpush1.xpose.msra.mxu0 0.0
    %5653 = vmatprep.subr.mxu0 0.0
    %5654 = vmatpush1.xpose.msra.mxu0 0.0
    %5655 = vmatprep.subr.mxu0 0.0
    %5656 = vmatpush1.xpose.msra.mxu0 0.0
    %5657 = vmatprep.subr.mxu0 0.0
    %5658 = vmatpush1.xpose.msra.mxu0 0.0
    %5659 = vmatprep.subr.mxu0 0.0
    %5660 = vmatpush1.xpose.msra.mxu0 0.0
    %5661 = vmatprep.subr.mxu0 0.0
    %5662 = vmatpush1.xpose.msra.mxu0 0.0
    %5663 = vmatprep.subr.mxu0 0.0
    %5664 = vmatpush1.xpose.msra.mxu0 0.0
    %5665 = vmatprep.subr.mxu0 0.0
    %5666 = vmatpush1.xpose.msra.mxu0 0.0
    %5667 = vmatprep.subr.mxu0 0.0
    %5668 = vmatpush1.xpose.msra.mxu0 0.0
    %5669 = vmatprep.subr.mxu0 0.0
    %5670 = vmatpush1.xpose.msra.mxu0 0.0
    %5671 = vmatprep.subr.mxu0 0.0
    %5672 = vmatpush1.xpose.msra.mxu0 0.0
    %5673 = vmatprep.subr.mxu0 0.0
    %5674 = vmatpush1.xpose.msra.mxu0 0.0
    %5675 = vmatprep.subr.mxu0 0.0
    %5676 = vmatpush1.xpose.msra.mxu0 0.0
    %5677 = vmatprep.subr.mxu0 0.0
    %5678 = vmatpush1.xpose.msra.mxu0 0.0
    %5679 = vmatprep.subr.mxu0 0.0
    %5680 = vmatpush1.xpose.msra.mxu0 0.0
    %5681 = vmatprep.subr.mxu0 0.0
    %5682 = vmatpush1.xpose.msra.mxu0 0.0
    %5683 = vmatprep.mubr.f32.mxu0 0.0
    %5684 = vmatmul.mubr.f32.gmra.mrb[0].mxu0 %v5615
    %v5685 = vpop.f32.mrb[0].mxu0
    %v5686 = vadd.f32 0.0, %v5685
    %v5687 = vpop.f32.mrb[0].mxu0
    %5688 = vdwg.mxu0
    %5689 = vrot.lane.b32.xlu0 %v4214, 104
    %v5690 = vpop.permute.xlu0 %5689
    %5691 = vrot.lane.b32.xlu0 %v4295, 104
    %v5692 = vpop.permute.xlu0 %5691
    %v5693 = vsel %vm378, %v5690, 0
    %v5695 = vsel %vm378, %v5692, 0
    %5697 = vmatprep.subr.mxu0 0.0
    %5698 = vmatpush1.xpose.msra.mxu0 %v5695
    %5699 = vmatprep.subr.mxu0 0.0
    %5700 = vmatpush1.xpose.msra.mxu0 0.0
    %5701 = vmatprep.subr.mxu0 0.0
    %5702 = vmatpush1.xpose.msra.mxu0 0.0
    %5703 = vmatprep.subr.mxu0 0.0
    %5704 = vmatpush1.xpose.msra.mxu0 0.0
    %5705 = vmatprep.subr.mxu0 0.0
    %5706 = vmatpush1.xpose.msra.mxu0 0.0
    %5707 = vmatprep.subr.mxu0 0.0
    %5708 = vmatpush1.xpose.msra.mxu0 0.0
    %5709 = vmatprep.subr.mxu0 0.0
    %5710 = vmatpush1.xpose.msra.mxu0 0.0
    %5711 = vmatprep.subr.mxu0 0.0
    %5712 = vmatpush1.xpose.msra.mxu0 0.0
    %5713 = vmatprep.subr.mxu0 0.0
    %5714 = vmatpush1.xpose.msra.mxu0 0.0
    %5715 = vmatprep.subr.mxu0 0.0
    %5716 = vmatpush1.xpose.msra.mxu0 0.0
    %5717 = vmatprep.subr.mxu0 0.0
    %5718 = vmatpush1.xpose.msra.mxu0 0.0
    %5719 = vmatprep.subr.mxu0 0.0
    %5720 = vmatpush1.xpose.msra.mxu0 0.0
    %5721 = vmatprep.subr.mxu0 0.0
    %5722 = vmatpush1.xpose.msra.mxu0 0.0
    %5723 = vmatprep.subr.mxu0 0.0
    %5724 = vmatpush1.xpose.msra.mxu0 0.0
    %5725 = vmatprep.subr.mxu0 0.0
    %5726 = vmatpush1.xpose.msra.mxu0 0.0
    %5727 = vmatprep.subr.mxu0 0.0
    %5728 = vmatpush1.xpose.msra.mxu0 0.0
    %5729 = vmatprep.subr.mxu0 0.0
    %5730 = vmatpush1.xpose.msra.mxu0 0.0
    %5731 = vmatprep.subr.mxu0 0.0
    %5732 = vmatpush1.xpose.msra.mxu0 0.0
    %5733 = vmatprep.subr.mxu0 0.0
    %5734 = vmatpush1.xpose.msra.mxu0 0.0
    %5735 = vmatprep.subr.mxu0 0.0
    %5736 = vmatpush1.xpose.msra.mxu0 0.0
    %5737 = vmatprep.subr.mxu0 0.0
    %5738 = vmatpush1.xpose.msra.mxu0 0.0
    %5739 = vmatprep.subr.mxu0 0.0
    %5740 = vmatpush1.xpose.msra.mxu0 0.0
    %5741 = vmatprep.subr.mxu0 0.0
    %5742 = vmatpush1.xpose.msra.mxu0 0.0
    %5743 = vmatprep.subr.mxu0 0.0
    %5744 = vmatpush1.xpose.msra.mxu0 0.0
    %5745 = vmatprep.subr.mxu0 0.0
    %5746 = vmatpush1.xpose.msra.mxu0 0.0
    %5747 = vmatprep.subr.mxu0 0.0
    %5748 = vmatpush1.xpose.msra.mxu0 0.0
    %5749 = vmatprep.subr.mxu0 0.0
    %5750 = vmatpush1.xpose.msra.mxu0 0.0
    %5751 = vmatprep.subr.mxu0 0.0
    %5752 = vmatpush1.xpose.msra.mxu0 0.0
    %5753 = vmatprep.subr.mxu0 0.0
    %5754 = vmatpush1.xpose.msra.mxu0 0.0
    %5755 = vmatprep.subr.mxu0 0.0
    %5756 = vmatpush1.xpose.msra.mxu0 0.0
    %5757 = vmatprep.subr.mxu0 0.0
    %5758 = vmatpush1.xpose.msra.mxu0 0.0
    %5759 = vmatprep.subr.mxu0 0.0
    %5760 = vmatpush1.xpose.msra.mxu0 0.0
    %5761 = vmatprep.mubr.f32.mxu0 0.0
    %5762 = vmatmul.mubr.f32.gmra.mrb[0].mxu0 %v5693
    %v5763 = vpop.f32.mrb[0].mxu0
    %v5764 = vadd.f32 0.0, %v5763
    %v5765 = vpop.f32.mrb[0].mxu0
    %5766 = vdwg.mxu0
    %v5767 = vsel %vm378, %v5686, -inf
    %5768 = vmax.xlane.f32.xlu0 %v5767
    %v5769 = vpop.xlane.xlu0 %5768
    %v5770 = vsel %vm378, %v5764, -inf
    %5771 = vmax.xlane.f32.xlu0 %v5770
    %v5772 = vpop.xlane.xlu0 %5771
    %v5773 = vsub.f32 %v5686, %v5769
    %v5774 = vsub.f32 %v5764, %v5772
    %v5775 = vmul.f32 %v5773, 1.442695
    %v5776 = vpow.pop %v5775
    %v5777 = vmul.f32 %v5774, 1.442695
    %v5778 = vpow.pop %v5777
    %v5779 = vsel %vm378, %v5776, 0.0
    %5780 = vadd.xlane.f32.xlu0 %v5779
    %v5781 = vpop.xlane.xlu0 %5780
    %v5782 = vsel %vm378, %v5778, 0.0
    %5783 = vadd.xlane.f32.xlu0 %v5782
    %v5784 = vpop.xlane.xlu0 %5783
    %v5785 = vrcp.pop %v5781
    %v5786 = vrcp.pop %v5784
    %v5787 = vmul.f32 %v5776, %v5785
    %v5788 = vmul.f32 %v5778, %v5786
    %5789 = vrot.lane.b32.xlu0 %v4371, 104
    %v5790 = vpop.permute.xlu0 %5789
    %v5793 = vsel %vm378, %v5787, 0
    %5795 = vmatprep.subr.mxu0 0.0
    %5796 = vmatpush1.msra.mxu0 %v5790
    %5797 = vmatprep.subr.mxu0 0.0
    %5798 = vmatpush1.msra.mxu0 0.0
    %5799 = vmatprep.subr.mxu0 0.0
    %5800 = vmatpush1.msra.mxu0 0.0
    %5801 = vmatprep.subr.mxu0 0.0
    %5802 = vmatpush1.msra.mxu0 0.0
    %5803 = vmatprep.subr.mxu0 0.0
    %5804 = vmatpush1.msra.mxu0 0.0
    %5805 = vmatprep.subr.mxu0 0.0
    %5806 = vmatpush1.msra.mxu0 0.0
    %5807 = vmatprep.subr.mxu0 0.0
    %5808 = vmatpush1.msra.mxu0 0.0
    %5809 = vmatprep.subr.mxu0 0.0
    %5810 = vmatpush1.msra.mxu0 0.0
    %5811 = vmatprep.subr.mxu0 0.0
    %5812 = vmatpush1.msra.mxu0 0.0
    %5813 = vmatprep.subr.mxu0 0.0
    %5814 = vmatpush1.msra.mxu0 0.0
    %5815 = vmatprep.subr.mxu0 0.0
    %5816 = vmatpush1.msra.mxu0 0.0
    %5817 = vmatprep.subr.mxu0 0.0
    %5818 = vmatpush1.msra.mxu0 0.0
    %5819 = vmatprep.subr.mxu0 0.0
    %5820 = vmatpush1.msra.mxu0 0.0
    %5821 = vmatprep.subr.mxu0 0.0
    %5822 = vmatpush1.msra.mxu0 0.0
    %5823 = vmatprep.subr.mxu0 0.0
    %5824 = vmatpush1.msra.mxu0 0.0
    %5825 = vmatprep.subr.mxu0 0.0
    %5826 = vmatpush1.msra.mxu0 0.0
    %5827 = vmatprep.subr.mxu0 0.0
    %5828 = vmatpush1.msra.mxu0 0.0
    %5829 = vmatprep.subr.mxu0 0.0
    %5830 = vmatpush1.msra.mxu0 0.0
    %5831 = vmatprep.subr.mxu0 0.0
    %5832 = vmatpush1.msra.mxu0 0.0
    %5833 = vmatprep.subr.mxu0 0.0
    %5834 = vmatpush1.msra.mxu0 0.0
    %5835 = vmatprep.subr.mxu0 0.0
    %5836 = vmatpush1.msra.mxu0 0.0
    %5837 = vmatprep.subr.mxu0 0.0
    %5838 = vmatpush1.msra.mxu0 0.0
    %5839 = vmatprep.subr.mxu0 0.0
    %5840 = vmatpush1.msra.mxu0 0.0
    %5841 = vmatprep.subr.mxu0 0.0
    %5842 = vmatpush1.msra.mxu0 0.0
    %5843 = vmatprep.subr.mxu0 0.0
    %5844 = vmatpush1.msra.mxu0 0.0
    %5845 = vmatprep.subr.mxu0 0.0
    %5846 = vmatpush1.msra.mxu0 0.0
    %5847 = vmatprep.subr.mxu0 0.0
    %5848 = vmatpush1.msra.mxu0 0.0
    %5849 = vmatprep.subr.mxu0 0.0
    %5850 = vmatpush1.msra.mxu0 0.0
    %5851 = vmatprep.subr.mxu0 0.0
    %5852 = vmatpush1.msra.mxu0 0.0
    %5853 = vmatprep.subr.mxu0 0.0
    %5854 = vmatpush1.msra.mxu0 0.0
    %5855 = vmatprep.subr.mxu0 0.0
    %5856 = vmatpush1.msra.mxu0 0.0
    %5857 = vmatprep.subr.mxu0 0.0
    %5858 = vmatpush1.msra.mxu0 0.0
    %5859 = vmatprep.mubr.f32.mxu0 0.0
    %5860 = vmatmul.mubr.f32.gmra.mrb[0].mxu0 %v5793
    %v5861 = vpop.f32.mrb[0].mxu0
    %v5862 = vadd.f32 0.0, %v5861
    %v5863 = vpop.f32.mrb[0].mxu0
    %5864 = vdwg.mxu0
    %5865 = vrot.lane.b32.xlu0 %v4376, 104
    %v5866 = vpop.permute.xlu0 %5865
    %v5869 = vsel %vm378, %v5788, 0
    %5871 = vmatprep.subr.mxu0 0.0
    %5872 = vmatpush1.msra.mxu0 %v5866
    %5873 = vmatprep.subr.mxu0 0.0
    %5874 = vmatpush1.msra.mxu0 0.0
    %5875 = vmatprep.subr.mxu0 0.0
    %5876 = vmatpush1.msra.mxu0 0.0
    %5877 = vmatprep.subr.mxu0 0.0
    %5878 = vmatpush1.msra.mxu0 0.0
    %5879 = vmatprep.subr.mxu0 0.0
    %5880 = vmatpush1.msra.mxu0 0.0
    %5881 = vmatprep.subr.mxu0 0.0
    %5882 = vmatpush1.msra.mxu0 0.0
    %5883 = vmatprep.subr.mxu0 0.0
    %5884 = vmatpush1.msra.mxu0 0.0
    %5885 = vmatprep.subr.mxu0 0.0
    %5886 = vmatpush1.msra.mxu0 0.0
    %5887 = vmatprep.subr.mxu0 0.0
    %5888 = vmatpush1.msra.mxu0 0.0
    %5889 = vmatprep.subr.mxu0 0.0
    %5890 = vmatpush1.msra.mxu0 0.0
    %5891 = vmatprep.subr.mxu0 0.0
    %5892 = vmatpush1.msra.mxu0 0.0
    %5893 = vmatprep.subr.mxu0 0.0
    %5894 = vmatpush1.msra.mxu0 0.0
    %5895 = vmatprep.subr.mxu0 0.0
    %5896 = vmatpush1.msra.mxu0 0.0
    %5897 = vmatprep.subr.mxu0 0.0
    %5898 = vmatpush1.msra.mxu0 0.0
    %5899 = vmatprep.subr.mxu0 0.0
    %5900 = vmatpush1.msra.mxu0 0.0
    %5901 = vmatprep.subr.mxu0 0.0
    %5902 = vmatpush1.msra.mxu0 0.0
    %5903 = vmatprep.subr.mxu0 0.0
    %5904 = vmatpush1.msra.mxu0 0.0
    %5905 = vmatprep.subr.mxu0 0.0
    %5906 = vmatpush1.msra.mxu0 0.0
    %5907 = vmatprep.subr.mxu0 0.0
    %5908 = vmatpush1.msra.mxu0 0.0
    %5909 = vmatprep.subr.mxu0 0.0
    %5910 = vmatpush1.msra.mxu0 0.0
    %5911 = vmatprep.subr.mxu0 0.0
    %5912 = vmatpush1.msra.mxu0 0.0
    %5913 = vmatprep.subr.mxu0 0.0
    %5914 = vmatpush1.msra.mxu0 0.0
    %5915 = vmatprep.subr.mxu0 0.0
    %5916 = vmatpush1.msra.mxu0 0.0
    %5917 = vmatprep.subr.mxu0 0.0
    %5918 = vmatpush1.msra.mxu0 0.0
    %5919 = vmatprep.subr.mxu0 0.0
    %5920 = vmatpush1.msra.mxu0 0.0
    %5921 = vmatprep.subr.mxu0 0.0
    %5922 = vmatpush1.msra.mxu0 0.0
    %5923 = vmatprep.subr.mxu0 0.0
    %5924 = vmatpush1.msra.mxu0 0.0
    %5925 = vmatprep.subr.mxu0 0.0
    %5926 = vmatpush1.msra.mxu0 0.0
    %5927 = vmatprep.subr.mxu0 0.0
    %5928 = vmatpush1.msra.mxu0 0.0
    %5929 = vmatprep.subr.mxu0 0.0
    %5930 = vmatpush1.msra.mxu0 0.0
    %5931 = vmatprep.subr.mxu0 0.0
    %5932 = vmatpush1.msra.mxu0 0.0
    %5933 = vmatprep.subr.mxu0 0.0
    %5934 = vmatpush1.msra.mxu0 0.0
    %5935 = vmatprep.mubr.f32.mxu0 0.0
    %5936 = vmatmul.mubr.f32.gmra.mrb[0].mxu0 %v5869
    %v5937 = vpop.f32.mrb[0].mxu0
    %v5938 = vadd.f32 0.0, %v5937
    %v5939 = vpop.f32.mrb[0].mxu0
    %5940 = vdwg.mxu0
    %v5942 = vsel %vm378, %v5862, 0
    %v5945 = vsel %vm378, %v5938, 0
    %5947 = vmatprep.subr.mxu0 0.0
    %5948 = vmatpush1.msra.mxu0 %v4383
    %5949 = vmatprep.subr.mxu0 0.0
    %5950 = vmatpush1.msra.mxu0 0.0
    %5951 = vmatprep.subr.mxu0 0.0
    %5952 = vmatpush1.msra.mxu0 0.0
    %5953 = vmatprep.subr.mxu0 0.0
    %5954 = vmatpush1.msra.mxu0 0.0
    %5955 = vmatprep.subr.mxu0 0.0
    %5956 = vmatpush1.msra.mxu0 0.0
    %5957 = vmatprep.subr.mxu0 0.0
    %5958 = vmatpush1.msra.mxu0 0.0
    %5959 = vmatprep.subr.mxu0 0.0
    %5960 = vmatpush1.msra.mxu0 0.0
    %5961 = vmatprep.subr.mxu0 0.0
    %5962 = vmatpush1.msra.mxu0 0.0
    %5963 = vmatprep.subr.mxu0 0.0
    %5964 = vmatpush1.msra.mxu0 0.0
    %5965 = vmatprep.subr.mxu0 0.0
    %5966 = vmatpush1.msra.mxu0 0.0
    %5967 = vmatprep.subr.mxu0 0.0
    %5968 = vmatpush1.msra.mxu0 0.0
    %5969 = vmatprep.subr.mxu0 0.0
    %5970 = vmatpush1.msra.mxu0 0.0
    %5971 = vmatprep.subr.mxu0 0.0
    %5972 = vmatpush1.msra.mxu0 0.0
    %5973 = vmatprep.subr.mxu0 0.0
    %5974 = vmatpush1.msra.mxu0 0.0
    %5975 = vmatprep.subr.mxu0 0.0
    %5976 = vmatpush1.msra.mxu0 0.0
    %5977 = vmatprep.subr.mxu0 0.0
    %5978 = vmatpush1.msra.mxu0 0.0
    %5979 = vmatprep.subr.mxu0 0.0
    %5980 = vmatpush1.msra.mxu0 0.0
    %5981 = vmatprep.subr.mxu0 0.0
    %5982 = vmatpush1.msra.mxu0 0.0
    %5983 = vmatprep.subr.mxu0 0.0
    %5984 = vmatpush1.msra.mxu0 0.0
    %5985 = vmatprep.subr.mxu0 0.0
    %5986 = vmatpush1.msra.mxu0 0.0
    %5987 = vmatprep.subr.mxu0 0.0
    %5988 = vmatpush1.msra.mxu0 0.0
    %5989 = vmatprep.subr.mxu0 0.0
    %5990 = vmatpush1.msra.mxu0 0.0
    %5991 = vmatprep.subr.mxu0 0.0
    %5992 = vmatpush1.msra.mxu0 0.0
    %5993 = vmatprep.subr.mxu0 0.0
    %5994 = vmatpush1.msra.mxu0 0.0
    %5995 = vmatprep.subr.mxu0 0.0
    %5996 = vmatpush1.msra.mxu0 0.0
    %5997 = vmatprep.subr.mxu0 0.0
    %5998 = vmatpush1.msra.mxu0 0.0
    %5999 = vmatprep.subr.mxu0 0.0
    %6000 = vmatpush1.msra.mxu0 0.0
    %6001 = vmatprep.subr.mxu0 0.0
    %6002 = vmatpush1.msra.mxu0 0.0
    %6003 = vmatprep.subr.mxu0 0.0
    %6004 = vmatpush1.msra.mxu0 0.0
    %6005 = vmatprep.subr.mxu0 0.0
    %6006 = vmatpush1.msra.mxu0 0.0
    %6007 = vmatprep.subr.mxu0 0.0
    %6008 = vmatpush1.msra.mxu0 0.0
    %6009 = vmatprep.subr.mxu0 0.0
    %6010 = vmatpush1.msra.mxu0 0.0
    %6011 = vmatprep.mubr.f32.mxu0 0.0
    %6012 = vmatmul.mubr.f32.gmra.mrb[0].mxu0 %v5942
    %v6013 = vpop.f32.mrb[0].mxu0
    %v6014 = vadd.f32 0.0, %v6013
    %v6015 = vpop.f32.mrb[0].mxu0
    %6016 = vmatprep.mubr.f32.mxu0 0.0
    %6017 = vmatmul.mubr.f32.gmra.mrb[0].mxu0 %v5945
    %v6018 = vpop.f32.mrb[0].mxu0
    %v6019 = vadd.f32 0.0, %v6018
    %v6020 = vpop.f32.mrb[0].mxu0
    %6021 = vdwg.mxu0
    %v6022 = vadd.f32 %v5609, %v6014
    %v6023 = vadd.f32 %v5610, %v6019
    %v6024 = vld [vmem:[%s8 + $0x100] ss:$0 sm:$0xff]
    %v6025 = vadd.f32 %v6022, %v6024
    %v6026 = vadd.f32 %v6023, %v6024
    %v6027 = vadd.f32 %v4128, %v6025
    %v6028 = vadd.f32 %v4129, %v6026
    %v6029 = vld [vmem:[%s8 + $0x101] ss:$0 sm:$0xff]
    %v6030 = vld [vmem:[%s8 + $0x102] ss:$0 sm:$0xff]
    %v6031 = vsel %vm130, %v6027, 0.0
    %6032 = vadd.xlane.f32.xlu0 %v6031
    %v6033 = vpop.xlane.xlu0 %6032
    %v6034 = vsel %vm130, %v6028, 0.0
    %6035 = vadd.xlane.f32.xlu0 %v6034
    %v6036 = vpop.xlane.xlu0 %6035
    %v6037 = vmul.f32 %v6033, %v2032
    %v6038 = vmul.f32 %v6036, %v2032
    %v6039 = vsub.f32 %v6027, %v6037
    %v6040 = vsub.f32 %v6028, %v6038
    %v6041 = vmul.f32 %v6039, %v6039
    %v6042 = vmul.f32 %v6040, %v6040
    %v6043 = vsel %vm130, %v6041, 0.0
    %6044 = vadd.xlane.f32.xlu0 %v6043
    %v6045 = vpop.xlane.xlu0 %6044
    %v6046 = vsel %vm130, %v6042, 0.0
    %6047 = vadd.xlane.f32.xlu0 %v6046
    %v6048 = vpop.xlane.xlu0 %6047
    %v6049 = vmul.f32 %v6045, %v2032
    %v6050 = vmul.f32 %v6048, %v2032
    %v6051 = vadd.f32 %v6049, 1e-05
    %v6052 = vadd.f32 %v6050, 1e-05
    %v6053 = vrsqrt.pop %v6051
    %v6054 = vrsqrt.pop %v6052
    %v6055 = vmul.f32 %v6039, %v6053
    %v6056 = vmul.f32 %v6040, %v6054
    %v6057 = vmul.f32 %v6055, %v6029
    %v6058 = vmul.f32 %v6056, %v6029
    %v6059 = vadd.f32 %v6057, %v6030
    %v6060 = vadd.f32 %v6058, %v6030
    %v6061 = vpack.c.bf16 %v6060, %v6059
    %s6062 = scalar_lea.vmem %s4, 256
    %v6063 = vld [vmem:[%s6062] sm:$0xff]
    %v6064 = vld [vmem:[%s6062 + $0x8] sm:$0xff]
    %v6065 = vld [vmem:[%s6062 + $0x40] sm:$0xff]
    %v6066 = vld [vmem:[%s6062 + $0x48] sm:$0xff]
    %v6067 = vld [vmem:[%s6062 + $0x80] sm:$0xff]
    %v6068 = vld [vmem:[%s6062 + $0x88] sm:$0xff]
    %v6069 = vld [vmem:[%s6062 + $0xc0] sm:$0xff]
    %v6070 = vld [vmem:[%s6062 + $0xc8] sm:$0xff]
    %s6071 = scalar_lea.vmem %s8, 259
    %v6072 = vld [vmem:[%s6071] ss:$8 sm:$0xf]
    %v6074 = vlaneseq
    %v6075 = vshrl.u32 %v6074, 7
    %v6076 = vsub.s32 0, %v6075
    %v6077 = vrot.slane %v6072, %v6076
    %v6078 = vlaneseq
    %v6079 = vshrl.u32 %v6078, 7
    %v6080 = vsub.s32 1, %v6079
    %v6081 = vrot.slane %v6072, %v6080
    %v6082 = vlaneseq
    %v6083 = vshrl.u32 %v6082, 7
    %v6084 = vsub.s32 2, %v6083
    %v6085 = vrot.slane %v6072, %v6084
    %v6086 = vlaneseq
    %v6087 = vshrl.u32 %v6086, 7
    %v6088 = vsub.s32 3, %v6087
    %v6089 = vrot.slane %v6072, %v6088
    %v6102 = vunpack.c.l.b16 %v6063
    %v6103 = vunpack.c.h.b16 %v6063
    %v6104 = vunpack.c.l.b16 %v6064
    %v6105 = vunpack.c.h.b16 %v6064
    %v6106 = vunpack.c.l.b16 %v6065
    %v6107 = vunpack.c.h.b16 %v6065
    %v6108 = vunpack.c.l.b16 %v6066
    %v6109 = vunpack.c.h.b16 %v6066
    %v6110 = vunpack.c.l.b16 %v6067
    %v6111 = vunpack.c.h.b16 %v6067
    %v6112 = vunpack.c.l.b16 %v6068
    %v6113 = vunpack.c.h.b16 %v6068
    %v6114 = vunpack.c.l.b16 %v6069
    %v6115 = vunpack.c.h.b16 %v6069
    %v6116 = vunpack.c.l.b16 %v6070
    %v6117 = vunpack.c.h.b16 %v6070
    %v6118 = vpack.c.b16 %v6106, %v6102
    %v6119 = vpack.c.b16 %v6107, %v6103
    %v6120 = vpack.c.b16 %v6108, %v6104
    %v6121 = vpack.c.b16 %v6109, %v6105
    %v6122 = vpack.c.b16 %v6114, %v6110
    %v6123 = vpack.c.b16 %v6115, %v6111
    %v6124 = vpack.c.b16 %v6116, %v6112
    %v6125 = vpack.c.b16 %v6117, %v6113
    %v6135 = vsel %vm130, %v6061, 0
    %6137 = vmatprep.subr.bf16.mxu0 %v6119
    %6138 = vmatpush1.bf16.msra.mxu0 %v6118
    %6139 = vmatprep.subr.bf16.mxu0 %v6123
    %6140 = vmatpush1.bf16.msra.mxu0 %v6122
    %6141 = vmatprep.subr.bf16.mxu0 0
    %6142 = vmatpush1.bf16.msra.mxu0 0
    %6143 = vmatprep.subr.bf16.mxu0 0
    %6144 = vmatpush1.bf16.msra.mxu0 0
    %6145 = vmatprep.subr.bf16.mxu0 0
    %6146 = vmatpush1.bf16.msra.mxu0 0
    %6147 = vmatprep.subr.bf16.mxu0 0
    %6148 = vmatpush1.bf16.msra.mxu0 0
    %6149 = vmatprep.subr.bf16.mxu0 0
    %6150 = vmatpush1.bf16.msra.mxu0 0
    %6151 = vmatprep.subr.bf16.mxu0 0
    %6152 = vmatpush1.bf16.msra.mxu0 0
    %6153 = vmatprep.subr.bf16.mxu0 0
    %6154 = vmatpush1.bf16.msra.mxu0 0
    %6155 = vmatprep.subr.bf16.mxu0 0
    %6156 = vmatpush1.bf16.msra.mxu0 0
    %6157 = vmatprep.subr.bf16.mxu0 0
    %6158 = vmatpush1.bf16.msra.mxu0 0
    %6159 = vmatprep.subr.bf16.mxu0 0
    %6160 = vmatpush1.bf16.msra.mxu0 0
    %6161 = vmatprep.subr.bf16.mxu0 0
    %6162 = vmatpush1.bf16.msra.mxu0 0
    %6163 = vmatprep.subr.bf16.mxu0 0
    %6164 = vmatpush1.bf16.msra.mxu0 0
    %6165 = vmatprep.subr.bf16.mxu0 0
    %6166 = vmatpush1.bf16.msra.mxu0 0
    %6167 = vmatprep.subr.bf16.mxu0 0
    %6168 = vmatpush1.bf16.msra.mxu0 0
    %6169 = vmatprep.mubr.bf16.mxu0 0
    %6170 = vmatmul.mubr.bf16.gmra.mrb[0].mxu0 %v6135
    %v6171 = vpop.f32.mrb[0].mxu0
    %v6172 = vadd.f32 %v6077, %v6171
    %v6173 = vpop.f32.mrb[0].mxu0
    %v6174 = vadd.f32 %v6081, %v6173
    %v6175 = vpop.f32.mrb[0].mxu0
    %v6176 = vadd.f32 %v6077, %v6175
    %v6177 = vpop.f32.mrb[0].mxu0
    %v6178 = vadd.f32 %v6081, %v6177
    %6179 = vdwg.mxu0
    %6180 = vmatprep.subr.bf16.mxu0 %v6121
    %6181 = vmatpush1.bf16.msra.mxu0 %v6120
    %6182 = vmatprep.subr.bf16.mxu0 %v6125
    %6183 = vmatpush1.bf16.msra.mxu0 %v6124
    %6184 = vmatprep.subr.bf16.mxu0 0
    %6185 = vmatpush1.bf16.msra.mxu0 0
    %6186 = vmatprep.subr.bf16.mxu0 0
    %6187 = vmatpush1.bf16.msra.mxu0 0
    %6188 = vmatprep.subr.bf16.mxu0 0
    %6189 = vmatpush1.bf16.msra.mxu0 0
    %6190 = vmatprep.subr.bf16.mxu0 0
    %6191 = vmatpush1.bf16.msra.mxu0 0
    %6192 = vmatprep.subr.bf16.mxu0 0
    %6193 = vmatpush1.bf16.msra.mxu0 0
    %6194 = vmatprep.subr.bf16.mxu0 0
    %6195 = vmatpush1.bf16.msra.mxu0 0
    %6196 = vmatprep.subr.bf16.mxu0 0
    %6197 = vmatpush1.bf16.msra.mxu0 0
    %6198 = vmatprep.subr.bf16.mxu0 0
    %6199 = vmatpush1.bf16.msra.mxu0 0
    %6200 = vmatprep.subr.bf16.mxu0 0
    %6201 = vmatpush1.bf16.msra.mxu0 0
    %6202 = vmatprep.subr.bf16.mxu0 0
    %6203 = vmatpush1.bf16.msra.mxu0 0
    %6204 = vmatprep.subr.bf16.mxu0 0
    %6205 = vmatpush1.bf16.msra.mxu0 0
    %6206 = vmatprep.subr.bf16.mxu0 0
    %6207 = vmatpush1.bf16.msra.mxu0 0
    %6208 = vmatprep.subr.bf16.mxu0 0
    %6209 = vmatpush1.bf16.msra.mxu0 0
    %6210 = vmatprep.subr.bf16.mxu0 0
    %6211 = vmatpush1.bf16.msra.mxu0 0
    %6212 = vmatprep.mubr.bf16.mxu0 0
    %6213 = vmatmul.mubr.bf16.gmra.mrb[0].mxu0 %v6135
    %v6214 = vpop.f32.mrb[0].mxu0
    %v6215 = vadd.f32 %v6085, %v6214
    %v6216 = vpop.f32.mrb[0].mxu0
    %v6217 = vadd.f32 %v6089, %v6216
    %v6218 = vpop.f32.mrb[0].mxu0
    %v6219 = vadd.f32 %v6085, %v6218
    %v6220 = vpop.f32.mrb[0].mxu0
    %v6221 = vadd.f32 %v6089, %v6220
    %6222 = vdwg.mxu0
    %v6223 = vmax.f32 %v6172, 0.0
    %v6224 = vmax.f32 %v6174, 0.0
    %v6225 = vmax.f32 %v6215, 0.0
    %v6226 = vmax.f32 %v6217, 0.0
    %v6227 = vmax.f32 %v6176, 0.0
    %v6228 = vmax.f32 %v6178, 0.0
    %v6229 = vmax.f32 %v6219, 0.0
    %v6230 = vmax.f32 %v6221, 0.0
    %v6231 = vpack.c.bf16 %v6227, %v6223
    %v6232 = vpack.c.bf16 %v6228, %v6224
    %v6233 = vpack.c.bf16 %v6229, %v6225
    %v6234 = vpack.c.bf16 %v6230, %v6226
    %s6235 = scalar_lea.vmem %s5, 1024
    %v6236 = vld [vmem:[%s6235] sm:$0xf]
    %v6237 = vld [vmem:[%s6235 + $0x4] sm:$0xf]
    %v6238 = vld [vmem:[%s6235 + $0x8] sm:$0xf]
    %v6239 = vld [vmem:[%s6235 + $0xc] sm:$0xf]
    %v6240 = vld [vmem:[%s6235 + $0x10] sm:$0xf]
    %v6241 = vld [vmem:[%s6235 + $0x14] sm:$0xf]
    %v6242 = vld [vmem:[%s6235 + $0x18] sm:$0xf]
    %v6243 = vld [vmem:[%s6235 + $0x1c] sm:$0xf]
    %v6244 = vld [vmem:[%s6235 + $0x20] sm:$0xf]
    %v6245 = vld [vmem:[%s6235 + $0x24] sm:$0xf]
    %v6246 = vld [vmem:[%s6235 + $0x28] sm:$0xf]
    %v6247 = vld [vmem:[%s6235 + $0x2c] sm:$0xf]
    %v6248 = vld [vmem:[%s6235 + $0x30] sm:$0xf]
    %v6249 = vld [vmem:[%s6235 + $0x34] sm:$0xf]
    %v6250 = vld [vmem:[%s6235 + $0x38] sm:$0xf]
    %v6251 = vld [vmem:[%s6235 + $0x3c] sm:$0xf]
    %v6252 = vld [vmem:[%s6235 + $0x40] sm:$0xf]
    %v6253 = vld [vmem:[%s6235 + $0x44] sm:$0xf]
    %v6254 = vld [vmem:[%s6235 + $0x48] sm:$0xf]
    %v6255 = vld [vmem:[%s6235 + $0x4c] sm:$0xf]
    %v6256 = vld [vmem:[%s6235 + $0x50] sm:$0xf]
    %v6257 = vld [vmem:[%s6235 + $0x54] sm:$0xf]
    %v6258 = vld [vmem:[%s6235 + $0x58] sm:$0xf]
    %v6259 = vld [vmem:[%s6235 + $0x5c] sm:$0xf]
    %v6260 = vld [vmem:[%s6235 + $0x60] sm:$0xf]
    %v6261 = vld [vmem:[%s6235 + $0x64] sm:$0xf]
    %v6262 = vld [vmem:[%s6235 + $0x68] sm:$0xf]
    %v6263 = vld [vmem:[%s6235 + $0x6c] sm:$0xf]
    %v6264 = vld [vmem:[%s6235 + $0x70] sm:$0xf]
    %v6265 = vld [vmem:[%s6235 + $0x74] sm:$0xf]
    %v6266 = vld [vmem:[%s6235 + $0x78] sm:$0xf]
    %v6267 = vld [vmem:[%s6235 + $0x7c] sm:$0xf]
    %v6268 = vld [vmem:[%s6235 + $0x80] sm:$0xf]
    %v6269 = vld [vmem:[%s6235 + $0x84] sm:$0xf]
    %v6270 = vld [vmem:[%s6235 + $0x88] sm:$0xf]
    %v6271 = vld [vmem:[%s6235 + $0x8c] sm:$0xf]
    %v6272 = vld [vmem:[%s6235 + $0x90] sm:$0xf]
    %v6273 = vld [vmem:[%s6235 + $0x94] sm:$0xf]
    %v6274 = vld [vmem:[%s6235 + $0x98] sm:$0xf]
    %v6275 = vld [vmem:[%s6235 + $0x9c] sm:$0xf]
    %v6276 = vld [vmem:[%s6235 + $0xa0] sm:$0xf]
    %v6277 = vld [vmem:[%s6235 + $0xa4] sm:$0xf]
    %v6278 = vld [vmem:[%s6235 + $0xa8] sm:$0xf]
    %v6279 = vld [vmem:[%s6235 + $0xac] sm:$0xf]
    %v6280 = vld [vmem:[%s6235 + $0xb0] sm:$0xf]
    %v6281 = vld [vmem:[%s6235 + $0xb4] sm:$0xf]
    %v6282 = vld [vmem:[%s6235 + $0xb8] sm:$0xf]
    %v6283 = vld [vmem:[%s6235 + $0xbc] sm:$0xf]
    %v6284 = vld [vmem:[%s6235 + $0xc0] sm:$0xf]
    %v6285 = vld [vmem:[%s6235 + $0xc4] sm:$0xf]
    %v6286 = vld [vmem:[%s6235 + $0xc8] sm:$0xf]
    %v6287 = vld [vmem:[%s6235 + $0xcc] sm:$0xf]
    %v6288 = vld [vmem:[%s6235 + $0xd0] sm:$0xf]
    %v6289 = vld [vmem:[%s6235 + $0xd4] sm:$0xf]
    %v6290 = vld [vmem:[%s6235 + $0xd8] sm:$0xf]
    %v6291 = vld [vmem:[%s6235 + $0xdc] sm:$0xf]
    %v6292 = vld [vmem:[%s6235 + $0xe0] sm:$0xf]
    %v6293 = vld [vmem:[%s6235 + $0xe4] sm:$0xf]
    %v6294 = vld [vmem:[%s6235 + $0xe8] sm:$0xf]
    %v6295 = vld [vmem:[%s6235 + $0xec] sm:$0xf]
    %v6296 = vld [vmem:[%s6235 + $0xf0] sm:$0xf]
    %v6297 = vld [vmem:[%s6235 + $0xf4] sm:$0xf]
    %v6298 = vld [vmem:[%s6235 + $0xf8] sm:$0xf]
    %v6299 = vld [vmem:[%s6235 + $0xfc] sm:$0xf]
    %v6300 = vld [vmem:[%s6062 + $0x10] sm:$0xff]
    %v6301 = vld [vmem:[%s6062 + $0x18] sm:$0xff]
    %v6302 = vld [vmem:[%s6062 + $0x50] sm:$0xff]
    %v6303 = vld [vmem:[%s6062 + $0x58] sm:$0xff]
    %v6304 = vld [vmem:[%s6062 + $0x90] sm:$0xff]
    %v6305 = vld [vmem:[%s6062 + $0x98] sm:$0xff]
    %v6306 = vld [vmem:[%s6062 + $0xd0] sm:$0xff]
    %v6307 = vld [vmem:[%s6062 + $0xd8] sm:$0xff]
    %s6308 = scalar_lea.vmem %s8, 291
    %v6309 = vld [vmem:[%s6308] ss:$8 sm:$0xf]
    %v6311 = vlaneseq
    %v6312 = vshrl.u32 %v6311, 7
    %v6313 = vsub.s32 0, %v6312
    %v6314 = vrot.slane %v6309, %v6313
    %v6315 = vlaneseq
    %v6316 = vshrl.u32 %v6315, 7
    %v6317 = vsub.s32 1, %v6316
    %v6318 = vrot.slane %v6309, %v6317
    %v6319 = vlaneseq
    %v6320 = vshrl.u32 %v6319, 7
    %v6321 = vsub.s32 2, %v6320
    %v6322 = vrot.slane %v6309, %v6321
    %v6323 = vlaneseq
    %v6324 = vshrl.u32 %v6323, 7
    %v6325 = vsub.s32 3, %v6324
    %v6326 = vrot.slane %v6309, %v6325
    %v6339 = vunpack.c.l.b16 %v6300
    %v6340 = vunpack.c.h.b16 %v6300
    %v6341 = vunpack.c.l.b16 %v6301
    %v6342 = vunpack.c.h.b16 %v6301
    %v6343 = vunpack.c.l.b16 %v6302
    %v6344 = vunpack.c.h.b16 %v6302
    %v6345 = vunpack.c.l.b16 %v6303
    %v6346 = vunpack.c.h.b16 %v6303
    %v6347 = vunpack.c.l.b16 %v6304
    %v6348 = vunpack.c.h.b16 %v6304
    %v6349 = vunpack.c.l.b16 %v6305
    %v6350 = vunpack.c.h.b16 %v6305
    %v6351 = vunpack.c.l.b16 %v6306
    %v6352 = vunpack.c.h.b16 %v6306
    %v6353 = vunpack.c.l.b16 %v6307
    %v6354 = vunpack.c.h.b16 %v6307
    %v6355 = vpack.c.b16 %v6343, %v6339
    %v6356 = vpack.c.b16 %v6344, %v6340
    %v6357 = vpack.c.b16 %v6345, %v6341
    %v6358 = vpack.c.b16 %v6346, %v6342
    %v6359 = vpack.c.b16 %v6351, %v6347
    %v6360 = vpack.c.b16 %v6352, %v6348
    %v6361 = vpack.c.b16 %v6353, %v6349
    %v6362 = vpack.c.b16 %v6354, %v6350
    %6371 = vmatprep.subr.bf16.mxu0 %v6356
    %6372 = vmatpush1.bf16.msra.mxu0 %v6355
    %6373 = vmatprep.subr.bf16.mxu0 %v6360
    %6374 = vmatpush1.bf16.msra.mxu0 %v6359
    %6375 = vmatprep.subr.bf16.mxu0 0
    %6376 = vmatpush1.bf16.msra.mxu0 0
    %6377 = vmatprep.subr.bf16.mxu0 0
    %6378 = vmatpush1.bf16.msra.mxu0 0
    %6379 = vmatprep.subr.bf16.mxu0 0
    %6380 = vmatpush1.bf16.msra.mxu0 0
    %6381 = vmatprep.subr.bf16.mxu0 0
    %6382 = vmatpush1.bf16.msra.mxu0 0
    %6383 = vmatprep.subr.bf16.mxu0 0
    %6384 = vmatpush1.bf16.msra.mxu0 0
    %6385 = vmatprep.subr.bf16.mxu0 0
    %6386 = vmatpush1.bf16.msra.mxu0 0
    %6387 = vmatprep.subr.bf16.mxu0 0
    %6388 = vmatpush1.bf16.msra.mxu0 0
    %6389 = vmatprep.subr.bf16.mxu0 0
    %6390 = vmatpush1.bf16.msra.mxu0 0
    %6391 = vmatprep.subr.bf16.mxu0 0
    %6392 = vmatpush1.bf16.msra.mxu0 0
    %6393 = vmatprep.subr.bf16.mxu0 0
    %6394 = vmatpush1.bf16.msra.mxu0 0
    %6395 = vmatprep.subr.bf16.mxu0 0
    %6396 = vmatpush1.bf16.msra.mxu0 0
    %6397 = vmatprep.subr.bf16.mxu0 0
    %6398 = vmatpush1.bf16.msra.mxu0 0
    %6399 = vmatprep.subr.bf16.mxu0 0
    %6400 = vmatpush1.bf16.msra.mxu0 0
    %6401 = vmatprep.subr.bf16.mxu0 0
    %6402 = vmatpush1.bf16.msra.mxu0 0
    %6403 = vmatprep.mubr.bf16.mxu0 0
    %6404 = vmatmul.mubr.bf16.gmra.mrb[0].mxu0 %v6135
    %v6405 = vpop.f32.mrb[0].mxu0
    %v6406 = vadd.f32 %v6314, %v6405
    %v6407 = vpop.f32.mrb[0].mxu0
    %v6408 = vadd.f32 %v6318, %v6407
    %v6409 = vpop.f32.mrb[0].mxu0
    %v6410 = vadd.f32 %v6314, %v6409
    %v6411 = vpop.f32.mrb[0].mxu0
    %v6412 = vadd.f32 %v6318, %v6411
    %6413 = vdwg.mxu0
    %6414 = vmatprep.subr.bf16.mxu0 %v6358
    %6415 = vmatpush1.bf16.msra.mxu0 %v6357
    %6416 = vmatprep.subr.bf16.mxu0 %v6362
    %6417 = vmatpush1.bf16.msra.mxu0 %v6361
    %6418 = vmatprep.subr.bf16.mxu0 0
    %6419 = vmatpush1.bf16.msra.mxu0 0
    %6420 = vmatprep.subr.bf16.mxu0 0
    %6421 = vmatpush1.bf16.msra.mxu0 0
    %6422 = vmatprep.subr.bf16.mxu0 0
    %6423 = vmatpush1.bf16.msra.mxu0 0
    %6424 = vmatprep.subr.bf16.mxu0 0
    %6425 = vmatpush1.bf16.msra.mxu0 0
    %6426 = vmatprep.subr.bf16.mxu0 0
    %6427 = vmatpush1.bf16.msra.mxu0 0
    %6428 = vmatprep.subr.bf16.mxu0 0
    %6429 = vmatpush1.bf16.msra.mxu0 0
    %6430 = vmatprep.subr.bf16.mxu0 0
    %6431 = vmatpush1.bf16.msra.mxu0 0
    %6432 = vmatprep.subr.bf16.mxu0 0
    %6433 = vmatpush1.bf16.msra.mxu0 0
    %6434 = vmatprep.subr.bf16.mxu0 0
    %6435 = vmatpush1.bf16.msra.mxu0 0
    %6436 = vmatprep.subr.bf16.mxu0 0
    %6437 = vmatpush1.bf16.msra.mxu0 0
    %6438 = vmatprep.subr.bf16.mxu0 0
    %6439 = vmatpush1.bf16.msra.mxu0 0
    %6440 = vmatprep.subr.bf16.mxu0 0
    %6441 = vmatpush1.bf16.msra.mxu0 0
    %6442 = vmatprep.subr.bf16.mxu0 0
    %6443 = vmatpush1.bf16.msra.mxu0 0
    %6444 = vmatprep.subr.bf16.mxu0 0
    %6445 = vmatpush1.bf16.msra.mxu0 0
    %6446 = vmatprep.mubr.bf16.mxu0 0
    %6447 = vmatmul.mubr.bf16.gmra.mrb[0].mxu0 %v6135
    %v6448 = vpop.f32.mrb[0].mxu0
    %v6449 = vadd.f32 %v6322, %v6448
    %v6450 = vpop.f32.mrb[0].mxu0
    %v6451 = vadd.f32 %v6326, %v6450
    %v6452 = vpop.f32.mrb[0].mxu0
    %v6453 = vadd.f32 %v6322, %v6452
    %v6454 = vpop.f32.mrb[0].mxu0
    %v6455 = vadd.f32 %v6326, %v6454
    %6456 = vdwg.mxu0
    %v6457 = vmax.f32 %v6406, 0.0
    %v6458 = vmax.f32 %v6408, 0.0
    %v6459 = vmax.f32 %v6449, 0.0
    %v6460 = vmax.f32 %v6451, 0.0
    %v6461 = vmax.f32 %v6410, 0.0
    %v6462 = vmax.f32 %v6412, 0.0
    %v6463 = vmax.f32 %v6453, 0.0
    %v6464 = vmax.f32 %v6455, 0.0
    %v6465 = vpack.c.bf16 %v6461, %v6457
    %v6466 = vpack.c.bf16 %v6462, %v6458
    %v6467 = vpack.c.bf16 %v6463, %v6459
    %v6468 = vpack.c.bf16 %v6464, %v6460
    %v6469 = vld [vmem:[%s6235 + $0x100] sm:$0xf]
    %v6470 = vld [vmem:[%s6235 + $0x104] sm:$0xf]
    %v6471 = vld [vmem:[%s6235 + $0x108] sm:$0xf]
    %v6472 = vld [vmem:[%s6235 + $0x10c] sm:$0xf]
    %v6473 = vld [vmem:[%s6235 + $0x110] sm:$0xf]
    %v6474 = vld [vmem:[%s6235 + $0x114] sm:$0xf]
    %v6475 = vld [vmem:[%s6235 + $0x118] sm:$0xf]
    %v6476 = vld [vmem:[%s6235 + $0x11c] sm:$0xf]
    %v6477 = vld [vmem:[%s6235 + $0x120] sm:$0xf]
    %v6478 = vld [vmem:[%s6235 + $0x124] sm:$0xf]
    %v6479 = vld [vmem:[%s6235 + $0x128] sm:$0xf]
    %v6480 = vld [vmem:[%s6235 + $0x12c] sm:$0xf]
    %v6481 = vld [vmem:[%s6235 + $0x130] sm:$0xf]
    %v6482 = vld [vmem:[%s6235 + $0x134] sm:$0xf]
    %v6483 = vld [vmem:[%s6235 + $0x138] sm:$0xf]
    %v6484 = vld [vmem:[%s6235 + $0x13c] sm:$0xf]
    %v6485 = vld [vmem:[%s6235 + $0x140] sm:$0xf]
    %v6486 = vld [vmem:[%s6235 + $0x144] sm:$0xf]
    %v6487 = vld [vmem:[%s6235 + $0x148] sm:$0xf]
    %v6488 = vld [vmem:[%s6235 + $0x14c] sm:$0xf]
    %v6489 = vld [vmem:[%s6235 + $0x150] sm:$0xf]
    %v6490 = vld [vmem:[%s6235 + $0x154] sm:$0xf]
    %v6491 = vld [vmem:[%s6235 + $0x158] sm:$0xf]
    %v6492 = vld [vmem:[%s6235 + $0x15c] sm:$0xf]
    %v6493 = vld [vmem:[%s6235 + $0x160] sm:$0xf]
    %v6494 = vld [vmem:[%s6235 + $0x164] sm:$0xf]
    %v6495 = vld [vmem:[%s6235 + $0x168] sm:$0xf]
    %v6496 = vld [vmem:[%s6235 + $0x16c] sm:$0xf]
    %v6497 = vld [vmem:[%s6235 + $0x170] sm:$0xf]
    %v6498 = vld [vmem:[%s6235 + $0x174] sm:$0xf]
    %v6499 = vld [vmem:[%s6235 + $0x178] sm:$0xf]
    %v6500 = vld [vmem:[%s6235 + $0x17c] sm:$0xf]
    %v6501 = vld [vmem:[%s6235 + $0x180] sm:$0xf]
    %v6502 = vld [vmem:[%s6235 + $0x184] sm:$0xf]
    %v6503 = vld [vmem:[%s6235 + $0x188] sm:$0xf]
    %v6504 = vld [vmem:[%s6235 + $0x18c] sm:$0xf]
    %v6505 = vld [vmem:[%s6235 + $0x190] sm:$0xf]
    %v6506 = vld [vmem:[%s6235 + $0x194] sm:$0xf]
    %v6507 = vld [vmem:[%s6235 + $0x198] sm:$0xf]
    %v6508 = vld [vmem:[%s6235 + $0x19c] sm:$0xf]
    %v6509 = vld [vmem:[%s6235 + $0x1a0] sm:$0xf]
    %v6510 = vld [vmem:[%s6235 + $0x1a4] sm:$0xf]
    %v6511 = vld [vmem:[%s6235 + $0x1a8] sm:$0xf]
    %v6512 = vld [vmem:[%s6235 + $0x1ac] sm:$0xf]
    %v6513 = vld [vmem:[%s6235 + $0x1b0] sm:$0xf]
    %v6514 = vld [vmem:[%s6235 + $0x1b4] sm:$0xf]
    %v6515 = vld [vmem:[%s6235 + $0x1b8] sm:$0xf]
    %v6516 = vld [vmem:[%s6235 + $0x1bc] sm:$0xf]
    %v6517 = vld [vmem:[%s6235 + $0x1c0] sm:$0xf]
    %v6518 = vld [vmem:[%s6235 + $0x1c4] sm:$0xf]
    %v6519 = vld [vmem:[%s6235 + $0x1c8] sm:$0xf]
    %v6520 = vld [vmem:[%s6235 + $0x1cc] sm:$0xf]
    %v6521 = vld [vmem:[%s6235 + $0x1d0] sm:$0xf]
    %v6522 = vld [vmem:[%s6235 + $0x1d4] sm:$0xf]
    %v6523 = vld [vmem:[%s6235 + $0x1d8] sm:$0xf]
    %v6524 = vld [vmem:[%s6235 + $0x1dc] sm:$0xf]
    %v6525 = vld [vmem:[%s6235 + $0x1e0] sm:$0xf]
    %v6526 = vld [vmem:[%s6235 + $0x1e4] sm:$0xf]
    %v6527 = vld [vmem:[%s6235 + $0x1e8] sm:$0xf]
    %v6528 = vld [vmem:[%s6235 + $0x1ec] sm:$0xf]
    %v6529 = vld [vmem:[%s6235 + $0x1f0] sm:$0xf]
    %v6530 = vld [vmem:[%s6235 + $0x1f4] sm:$0xf]
    %v6531 = vld [vmem:[%s6235 + $0x1f8] sm:$0xf]
    %v6532 = vld [vmem:[%s6235 + $0x1fc] sm:$0xf]
    %v6597 = vunpack.c.l.b16 %v6469
    %v6598 = vunpack.c.l.b16 %v6470
    %v6599 = vunpack.c.l.b16 %v6471
    %v6600 = vunpack.c.l.b16 %v6472
    %v6601 = vunpack.c.l.b16 %v6473
    %v6602 = vunpack.c.l.b16 %v6474
    %v6603 = vunpack.c.l.b16 %v6475
    %v6604 = vunpack.c.l.b16 %v6476
    %v6605 = vunpack.c.l.b16 %v6477
    %v6606 = vunpack.c.l.b16 %v6478
    %v6607 = vunpack.c.l.b16 %v6479
    %v6608 = vunpack.c.l.b16 %v6480
    %v6609 = vunpack.c.l.b16 %v6481
    %v6610 = vunpack.c.l.b16 %v6482
    %v6611 = vunpack.c.l.b16 %v6483
    %v6612 = vunpack.c.l.b16 %v6484
    %v6613 = vunpack.c.l.b16 %v6485
    %v6614 = vunpack.c.l.b16 %v6486
    %v6615 = vunpack.c.l.b16 %v6487
    %v6616 = vunpack.c.l.b16 %v6488
    %v6617 = vunpack.c.l.b16 %v6489
    %v6618 = vunpack.c.l.b16 %v6490
    %v6619 = vunpack.c.l.b16 %v6491
    %v6620 = vunpack.c.l.b16 %v6492
    %v6621 = vunpack.c.l.b16 %v6493
    %v6622 = vunpack.c.l.b16 %v6494
    %v6623 = vunpack.c.l.b16 %v6495
    %v6624 = vunpack.c.l.b16 %v6496
    %v6625 = vunpack.c.l.b16 %v6497
    %v6626 = vunpack.c.l.b16 %v6498
    %v6627 = vunpack.c.l.b16 %v6499
    %v6628 = vunpack.c.l.b16 %v6500
    %v6629 = vunpack.c.l.b16 %v6501
    %v6630 = vunpack.c.l.b16 %v6502
    %v6631 = vunpack.c.l.b16 %v6503
    %v6632 = vunpack.c.l.b16 %v6504
    %v6633 = vunpack.c.l.b16 %v6505
    %v6634 = vunpack.c.l.b16 %v6506
    %v6635 = vunpack.c.l.b16 %v6507
    %v6636 = vunpack.c.l.b16 %v6508
    %v6637 = vunpack.c.l.b16 %v6509
    %v6638 = vunpack.c.l.b16 %v6510
    %v6639 = vunpack.c.l.b16 %v6511
    %v6640 = vunpack.c.l.b16 %v6512
    %v6641 = vunpack.c.l.b16 %v6513
    %v6642 = vunpack.c.l.b16 %v6514
    %v6643 = vunpack.c.l.b16 %v6515
    %v6644 = vunpack.c.l.b16 %v6516
    %v6645 = vunpack.c.l.b16 %v6517
    %v6646 = vunpack.c.l.b16 %v6518
    %v6647 = vunpack.c.l.b16 %v6519
    %v6648 = vunpack.c.l.b16 %v6520
    %v6649 = vunpack.c.l.b16 %v6521
    %v6650 = vunpack.c.l.b16 %v6522
    %v6651 = vunpack.c.l.b16 %v6523
    %v6652 = vunpack.c.l.b16 %v6524
    %v6653 = vunpack.c.l.b16 %v6525
    %v6654 = vunpack.c.l.b16 %v6526
    %v6655 = vunpack.c.l.b16 %v6527
    %v6656 = vunpack.c.l.b16 %v6528
    %v6657 = vunpack.c.l.b16 %v6529
    %v6658 = vunpack.c.l.b16 %v6530
    %v6659 = vunpack.c.l.b16 %v6531
    %v6660 = vunpack.c.l.b16 %v6532
    %v6661 = vpack.c.b16 %v6598, %v6597
    %v6662 = vpack.c.b16 %v6600, %v6599
    %v6663 = vpack.c.b16 %v6602, %v6601
    %v6664 = vpack.c.b16 %v6604, %v6603
    %v6665 = vpack.c.b16 %v6606, %v6605
    %v6666 = vpack.c.b16 %v6608, %v6607
    %v6667 = vpack.c.b16 %v6610, %v6609
    %v6668 = vpack.c.b16 %v6612, %v6611
    %v6669 = vpack.c.b16 %v6614, %v6613
    %v6670 = vpack.c.b16 %v6616, %v6615
    %v6671 = vpack.c.b16 %v6618, %v6617
    %v6672 = vpack.c.b16 %v6620, %v6619
    %v6673 = vpack.c.b16 %v6622, %v6621
    %v6674 = vpack.c.b16 %v6624, %v6623
    %v6675 = vpack.c.b16 %v6626, %v6625
    %v6676 = vpack.c.b16 %v6628, %v6627
    %v6677 = vpack.c.b16 %v6630, %v6629
    %v6678 = vpack.c.b16 %v6632, %v6631
    %v6679 = vpack.c.b16 %v6634, %v6633
    %v6680 = vpack.c.b16 %v6636, %v6635
    %v6681 = vpack.c.b16 %v6638, %v6637
    %v6682 = vpack.c.b16 %v6640, %v6639
    %v6683 = vpack.c.b16 %v6642, %v6641
    %v6684 = vpack.c.b16 %v6644, %v6643
    %v6685 = vpack.c.b16 %v6646, %v6645
    %v6686 = vpack.c.b16 %v6648, %v6647
    %v6687 = vpack.c.b16 %v6650, %v6649
    %v6688 = vpack.c.b16 %v6652, %v6651
    %v6689 = vpack.c.b16 %v6654, %v6653
    %v6690 = vpack.c.b16 %v6656, %v6655
    %v6691 = vpack.c.b16 %v6658, %v6657
    %v6692 = vpack.c.b16 %v6660, %v6659
    %6725 = vmatprep.subr.bf16.mxu0 0
    %6726 = vmatpush1.bf16.msra.mxu0 %v6661
    %6727 = vmatprep.subr.bf16.mxu0 0
    %6728 = vmatpush1.bf16.msra.mxu0 %v6662
    %6729 = vmatprep.subr.bf16.mxu0 0
    %6730 = vmatpush1.bf16.msra.mxu0 %v6663
    %6731 = vmatprep.subr.bf16.mxu0 0
    %6732 = vmatpush1.bf16.msra.mxu0 %v6664
    %6733 = vmatprep.subr.bf16.mxu0 0
    %6734 = vmatpush1.bf16.msra.mxu0 %v6665
    %6735 = vmatprep.subr.bf16.mxu0 0
    %6736 = vmatpush1.bf16.msra.mxu0 %v6666
    %6737 = vmatprep.subr.bf16.mxu0 0
    %6738 = vmatpush1.bf16.msra.mxu0 %v6667
    %6739 = vmatprep.subr.bf16.mxu0 0
    %6740 = vmatpush1.bf16.msra.mxu0 %v6668
    %6741 = vmatprep.subr.bf16.mxu0 0
    %6742 = vmatpush1.bf16.msra.mxu0 %v6669
    %6743 = vmatprep.subr.bf16.mxu0 0
    %6744 = vmatpush1.bf16.msra.mxu0 %v6670
    %6745 = vmatprep.subr.bf16.mxu0 0
    %6746 = vmatpush1.bf16.msra.mxu0 %v6671
    %6747 = vmatprep.subr.bf16.mxu0 0
    %6748 = vmatpush1.bf16.msra.mxu0 %v6672
    %6749 = vmatprep.subr.bf16.mxu0 0
    %6750 = vmatpush1.bf16.msra.mxu0 %v6673
    %6751 = vmatprep.subr.bf16.mxu0 0
    %6752 = vmatpush1.bf16.msra.mxu0 %v6674
    %6753 = vmatprep.subr.bf16.mxu0 0
    %6754 = vmatpush1.bf16.msra.mxu0 %v6675
    %6755 = vmatprep.subr.bf16.mxu0 0
    %6756 = vmatpush1.bf16.msra.mxu0 %v6676
    %6757 = vmatprep.mubr.bf16.mxu0 %v6466
    %6758 = vmatmul.mubr.bf16.gmra.mrb[0].mxu0 %v6465
    %v6759 = vpop.f32.mrb[0].mxu0
    %v6760 = vadd.f32 0.0, %v6759
    %v6761 = vpop.f32.mrb[0].mxu0
    %v6762 = vpop.f32.mrb[0].mxu0
    %v6763 = vadd.f32 0.0, %v6762
    %v6764 = vpop.f32.mrb[0].mxu0
    %6765 = vdwg.mxu0
    %6766 = vmatprep.subr.bf16.mxu0 0
    %6767 = vmatpush1.bf16.msra.mxu0 %v6677
    %6768 = vmatprep.subr.bf16.mxu0 0
    %6769 = vmatpush1.bf16.msra.mxu0 %v6678
    %6770 = vmatprep.subr.bf16.mxu0 0
    %6771 = vmatpush1.bf16.msra.mxu0 %v6679
    %6772 = vmatprep.subr.bf16.mxu0 0
    %6773 = vmatpush1.bf16.msra.mxu0 %v6680
    %6774 = vmatprep.subr.bf16.mxu0 0
    %6775 = vmatpush1.bf16.msra.mxu0 %v6681
    %6776 = vmatprep.subr.bf16.mxu0 0
    %6777 = vmatpush1.bf16.msra.mxu0 %v6682
    %6778 = vmatprep.subr.bf16.mxu0 0
    %6779 = vmatpush1.bf16.msra.mxu0 %v6683
    %6780 = vmatprep.subr.bf16.mxu0 0
    %6781 = vmatpush1.bf16.msra.mxu0 %v6684
    %6782 = vmatprep.subr.bf16.mxu0 0
    %6783 = vmatpush1.bf16.msra.mxu0 %v6685
    %6784 = vmatprep.subr.bf16.mxu0 0
    %6785 = vmatpush1.bf16.msra.mxu0 %v6686
    %6786 = vmatprep.subr.bf16.mxu0 0
    %6787 = vmatpush1.bf16.msra.mxu0 %v6687
    %6788 = vmatprep.subr.bf16.mxu0 0
    %6789 = vmatpush1.bf16.msra.mxu0 %v6688
    %6790 = vmatprep.subr.bf16.mxu0 0
    %6791 = vmatpush1.bf16.msra.mxu0 %v6689
    %6792 = vmatprep.subr.bf16.mxu0 0
    %6793 = vmatpush1.bf16.msra.mxu0 %v6690
    %6794 = vmatprep.subr.bf16.mxu0 0
    %6795 = vmatpush1.bf16.msra.mxu0 %v6691
    %6796 = vmatprep.subr.bf16.mxu0 0
    %6797 = vmatpush1.bf16.msra.mxu0 %v6692
    %6798 = vmatprep.mubr.bf16.mxu0 %v6468
    %6799 = vmatmul.mubr.bf16.gmra.mrb[0].mxu0 %v6467
    %v6800 = vpop.f32.mrb[0].mxu0
    %v6801 = vadd.f32 %v6760, %v6800
    %v6802 = vpop.f32.mrb[0].mxu0
    %v6803 = vpop.f32.mrb[0].mxu0
    %v6804 = vadd.f32 %v6763, %v6803
    %v6805 = vpop.f32.mrb[0].mxu0
    %6806 = vdwg.mxu0
    %v6871 = vunpack.c.l.b16 %v6236
    %v6872 = vunpack.c.l.b16 %v6237
    %v6873 = vunpack.c.l.b16 %v6238
    %v6874 = vunpack.c.l.b16 %v6239
    %v6875 = vunpack.c.l.b16 %v6240
    %v6876 = vunpack.c.l.b16 %v6241
    %v6877 = vunpack.c.l.b16 %v6242
    %v6878 = vunpack.c.l.b16 %v6243
    %v6879 = vunpack.c.l.b16 %v6244
    %v6880 = vunpack.c.l.b16 %v6245
    %v6881 = vunpack.c.l.b16 %v6246
    %v6882 = vunpack.c.l.b16 %v6247
    %v6883 = vunpack.c.l.b16 %v6248
    %v6884 = vunpack.c.l.b16 %v6249
    %v6885 = vunpack.c.l.b16 %v6250
    %v6886 = vunpack.c.l.b16 %v6251
    %v6887 = vunpack.c.l.b16 %v6252
    %v6888 = vunpack.c.l.b16 %v6253
    %v6889 = vunpack.c.l.b16 %v6254
    %v6890 = vunpack.c.l.b16 %v6255
    %v6891 = vunpack.c.l.b16 %v6256
    %v6892 = vunpack.c.l.b16 %v6257
    %v6893 = vunpack.c.l.b16 %v6258
    %v6894 = vunpack.c.l.b16 %v6259
    %v6895 = vunpack.c.l.b16 %v6260
    %v6896 = vunpack.c.l.b16 %v6261
    %v6897 = vunpack.c.l.b16 %v6262
    %v6898 = vunpack.c.l.b16 %v6263
    %v6899 = vunpack.c.l.b16 %v6264
    %v6900 = vunpack.c.l.b16 %v6265
    %v6901 = vunpack.c.l.b16 %v6266
    %v6902 = vunpack.c.l.b16 %v6267
    %v6903 = vunpack.c.l.b16 %v6268
    %v6904 = vunpack.c.l.b16 %v6269
    %v6905 = vunpack.c.l.b16 %v6270
    %v6906 = vunpack.c.l.b16 %v6271
    %v6907 = vunpack.c.l.b16 %v6272
    %v6908 = vunpack.c.l.b16 %v6273
    %v6909 = vunpack.c.l.b16 %v6274
    %v6910 = vunpack.c.l.b16 %v6275
    %v6911 = vunpack.c.l.b16 %v6276
    %v6912 = vunpack.c.l.b16 %v6277
    %v6913 = vunpack.c.l.b16 %v6278
    %v6914 = vunpack.c.l.b16 %v6279
    %v6915 = vunpack.c.l.b16 %v6280
    %v6916 = vunpack.c.l.b16 %v6281
    %v6917 = vunpack.c.l.b16 %v6282
    %v6918 = vunpack.c.l.b16 %v6283
    %v6919 = vunpack.c.l.b16 %v6284
    %v6920 = vunpack.c.l.b16 %v6285
    %v6921 = vunpack.c.l.b16 %v6286
    %v6922 = vunpack.c.l.b16 %v6287
    %v6923 = vunpack.c.l.b16 %v6288
    %v6924 = vunpack.c.l.b16 %v6289
    %v6925 = vunpack.c.l.b16 %v6290
    %v6926 = vunpack.c.l.b16 %v6291
    %v6927 = vunpack.c.l.b16 %v6292
    %v6928 = vunpack.c.l.b16 %v6293
    %v6929 = vunpack.c.l.b16 %v6294
    %v6930 = vunpack.c.l.b16 %v6295
    %v6931 = vunpack.c.l.b16 %v6296
    %v6932 = vunpack.c.l.b16 %v6297
    %v6933 = vunpack.c.l.b16 %v6298
    %v6934 = vunpack.c.l.b16 %v6299
    %v6935 = vpack.c.b16 %v6872, %v6871
    %v6936 = vpack.c.b16 %v6874, %v6873
    %v6937 = vpack.c.b16 %v6876, %v6875
    %v6938 = vpack.c.b16 %v6878, %v6877
    %v6939 = vpack.c.b16 %v6880, %v6879
    %v6940 = vpack.c.b16 %v6882, %v6881
    %v6941 = vpack.c.b16 %v6884, %v6883
    %v6942 = vpack.c.b16 %v6886, %v6885
    %v6943 = vpack.c.b16 %v6888, %v6887
    %v6944 = vpack.c.b16 %v6890, %v6889
    %v6945 = vpack.c.b16 %v6892, %v6891
    %v6946 = vpack.c.b16 %v6894, %v6893
    %v6947 = vpack.c.b16 %v6896, %v6895
    %v6948 = vpack.c.b16 %v6898, %v6897
    %v6949 = vpack.c.b16 %v6900, %v6899
    %v6950 = vpack.c.b16 %v6902, %v6901
    %v6951 = vpack.c.b16 %v6904, %v6903
    %v6952 = vpack.c.b16 %v6906, %v6905
    %v6953 = vpack.c.b16 %v6908, %v6907
    %v6954 = vpack.c.b16 %v6910, %v6909
    %v6955 = vpack.c.b16 %v6912, %v6911
    %v6956 = vpack.c.b16 %v6914, %v6913
    %v6957 = vpack.c.b16 %v6916, %v6915
    %v6958 = vpack.c.b16 %v6918, %v6917
    %v6959 = vpack.c.b16 %v6920, %v6919
    %v6960 = vpack.c.b16 %v6922, %v6921
    %v6961 = vpack.c.b16 %v6924, %v6923
    %v6962 = vpack.c.b16 %v6926, %v6925
    %v6963 = vpack.c.b16 %v6928, %v6927
    %v6964 = vpack.c.b16 %v6930, %v6929
    %v6965 = vpack.c.b16 %v6932, %v6931
    %v6966 = vpack.c.b16 %v6934, %v6933
    %6999 = vmatprep.subr.bf16.mxu0 0
    %7000 = vmatpush1.bf16.msra.mxu0 %v6935
    %7001 = vmatprep.subr.bf16.mxu0 0
    %7002 = vmatpush1.bf16.msra.mxu0 %v6936
    %7003 = vmatprep.subr.bf16.mxu0 0
    %7004 = vmatpush1.bf16.msra.mxu0 %v6937
    %7005 = vmatprep.subr.bf16.mxu0 0
    %7006 = vmatpush1.bf16.msra.mxu0 %v6938
    %7007 = vmatprep.subr.bf16.mxu0 0
    %7008 = vmatpush1.bf16.msra.mxu0 %v6939
    %7009 = vmatprep.subr.bf16.mxu0 0
    %7010 = vmatpush1.bf16.msra.mxu0 %v6940
    %7011 = vmatprep.subr.bf16.mxu0 0
    %7012 = vmatpush1.bf16.msra.mxu0 %v6941
    %7013 = vmatprep.subr.bf16.mxu0 0
    %7014 = vmatpush1.bf16.msra.mxu0 %v6942
    %7015 = vmatprep.subr.bf16.mxu0 0
    %7016 = vmatpush1.bf16.msra.mxu0 %v6943
    %7017 = vmatprep.subr.bf16.mxu0 0
    %7018 = vmatpush1.bf16.msra.mxu0 %v6944
    %7019 = vmatprep.subr.bf16.mxu0 0
    %7020 = vmatpush1.bf16.msra.mxu0 %v6945
    %7021 = vmatprep.subr.bf16.mxu0 0
    %7022 = vmatpush1.bf16.msra.mxu0 %v6946
    %7023 = vmatprep.subr.bf16.mxu0 0
    %7024 = vmatpush1.bf16.msra.mxu0 %v6947
    %7025 = vmatprep.subr.bf16.mxu0 0
    %7026 = vmatpush1.bf16.msra.mxu0 %v6948
    %7027 = vmatprep.subr.bf16.mxu0 0
    %7028 = vmatpush1.bf16.msra.mxu0 %v6949
    %7029 = vmatprep.subr.bf16.mxu0 0
    %7030 = vmatpush1.bf16.msra.mxu0 %v6950
    %7031 = vmatprep.mubr.bf16.mxu0 %v6232
    %7032 = vmatmul.mubr.bf16.gmra.mrb[0].mxu0 %v6231
    %v7033 = vpop.f32.mrb[0].mxu0
    %v7034 = vadd.f32 %v6801, %v7033
    %v7035 = vpop.f32.mrb[0].mxu0
    %v7036 = vpop.f32.mrb[0].mxu0
    %v7037 = vadd.f32 %v6804, %v7036
    %v7038 = vpop.f32.mrb[0].mxu0
    %7039 = vdwg.mxu0
    %7040 = vmatprep.subr.bf16.mxu0 0
    %7041 = vmatpush1.bf16.msra.mxu0 %v6951
    %7042 = vmatprep.subr.bf16.mxu0 0
    %7043 = vmatpush1.bf16.msra.mxu0 %v6952
    %7044 = vmatprep.subr.bf16.mxu0 0
    %7045 = vmatpush1.bf16.msra.mxu0 %v6953
    %7046 = vmatprep.subr.bf16.mxu0 0
    %7047 = vmatpush1.bf16.msra.mxu0 %v6954
    %7048 = vmatprep.subr.bf16.mxu0 0
    %7049 = vmatpush1.bf16.msra.mxu0 %v6955
    %7050 = vmatprep.subr.bf16.mxu0 0
    %7051 = vmatpush1.bf16.msra.mxu0 %v6956
    %7052 = vmatprep.subr.bf16.mxu0 0
    %7053 = vmatpush1.bf16.msra.mxu0 %v6957
    %7054 = vmatprep.subr.bf16.mxu0 0
    %7055 = vmatpush1.bf16.msra.mxu0 %v6958
    %7056 = vmatprep.subr.bf16.mxu0 0
    %7057 = vmatpush1.bf16.msra.mxu0 %v6959
    %7058 = vmatprep.subr.bf16.mxu0 0
    %7059 = vmatpush1.bf16.msra.mxu0 %v6960
    %7060 = vmatprep.subr.bf16.mxu0 0
    %7061 = vmatpush1.bf16.msra.mxu0 %v6961
    %7062 = vmatprep.subr.bf16.mxu0 0
    %7063 = vmatpush1.bf16.msra.mxu0 %v6962
    %7064 = vmatprep.subr.bf16.mxu0 0
    %7065 = vmatpush1.bf16.msra.mxu0 %v6963
    %7066 = vmatprep.subr.bf16.mxu0 0
    %7067 = vmatpush1.bf16.msra.mxu0 %v6964
    %7068 = vmatprep.subr.bf16.mxu0 0
    %7069 = vmatpush1.bf16.msra.mxu0 %v6965
    %7070 = vmatprep.subr.bf16.mxu0 0
    %7071 = vmatpush1.bf16.msra.mxu0 %v6966
    %7072 = vmatprep.mubr.bf16.mxu0 %v6234
    %7073 = vmatmul.mubr.bf16.gmra.mrb[0].mxu0 %v6233
    %v7074 = vpop.f32.mrb[0].mxu0
    %v7075 = vadd.f32 %v7034, %v7074
    %v7076 = vpop.f32.mrb[0].mxu0
    %v7077 = vpop.f32.mrb[0].mxu0
    %v7078 = vadd.f32 %v7037, %v7077
    %v7079 = vpop.f32.mrb[0].mxu0
    %7080 = vdwg.mxu0
    %v7081 = vld [vmem:[%s6062 + $0x20] sm:$0xff]
    %v7082 = vld [vmem:[%s6062 + $0x28] sm:$0xff]
    %v7083 = vld [vmem:[%s6062 + $0x60] sm:$0xff]
    %v7084 = vld [vmem:[%s6062 + $0x68] sm:$0xff]
    %v7085 = vld [vmem:[%s6062 + $0xa0] sm:$0xff]
    %v7086 = vld [vmem:[%s6062 + $0xa8] sm:$0xff]
    %v7087 = vld [vmem:[%s6062 + $0xe0] sm:$0xff]
    %v7088 = vld [vmem:[%s6062 + $0xe8] sm:$0xff]
    %s7089 = scalar_lea.vmem %s8, 323
    %v7090 = vld [vmem:[%s7089] ss:$8 sm:$0xf]
    %v7092 = vlaneseq
    %v7093 = vshrl.u32 %v7092, 7
    %v7094 = vsub.s32 0, %v7093
    %v7095 = vrot.slane %v7090, %v7094
    %v7096 = vlaneseq
    %v7097 = vshrl.u32 %v7096, 7
    %v7098 = vsub.s32 1, %v7097
    %v7099 = vrot.slane %v7090, %v7098
    %v7100 = vlaneseq
    %v7101 = vshrl.u32 %v7100, 7
    %v7102 = vsub.s32 2, %v7101
    %v7103 = vrot.slane %v7090, %v7102
    %v7104 = vlaneseq
    %v7105 = vshrl.u32 %v7104, 7
    %v7106 = vsub.s32 3, %v7105
    %v7107 = vrot.slane %v7090, %v7106
    %v7120 = vunpack.c.l.b16 %v7081
    %v7121 = vunpack.c.h.b16 %v7081
    %v7122 = vunpack.c.l.b16 %v7082
    %v7123 = vunpack.c.h.b16 %v7082
    %v7124 = vunpack.c.l.b16 %v7083
    %v7125 = vunpack.c.h.b16 %v7083
    %v7126 = vunpack.c.l.b16 %v7084
    %v7127 = vunpack.c.h.b16 %v7084
    %v7128 = vunpack.c.l.b16 %v7085
    %v7129 = vunpack.c.h.b16 %v7085
    %v7130 = vunpack.c.l.b16 %v7086
    %v7131 = vunpack.c.h.b16 %v7086
    %v7132 = vunpack.c.l.b16 %v7087
    %v7133 = vunpack.c.h.b16 %v7087
    %v7134 = vunpack.c.l.b16 %v7088
    %v7135 = vunpack.c.h.b16 %v7088
    %v7136 = vpack.c.b16 %v7124, %v7120
    %v7137 = vpack.c.b16 %v7125, %v7121
    %v7138 = vpack.c.b16 %v7126, %v7122
    %v7139 = vpack.c.b16 %v7127, %v7123
    %v7140 = vpack.c.b16 %v7132, %v7128
    %v7141 = vpack.c.b16 %v7133, %v7129
    %v7142 = vpack.c.b16 %v7134, %v7130
    %v7143 = vpack.c.b16 %v7135, %v7131
    %7152 = vmatprep.subr.bf16.mxu0 %v7137
    %7153 = vmatpush1.bf16.msra.mxu0 %v7136
    %7154 = vmatprep.subr.bf16.mxu0 %v7141
    %7155 = vmatpush1.bf16.msra.mxu0 %v7140
    %7156 = vmatprep.subr.bf16.mxu0 0
    %7157 = vmatpush1.bf16.msra.mxu0 0
    %7158 = vmatprep.subr.bf16.mxu0 0
    %7159 = vmatpush1.bf16.msra.mxu0 0
    %7160 = vmatprep.subr.bf16.mxu0 0
    %7161 = vmatpush1.bf16.msra.mxu0 0
    %7162 = vmatprep.subr.bf16.mxu0 0
    %7163 = vmatpush1.bf16.msra.mxu0 0
    %7164 = vmatprep.subr.bf16.mxu0 0
    %7165 = vmatpush1.bf16.msra.mxu0 0
    %7166 = vmatprep.subr.bf16.mxu0 0
    %7167 = vmatpush1.bf16.msra.mxu0 0
    %7168 = vmatprep.subr.bf16.mxu0 0
    %7169 = vmatpush1.bf16.msra.mxu0 0
    %7170 = vmatprep.subr.bf16.mxu0 0
    %7171 = vmatpush1.bf16.msra.mxu0 0
    %7172 = vmatprep.subr.bf16.mxu0 0
    %7173 = vmatpush1.bf16.msra.mxu0 0
    %7174 = vmatprep.subr.bf16.mxu0 0
    %7175 = vmatpush1.bf16.msra.mxu0 0
    %7176 = vmatprep.subr.bf16.mxu0 0
    %7177 = vmatpush1.bf16.msra.mxu0 0
    %7178 = vmatprep.subr.bf16.mxu0 0
    %7179 = vmatpush1.bf16.msra.mxu0 0
    %7180 = vmatprep.subr.bf16.mxu0 0
    %7181 = vmatpush1.bf16.msra.mxu0 0
    %7182 = vmatprep.subr.bf16.mxu0 0
    %7183 = vmatpush1.bf16.msra.mxu0 0
    %7184 = vmatprep.mubr.bf16.mxu0 0
    %7185 = vmatmul.mubr.bf16.gmra.mrb[0].mxu0 %v6135
    %v7186 = vpop.f32.mrb[0].mxu0
    %v7187 = vadd.f32 %v7095, %v7186
    %v7188 = vpop.f32.mrb[0].mxu0
    %v7189 = vadd.f32 %v7099, %v7188
    %v7190 = vpop.f32.mrb[0].mxu0
    %v7191 = vadd.f32 %v7095, %v7190
    %v7192 = vpop.f32.mrb[0].mxu0
    %v7193 = vadd.f32 %v7099, %v7192
    %7194 = vdwg.mxu0
    %7195 = vmatprep.subr.bf16.mxu0 %v7139
    %7196 = vmatpush1.bf16.msra.mxu0 %v7138
    %7197 = vmatprep.subr.bf16.mxu0 %v7143
    %7198 = vmatpush1.bf16.msra.mxu0 %v7142
    %7199 = vmatprep.subr.bf16.mxu0 0
    %7200 = vmatpush1.bf16.msra.mxu0 0
    %7201 = vmatprep.subr.bf16.mxu0 0
    %7202 = vmatpush1.bf16.msra.mxu0 0
    %7203 = vmatprep.subr.bf16.mxu0 0
    %7204 = vmatpush1.bf16.msra.mxu0 0
    %7205 = vmatprep.subr.bf16.mxu0 0
    %7206 = vmatpush1.bf16.msra.mxu0 0
    %7207 = vmatprep.subr.bf16.mxu0 0
    %7208 = vmatpush1.bf16.msra.mxu0 0
    %7209 = vmatprep.subr.bf16.mxu0 0
    %7210 = vmatpush1.bf16.msra.mxu0 0
    %7211 = vmatprep.subr.bf16.mxu0 0
    %7212 = vmatpush1.bf16.msra.mxu0 0
    %7213 = vmatprep.subr.bf16.mxu0 0
    %7214 = vmatpush1.bf16.msra.mxu0 0
    %7215 = vmatprep.subr.bf16.mxu0 0
    %7216 = vmatpush1.bf16.msra.mxu0 0
    %7217 = vmatprep.subr.bf16.mxu0 0
    %7218 = vmatpush1.bf16.msra.mxu0 0
    %7219 = vmatprep.subr.bf16.mxu0 0
    %7220 = vmatpush1.bf16.msra.mxu0 0
    %7221 = vmatprep.subr.bf16.mxu0 0
    %7222 = vmatpush1.bf16.msra.mxu0 0
    %7223 = vmatprep.subr.bf16.mxu0 0
    %7224 = vmatpush1.bf16.msra.mxu0 0
    %7225 = vmatprep.subr.bf16.mxu0 0
    %7226 = vmatpush1.bf16.msra.mxu0 0
    %7227 = vmatprep.mubr.bf16.mxu0 0
    %7228 = vmatmul.mubr.bf16.gmra.mrb[0].mxu0 %v6135
    %v7229 = vpop.f32.mrb[0].mxu0
    %v7230 = vadd.f32 %v7103, %v7229
    %v7231 = vpop.f32.mrb[0].mxu0
    %v7232 = vadd.f32 %v7107, %v7231
    %v7233 = vpop.f32.mrb[0].mxu0
    %v7234 = vadd.f32 %v7103, %v7233
    %v7235 = vpop.f32.mrb[0].mxu0
    %v7236 = vadd.f32 %v7107, %v7235
    %7237 = vdwg.mxu0
    %v7238 = vmax.f32 %v7187, 0.0
    %v7239 = vmax.f32 %v7189, 0.0
    %v7240 = vmax.f32 %v7230, 0.0
    %v7241 = vmax.f32 %v7232, 0.0
    %v7242 = vmax.f32 %v7191, 0.0
    %v7243 = vmax.f32 %v7193, 0.0
    %v7244 = vmax.f32 %v7234, 0.0
    %v7245 = vmax.f32 %v7236, 0.0
    %v7246 = vpack.c.bf16 %v7242, %v7238
    %v7247 = vpack.c.bf16 %v7243, %v7239
    %v7248 = vpack.c.bf16 %v7244, %v7240
    %v7249 = vpack.c.bf16 %v7245, %v7241
    %v7250 = vld [vmem:[%s6235 + $0x200] sm:$0xf]
    %v7251 = vld [vmem:[%s6235 + $0x204] sm:$0xf]
    %v7252 = vld [vmem:[%s6235 + $0x208] sm:$0xf]
    %v7253 = vld [vmem:[%s6235 + $0x20c] sm:$0xf]
    %v7254 = vld [vmem:[%s6235 + $0x210] sm:$0xf]
    %v7255 = vld [vmem:[%s6235 + $0x214] sm:$0xf]
    %v7256 = vld [vmem:[%s6235 + $0x218] sm:$0xf]
    %v7257 = vld [vmem:[%s6235 + $0x21c] sm:$0xf]
    %v7258 = vld [vmem:[%s6235 + $0x220] sm:$0xf]
    %v7259 = vld [vmem:[%s6235 + $0x224] sm:$0xf]
    %v7260 = vld [vmem:[%s6235 + $0x228] sm:$0xf]
    %v7261 = vld [vmem:[%s6235 + $0x22c] sm:$0xf]
    %v7262 = vld [vmem:[%s6235 + $0x230] sm:$0xf]
    %v7263 = vld [vmem:[%s6235 + $0x234] sm:$0xf]
    %v7264 = vld [vmem:[%s6235 + $0x238] sm:$0xf]
    %v7265 = vld [vmem:[%s6235 + $0x23c] sm:$0xf]
    %v7266 = vld [vmem:[%s6235 + $0x240] sm:$0xf]
    %v7267 = vld [vmem:[%s6235 + $0x244] sm:$0xf]
    %v7268 = vld [vmem:[%s6235 + $0x248] sm:$0xf]
    %v7269 = vld [vmem:[%s6235 + $0x24c] sm:$0xf]
    %v7270 = vld [vmem:[%s6235 + $0x250] sm:$0xf]
    %v7271 = vld [vmem:[%s6235 + $0x254] sm:$0xf]
    %v7272 = vld [vmem:[%s6235 + $0x258] sm:$0xf]
    %v7273 = vld [vmem:[%s6235 + $0x25c] sm:$0xf]
    %v7274 = vld [vmem:[%s6235 + $0x260] sm:$0xf]
    %v7275 = vld [vmem:[%s6235 + $0x264] sm:$0xf]
    %v7276 = vld [vmem:[%s6235 + $0x268] sm:$0xf]
    %v7277 = vld [vmem:[%s6235 + $0x26c] sm:$0xf]
    %v7278 = vld [vmem:[%s6235 + $0x270] sm:$0xf]
    %v7279 = vld [vmem:[%s6235 + $0x274] sm:$0xf]
    %v7280 = vld [vmem:[%s6235 + $0x278] sm:$0xf]
    %v7281 = vld [vmem:[%s6235 + $0x27c] sm:$0xf]
    %v7282 = vld [vmem:[%s6235 + $0x280] sm:$0xf]
    %v7283 = vld [vmem:[%s6235 + $0x284] sm:$0xf]
    %v7284 = vld [vmem:[%s6235 + $0x288] sm:$0xf]
    %v7285 = vld [vmem:[%s6235 + $0x28c] sm:$0xf]
    %v7286 = vld [vmem:[%s6235 + $0x290] sm:$0xf]
    %v7287 = vld [vmem:[%s6235 + $0x294] sm:$0xf]
    %v7288 = vld [vmem:[%s6235 + $0x298] sm:$0xf]
    %v7289 = vld [vmem:[%s6235 + $0x29c] sm:$0xf]
    %v7290 = vld [vmem:[%s6235 + $0x2a0] sm:$0xf]
    %v7291 = vld [vmem:[%s6235 + $0x2a4] sm:$0xf]
    %v7292 = vld [vmem:[%s6235 + $0x2a8] sm:$0xf]
    %v7293 = vld [vmem:[%s6235 + $0x2ac] sm:$0xf]
    %v7294 = vld [vmem:[%s6235 + $0x2b0] sm:$0xf]
    %v7295 = vld [vmem:[%s6235 + $0x2b4] sm:$0xf]
    %v7296 = vld [vmem:[%s6235 + $0x2b8] sm:$0xf]
    %v7297 = vld [vmem:[%s6235 + $0x2bc] sm:$0xf]
    %v7298 = vld [vmem:[%s6235 + $0x2c0] sm:$0xf]
    %v7299 = vld [vmem:[%s6235 + $0x2c4] sm:$0xf]
    %v7300 = vld [vmem:[%s6235 + $0x2c8] sm:$0xf]
    %v7301 = vld [vmem:[%s6235 + $0x2cc] sm:$0xf]
    %v7302 = vld [vmem:[%s6235 + $0x2d0] sm:$0xf]
    %v7303 = vld [vmem:[%s6235 + $0x2d4] sm:$0xf]
    %v7304 = vld [vmem:[%s6235 + $0x2d8] sm:$0xf]
    %v7305 = vld [vmem:[%s6235 + $0x2dc] sm:$0xf]
    %v7306 = vld [vmem:[%s6235 + $0x2e0] sm:$0xf]
    %v7307 = vld [vmem:[%s6235 + $0x2e4] sm:$0xf]
    %v7308 = vld [vmem:[%s6235 + $0x2e8] sm:$0xf]
    %v7309 = vld [vmem:[%s6235 + $0x2ec] sm:$0xf]
    %v7310 = vld [vmem:[%s6235 + $0x2f0] sm:$0xf]
    %v7311 = vld [vmem:[%s6235 + $0x2f4] sm:$0xf]
    %v7312 = vld [vmem:[%s6235 + $0x2f8] sm:$0xf]
    %v7313 = vld [vmem:[%s6235 + $0x2fc] sm:$0xf]
    %v7378 = vunpack.c.l.b16 %v7250
    %v7379 = vunpack.c.l.b16 %v7251
    %v7380 = vunpack.c.l.b16 %v7252
    %v7381 = vunpack.c.l.b16 %v7253
    %v7382 = vunpack.c.l.b16 %v7254
    %v7383 = vunpack.c.l.b16 %v7255
    %v7384 = vunpack.c.l.b16 %v7256
    %v7385 = vunpack.c.l.b16 %v7257
    %v7386 = vunpack.c.l.b16 %v7258
    %v7387 = vunpack.c.l.b16 %v7259
    %v7388 = vunpack.c.l.b16 %v7260
    %v7389 = vunpack.c.l.b16 %v7261
    %v7390 = vunpack.c.l.b16 %v7262
    %v7391 = vunpack.c.l.b16 %v7263
    %v7392 = vunpack.c.l.b16 %v7264
    %v7393 = vunpack.c.l.b16 %v7265
    %v7394 = vunpack.c.l.b16 %v7266
    %v7395 = vunpack.c.l.b16 %v7267
    %v7396 = vunpack.c.l.b16 %v7268
    %v7397 = vunpack.c.l.b16 %v7269
    %v7398 = vunpack.c.l.b16 %v7270
    %v7399 = vunpack.c.l.b16 %v7271
    %v7400 = vunpack.c.l.b16 %v7272
    %v7401 = vunpack.c.l.b16 %v7273
    %v7402 = vunpack.c.l.b16 %v7274
    %v7403 = vunpack.c.l.b16 %v7275
    %v7404 = vunpack.c.l.b16 %v7276
    %v7405 = vunpack.c.l.b16 %v7277
    %v7406 = vunpack.c.l.b16 %v7278
    %v7407 = vunpack.c.l.b16 %v7279
    %v7408 = vunpack.c.l.b16 %v7280
    %v7409 = vunpack.c.l.b16 %v7281
    %v7410 = vunpack.c.l.b16 %v7282
    %v7411 = vunpack.c.l.b16 %v7283
    %v7412 = vunpack.c.l.b16 %v7284
    %v7413 = vunpack.c.l.b16 %v7285
    %v7414 = vunpack.c.l.b16 %v7286
    %v7415 = vunpack.c.l.b16 %v7287
    %v7416 = vunpack.c.l.b16 %v7288
    %v7417 = vunpack.c.l.b16 %v7289
    %v7418 = vunpack.c.l.b16 %v7290
    %v7419 = vunpack.c.l.b16 %v7291
    %v7420 = vunpack.c.l.b16 %v7292
    %v7421 = vunpack.c.l.b16 %v7293
    %v7422 = vunpack.c.l.b16 %v7294
    %v7423 = vunpack.c.l.b16 %v7295
    %v7424 = vunpack.c.l.b16 %v7296
    %v7425 = vunpack.c.l.b16 %v7297
    %v7426 = vunpack.c.l.b16 %v7298
    %v7427 = vunpack.c.l.b16 %v7299
    %v7428 = vunpack.c.l.b16 %v7300
    %v7429 = vunpack.c.l.b16 %v7301
    %v7430 = vunpack.c.l.b16 %v7302
    %v7431 = vunpack.c.l.b16 %v7303
    %v7432 = vunpack.c.l.b16 %v7304
    %v7433 = vunpack.c.l.b16 %v7305
    %v7434 = vunpack.c.l.b16 %v7306
    %v7435 = vunpack.c.l.b16 %v7307
    %v7436 = vunpack.c.l.b16 %v7308
    %v7437 = vunpack.c.l.b16 %v7309
    %v7438 = vunpack.c.l.b16 %v7310
    %v7439 = vunpack.c.l.b16 %v7311
    %v7440 = vunpack.c.l.b16 %v7312
    %v7441 = vunpack.c.l.b16 %v7313
    %v7442 = vpack.c.b16 %v7379, %v7378
    %v7443 = vpack.c.b16 %v7381, %v7380
    %v7444 = vpack.c.b16 %v7383, %v7382
    %v7445 = vpack.c.b16 %v7385, %v7384
    %v7446 = vpack.c.b16 %v7387, %v7386
    %v7447 = vpack.c.b16 %v7389, %v7388
    %v7448 = vpack.c.b16 %v7391, %v7390
    %v7449 = vpack.c.b16 %v7393, %v7392
    %v7450 = vpack.c.b16 %v7395, %v7394
    %v7451 = vpack.c.b16 %v7397, %v7396
    %v7452 = vpack.c.b16 %v7399, %v7398
    %v7453 = vpack.c.b16 %v7401, %v7400
    %v7454 = vpack.c.b16 %v7403, %v7402
    %v7455 = vpack.c.b16 %v7405, %v7404
    %v7456 = vpack.c.b16 %v7407, %v7406
    %v7457 = vpack.c.b16 %v7409, %v7408
    %v7458 = vpack.c.b16 %v7411, %v7410
    %v7459 = vpack.c.b16 %v7413, %v7412
    %v7460 = vpack.c.b16 %v7415, %v7414
    %v7461 = vpack.c.b16 %v7417, %v7416
    %v7462 = vpack.c.b16 %v7419, %v7418
    %v7463 = vpack.c.b16 %v7421, %v7420
    %v7464 = vpack.c.b16 %v7423, %v7422
    %v7465 = vpack.c.b16 %v7425, %v7424
    %v7466 = vpack.c.b16 %v7427, %v7426
    %v7467 = vpack.c.b16 %v7429, %v7428
    %v7468 = vpack.c.b16 %v7431, %v7430
    %v7469 = vpack.c.b16 %v7433, %v7432
    %v7470 = vpack.c.b16 %v7435, %v7434
    %v7471 = vpack.c.b16 %v7437, %v7436
    %v7472 = vpack.c.b16 %v7439, %v7438
    %v7473 = vpack.c.b16 %v7441, %v7440
    %7506 = vmatprep.subr.bf16.mxu0 0
    %7507 = vmatpush1.bf16.msra.mxu0 %v7442
    %7508 = vmatprep.subr.bf16.mxu0 0
    %7509 = vmatpush1.bf16.msra.mxu0 %v7443
    %7510 = vmatprep.subr.bf16.mxu0 0
    %7511 = vmatpush1.bf16.msra.mxu0 %v7444
    %7512 = vmatprep.subr.bf16.mxu0 0
    %7513 = vmatpush1.bf16.msra.mxu0 %v7445
    %7514 = vmatprep.subr.bf16.mxu0 0
    %7515 = vmatpush1.bf16.msra.mxu0 %v7446
    %7516 = vmatprep.subr.bf16.mxu0 0
    %7517 = vmatpush1.bf16.msra.mxu0 %v7447
    %7518 = vmatprep.subr.bf16.mxu0 0
    %7519 = vmatpush1.bf16.msra.mxu0 %v7448
    %7520 = vmatprep.subr.bf16.mxu0 0
    %7521 = vmatpush1.bf16.msra.mxu0 %v7449
    %7522 = vmatprep.subr.bf16.mxu0 0
    %7523 = vmatpush1.bf16.msra.mxu0 %v7450
    %7524 = vmatprep.subr.bf16.mxu0 0
    %7525 = vmatpush1.bf16.msra.mxu0 %v7451
    %7526 = vmatprep.subr.bf16.mxu0 0
    %7527 = vmatpush1.bf16.msra.mxu0 %v7452
    %7528 = vmatprep.subr.bf16.mxu0 0
    %7529 = vmatpush1.bf16.msra.mxu0 %v7453
    %7530 = vmatprep.subr.bf16.mxu0 0
    %7531 = vmatpush1.bf16.msra.mxu0 %v7454
    %7532 = vmatprep.subr.bf16.mxu0 0
    %7533 = vmatpush1.bf16.msra.mxu0 %v7455
    %7534 = vmatprep.subr.bf16.mxu0 0
    %7535 = vmatpush1.bf16.msra.mxu0 %v7456
    %7536 = vmatprep.subr.bf16.mxu0 0
    %7537 = vmatpush1.bf16.msra.mxu0 %v7457
    %7538 = vmatprep.mubr.bf16.mxu0 %v7247
    %7539 = vmatmul.mubr.bf16.gmra.mrb[0].mxu0 %v7246
    %v7540 = vpop.f32.mrb[0].mxu0
    %v7541 = vadd.f32 0.0, %v7540
    %v7542 = vpop.f32.mrb[0].mxu0
    %v7543 = vpop.f32.mrb[0].mxu0
    %v7544 = vadd.f32 0.0, %v7543
    %v7545 = vpop.f32.mrb[0].mxu0
    %7546 = vdwg.mxu0
    %7547 = vmatprep.subr.bf16.mxu0 0
    %7548 = vmatpush1.bf16.msra.mxu0 %v7458
    %7549 = vmatprep.subr.bf16.mxu0 0
    %7550 = vmatpush1.bf16.msra.mxu0 %v7459
    %7551 = vmatprep.subr.bf16.mxu0 0
    %7552 = vmatpush1.bf16.msra.mxu0 %v7460
    %7553 = vmatprep.subr.bf16.mxu0 0
    %7554 = vmatpush1.bf16.msra.mxu0 %v7461
    %7555 = vmatprep.subr.bf16.mxu0 0
    %7556 = vmatpush1.bf16.msra.mxu0 %v7462
    %7557 = vmatprep.subr.bf16.mxu0 0
    %7558 = vmatpush1.bf16.msra.mxu0 %v7463
    %7559 = vmatprep.subr.bf16.mxu0 0
    %7560 = vmatpush1.bf16.msra.mxu0 %v7464
    %7561 = vmatprep.subr.bf16.mxu0 0
    %7562 = vmatpush1.bf16.msra.mxu0 %v7465
    %7563 = vmatprep.subr.bf16.mxu0 0
    %7564 = vmatpush1.bf16.msra.mxu0 %v7466
    %7565 = vmatprep.subr.bf16.mxu0 0
    %7566 = vmatpush1.bf16.msra.mxu0 %v7467
    %7567 = vmatprep.subr.bf16.mxu0 0
    %7568 = vmatpush1.bf16.msra.mxu0 %v7468
    %7569 = vmatprep.subr.bf16.mxu0 0
    %7570 = vmatpush1.bf16.msra.mxu0 %v7469
    %7571 = vmatprep.subr.bf16.mxu0 0
    %7572 = vmatpush1.bf16.msra.mxu0 %v7470
    %7573 = vmatprep.subr.bf16.mxu0 0
    %7574 = vmatpush1.bf16.msra.mxu0 %v7471
    %7575 = vmatprep.subr.bf16.mxu0 0
    %7576 = vmatpush1.bf16.msra.mxu0 %v7472
    %7577 = vmatprep.subr.bf16.mxu0 0
    %7578 = vmatpush1.bf16.msra.mxu0 %v7473
    %7579 = vmatprep.mubr.bf16.mxu0 %v7249
    %7580 = vmatmul.mubr.bf16.gmra.mrb[0].mxu0 %v7248
    %v7581 = vpop.f32.mrb[0].mxu0
    %v7582 = vadd.f32 %v7541, %v7581
    %v7583 = vpop.f32.mrb[0].mxu0
    %v7584 = vpop.f32.mrb[0].mxu0
    %v7585 = vadd.f32 %v7544, %v7584
    %v7586 = vpop.f32.mrb[0].mxu0
    %7587 = vdwg.mxu0
    %v7588 = vadd.f32 %v7075, %v7582
    %v7589 = vadd.f32 %v7078, %v7585
    %v7590 = vld [vmem:[%s6062 + $0x30] sm:$0xff]
    %v7591 = vld [vmem:[%s6062 + $0x38] sm:$0xff]
    %v7592 = vld [vmem:[%s6062 + $0x70] sm:$0xff]
    %v7593 = vld [vmem:[%s6062 + $0x78] sm:$0xff]
    %v7594 = vld [vmem:[%s6062 + $0xb0] sm:$0xff]
    %v7595 = vld [vmem:[%s6062 + $0xb8] sm:$0xff]
    %v7596 = vld [vmem:[%s6062 + $0xf0] sm:$0xff]
    %v7597 = vld [vmem:[%s6062 + $0xf8] sm:$0xff]
    %s7598 = scalar_lea.vmem %s8, 355
    %v7599 = vld [vmem:[%s7598] ss:$8 sm:$0xf]
    %v7601 = vlaneseq
    %v7602 = vshrl.u32 %v7601, 7
    %v7603 = vsub.s32 0, %v7602
    %v7604 = vrot.slane %v7599, %v7603
    %v7605 = vlaneseq
    %v7606 = vshrl.u32 %v7605, 7
    %v7607 = vsub.s32 1, %v7606
    %v7608 = vrot.slane %v7599, %v7607
    %v7609 = vlaneseq
    %v7610 = vshrl.u32 %v7609, 7
    %v7611 = vsub.s32 2, %v7610
    %v7612 = vrot.slane %v7599, %v7611
    %v7613 = vlaneseq
    %v7614 = vshrl.u32 %v7613, 7
    %v7615 = vsub.s32 3, %v7614
    %v7616 = vrot.slane %v7599, %v7615
    %v7629 = vunpack.c.l.b16 %v7590
    %v7630 = vunpack.c.h.b16 %v7590
    %v7631 = vunpack.c.l.b16 %v7591
    %v7632 = vunpack.c.h.b16 %v7591
    %v7633 = vunpack.c.l.b16 %v7592
    %v7634 = vunpack.c.h.b16 %v7592
    %v7635 = vunpack.c.l.b16 %v7593
    %v7636 = vunpack.c.h.b16 %v7593
    %v7637 = vunpack.c.l.b16 %v7594
    %v7638 = vunpack.c.h.b16 %v7594
    %v7639 = vunpack.c.l.b16 %v7595
    %v7640 = vunpack.c.h.b16 %v7595
    %v7641 = vunpack.c.l.b16 %v7596
    %v7642 = vunpack.c.h.b16 %v7596
    %v7643 = vunpack.c.l.b16 %v7597
    %v7644 = vunpack.c.h.b16 %v7597
    %v7645 = vpack.c.b16 %v7633, %v7629
    %v7646 = vpack.c.b16 %v7634, %v7630
    %v7647 = vpack.c.b16 %v7635, %v7631
    %v7648 = vpack.c.b16 %v7636, %v7632
    %v7649 = vpack.c.b16 %v7641, %v7637
    %v7650 = vpack.c.b16 %v7642, %v7638
    %v7651 = vpack.c.b16 %v7643, %v7639
    %v7652 = vpack.c.b16 %v7644, %v7640
    %7661 = vmatprep.subr.bf16.mxu0 %v7646
    %7662 = vmatpush1.bf16.msra.mxu0 %v7645
    %7663 = vmatprep.subr.bf16.mxu0 %v7650
    %7664 = vmatpush1.bf16.msra.mxu0 %v7649
    %7665 = vmatprep.subr.bf16.mxu0 0
    %7666 = vmatpush1.bf16.msra.mxu0 0
    %7667 = vmatprep.subr.bf16.mxu0 0
    %7668 = vmatpush1.bf16.msra.mxu0 0
    %7669 = vmatprep.subr.bf16.mxu0 0
    %7670 = vmatpush1.bf16.msra.mxu0 0
    %7671 = vmatprep.subr.bf16.mxu0 0
    %7672 = vmatpush1.bf16.msra.mxu0 0
    %7673 = vmatprep.subr.bf16.mxu0 0
    %7674 = vmatpush1.bf16.msra.mxu0 0
    %7675 = vmatprep.subr.bf16.mxu0 0
    %7676 = vmatpush1.bf16.msra.mxu0 0
    %7677 = vmatprep.subr.bf16.mxu0 0
    %7678 = vmatpush1.bf16.msra.mxu0 0
    %7679 = vmatprep.subr.bf16.mxu0 0
    %7680 = vmatpush1.bf16.msra.mxu0 0
    %7681 = vmatprep.subr.bf16.mxu0 0
    %7682 = vmatpush1.bf16.msra.mxu0 0
    %7683 = vmatprep.subr.bf16.mxu0 0
    %7684 = vmatpush1.bf16.msra.mxu0 0
    %7685 = vmatprep.subr.bf16.mxu0 0
    %7686 = vmatpush1.bf16.msra.mxu0 0
    %7687 = vmatprep.subr.bf16.mxu0 0
    %7688 = vmatpush1.bf16.msra.mxu0 0
    %7689 = vmatprep.subr.bf16.mxu0 0
    %7690 = vmatpush1.bf16.msra.mxu0 0
    %7691 = vmatprep.subr.bf16.mxu0 0
    %7692 = vmatpush1.bf16.msra.mxu0 0
    %7693 = vmatprep.mubr.bf16.mxu0 0
    %7694 = vmatmul.mubr.bf16.gmra.mrb[0].mxu0 %v6135
    %v7695 = vpop.f32.mrb[0].mxu0
    %v7696 = vadd.f32 %v7604, %v7695
    %v7697 = vpop.f32.mrb[0].mxu0
    %v7698 = vadd.f32 %v7608, %v7697
    %v7699 = vpop.f32.mrb[0].mxu0
    %v7700 = vadd.f32 %v7604, %v7699
    %v7701 = vpop.f32.mrb[0].mxu0
    %v7702 = vadd.f32 %v7608, %v7701
    %7703 = vdwg.mxu0
    %7704 = vmatprep.subr.bf16.mxu0 %v7648
    %7705 = vmatpush1.bf16.msra.mxu0 %v7647
    %7706 = vmatprep.subr.bf16.mxu0 %v7652
    %7707 = vmatpush1.bf16.msra.mxu0 %v7651
    %7708 = vmatprep.subr.bf16.mxu0 0
    %7709 = vmatpush1.bf16.msra.mxu0 0
    %7710 = vmatprep.subr.bf16.mxu0 0
    %7711 = vmatpush1.bf16.msra.mxu0 0
    %7712 = vmatprep.subr.bf16.mxu0 0
    %7713 = vmatpush1.bf16.msra.mxu0 0
    %7714 = vmatprep.subr.bf16.mxu0 0
    %7715 = vmatpush1.bf16.msra.mxu0 0
    %7716 = vmatprep.subr.bf16.mxu0 0
    %7717 = vmatpush1.bf16.msra.mxu0 0
    %7718 = vmatprep.subr.bf16.mxu0 0
    %7719 = vmatpush1.bf16.msra.mxu0 0
    %7720 = vmatprep.subr.bf16.mxu0 0
    %7721 = vmatpush1.bf16.msra.mxu0 0
    %7722 = vmatprep.subr.bf16.mxu0 0
    %7723 = vmatpush1.bf16.msra.mxu0 0
    %7724 = vmatprep.subr.bf16.mxu0 0
    %7725 = vmatpush1.bf16.msra.mxu0 0
    %7726 = vmatprep.subr.bf16.mxu0 0
    %7727 = vmatpush1.bf16.msra.mxu0 0
    %7728 = vmatprep.subr.bf16.mxu0 0
    %7729 = vmatpush1.bf16.msra.mxu0 0
    %7730 = vmatprep.subr.bf16.mxu0 0
    %7731 = vmatpush1.bf16.msra.mxu0 0
    %7732 = vmatprep.subr.bf16.mxu0 0
    %7733 = vmatpush1.bf16.msra.mxu0 0
    %7734 = vmatprep.subr.bf16.mxu0 0
    %7735 = vmatpush1.bf16.msra.mxu0 0
    %7736 = vmatprep.mubr.bf16.mxu0 0
    %7737 = vmatmul.mubr.bf16.gmra.mrb[0].mxu0 %v6135
    %v7738 = vpop.f32.mrb[0].mxu0
    %v7739 = vadd.f32 %v7612, %v7738
    %v7740 = vpop.f32.mrb[0].mxu0
    %v7741 = vadd.f32 %v7616, %v7740
    %v7742 = vpop.f32.mrb[0].mxu0
    %v7743 = vadd.f32 %v7612, %v7742
    %v7744 = vpop.f32.mrb[0].mxu0
    %v7745 = vadd.f32 %v7616, %v7744
    %7746 = vdwg.mxu0
    %v7747 = vmax.f32 %v7696, 0.0
    %v7748 = vmax.f32 %v7698, 0.0
    %v7749 = vmax.f32 %v7739, 0.0
    %v7750 = vmax.f32 %v7741, 0.0
    %v7751 = vmax.f32 %v7700, 0.0
    %v7752 = vmax.f32 %v7702, 0.0
    %v7753 = vmax.f32 %v7743, 0.0
    %v7754 = vmax.f32 %v7745, 0.0
    %v7755 = vpack.c.bf16 %v7751, %v7747
    %v7756 = vpack.c.bf16 %v7752, %v7748
    %v7757 = vpack.c.bf16 %v7753, %v7749
    %v7758 = vpack.c.bf16 %v7754, %v7750
    %v7759 = vld [vmem:[%s6235 + $0x300] sm:$0xf]
    %v7760 = vld [vmem:[%s6235 + $0x304] sm:$0xf]
    %v7761 = vld [vmem:[%s6235 + $0x308] sm:$0xf]
    %v7762 = vld [vmem:[%s6235 + $0x30c] sm:$0xf]
    %v7763 = vld [vmem:[%s6235 + $0x310] sm:$0xf]
    %v7764 = vld [vmem:[%s6235 + $0x314] sm:$0xf]
    %v7765 = vld [vmem:[%s6235 + $0x318] sm:$0xf]
    %v7766 = vld [vmem:[%s6235 + $0x31c] sm:$0xf]
    %v7767 = vld [vmem:[%s6235 + $0x320] sm:$0xf]
    %v7768 = vld [vmem:[%s6235 + $0x324] sm:$0xf]
    %v7769 = vld [vmem:[%s6235 + $0x328] sm:$0xf]
    %v7770 = vld [vmem:[%s6235 + $0x32c] sm:$0xf]
    %v7771 = vld [vmem:[%s6235 + $0x330] sm:$0xf]
    %v7772 = vld [vmem:[%s6235 + $0x334] sm:$0xf]
    %v7773 = vld [vmem:[%s6235 + $0x338] sm:$0xf]
    %v7774 = vld [vmem:[%s6235 + $0x33c] sm:$0xf]
    %v7775 = vld [vmem:[%s6235 + $0x340] sm:$0xf]
    %v7776 = vld [vmem:[%s6235 + $0x344] sm:$0xf]
    %v7777 = vld [vmem:[%s6235 + $0x348] sm:$0xf]
    %v7778 = vld [vmem:[%s6235 + $0x34c] sm:$0xf]
    %v7779 = vld [vmem:[%s6235 + $0x350] sm:$0xf]
    %v7780 = vld [vmem:[%s6235 + $0x354] sm:$0xf]
    %v7781 = vld [vmem:[%s6235 + $0x358] sm:$0xf]
    %v7782 = vld [vmem:[%s6235 + $0x35c] sm:$0xf]
    %v7783 = vld [vmem:[%s6235 + $0x360] sm:$0xf]
    %v7784 = vld [vmem:[%s6235 + $0x364] sm:$0xf]
    %v7785 = vld [vmem:[%s6235 + $0x368] sm:$0xf]
    %v7786 = vld [vmem:[%s6235 + $0x36c] sm:$0xf]
    %v7787 = vld [vmem:[%s6235 + $0x370] sm:$0xf]
    %v7788 = vld [vmem:[%s6235 + $0x374] sm:$0xf]
    %v7789 = vld [vmem:[%s6235 + $0x378] sm:$0xf]
    %v7790 = vld [vmem:[%s6235 + $0x37c] sm:$0xf]
    %v7791 = vld [vmem:[%s6235 + $0x380] sm:$0xf]
    %v7792 = vld [vmem:[%s6235 + $0x384] sm:$0xf]
    %v7793 = vld [vmem:[%s6235 + $0x388] sm:$0xf]
    %v7794 = vld [vmem:[%s6235 + $0x38c] sm:$0xf]
    %v7795 = vld [vmem:[%s6235 + $0x390] sm:$0xf]
    %v7796 = vld [vmem:[%s6235 + $0x394] sm:$0xf]
    %v7797 = vld [vmem:[%s6235 + $0x398] sm:$0xf]
    %v7798 = vld [vmem:[%s6235 + $0x39c] sm:$0xf]
    %v7799 = vld [vmem:[%s6235 + $0x3a0] sm:$0xf]
    %v7800 = vld [vmem:[%s6235 + $0x3a4] sm:$0xf]
    %v7801 = vld [vmem:[%s6235 + $0x3a8] sm:$0xf]
    %v7802 = vld [vmem:[%s6235 + $0x3ac] sm:$0xf]
    %v7803 = vld [vmem:[%s6235 + $0x3b0] sm:$0xf]
    %v7804 = vld [vmem:[%s6235 + $0x3b4] sm:$0xf]
    %v7805 = vld [vmem:[%s6235 + $0x3b8] sm:$0xf]
    %v7806 = vld [vmem:[%s6235 + $0x3bc] sm:$0xf]
    %v7807 = vld [vmem:[%s6235 + $0x3c0] sm:$0xf]
    %v7808 = vld [vmem:[%s6235 + $0x3c4] sm:$0xf]
    %v7809 = vld [vmem:[%s6235 + $0x3c8] sm:$0xf]
    %v7810 = vld [vmem:[%s6235 + $0x3cc] sm:$0xf]
    %v7811 = vld [vmem:[%s6235 + $0x3d0] sm:$0xf]
    %v7812 = vld [vmem:[%s6235 + $0x3d4] sm:$0xf]
    %v7813 = vld [vmem:[%s6235 + $0x3d8] sm:$0xf]
    %v7814 = vld [vmem:[%s6235 + $0x3dc] sm:$0xf]
    %v7815 = vld [vmem:[%s6235 + $0x3e0] sm:$0xf]
    %v7816 = vld [vmem:[%s6235 + $0x3e4] sm:$0xf]
    %v7817 = vld [vmem:[%s6235 + $0x3e8] sm:$0xf]
    %v7818 = vld [vmem:[%s6235 + $0x3ec] sm:$0xf]
    %v7819 = vld [vmem:[%s6235 + $0x3f0] sm:$0xf]
    %v7820 = vld [vmem:[%s6235 + $0x3f4] sm:$0xf]
    %v7821 = vld [vmem:[%s6235 + $0x3f8] sm:$0xf]
    %v7822 = vld [vmem:[%s6235 + $0x3fc] sm:$0xf]
    %v7887 = vunpack.c.l.b16 %v7759
    %v7888 = vunpack.c.l.b16 %v7760
    %v7889 = vunpack.c.l.b16 %v7761
    %v7890 = vunpack.c.l.b16 %v7762
    %v7891 = vunpack.c.l.b16 %v7763
    %v7892 = vunpack.c.l.b16 %v7764
    %v7893 = vunpack.c.l.b16 %v7765
    %v7894 = vunpack.c.l.b16 %v7766
    %v7895 = vunpack.c.l.b16 %v7767
    %v7896 = vunpack.c.l.b16 %v7768
    %v7897 = vunpack.c.l.b16 %v7769
    %v7898 = vunpack.c.l.b16 %v7770
    %v7899 = vunpack.c.l.b16 %v7771
    %v7900 = vunpack.c.l.b16 %v7772
    %v7901 = vunpack.c.l.b16 %v7773
    %v7902 = vunpack.c.l.b16 %v7774
    %v7903 = vunpack.c.l.b16 %v7775
    %v7904 = vunpack.c.l.b16 %v7776
    %v7905 = vunpack.c.l.b16 %v7777
    %v7906 = vunpack.c.l.b16 %v7778
    %v7907 = vunpack.c.l.b16 %v7779
    %v7908 = vunpack.c.l.b16 %v7780
    %v7909 = vunpack.c.l.b16 %v7781
    %v7910 = vunpack.c.l.b16 %v7782
    %v7911 = vunpack.c.l.b16 %v7783
    %v7912 = vunpack.c.l.b16 %v7784
    %v7913 = vunpack.c.l.b16 %v7785
    %v7914 = vunpack.c.l.b16 %v7786
    %v7915 = vunpack.c.l.b16 %v7787
    %v7916 = vunpack.c.l.b16 %v7788
    %v7917 = vunpack.c.l.b16 %v7789
    %v7918 = vunpack.c.l.b16 %v7790
    %v7919 = vunpack.c.l.b16 %v7791
    %v7920 = vunpack.c.l.b16 %v7792
    %v7921 = vunpack.c.l.b16 %v7793
    %v7922 = vunpack.c.l.b16 %v7794
    %v7923 = vunpack.c.l.b16 %v7795
    %v7924 = vunpack.c.l.b16 %v7796
    %v7925 = vunpack.c.l.b16 %v7797
    %v7926 = vunpack.c.l.b16 %v7798
    %v7927 = vunpack.c.l.b16 %v7799
    %v7928 = vunpack.c.l.b16 %v7800
    %v7929 = vunpack.c.l.b16 %v7801
    %v7930 = vunpack.c.l.b16 %v7802
    %v7931 = vunpack.c.l.b16 %v7803
    %v7932 = vunpack.c.l.b16 %v7804
    %v7933 = vunpack.c.l.b16 %v7805
    %v7934 = vunpack.c.l.b16 %v7806
    %v7935 = vunpack.c.l.b16 %v7807
    %v7936 = vunpack.c.l.b16 %v7808
    %v7937 = vunpack.c.l.b16 %v7809
    %v7938 = vunpack.c.l.b16 %v7810
    %v7939 = vunpack.c.l.b16 %v7811
    %v7940 = vunpack.c.l.b16 %v7812
    %v7941 = vunpack.c.l.b16 %v7813
    %v7942 = vunpack.c.l.b16 %v7814
    %v7943 = vunpack.c.l.b16 %v7815
    %v7944 = vunpack.c.l.b16 %v7816
    %v7945 = vunpack.c.l.b16 %v7817
    %v7946 = vunpack.c.l.b16 %v7818
    %v7947 = vunpack.c.l.b16 %v7819
    %v7948 = vunpack.c.l.b16 %v7820
    %v7949 = vunpack.c.l.b16 %v7821
    %v7950 = vunpack.c.l.b16 %v7822
    %v7951 = vpack.c.b16 %v7888, %v7887
    %v7952 = vpack.c.b16 %v7890, %v7889
    %v7953 = vpack.c.b16 %v7892, %v7891
    %v7954 = vpack.c.b16 %v7894, %v7893
    %v7955 = vpack.c.b16 %v7896, %v7895
    %v7956 = vpack.c.b16 %v7898, %v7897
    %v7957 = vpack.c.b16 %v7900, %v7899
    %v7958 = vpack.c.b16 %v7902, %v7901
    %v7959 = vpack.c.b16 %v7904, %v7903
    %v7960 = vpack.c.b16 %v7906, %v7905
    %v7961 = vpack.c.b16 %v7908, %v7907
    %v7962 = vpack.c.b16 %v7910, %v7909
    %v7963 = vpack.c.b16 %v7912, %v7911
    %v7964 = vpack.c.b16 %v7914, %v7913
    %v7965 = vpack.c.b16 %v7916, %v7915
    %v7966 = vpack.c.b16 %v7918, %v7917
    %v7967 = vpack.c.b16 %v7920, %v7919
    %v7968 = vpack.c.b16 %v7922, %v7921
    %v7969 = vpack.c.b16 %v7924, %v7923
    %v7970 = vpack.c.b16 %v7926, %v7925
    %v7971 = vpack.c.b16 %v7928, %v7927
    %v7972 = vpack.c.b16 %v7930, %v7929
    %v7973 = vpack.c.b16 %v7932, %v7931
    %v7974 = vpack.c.b16 %v7934, %v7933
    %v7975 = vpack.c.b16 %v7936, %v7935
    %v7976 = vpack.c.b16 %v7938, %v7937
    %v7977 = vpack.c.b16 %v7940, %v7939
    %v7978 = vpack.c.b16 %v7942, %v7941
    %v7979 = vpack.c.b16 %v7944, %v7943
    %v7980 = vpack.c.b16 %v7946, %v7945
    %v7981 = vpack.c.b16 %v7948, %v7947
    %v7982 = vpack.c.b16 %v7950, %v7949
    %8015 = vmatprep.subr.bf16.mxu0 0
    %8016 = vmatpush1.bf16.msra.mxu0 %v7951
    %8017 = vmatprep.subr.bf16.mxu0 0
    %8018 = vmatpush1.bf16.msra.mxu0 %v7952
    %8019 = vmatprep.subr.bf16.mxu0 0
    %8020 = vmatpush1.bf16.msra.mxu0 %v7953
    %8021 = vmatprep.subr.bf16.mxu0 0
    %8022 = vmatpush1.bf16.msra.mxu0 %v7954
    %8023 = vmatprep.subr.bf16.mxu0 0
    %8024 = vmatpush1.bf16.msra.mxu0 %v7955
    %8025 = vmatprep.subr.bf16.mxu0 0
    %8026 = vmatpush1.bf16.msra.mxu0 %v7956
    %8027 = vmatprep.subr.bf16.mxu0 0
    %8028 = vmatpush1.bf16.msra.mxu0 %v7957
    %8029 = vmatprep.subr.bf16.mxu0 0
    %8030 = vmatpush1.bf16.msra.mxu0 %v7958
    %8031 = vmatprep.subr.bf16.mxu0 0
    %8032 = vmatpush1.bf16.msra.mxu0 %v7959
    %8033 = vmatprep.subr.bf16.mxu0 0
    %8034 = vmatpush1.bf16.msra.mxu0 %v7960
    %8035 = vmatprep.subr.bf16.mxu0 0
    %8036 = vmatpush1.bf16.msra.mxu0 %v7961
    %8037 = vmatprep.subr.bf16.mxu0 0
    %8038 = vmatpush1.bf16.msra.mxu0 %v7962
    %8039 = vmatprep.subr.bf16.mxu0 0
    %8040 = vmatpush1.bf16.msra.mxu0 %v7963
    %8041 = vmatprep.subr.bf16.mxu0 0
    %8042 = vmatpush1.bf16.msra.mxu0 %v7964
    %8043 = vmatprep.subr.bf16.mxu0 0
    %8044 = vmatpush1.bf16.msra.mxu0 %v7965
    %8045 = vmatprep.subr.bf16.mxu0 0
    %8046 = vmatpush1.bf16.msra.mxu0 %v7966
    %8047 = vmatprep.mubr.bf16.mxu0 %v7756
    %8048 = vmatmul.mubr.bf16.gmra.mrb[0].mxu0 %v7755
    %v8049 = vpop.f32.mrb[0].mxu0
    %v8050 = vadd.f32 0.0, %v8049
    %v8051 = vpop.f32.mrb[0].mxu0
    %v8052 = vpop.f32.mrb[0].mxu0
    %v8053 = vadd.f32 0.0, %v8052
    %v8054 = vpop.f32.mrb[0].mxu0
    %8055 = vdwg.mxu0
    %8056 = vmatprep.subr.bf16.mxu0 0
    %8057 = vmatpush1.bf16.msra.mxu0 %v7967
    %8058 = vmatprep.subr.bf16.mxu0 0
    %8059 = vmatpush1.bf16.msra.mxu0 %v7968
    %8060 = vmatprep.subr.bf16.mxu0 0
    %8061 = vmatpush1.bf16.msra.mxu0 %v7969
    %8062 = vmatprep.subr.bf16.mxu0 0
    %8063 = vmatpush1.bf16.msra.mxu0 %v7970
    %8064 = vmatprep.subr.bf16.mxu0 0
    %8065 = vmatpush1.bf16.msra.mxu0 %v7971
    %8066 = vmatprep.subr.bf16.mxu0 0
    %8067 = vmatpush1.bf16.msra.mxu0 %v7972
    %8068 = vmatprep.subr.bf16.mxu0 0
    %8069 = vmatpush1.bf16.msra.mxu0 %v7973
    %8070 = vmatprep.subr.bf16.mxu0 0
    %8071 = vmatpush1.bf16.msra.mxu0 %v7974
    %8072 = vmatprep.subr.bf16.mxu0 0
    %8073 = vmatpush1.bf16.msra.mxu0 %v7975
    %8074 = vmatprep.subr.bf16.mxu0 0
    %8075 = vmatpush1.bf16.msra.mxu0 %v7976
    %8076 = vmatprep.subr.bf16.mxu0 0
    %8077 = vmatpush1.bf16.msra.mxu0 %v7977
    %8078 = vmatprep.subr.bf16.mxu0 0
    %8079 = vmatpush1.bf16.msra.mxu0 %v7978
    %8080 = vmatprep.subr.bf16.mxu0 0
    %8081 = vmatpush1.bf16.msra.mxu0 %v7979
    %8082 = vmatprep.subr.bf16.mxu0 0
    %8083 = vmatpush1.bf16.msra.mxu0 %v7980
    %8084 = vmatprep.subr.bf16.mxu0 0
    %8085 = vmatpush1.bf16.msra.mxu0 %v7981
    %8086 = vmatprep.subr.bf16.mxu0 0
    %8087 = vmatpush1.bf16.msra.mxu0 %v7982
    %8088 = vmatprep.mubr.bf16.mxu0 %v7758
    %8089 = vmatmul.mubr.bf16.gmra.mrb[0].mxu0 %v7757
    %v8090 = vpop.f32.mrb[0].mxu0
    %v8091 = vadd.f32 %v8050, %v8090
    %v8092 = vpop.f32.mrb[0].mxu0
    %v8093 = vpop.f32.mrb[0].mxu0
    %v8094 = vadd.f32 %v8053, %v8093
    %v8095 = vpop.f32.mrb[0].mxu0
    %8096 = vdwg.mxu0
    %v8097 = vadd.f32 %v7588, %v8091
    %v8098 = vadd.f32 %v7589, %v8094
    %v8099 = vld [vmem:[%s8 + $0x104] ss:$0 sm:$0xff]
    %v8100 = vadd.f32 %v8097, %v8099
    %v8101 = vadd.f32 %v8098, %v8099
    %v8102 = vadd.f32 %v6059, %v8100
    %v8103 = vadd.f32 %v6060, %v8101
    %v8104 = vld [vmem:[%s8 + $0x105] ss:$0 sm:$0xff]
    %v8105 = vld [vmem:[%s8 + $0x106] ss:$0 sm:$0xff]
    %v8106 = vsel %vm130, %v8102, 0.0
    %8107 = vadd.xlane.f32.xlu0 %v8106
    %v8108 = vpop.xlane.xlu0 %8107
    %v8109 = vsel %vm130, %v8103, 0.0
    %8110 = vadd.xlane.f32.xlu0 %v8109
    %v8111 = vpop.xlane.xlu0 %8110
    %v8112 = vmul.f32 %v8108, %v2032
    %v8113 = vmul.f32 %v8111, %v2032
    %v8114 = vsub.f32 %v8102, %v8112
    %v8115 = vsub.f32 %v8103, %v8113
    %v8116 = vmul.f32 %v8114, %v8114
    %v8117 = vmul.f32 %v8115, %v8115
    %v8118 = vsel %vm130, %v8116, 0.0
    %8119 = vadd.xlane.f32.xlu0 %v8118
    %v8120 = vpop.xlane.xlu0 %8119
    %v8121 = vsel %vm130, %v8117, 0.0
    %8122 = vadd.xlane.f32.xlu0 %v8121
    %v8123 = vpop.xlane.xlu0 %8122
    %v8124 = vmul.f32 %v8120, %v2032
    %v8125 = vmul.f32 %v8123, %v2032
    %v8126 = vadd.f32 %v8124, 1e-05
    %v8127 = vadd.f32 %v8125, 1e-05
    %v8128 = vrsqrt.pop %v8126
    %v8129 = vrsqrt.pop %v8127
    %v8130 = vmul.f32 %v8114, %v8128
    %v8131 = vmul.f32 %v8115, %v8129
    %v8132 = vmul.f32 %v8130, %v8104
    %v8133 = vmul.f32 %v8131, %v8104
    %v8134 = vadd.f32 %v8132, %v8105
    %v8135 = vadd.f32 %v8133, %v8105
    %v8136 = vld [vmem:[%s6] sm:$0xff]
    %v8137 = vld [vmem:[%s6 + $0x8] sm:$0xff]
    %v8138 = vld [vmem:[%s6 + $0x10] sm:$0xff]
    %v8139 = vld [vmem:[%s6 + $0x18] sm:$0xff]
    %s8140 = scalar_lea.vmem %s6, 32
    %v8141 = vld [vmem:[%s8140] sm:$0xff]
    %v8142 = vld [vmem:[%s8140 + $0x8] sm:$0xff]
    %v8143 = vld [vmem:[%s8140 + $0x10] sm:$0xff]
    %v8144 = vld [vmem:[%s8140 + $0x18] sm:$0xff]
    %v8147 = vrot.slane %v8134, 1
    %vm8148 = vcmask 1041409
    %v8149 = vsel %vm8148, %v8135, %v8147
    %v8150 = vsel %vm130, %v8149, 0
    %8152 = vmatprep.subr.mxu0 0.0
    %8153 = vmatpush1.msra.mxu0 %v8141
    %8154 = vmatprep.subr.mxu0 0.0
    %8155 = vmatpush1.msra.mxu0 %v8142
    %8156 = vmatprep.subr.mxu0 0.0
    %8157 = vmatpush1.msra.mxu0 %v8143
    %8158 = vmatprep.subr.mxu0 0.0
    %8159 = vmatpush1.msra.mxu0 %v8144
    %8160 = vmatprep.subr.mxu0 0.0
    %8161 = vmatpush1.msra.mxu0 0.0
    %8162 = vmatprep.subr.mxu0 0.0
    %8163 = vmatpush1.msra.mxu0 0.0
    %8164 = vmatprep.subr.mxu0 0.0
    %8165 = vmatpush1.msra.mxu0 0.0
    %8166 = vmatprep.subr.mxu0 0.0
    %8167 = vmatpush1.msra.mxu0 0.0
    %8168 = vmatprep.subr.mxu0 0.0
    %8169 = vmatpush1.msra.mxu0 0.0
    %8170 = vmatprep.subr.mxu0 0.0
    %8171 = vmatpush1.msra.mxu0 0.0
    %8172 = vmatprep.subr.mxu0 0.0
    %8173 = vmatpush1.msra.mxu0 0.0
    %8174 = vmatprep.subr.mxu0 0.0
    %8175 = vmatpush1.msra.mxu0 0.0
    %8176 = vmatprep.subr.mxu0 0.0
    %8177 = vmatpush1.msra.mxu0 0.0
    %8178 = vmatprep.subr.mxu0 0.0
    %8179 = vmatpush1.msra.mxu0 0.0
    %8180 = vmatprep.subr.mxu0 0.0
    %8181 = vmatpush1.msra.mxu0 0.0
    %8182 = vmatprep.subr.mxu0 0.0
    %8183 = vmatpush1.msra.mxu0 0.0
    %8184 = vmatprep.subr.mxu0 0.0
    %8185 = vmatpush1.msra.mxu0 0.0
    %8186 = vmatprep.subr.mxu0 0.0
    %8187 = vmatpush1.msra.mxu0 0.0
    %8188 = vmatprep.subr.mxu0 0.0
    %8189 = vmatpush1.msra.mxu0 0.0
    %8190 = vmatprep.subr.mxu0 0.0
    %8191 = vmatpush1.msra.mxu0 0.0
    %8192 = vmatprep.subr.mxu0 0.0
    %8193 = vmatpush1.msra.mxu0 0.0
    %8194 = vmatprep.subr.mxu0 0.0
    %8195 = vmatpush1.msra.mxu0 0.0
    %8196 = vmatprep.subr.mxu0 0.0
    %8197 = vmatpush1.msra.mxu0 0.0
    %8198 = vmatprep.subr.mxu0 0.0
    %8199 = vmatpush1.msra.mxu0 0.0
    %8200 = vmatprep.subr.mxu0 0.0
    %8201 = vmatpush1.msra.mxu0 0.0
    %8202 = vmatprep.subr.mxu0 0.0
    %8203 = vmatpush1.msra.mxu0 0.0
    %8204 = vmatprep.subr.mxu0 0.0
    %8205 = vmatpush1.msra.mxu0 0.0
    %8206 = vmatprep.subr.mxu0 0.0
    %8207 = vmatpush1.msra.mxu0 0.0
    %8208 = vmatprep.subr.mxu0 0.0
    %8209 = vmatpush1.msra.mxu0 0.0
    %8210 = vmatprep.subr.mxu0 0.0
    %8211 = vmatpush1.msra.mxu0 0.0
    %8212 = vmatprep.subr.mxu0 0.0
    %8213 = vmatpush1.msra.mxu0 0.0
    %8214 = vmatprep.subr.mxu0 0.0
    %8215 = vmatpush1.msra.mxu0 0.0
    %8216 = vmatprep.mubr.f32.mxu0 0.0
    %8217 = vmatmul.mubr.f32.gmra.mrb[0].mxu0 %v8150
    %v8218 = vpop.f32.mrb[0].mxu0
    %v8219 = vadd.f32 0.0, %v8218
    %v8220 = vpop.f32.mrb[0].mxu0
    %8221 = vdwg.mxu0
    %v8222 = vrot.slane %v8135, 7
    %v8223 = vsel %vm8148, %v8222, %v8134
    %v8224 = vsel %vm130, %v8223, 0
    %8226 = vmatprep.subr.mxu0 0.0
    %8227 = vmatpush1.msra.mxu0 %v8136
    %8228 = vmatprep.subr.mxu0 0.0
    %8229 = vmatpush1.msra.mxu0 %v8137
    %8230 = vmatprep.subr.mxu0 0.0
    %8231 = vmatpush1.msra.mxu0 %v8138
    %8232 = vmatprep.subr.mxu0 0.0
    %8233 = vmatpush1.msra.mxu0 %v8139
    %8234 = vmatprep.subr.mxu0 0.0
    %8235 = vmatpush1.msra.mxu0 0.0
    %8236 = vmatprep.subr.mxu0 0.0
    %8237 = vmatpush1.msra.mxu0 0.0
    %8238 = vmatprep.subr.mxu0 0.0
    %8239 = vmatpush1.msra.mxu0 0.0
    %8240 = vmatprep.subr.mxu0 0.0
    %8241 = vmatpush1.msra.mxu0 0.0
    %8242 = vmatprep.subr.mxu0 0.0
    %8243 = vmatpush1.msra.mxu0 0.0
    %8244 = vmatprep.subr.mxu0 0.0
    %8245 = vmatpush1.msra.mxu0 0.0
    %8246 = vmatprep.subr.mxu0 0.0
    %8247 = vmatpush1.msra.mxu0 0.0
    %8248 = vmatprep.subr.mxu0 0.0
    %8249 = vmatpush1.msra.mxu0 0.0
    %8250 = vmatprep.subr.mxu0 0.0
    %8251 = vmatpush1.msra.mxu0 0.0
    %8252 = vmatprep.subr.mxu0 0.0
    %8253 = vmatpush1.msra.mxu0 0.0
    %8254 = vmatprep.subr.mxu0 0.0
    %8255 = vmatpush1.msra.mxu0 0.0
    %8256 = vmatprep.subr.mxu0 0.0
    %8257 = vmatpush1.msra.mxu0 0.0
    %8258 = vmatprep.subr.mxu0 0.0
    %8259 = vmatpush1.msra.mxu0 0.0
    %8260 = vmatprep.subr.mxu0 0.0
    %8261 = vmatpush1.msra.mxu0 0.0
    %8262 = vmatprep.subr.mxu0 0.0
    %8263 = vmatpush1.msra.mxu0 0.0
    %8264 = vmatprep.subr.mxu0 0.0
    %8265 = vmatpush1.msra.mxu0 0.0
    %8266 = vmatprep.subr.mxu0 0.0
    %8267 = vmatpush1.msra.mxu0 0.0
    %8268 = vmatprep.subr.mxu0 0.0
    %8269 = vmatpush1.msra.mxu0 0.0
    %8270 = vmatprep.subr.mxu0 0.0
    %8271 = vmatpush1.msra.mxu0 0.0
    %8272 = vmatprep.subr.mxu0 0.0
    %8273 = vmatpush1.msra.mxu0 0.0
    %8274 = vmatprep.subr.mxu0 0.0
    %8275 = vmatpush1.msra.mxu0 0.0
    %8276 = vmatprep.subr.mxu0 0.0
    %8277 = vmatpush1.msra.mxu0 0.0
    %8278 = vmatprep.subr.mxu0 0.0
    %8279 = vmatpush1.msra.mxu0 0.0
    %8280 = vmatprep.subr.mxu0 0.0
    %8281 = vmatpush1.msra.mxu0 0.0
    %8282 = vmatprep.subr.mxu0 0.0
    %8283 = vmatpush1.msra.mxu0 0.0
    %8284 = vmatprep.subr.mxu0 0.0
    %8285 = vmatpush1.msra.mxu0 0.0
    %8286 = vmatprep.subr.mxu0 0.0
    %8287 = vmatpush1.msra.mxu0 0.0
    %8288 = vmatprep.subr.mxu0 0.0
    %8289 = vmatpush1.msra.mxu0 0.0
    %8290 = vmatprep.mubr.f32.mxu0 0.0
    %8291 = vmatmul.mubr.f32.gmra.mrb[0].mxu0 %v8224
    %v8292 = vpop.f32.mrb[0].mxu0
    %v8293 = vadd.f32 %v8219, %v8292
    %v8294 = vpop.f32.mrb[0].mxu0
    %8295 = vdwg.mxu0
    %s8296 = scalar_lea.vmem %s6, 64
    %v8297 = vld [vmem:[%s8296] sm:$0xff]
    %v8298 = vld [vmem:[%s8296 + $0x8] sm:$0xff]
    %v8299 = vld [vmem:[%s8296 + $0x10] sm:$0xff]
    %v8300 = vld [vmem:[%s8296 + $0x18] sm:$0xff]
    %v8301 = vrot.slane %v8134, 2
    %v8302 = vrot.slane %v8135, 1
    %v8303 = vsel %vm8148, %v8302, %v8301
    %v8304 = vsel %vm130, %v8303, 0
    %8306 = vmatprep.subr.mxu0 0.0
    %8307 = vmatpush1.msra.mxu0 %v8297
    %8308 = vmatprep.subr.mxu0 0.0
    %8309 = vmatpush1.msra.mxu0 %v8298
    %8310 = vmatprep.subr.mxu0 0.0
    %8311 = vmatpush1.msra.mxu0 %v8299
    %8312 = vmatprep.subr.mxu0 0.0
    %8313 = vmatpush1.msra.mxu0 %v8300
    %8314 = vmatprep.subr.mxu0 0.0
    %8315 = vmatpush1.msra.mxu0 0.0
    %8316 = vmatprep.subr.mxu0 0.0
    %8317 = vmatpush1.msra.mxu0 0.0
    %8318 = vmatprep.subr.mxu0 0.0
    %8319 = vmatpush1.msra.mxu0 0.0
    %8320 = vmatprep.subr.mxu0 0.0
    %8321 = vmatpush1.msra.mxu0 0.0
    %8322 = vmatprep.subr.mxu0 0.0
    %8323 = vmatpush1.msra.mxu0 0.0
    %8324 = vmatprep.subr.mxu0 0.0
    %8325 = vmatpush1.msra.mxu0 0.0
    %8326 = vmatprep.subr.mxu0 0.0
    %8327 = vmatpush1.msra.mxu0 0.0
    %8328 = vmatprep.subr.mxu0 0.0
    %8329 = vmatpush1.msra.mxu0 0.0
    %8330 = vmatprep.subr.mxu0 0.0
    %8331 = vmatpush1.msra.mxu0 0.0
    %8332 = vmatprep.subr.mxu0 0.0
    %8333 = vmatpush1.msra.mxu0 0.0
    %8334 = vmatprep.subr.mxu0 0.0
    %8335 = vmatpush1.msra.mxu0 0.0
    %8336 = vmatprep.subr.mxu0 0.0
    %8337 = vmatpush1.msra.mxu0 0.0
    %8338 = vmatprep.subr.mxu0 0.0
    %8339 = vmatpush1.msra.mxu0 0.0
    %8340 = vmatprep.subr.mxu0 0.0
    %8341 = vmatpush1.msra.mxu0 0.0
    %8342 = vmatprep.subr.mxu0 0.0
    %8343 = vmatpush1.msra.mxu0 0.0
    %8344 = vmatprep.subr.mxu0 0.0
    %8345 = vmatpush1.msra.mxu0 0.0
    %8346 = vmatprep.subr.mxu0 0.0
    %8347 = vmatpush1.msra.mxu0 0.0
    %8348 = vmatprep.subr.mxu0 0.0
    %8349 = vmatpush1.msra.mxu0 0.0
    %8350 = vmatprep.subr.mxu0 0.0
    %8351 = vmatpush1.msra.mxu0 0.0
    %8352 = vmatprep.subr.mxu0 0.0
    %8353 = vmatpush1.msra.mxu0 0.0
    %8354 = vmatprep.subr.mxu0 0.0
    %8355 = vmatpush1.msra.mxu0 0.0
    %8356 = vmatprep.subr.mxu0 0.0
    %8357 = vmatpush1.msra.mxu0 0.0
    %8358 = vmatprep.subr.mxu0 0.0
    %8359 = vmatpush1.msra.mxu0 0.0
    %8360 = vmatprep.subr.mxu0 0.0
    %8361 = vmatpush1.msra.mxu0 0.0
    %8362 = vmatprep.subr.mxu0 0.0
    %8363 = vmatpush1.msra.mxu0 0.0
    %8364 = vmatprep.subr.mxu0 0.0
    %8365 = vmatpush1.msra.mxu0 0.0
    %8366 = vmatprep.subr.mxu0 0.0
    %8367 = vmatpush1.msra.mxu0 0.0
    %8368 = vmatprep.subr.mxu0 0.0
    %8369 = vmatpush1.msra.mxu0 0.0
    %8370 = vmatprep.mubr.f32.mxu0 0.0
    %8371 = vmatmul.mubr.f32.gmra.mrb[0].mxu0 %v8304
    %v8372 = vpop.f32.mrb[0].mxu0
    %v8373 = vadd.f32 0.0, %v8372
    %v8374 = vpop.f32.mrb[0].mxu0
    %8375 = vdwg.mxu0
    %v8376 = vadd.f32 %v8293, %v8373
    %s8377 = scalar_lea.vmem %s6, 96
    %v8378 = vld [vmem:[%s8377] sm:$0xff]
    %v8379 = vld [vmem:[%s8377 + $0x8] sm:$0xff]
    %v8380 = vld [vmem:[%s8377 + $0x10] sm:$0xff]
    %v8381 = vld [vmem:[%s8377 + $0x18] sm:$0xff]
    %v8382 = vrot.slane %v8134, 3
    %v8383 = vrot.slane %v8135, 2
    %v8384 = vsel %vm8148, %v8383, %v8382
    %v8385 = vsel %vm130, %v8384, 0
    %8387 = vmatprep.subr.mxu0 0.0
    %8388 = vmatpush1.msra.mxu0 %v8378
    %8389 = vmatprep.subr.mxu0 0.0
    %8390 = vmatpush1.msra.mxu0 %v8379
    %8391 = vmatprep.subr.mxu0 0.0
    %8392 = vmatpush1.msra.mxu0 %v8380
    %8393 = vmatprep.subr.mxu0 0.0
    %8394 = vmatpush1.msra.mxu0 %v8381
    %8395 = vmatprep.subr.mxu0 0.0
    %8396 = vmatpush1.msra.mxu0 0.0
    %8397 = vmatprep.subr.mxu0 0.0
    %8398 = vmatpush1.msra.mxu0 0.0
    %8399 = vmatprep.subr.mxu0 0.0
    %8400 = vmatpush1.msra.mxu0 0.0
    %8401 = vmatprep.subr.mxu0 0.0
    %8402 = vmatpush1.msra.mxu0 0.0
    %8403 = vmatprep.subr.mxu0 0.0
    %8404 = vmatpush1.msra.mxu0 0.0
    %8405 = vmatprep.subr.mxu0 0.0
    %8406 = vmatpush1.msra.mxu0 0.0
    %8407 = vmatprep.subr.mxu0 0.0
    %8408 = vmatpush1.msra.mxu0 0.0
    %8409 = vmatprep.subr.mxu0 0.0
    %8410 = vmatpush1.msra.mxu0 0.0
    %8411 = vmatprep.subr.mxu0 0.0
    %8412 = vmatpush1.msra.mxu0 0.0
    %8413 = vmatprep.subr.mxu0 0.0
    %8414 = vmatpush1.msra.mxu0 0.0
    %8415 = vmatprep.subr.mxu0 0.0
    %8416 = vmatpush1.msra.mxu0 0.0
    %8417 = vmatprep.subr.mxu0 0.0
    %8418 = vmatpush1.msra.mxu0 0.0
    %8419 = vmatprep.subr.mxu0 0.0
    %8420 = vmatpush1.msra.mxu0 0.0
    %8421 = vmatprep.subr.mxu0 0.0
    %8422 = vmatpush1.msra.mxu0 0.0
    %8423 = vmatprep.subr.mxu0 0.0
    %8424 = vmatpush1.msra.mxu0 0.0
    %8425 = vmatprep.subr.mxu0 0.0
    %8426 = vmatpush1.msra.mxu0 0.0
    %8427 = vmatprep.subr.mxu0 0.0
    %8428 = vmatpush1.msra.mxu0 0.0
    %8429 = vmatprep.subr.mxu0 0.0
    %8430 = vmatpush1.msra.mxu0 0.0
    %8431 = vmatprep.subr.mxu0 0.0
    %8432 = vmatpush1.msra.mxu0 0.0
    %8433 = vmatprep.subr.mxu0 0.0
    %8434 = vmatpush1.msra.mxu0 0.0
    %8435 = vmatprep.subr.mxu0 0.0
    %8436 = vmatpush1.msra.mxu0 0.0
    %8437 = vmatprep.subr.mxu0 0.0
    %8438 = vmatpush1.msra.mxu0 0.0
    %8439 = vmatprep.subr.mxu0 0.0
    %8440 = vmatpush1.msra.mxu0 0.0
    %8441 = vmatprep.subr.mxu0 0.0
    %8442 = vmatpush1.msra.mxu0 0.0
    %8443 = vmatprep.subr.mxu0 0.0
    %8444 = vmatpush1.msra.mxu0 0.0
    %8445 = vmatprep.subr.mxu0 0.0
    %8446 = vmatpush1.msra.mxu0 0.0
    %8447 = vmatprep.subr.mxu0 0.0
    %8448 = vmatpush1.msra.mxu0 0.0
    %8449 = vmatprep.subr.mxu0 0.0
    %8450 = vmatpush1.msra.mxu0 0.0
    %8451 = vmatprep.mubr.f32.mxu0 0.0
    %8452 = vmatmul.mubr.f32.gmra.mrb[0].mxu0 %v8385
    %v8453 = vpop.f32.mrb[0].mxu0
    %v8454 = vadd.f32 0.0, %v8453
    %v8455 = vpop.f32.mrb[0].mxu0
    %8456 = vdwg.mxu0
    %v8457 = vadd.f32 %v8376, %v8454
    %s8458 = scalar_lea.vmem %s6, 128
    %v8459 = vld [vmem:[%s8458] sm:$0xff]
    %v8460 = vld [vmem:[%s8458 + $0x8] sm:$0xff]
    %v8461 = vld [vmem:[%s8458 + $0x10] sm:$0xff]
    %v8462 = vld [vmem:[%s8458 + $0x18] sm:$0xff]
    %v8463 = vrot.slane %v8134, 4
    %v8464 = vrot.slane %v8135, 3
    %v8465 = vsel %vm8148, %v8464, %v8463
    %v8466 = vsel %vm130, %v8465, 0
    %8468 = vmatprep.subr.mxu0 0.0
    %8469 = vmatpush1.msra.mxu0 %v8459
    %8470 = vmatprep.subr.mxu0 0.0
    %8471 = vmatpush1.msra.mxu0 %v8460
    %8472 = vmatprep.subr.mxu0 0.0
    %8473 = vmatpush1.msra.mxu0 %v8461
    %8474 = vmatprep.subr.mxu0 0.0
    %8475 = vmatpush1.msra.mxu0 %v8462
    %8476 = vmatprep.subr.mxu0 0.0
    %8477 = vmatpush1.msra.mxu0 0.0
    %8478 = vmatprep.subr.mxu0 0.0
    %8479 = vmatpush1.msra.mxu0 0.0
    %8480 = vmatprep.subr.mxu0 0.0
    %8481 = vmatpush1.msra.mxu0 0.0
    %8482 = vmatprep.subr.mxu0 0.0
    %8483 = vmatpush1.msra.mxu0 0.0
    %8484 = vmatprep.subr.mxu0 0.0
    %8485 = vmatpush1.msra.mxu0 0.0
    %8486 = vmatprep.subr.mxu0 0.0
    %8487 = vmatpush1.msra.mxu0 0.0
    %8488 = vmatprep.subr.mxu0 0.0
    %8489 = vmatpush1.msra.mxu0 0.0
    %8490 = vmatprep.subr.mxu0 0.0
    %8491 = vmatpush1.msra.mxu0 0.0
    %8492 = vmatprep.subr.mxu0 0.0
    %8493 = vmatpush1.msra.mxu0 0.0
    %8494 = vmatprep.subr.mxu0 0.0
    %8495 = vmatpush1.msra.mxu0 0.0
    %8496 = vmatprep.subr.mxu0 0.0
    %8497 = vmatpush1.msra.mxu0 0.0
    %8498 = vmatprep.subr.mxu0 0.0
    %8499 = vmatpush1.msra.mxu0 0.0
    %8500 = vmatprep.subr.mxu0 0.0
    %8501 = vmatpush1.msra.mxu0 0.0
    %8502 = vmatprep.subr.mxu0 0.0
    %8503 = vmatpush1.msra.mxu0 0.0
    %8504 = vmatprep.subr.mxu0 0.0
    %8505 = vmatpush1.msra.mxu0 0.0
    %8506 = vmatprep.subr.mxu0 0.0
    %8507 = vmatpush1.msra.mxu0 0.0
    %8508 = vmatprep.subr.mxu0 0.0
    %8509 = vmatpush1.msra.mxu0 0.0
    %8510 = vmatprep.subr.mxu0 0.0
    %8511 = vmatpush1.msra.mxu0 0.0
    %8512 = vmatprep.subr.mxu0 0.0
    %8513 = vmatpush1.msra.mxu0 0.0
    %8514 = vmatprep.subr.mxu0 0.0
    %8515 = vmatpush1.msra.mxu0 0.0
    %8516 = vmatprep.subr.mxu0 0.0
    %8517 = vmatpush1.msra.mxu0 0.0
    %8518 = vmatprep.subr.mxu0 0.0
    %8519 = vmatpush1.msra.mxu0 0.0
    %8520 = vmatprep.subr.mxu0 0.0
    %8521 = vmatpush1.msra.mxu0 0.0
    %8522 = vmatprep.subr.mxu0 0.0
    %8523 = vmatpush1.msra.mxu0 0.0
    %8524 = vmatprep.subr.mxu0 0.0
    %8525 = vmatpush1.msra.mxu0 0.0
    %8526 = vmatprep.subr.mxu0 0.0
    %8527 = vmatpush1.msra.mxu0 0.0
    %8528 = vmatprep.subr.mxu0 0.0
    %8529 = vmatpush1.msra.mxu0 0.0
    %8530 = vmatprep.subr.mxu0 0.0
    %8531 = vmatpush1.msra.mxu0 0.0
    %8532 = vmatprep.mubr.f32.mxu0 0.0
    %8533 = vmatmul.mubr.f32.gmra.mrb[0].mxu0 %v8466
    %v8534 = vpop.f32.mrb[0].mxu0
    %v8535 = vadd.f32 0.0, %v8534
    %v8536 = vpop.f32.mrb[0].mxu0
    %8537 = vdwg.mxu0
    %v8538 = vadd.f32 %v8457, %v8535
    %s8539 = scalar_lea.vmem %s6, 160
    %v8540 = vld [vmem:[%s8539] sm:$0xff]
    %v8541 = vld [vmem:[%s8539 + $0x8] sm:$0xff]
    %v8542 = vld [vmem:[%s8539 + $0x10] sm:$0xff]
    %v8543 = vld [vmem:[%s8539 + $0x18] sm:$0xff]
    %v8544 = vrot.slane %v8134, 5
    %v8545 = vrot.slane %v8135, 4
    %v8546 = vsel %vm8148, %v8545, %v8544
    %v8547 = vsel %vm130, %v8546, 0
    %8549 = vmatprep.subr.mxu0 0.0
    %8550 = vmatpush1.msra.mxu0 %v8540
    %8551 = vmatprep.subr.mxu0 0.0
    %8552 = vmatpush1.msra.mxu0 %v8541
    %8553 = vmatprep.subr.mxu0 0.0
    %8554 = vmatpush1.msra.mxu0 %v8542
    %8555 = vmatprep.subr.mxu0 0.0
    %8556 = vmatpush1.msra.mxu0 %v8543
    %8557 = vmatprep.subr.mxu0 0.0
    %8558 = vmatpush1.msra.mxu0 0.0
    %8559 = vmatprep.subr.mxu0 0.0
    %8560 = vmatpush1.msra.mxu0 0.0
    %8561 = vmatprep.subr.mxu0 0.0
    %8562 = vmatpush1.msra.mxu0 0.0
    %8563 = vmatprep.subr.mxu0 0.0
    %8564 = vmatpush1.msra.mxu0 0.0
    %8565 = vmatprep.subr.mxu0 0.0
    %8566 = vmatpush1.msra.mxu0 0.0
    %8567 = vmatprep.subr.mxu0 0.0
    %8568 = vmatpush1.msra.mxu0 0.0
    %8569 = vmatprep.subr.mxu0 0.0
    %8570 = vmatpush1.msra.mxu0 0.0
    %8571 = vmatprep.subr.mxu0 0.0
    %8572 = vmatpush1.msra.mxu0 0.0
    %8573 = vmatprep.subr.mxu0 0.0
    %8574 = vmatpush1.msra.mxu0 0.0
    %8575 = vmatprep.subr.mxu0 0.0
    %8576 = vmatpush1.msra.mxu0 0.0
    %8577 = vmatprep.subr.mxu0 0.0
    %8578 = vmatpush1.msra.mxu0 0.0
    %8579 = vmatprep.subr.mxu0 0.0
    %8580 = vmatpush1.msra.mxu0 0.0
    %8581 = vmatprep.subr.mxu0 0.0
    %8582 = vmatpush1.msra.mxu0 0.0
    %8583 = vmatprep.subr.mxu0 0.0
    %8584 = vmatpush1.msra.mxu0 0.0
    %8585 = vmatprep.subr.mxu0 0.0
    %8586 = vmatpush1.msra.mxu0 0.0
    %8587 = vmatprep.subr.mxu0 0.0
    %8588 = vmatpush1.msra.mxu0 0.0
    %8589 = vmatprep.subr.mxu0 0.0
    %8590 = vmatpush1.msra.mxu0 0.0
    %8591 = vmatprep.subr.mxu0 0.0
    %8592 = vmatpush1.msra.mxu0 0.0
    %8593 = vmatprep.subr.mxu0 0.0
    %8594 = vmatpush1.msra.mxu0 0.0
    %8595 = vmatprep.subr.mxu0 0.0
    %8596 = vmatpush1.msra.mxu0 0.0
    %8597 = vmatprep.subr.mxu0 0.0
    %8598 = vmatpush1.msra.mxu0 0.0
    %8599 = vmatprep.subr.mxu0 0.0
    %8600 = vmatpush1.msra.mxu0 0.0
    %8601 = vmatprep.subr.mxu0 0.0
    %8602 = vmatpush1.msra.mxu0 0.0
    %8603 = vmatprep.subr.mxu0 0.0
    %8604 = vmatpush1.msra.mxu0 0.0
    %8605 = vmatprep.subr.mxu0 0.0
    %8606 = vmatpush1.msra.mxu0 0.0
    %8607 = vmatprep.subr.mxu0 0.0
    %8608 = vmatpush1.msra.mxu0 0.0
    %8609 = vmatprep.subr.mxu0 0.0
    %8610 = vmatpush1.msra.mxu0 0.0
    %8611 = vmatprep.subr.mxu0 0.0
    %8612 = vmatpush1.msra.mxu0 0.0
    %8613 = vmatprep.mubr.f32.mxu0 0.0
    %8614 = vmatmul.mubr.f32.gmra.mrb[0].mxu0 %v8547
    %v8615 = vpop.f32.mrb[0].mxu0
    %v8616 = vadd.f32 0.0, %v8615
    %v8617 = vpop.f32.mrb[0].mxu0
    %8618 = vdwg.mxu0
    %v8619 = vadd.f32 %v8538, %v8616
    %s8620 = scalar_lea.vmem %s6, 192
    %v8621 = vld [vmem:[%s8620] sm:$0xff]
    %v8622 = vld [vmem:[%s8620 + $0x8] sm:$0xff]
    %v8623 = vld [vmem:[%s8620 + $0x10] sm:$0xff]
    %v8624 = vld [vmem:[%s8620 + $0x18] sm:$0xff]
    %v8625 = vrot.slane %v8134, 6
    %v8626 = vrot.slane %v8135, 5
    %v8627 = vsel %vm8148, %v8626, %v8625
    %v8628 = vsel %vm130, %v8627, 0
    %8630 = vmatprep.subr.mxu0 0.0
    %8631 = vmatpush1.msra.mxu0 %v8621
    %8632 = vmatprep.subr.mxu0 0.0
    %8633 = vmatpush1.msra.mxu0 %v8622
    %8634 = vmatprep.subr.mxu0 0.0
    %8635 = vmatpush1.msra.mxu0 %v8623
    %8636 = vmatprep.subr.mxu0 0.0
    %8637 = vmatpush1.msra.mxu0 %v8624
    %8638 = vmatprep.subr.mxu0 0.0
    %8639 = vmatpush1.msra.mxu0 0.0
    %8640 = vmatprep.subr.mxu0 0.0
    %8641 = vmatpush1.msra.mxu0 0.0
    %8642 = vmatprep.subr.mxu0 0.0
    %8643 = vmatpush1.msra.mxu0 0.0
    %8644 = vmatprep.subr.mxu0 0.0
    %8645 = vmatpush1.msra.mxu0 0.0
    %8646 = vmatprep.subr.mxu0 0.0
    %8647 = vmatpush1.msra.mxu0 0.0
    %8648 = vmatprep.subr.mxu0 0.0
    %8649 = vmatpush1.msra.mxu0 0.0
    %8650 = vmatprep.subr.mxu0 0.0
    %8651 = vmatpush1.msra.mxu0 0.0
    %8652 = vmatprep.subr.mxu0 0.0
    %8653 = vmatpush1.msra.mxu0 0.0
    %8654 = vmatprep.subr.mxu0 0.0
    %8655 = vmatpush1.msra.mxu0 0.0
    %8656 = vmatprep.subr.mxu0 0.0
    %8657 = vmatpush1.msra.mxu0 0.0
    %8658 = vmatprep.subr.mxu0 0.0
    %8659 = vmatpush1.msra.mxu0 0.0
    %8660 = vmatprep.subr.mxu0 0.0
    %8661 = vmatpush1.msra.mxu0 0.0
    %8662 = vmatprep.subr.mxu0 0.0
    %8663 = vmatpush1.msra.mxu0 0.0
    %8664 = vmatprep.subr.mxu0 0.0
    %8665 = vmatpush1.msra.mxu0 0.0
    %8666 = vmatprep.subr.mxu0 0.0
    %8667 = vmatpush1.msra.mxu0 0.0
    %8668 = vmatprep.subr.mxu0 0.0
    %8669 = vmatpush1.msra.mxu0 0.0
    %8670 = vmatprep.subr.mxu0 0.0
    %8671 = vmatpush1.msra.mxu0 0.0
    %8672 = vmatprep.subr.mxu0 0.0
    %8673 = vmatpush1.msra.mxu0 0.0
    %8674 = vmatprep.subr.mxu0 0.0
    %8675 = vmatpush1.msra.mxu0 0.0
    %8676 = vmatprep.subr.mxu0 0.0
    %8677 = vmatpush1.msra.mxu0 0.0
    %8678 = vmatprep.subr.mxu0 0.0
    %8679 = vmatpush1.msra.mxu0 0.0
    %8680 = vmatprep.subr.mxu0 0.0
    %8681 = vmatpush1.msra.mxu0 0.0
    %8682 = vmatprep.subr.mxu0 0.0
    %8683 = vmatpush1.msra.mxu0 0.0
    %8684 = vmatprep.subr.mxu0 0.0
    %8685 = vmatpush1.msra.mxu0 0.0
    %8686 = vmatprep.subr.mxu0 0.0
    %8687 = vmatpush1.msra.mxu0 0.0
    %8688 = vmatprep.subr.mxu0 0.0
    %8689 = vmatpush1.msra.mxu0 0.0
    %8690 = vmatprep.subr.mxu0 0.0
    %8691 = vmatpush1.msra.mxu0 0.0
    %8692 = vmatprep.subr.mxu0 0.0
    %8693 = vmatpush1.msra.mxu0 0.0
    %8694 = vmatprep.mubr.f32.mxu0 0.0
    %8695 = vmatmul.mubr.f32.gmra.mrb[0].mxu0 %v8628
    %v8696 = vpop.f32.mrb[0].mxu0
    %v8697 = vadd.f32 0.0, %v8696
    %v8698 = vpop.f32.mrb[0].mxu0
    %8699 = vdwg.mxu0
    %v8700 = vadd.f32 %v8619, %v8697
    %s8701 = scalar_lea.vmem %s6, 224
    %v8702 = vld [vmem:[%s8701] sm:$0xff]
    %v8703 = vld [vmem:[%s8701 + $0x8] sm:$0xff]
    %v8704 = vld [vmem:[%s8701 + $0x10] sm:$0xff]
    %v8705 = vld [vmem:[%s8701 + $0x18] sm:$0xff]
    %v8706 = vrot.slane %v8134, 7
    %v8707 = vrot.slane %v8135, 6
    %v8708 = vsel %vm8148, %v8707, %v8706
    %v8709 = vsel %vm130, %v8708, 0
    %8711 = vmatprep.subr.mxu0 0.0
    %8712 = vmatpush1.msra.mxu0 %v8702
    %8713 = vmatprep.subr.mxu0 0.0
    %8714 = vmatpush1.msra.mxu0 %v8703
    %8715 = vmatprep.subr.mxu0 0.0
    %8716 = vmatpush1.msra.mxu0 %v8704
    %8717 = vmatprep.subr.mxu0 0.0
    %8718 = vmatpush1.msra.mxu0 %v8705
    %8719 = vmatprep.subr.mxu0 0.0
    %8720 = vmatpush1.msra.mxu0 0.0
    %8721 = vmatprep.subr.mxu0 0.0
    %8722 = vmatpush1.msra.mxu0 0.0
    %8723 = vmatprep.subr.mxu0 0.0
    %8724 = vmatpush1.msra.mxu0 0.0
    %8725 = vmatprep.subr.mxu0 0.0
    %8726 = vmatpush1.msra.mxu0 0.0
    %8727 = vmatprep.subr.mxu0 0.0
    %8728 = vmatpush1.msra.mxu0 0.0
    %8729 = vmatprep.subr.mxu0 0.0
    %8730 = vmatpush1.msra.mxu0 0.0
    %8731 = vmatprep.subr.mxu0 0.0
    %8732 = vmatpush1.msra.mxu0 0.0
    %8733 = vmatprep.subr.mxu0 0.0
    %8734 = vmatpush1.msra.mxu0 0.0
    %8735 = vmatprep.subr.mxu0 0.0
    %8736 = vmatpush1.msra.mxu0 0.0
    %8737 = vmatprep.subr.mxu0 0.0
    %8738 = vmatpush1.msra.mxu0 0.0
    %8739 = vmatprep.subr.mxu0 0.0
    %8740 = vmatpush1.msra.mxu0 0.0
    %8741 = vmatprep.subr.mxu0 0.0
    %8742 = vmatpush1.msra.mxu0 0.0
    %8743 = vmatprep.subr.mxu0 0.0
    %8744 = vmatpush1.msra.mxu0 0.0
    %8745 = vmatprep.subr.mxu0 0.0
    %8746 = vmatpush1.msra.mxu0 0.0
    %8747 = vmatprep.subr.mxu0 0.0
    %8748 = vmatpush1.msra.mxu0 0.0
    %8749 = vmatprep.subr.mxu0 0.0
    %8750 = vmatpush1.msra.mxu0 0.0
    %8751 = vmatprep.subr.mxu0 0.0
    %8752 = vmatpush1.msra.mxu0 0.0
    %8753 = vmatprep.subr.mxu0 0.0
    %8754 = vmatpush1.msra.mxu0 0.0
    %8755 = vmatprep.subr.mxu0 0.0
    %8756 = vmatpush1.msra.mxu0 0.0
    %8757 = vmatprep.subr.mxu0 0.0
    %8758 = vmatpush1.msra.mxu0 0.0
    %8759 = vmatprep.subr.mxu0 0.0
    %8760 = vmatpush1.msra.mxu0 0.0
    %8761 = vmatprep.subr.mxu0 0.0
    %8762 = vmatpush1.msra.mxu0 0.0
    %8763 = vmatprep.subr.mxu0 0.0
    %8764 = vmatpush1.msra.mxu0 0.0
    %8765 = vmatprep.subr.mxu0 0.0
    %8766 = vmatpush1.msra.mxu0 0.0
    %8767 = vmatprep.subr.mxu0 0.0
    %8768 = vmatpush1.msra.mxu0 0.0
    %8769 = vmatprep.subr.mxu0 0.0
    %8770 = vmatpush1.msra.mxu0 0.0
    %8771 = vmatprep.subr.mxu0 0.0
    %8772 = vmatpush1.msra.mxu0 0.0
    %8773 = vmatprep.subr.mxu0 0.0
    %8774 = vmatpush1.msra.mxu0 0.0
    %8775 = vmatprep.mubr.f32.mxu0 0.0
    %8776 = vmatmul.mubr.f32.gmra.mrb[0].mxu0 %v8709
    %v8777 = vpop.f32.mrb[0].mxu0
    %v8778 = vadd.f32 0.0, %v8777
    %v8779 = vpop.f32.mrb[0].mxu0
    %8780 = vdwg.mxu0
    %v8781 = vadd.f32 %v8700, %v8778
    %v8782 = vld [vmem:[%s8 + $0x1] ss:$0 sm:$0xff]
    %v8783 = vadd.f32 %v8781, %v8782
    %vm8784 = vcmask 123904
    %8785 = vst.msk [vmem:[#allocation2] sm:$0x3] %vm8784, %v8783
    %v8786 = vld [vmem:[%s7] sm:$0xff]
    %v8787 = vld [vmem:[%s7 + $0x8] sm:$0xff]
    %v8788 = vld [vmem:[%s8 + $0x2] ss:$0 sm:$0xff]
    %v8790 = vsel %vm41, %v8783, 0
    %8792 = vmatprep.subr.mxu0 0.0
    %8793 = vmatpush1.msra.mxu0 %v8786
    %8794 = vmatprep.subr.mxu0 0.0
    %8795 = vmatpush1.msra.mxu0 %v8787
    %8796 = vmatprep.subr.mxu0 0.0
    %8797 = vmatpush1.msra.mxu0 0.0
    %8798 = vmatprep.subr.mxu0 0.0
    %8799 = vmatpush1.msra.mxu0 0.0
    %8800 = vmatprep.subr.mxu0 0.0
    %8801 = vmatpush1.msra.mxu0 0.0
    %8802 = vmatprep.subr.mxu0 0.0
    %8803 = vmatpush1.msra.mxu0 0.0
    %8804 = vmatprep.subr.mxu0 0.0
    %8805 = vmatpush1.msra.mxu0 0.0
    %8806 = vmatprep.subr.mxu0 0.0
    %8807 = vmatpush1.msra.mxu0 0.0
    %8808 = vmatprep.subr.mxu0 0.0
    %8809 = vmatpush1.msra.mxu0 0.0
    %8810 = vmatprep.subr.mxu0 0.0
    %8811 = vmatpush1.msra.mxu0 0.0
    %8812 = vmatprep.subr.mxu0 0.0
    %8813 = vmatpush1.msra.mxu0 0.0
    %8814 = vmatprep.subr.mxu0 0.0
    %8815 = vmatpush1.msra.mxu0 0.0
    %8816 = vmatprep.subr.mxu0 0.0
    %8817 = vmatpush1.msra.mxu0 0.0
    %8818 = vmatprep.subr.mxu0 0.0
    %8819 = vmatpush1.msra.mxu0 0.0
    %8820 = vmatprep.subr.mxu0 0.0
    %8821 = vmatpush1.msra.mxu0 0.0
    %8822 = vmatprep.subr.mxu0 0.0
    %8823 = vmatpush1.msra.mxu0 0.0
    %8824 = vmatprep.subr.mxu0 0.0
    %8825 = vmatpush1.msra.mxu0 0.0
    %8826 = vmatprep.subr.mxu0 0.0
    %8827 = vmatpush1.msra.mxu0 0.0
    %8828 = vmatprep.subr.mxu0 0.0
    %8829 = vmatpush1.msra.mxu0 0.0
    %8830 = vmatprep.subr.mxu0 0.0
    %8831 = vmatpush1.msra.mxu0 0.0
    %8832 = vmatprep.subr.mxu0 0.0
    %8833 = vmatpush1.msra.mxu0 0.0
    %8834 = vmatprep.subr.mxu0 0.0
    %8835 = vmatpush1.msra.mxu0 0.0
    %8836 = vmatprep.subr.mxu0 0.0
    %8837 = vmatpush1.msra.mxu0 0.0
    %8838 = vmatprep.subr.mxu0 0.0
    %8839 = vmatpush1.msra.mxu0 0.0
    %8840 = vmatprep.subr.mxu0 0.0
    %8841 = vmatpush1.msra.mxu0 0.0
    %8842 = vmatprep.subr.mxu0 0.0
    %8843 = vmatpush1.msra.mxu0 0.0
    %8844 = vmatprep.subr.mxu0 0.0
    %8845 = vmatpush1.msra.mxu0 0.0
    %8846 = vmatprep.subr.mxu0 0.0
    %8847 = vmatpush1.msra.mxu0 0.0
    %8848 = vmatprep.subr.mxu0 0.0
    %8849 = vmatpush1.msra.mxu0 0.0
    %8850 = vmatprep.subr.mxu0 0.0
    %8851 = vmatpush1.msra.mxu0 0.0
    %8852 = vmatprep.subr.mxu0 0.0
    %8853 = vmatpush1.msra.mxu0 0.0
    %8854 = vmatprep.subr.mxu0 0.0
    %8855 = vmatpush1.msra.mxu0 0.0
    %8856 = vmatprep.mubr.f32.mxu0 0.0
    %8857 = vmatmul.mubr.f32.gmra.mrb[0].mxu0 %v8790
    %v8858 = vpop.f32.mrb[0].mxu0
    %v8859 = vadd.f32 %v8788, %v8858
    %v8860 = vpop.f32.mrb[0].mxu0
    %8861 = vdwg.mxu0
    %8862 = vst [vmem:[%s10] sm:$0x3] %v8859
    // Predicated region
    $region38: #{transformer_reduction_forward.1} parent=1 // pred_check
      _
    $region39: #{transformer_reduction_forward.1} parent=1 // pred_check_branch
      %8864 = sbr.rel (0) target = $region41
    $region40: #{transformer_reduction_forward.1} parent=1 // pred_region
      %s8866 = ssub.s32 32, 32
      %8867 = vsyncadd [#allocation3], %s8866
      %s8869 = sshll.u32 [#allocation2], 4
      %s8870 = int_to_ptr.vmem [resolvable:$true] %s8869
      %8872 = dma.vmem_to_hbm [thread:$0]  %s8870, 32, %s9, [#allocation3]
    $region41: #{transformer_reduction_forward.1} parent=1 // pred_fallthru
      _
    // Predicated region
    $region42: #{transformer_reduction_forward.1} parent=1 // pred_check
      _
    $region43: #{transformer_reduction_forward.1} parent=1 // pred_check_branch
      %8874 = sbr.rel (0) target = $region45
    $region44: #{transformer_reduction_forward.1} parent=1 // pred_region
      _
    $region45: #{transformer_reduction_forward.1} parent=1 // pred_fallthru
      _
    // Predicated region
    $region46: #{transformer_reduction_forward.1} parent=1 // pred_check
      _
    $region47: #{transformer_reduction_forward.1} parent=1 // pred_check_branch
      %8876 = sbr.rel (0) target = $region49
    $region48: #{transformer_reduction_forward.1} parent=1 // pred_region
      %8877 = dma.done [#allocation3], 32
    $region49: #{transformer_reduction_forward.1} parent=1 // pred_fallthru
      _
    // Predicated region
    $region50: #{transformer_reduction_forward.1} parent=1 // pred_check
      _
    $region51: #{transformer_reduction_forward.1} parent=1 // pred_check_branch
      %8879 = sbr.rel (0) target = $region53
    $region52: #{transformer_reduction_forward.1} parent=1 // pred_region
      _
    $region53: #{transformer_reduction_forward.1} parent=1 // pred_fallthru
      _
    %8880 = vsyncpa [#allocation3], 1

</llo_original>
